<compile_context>
chip_gen: v5e
topology: v5e:2x2
jax: 0.10.0
libtpu: 0.0.40
codegen_flags: <defaults>
</compile_context>

<pallas_src>
import math
import functools

import jax
import jax.numpy as jnp
from jax.experimental import pallas as pl
from jax.experimental.pallas import tpu as pltpu


_PREC = jax.lax.Precision.HIGHEST  # accurate multi-pass MXU path for f32 operands
                                   # (a no-op for bf16 operands on the production path)


def _mm(a, b):
  """a @ b, f32 accumulation."""
  return jnp.dot(a, b, preferred_element_type=jnp.float32, precision=_PREC)


def _mm_nt(a, b):
  """a @ b.T (contract the last dim of both), f32 accumulation."""
  return jax.lax.dot_general(a, b, (((1,), (1,)), ((), ())),
                             precision=_PREC,
                             preferred_element_type=jnp.float32)


def _attention_block_kernel(
    x_ref,       # (1, C, N)  input, natural (frame-major) layout, f32
    gamma_ref,   # (1, C)     GroupNorm weight (row layout)
    beta_ref,    # (1, C)     GroupNorm bias   (row layout)
    grp_ref,     # (C, C)     group-mean matrix, entries 1/(cg*N) within a group
    wa_ref,      # (6C, C)    fused [W_qs; W_ks; W_vs; W_qt; W_kt; W_vt]
    ba_ref,      # (6C, 1)    fused biases
    w1_ref,      # (C//2, C)  gate MLP layer 1
    b1_ref,      # (C//2, 1)
    w2_ref,      # (C, C//2)  gate MLP layer 2
    b2_ref,      # (C, 1)
    eframe_ref,  # (T, N)     0/1: row i marks columns of (video/attention) frame i
    egate_ref,   # (T, N)     0/1: row f marks OUTPUT columns whose natural column
                 #            lies in video frame f (gate broadcast, attention layout)
    a_ref,       # (1, C, N)  out: s1 * gate, attention ("transposed") layout
    bnat_ref,    # (1, C, N)  out: s2 * gate + x, natural layout
    *, t, hw, eps, cdt):
  f32 = jnp.float32
  C = grp_ref.shape[0]
  N = t * hw

  x = x_ref[0]                                   # (C, N) f32
  eframe = eframe_ref[...]                       # (T, N)

  # ---- GroupNorm statistics: single pass, kept in lane-dense row layout ----------
  # (row layout lets the affine be folded straight into the weight columns below).
  ones_row = jnp.ones((1, N), f32)
  sx = _mm_nt(ones_row, x)                       # (1, C)  sum_n x
  sxx = _mm_nt(ones_row, x * x)                  # (1, C)  sum_n x^2
  gstats = _mm(jnp.concatenate([sx, sxx], axis=0), grp_ref[...])   # (2, C) group E[x], E[x^2]
  mean = gstats[0:1]                             # (1, C)
  var = gstats[1:2] - mean * mean                # TODO(synk): two-pass/compensated stats
  scale = jax.lax.rsqrt(var + eps) * gamma_ref[...]   # (1, C)    if |mean| >> std in prod
  shift = beta_ref[...] - mean * scale                # (1, C)

  # ---- fold the GroupNorm affine into the fused 1x1-conv projection --------------
  #   wa @ (x*scale + shift) + ba  ==  (wa * scale) @ x + (ba + wa @ shift)
  wa = wa_ref[...]                                # (6C, C)
  wa_s = (wa * scale).astype(cdt)
  ba_adj = ba_ref[...] + _mm_nt(wa, shift)        # (6C, 1)
  proj = _mm(wa_s, x.astype(cdt)) + ba_adj        # (6C, N) f32
  qs = proj[0 * C:1 * C]    # spatial Q  (s1)
  ks = proj[1 * C:2 * C]    # spatial K  (used by channel attention s2)
  vs = proj[2 * C:3 * C]    # spatial V  (s1)
  qt = proj[3 * C:4 * C]    # temporal Q (s2)
  kt = proj[4 * C:5 * C]    # temporal K (used by spatial attention s1)
  vt = proj[5 * C:6 * C]    # temporal V (s2)

  # ---- channel gate: per-frame mean pool (matmul) -> affine-folded MLP -> expand --
  f_raw = _mm_nt(x, eframe) * (1.0 / hw)          # (C, T) per-frame mean of raw x
  w1_s = w1_ref[...] * scale                      # fold GN affine into gate layer 1
  b1_adj = b1_ref[...] + _mm_nt(w1_ref[...], shift)
  h1 = jnp.maximum(_mm(w1_s, f_raw) + b1_adj, 0.0)            # (C//2, T)
  fm = jax.nn.sigmoid(_mm(w2_ref[...], h1) + b2_ref[...])     # (C, T)
  fm_att = _mm(fm, egate_ref[...])                # (C, N) gate, attention/output layout
  fm_nat = _mm(fm, eframe)                        # (C, N) gate, natural layout

  # ---- s1: per-channel attention over frames (seq=T, head_dim=HW) ----------------
  # Roll-by-whole-frames trick: shift d pairs query frame i with key/value frame
  # (i-d) mod T; d=0..T-1 enumerates all keys, so softmax over d == per-frame softmax.
  inv_sqrt_hw = 1.0 / math.sqrt(hw)
  gs = []                                         # T tiny (C, T) score tiles
  for d in range(t):                              # T is small & static; unrolled
    kt_d = kt if d == 0 else pltpu.roll(kt, shift=d * hw, axis=1)
    gs.append(_mm_nt(qs * kt_d, eframe) * inv_sqrt_hw)         # (C, T)
  m1 = gs[0]
  for d in range(1, t):
    m1 = jnp.maximum(m1, gs[d])
  den = jnp.exp(gs[0] - m1)
  for d in range(1, t):
    den = den + jnp.exp(gs[d] - m1)               # exp recomputed; no `es` list kept
  inv_den = 1.0 / den                             # exact reciprocal (tiny (C, T))
  o_s1 = None
  for d in range(t):
    w_d = jnp.exp(gs[d] - m1) * inv_den           # (C, T) attention weights for shift d
    vs_d = vs if d == 0 else pltpu.roll(vs, shift=d * hw, axis=1)
    term = _mm(w_d, eframe) * vs_d                # (C, N); rolled operand used once
    o_s1 = term if o_s1 is None else o_s1 + term
  # o_s1 is already in the output ("transposed") column order.

  # ---- s2: attention over channels (seq=C, head_dim=N), natural layout -----------
  sc2 = _mm_nt(qt.astype(cdt), ks.astype(cdt)) * (1.0 / math.sqrt(N))   # (C, C)
  m2 = jnp.max(sc2, axis=-1, keepdims=True)
  e2 = jnp.exp(sc2 - m2)
  p2 = e2 / jnp.sum(e2, axis=-1, keepdims=True)   # exact softmax
  s2 = _mm(p2.astype(cdt), vt.astype(cdt))        # (C, N)

  # ---- gated outputs --------------------------------------------------------------
  a_ref[0] = o_s1 * fm_att                        # attention layout contribution
  bnat_ref[0] = s2 * fm_nat + x                   # natural layout contribution + residual


@functools.partial(jax.jit, static_argnames=("num_groups",))
def attention_block_pallas(x, params, num_groups):
  B, C, T, H, W = x.shape
  HW = H * W
  N = T * HW
  cg = C // num_groups
  # bf16 MXU operands only when the GEMMs are deep enough to bind the MXU.
  cdt = jnp.bfloat16 if C >= 128 else jnp.float32

  xf = x.reshape(B, C, N).astype(jnp.float32)

  # group-mean matrix with 1/(cg*N) folded in (symmetric)
  gidx = jnp.arange(C) // cg
  grp = (gidx[:, None] == gidx[None, :]).astype(jnp.float32) / float(cg * N)

  # tiny constant 0/1 matrices (lane-dense (T, N); constant-folded under jit)
  m_idx = jnp.arange(N)
  i_of_m = m_idx // HW                                  # frame block of column m
  f_of_m = ((m_idx % HW) * T + i_of_m) // HW            # video frame feeding output col m
  tt = jnp.arange(T)
  eframe = (tt[:, None] == i_of_m[None, :]).astype(jnp.float32)   # (T, N)
  egate = (tt[:, None] == f_of_m[None, :]).astype(jnp.float32)    # (T, N)

  # fused projection: [W_qs; W_ks; W_vs; W_qt; W_kt; W_vt]
  wa = jnp.concatenate([params['ws'], params['wt']], axis=0).astype(jnp.float32)   # (6C, C)
  ba = jnp.concatenate([params['bs'], params['bt']], axis=0).reshape(6 * C, 1).astype(jnp.float32)
  gamma = params['gn_w'].reshape(1, C).astype(jnp.float32)
  beta = params['gn_b'].reshape(1, C).astype(jnp.float32)
  w1 = params['w1'].astype(jnp.float32)
  b1 = params['b1'].reshape(C // 2, 1).astype(jnp.float32)
  w2 = params['w2'].astype(jnp.float32)
  b2 = params['b2'].reshape(C, 1).astype(jnp.float32)

  kernel = functools.partial(_attention_block_kernel, t=T, hw=HW, eps=1e-5, cdt=cdt)
  wspec = lambda shape: pl.BlockSpec(shape, lambda b: (0, 0))   # resident across grid

  a_att, b_nat = pl.pallas_call(
      kernel,
      out_shape=(jax.ShapeDtypeStruct((B, C, N), jnp.float32),
                 jax.ShapeDtypeStruct((B, C, N), jnp.float32)),
      grid_spec=pltpu.PrefetchScalarGridSpec(
          num_scalar_prefetch=0,
          grid=(B,),
          in_specs=[
              pl.BlockSpec((1, C, N), lambda b: (b, 0, 0)),   # x (natural, frame-major)
              wspec((1, C)),                                  # gamma
              wspec((1, C)),                                  # beta
              wspec((C, C)),                                  # grp
              wspec((6 * C, C)),                              # fused projection weight
              wspec((6 * C, 1)),                              # fused projection bias
              wspec((C // 2, C)),                             # w1
              wspec((C // 2, 1)),                             # b1
              wspec((C, C // 2)),                             # w2
              wspec((C, 1)),                                  # b2
              wspec((T, N)),                                  # eframe
              wspec((T, N)),                                  # egate
          ],
          out_specs=(pl.BlockSpec((1, C, N), lambda b: (b, 0, 0)),
                     pl.BlockSpec((1, C, N), lambda b: (b, 0, 0))),
      ),
      compiler_params=pltpu.CompilerParams(
          # batch axis splits across v7x's two cores; inert on v5e/v6e single-TC.
          dimension_semantics=("parallel",),
          vmem_limit_bytes=64 * 1024 * 1024),
  )(xf, gamma, beta, grp, wa, ba, w1, b1, w2, b2, eframe, egate)

  # combine the two contributions: o[natural n = p*T + i] = a_att[m = i*HW + p] + b_nat[n]
  a_perm = a_att.reshape(B, C, T, HW).swapaxes(-1, -2).reshape(B, C, N)
  return (a_perm + b_nat).reshape(B, C, T, H, W)


def attention_block_reference(x, params, num_groups):
  """Pure-JAX reference mirroring the PyTorch forward (prompt_emb=None), f32 throughout."""
  B, C, T, H, W = x.shape
  HW = H * W
  G = num_groups

  N = T * HW
  xr = x.reshape(B, G, C // G, N)
  mean = xr.mean(axis=(2, 3), keepdims=True)
  var = ((xr - mean) ** 2).mean(axis=(2, 3), keepdims=True)
  xs = ((xr - mean) / jnp.sqrt(var + 1e-5)).reshape(B, C, N)
  xs = xs * params['gn_w'].reshape(1, C, 1) + params['gn_b'].reshape(1, C, 1)

  f = xs.reshape(B, C, T, HW).mean(-1)                 # (B, C, T)
  ft = jnp.swapaxes(f, 1, 2)                           # (B, T, C)
  h1 = jax.nn.relu(ft @ params['w1'].T + params['b1'].reshape(1, 1, -1))
  h2 = jax.nn.sigmoid(h1 @ params['w2'].T + params['b2'].reshape(1, 1, -1))
  fm = jnp.swapaxes(h2, 1, 2).reshape(B, C, T, 1, 1)

  qkv_s = jnp.einsum('oc,bcn->bon', params['ws'], xs) + params['bs'].reshape(1, -1, 1)
  qkv_t = jnp.einsum('oc,bcn->bon', params['wt'], xs) + params['bt'].reshape(1, -1, 1)
  qs, ks, vs = qkv_s[:, :C], qkv_s[:, C:2 * C], qkv_s[:, 2 * C:]
  qt, kt, vt = qkv_t[:, :C], qkv_t[:, C:2 * C], qkv_t[:, 2 * C:]

  def sdp(q, k, v):
    scale = 1.0 / math.sqrt(q.shape[-1])
    a = jax.nn.softmax(jnp.einsum('...ld,...md->...lm', q, k) * scale, axis=-1)
    return jnp.einsum('...lm,...md->...ld', a, v)

  s1 = sdp(qs.reshape(B, C, T, HW), kt.reshape(B, C, T, HW), vs.reshape(B, C, T, HW))
  s1 = jnp.swapaxes(s1, -1, -2).reshape(B, C, T, H, W)
  s2 = sdp(qt, ks, vt).reshape(B, C, T, H, W)
  return (s1 + s2) * fm + x


def make_params(key, C):
  ks = jax.random.split(key, 10)
  return {
      'gn_w': 1.0 + 0.1 * jax.random.normal(ks[0], (C,), jnp.float32),
      'gn_b': 0.1 * jax.random.normal(ks[1], (C,), jnp.float32),
      'ws': 0.2 * jax.random.normal(ks[2], (3 * C, C), jnp.float32),
      'bs': 0.05 * jax.random.normal(ks[3], (3 * C,), jnp.float32),
      'wt': 0.2 * jax.random.normal(ks[4], (3 * C, C), jnp.float32),
      'bt': 0.05 * jax.random.normal(ks[5], (3 * C,), jnp.float32),
      'w1': 0.3 * jax.random.normal(ks[6], (C // 2, C), jnp.float32),
      'b1': 0.05 * jax.random.normal(ks[7], (C // 2,), jnp.float32),
      'w2': 0.3 * jax.random.normal(ks[8], (C, C // 2), jnp.float32),
      'b2': 0.05 * jax.random.normal(ks[9], (C,), jnp.float32),
  }


if __name__ == "__main__":
  B, C, T, H, W = 2, 32, 4, 8, 8
  num_groups = 8

  key = jax.random.PRNGKey(0)
  kx, kp = jax.random.split(key)
  x = jax.random.normal(kx, (B, C, T, H, W), jnp.float32)
  params = make_params(kp, C)

  out = attention_block_pallas(x, params, num_groups)
  out = jax.block_until_ready(out)

  # Reference computed with accurate f32 matmuls so the tightened tolerance is meaningful.
  with jax.default_matmul_precision("highest"):
    ref = attention_block_reference(x, params, num_groups)
  ref = jax.block_until_ready(ref)

  max_diff = float(jnp.max(jnp.abs(out - ref)))
  assert out.shape == (B, C, T, H, W), out.shape
  assert max_diff < 5e-3, f"mismatch vs f32 reference: max|diff|={max_diff}"
  print("KERNEL_OK")
</pallas_src>

<mosaic_0001>
module attributes {stable_mosaic.version = 11 : i64} {
  func.func @_attention_block_kernel(%arg0: i32, %arg1: memref<1x32x256xf32, #tpu.memory_space<vmem>>, %arg2: memref<1x32xf32, #tpu.memory_space<vmem>>, %arg3: memref<1x32xf32, #tpu.memory_space<vmem>>, %arg4: memref<32x32xf32, #tpu.memory_space<vmem>>, %arg5: memref<192x32xf32, #tpu.memory_space<vmem>>, %arg6: memref<192x1xf32, #tpu.memory_space<vmem>>, %arg7: memref<16x32xf32, #tpu.memory_space<vmem>>, %arg8: memref<16x1xf32, #tpu.memory_space<vmem>>, %arg9: memref<32x16xf32, #tpu.memory_space<vmem>>, %arg10: memref<32x1xf32, #tpu.memory_space<vmem>>, %arg11: memref<4x256xf32, #tpu.memory_space<vmem>>, %arg12: memref<4x256xf32, #tpu.memory_space<vmem>>, %arg13: memref<1x32x256xf32, #tpu.memory_space<vmem>>, %arg14: memref<1x32x256xf32, #tpu.memory_space<vmem>>) attributes {dimension_semantics = [#tpu.dimension_semantics<parallel>], iteration_bounds = array<i64: 2>, scalar_prefetch = 0 : i64, scratch_operands = 0 : i64, tpu.core_type = #tpu.core_type<tc>, window_params = [{transform_indices = @transform_0, window_bounds = array<i64: 1, 32, 256>}, {pipeline_mode = #tpu.pipeline_mode<synchronous>, transform_indices = @transform_1, window_bounds = array<i64: 1, 32>}, {pipeline_mode = #tpu.pipeline_mode<synchronous>, transform_indices = @transform_2, window_bounds = array<i64: 1, 32>}, {pipeline_mode = #tpu.pipeline_mode<synchronous>, transform_indices = @transform_3, window_bounds = array<i64: 32, 32>}, {pipeline_mode = #tpu.pipeline_mode<synchronous>, transform_indices = @transform_4, window_bounds = array<i64: 192, 32>}, {pipeline_mode = #tpu.pipeline_mode<synchronous>, transform_indices = @transform_5, window_bounds = array<i64: 192, 1>}, {pipeline_mode = #tpu.pipeline_mode<synchronous>, transform_indices = @transform_6, window_bounds = array<i64: 16, 32>}, {pipeline_mode = #tpu.pipeline_mode<synchronous>, transform_indices = @transform_7, window_bounds = array<i64: 16, 1>}, {pipeline_mode = #tpu.pipeline_mode<synchronous>, transform_indices = @transform_8, window_bounds = array<i64: 32, 16>}, {pipeline_mode = #tpu.pipeline_mode<synchronous>, transform_indices = @transform_9, window_bounds = array<i64: 32, 1>}, {pipeline_mode = #tpu.pipeline_mode<synchronous>, transform_indices = @transform_10, window_bounds = array<i64: 4, 256>}, {pipeline_mode = #tpu.pipeline_mode<synchronous>, transform_indices = @transform_11, window_bounds = array<i64: 4, 256>}, {transform_indices = @transform_12, window_bounds = array<i64: 1, 32, 256>}, {transform_indices = @transform_13, window_bounds = array<i64: 1, 32, 256>}]} {
    %c0 = arith.constant 0 : index
    %c0_0 = arith.constant 0 : index
    %c0_1 = arith.constant 0 : index
    %0 = vector.load %arg1[%c0, %c0_0, %c0_1] : memref<1x32x256xf32, #tpu.memory_space<vmem>>, vector<1x32x256xf32>
    %1 = vector.shape_cast %0 : vector<1x32x256xf32> to vector<32x256xf32>
    %c0_2 = arith.constant 0 : index
    %c0_3 = arith.constant 0 : index
    %2 = vector.load %arg11[%c0_2, %c0_3] : memref<4x256xf32, #tpu.memory_space<vmem>>, vector<4x256xf32>
    %cst = arith.constant 1.000000e+00 : f32
    %3 = vector.broadcast %cst : f32 to vector<1x256xf32>
    %cst_4 = arith.constant dense<0.000000e+00> : vector<1x32xf32>
    %4 = tpu.matmul %3, %1, %cst_4 {dimension_numbers = #tpu.dot_dimension_numbers<[1], [1], [0], [0], [0, 0, 1, 0], [], []>, precision = #tpu.contract_precision<fp32>} : vector<1x256xf32>, vector<32x256xf32>, vector<1x32xf32> -> vector<1x32xf32>
    %5 = arith.mulf %1, %1 : vector<32x256xf32>
    %cst_5 = arith.constant dense<0.000000e+00> : vector<1x32xf32>
    %6 = tpu.matmul %3, %5, %cst_5 {dimension_numbers = #tpu.dot_dimension_numbers<[1], [1], [0], [0], [0, 0, 1, 0], [], []>, precision = #tpu.contract_precision<fp32>} : vector<1x256xf32>, vector<32x256xf32>, vector<1x32xf32> -> vector<1x32xf32>
    %7 = tpu.concatenate %4, %6 in 0 : vector<1x32xf32>, vector<1x32xf32> -> vector<2x32xf32>
    %c0_6 = arith.constant 0 : index
    %c0_7 = arith.constant 0 : index
    %8 = vector.load %arg4[%c0_6, %c0_7] : memref<32x32xf32, #tpu.memory_space<vmem>>, vector<32x32xf32>
    %cst_8 = arith.constant dense<0.000000e+00> : vector<2x32xf32>
    %9 = tpu.matmul %7, %8, %cst_8 {dimension_numbers = #tpu.dot_dimension_numbers<[1], [0], [0], [1], [0, 0, 1, 1], [], []>, precision = #tpu.contract_precision<fp32>} : vector<2x32xf32>, vector<32x32xf32>, vector<2x32xf32> -> vector<2x32xf32>
    %10 = vector.extract_strided_slice %9 {offsets = [0, 0], sizes = [1, 32], strides = [1, 1]} : vector<2x32xf32> to vector<1x32xf32>
    %11 = vector.extract_strided_slice %9 {offsets = [1, 0], sizes = [1, 32], strides = [1, 1]} : vector<2x32xf32> to vector<1x32xf32>
    %12 = arith.mulf %10, %10 : vector<1x32xf32>
    %13 = arith.subf %11, %12 : vector<1x32xf32>
    %cst_9 = arith.constant 9.99999974E-6 : f32
    %14 = vector.broadcast %cst_9 : f32 to vector<1x32xf32>
    %15 = arith.addf %13, %14 : vector<1x32xf32>
    %16 = math.rsqrt %15 : vector<1x32xf32>
    %c0_10 = arith.constant 0 : index
    %c0_11 = arith.constant 0 : index
    %17 = vector.load %arg2[%c0_10, %c0_11] : memref<1x32xf32, #tpu.memory_space<vmem>>, vector<1x32xf32>
    %18 = arith.mulf %16, %17 : vector<1x32xf32>
    %c0_12 = arith.constant 0 : index
    %c0_13 = arith.constant 0 : index
    %19 = vector.load %arg3[%c0_12, %c0_13] : memref<1x32xf32, #tpu.memory_space<vmem>>, vector<1x32xf32>
    %20 = arith.mulf %10, %18 : vector<1x32xf32>
    %21 = arith.subf %19, %20 : vector<1x32xf32>
    %c0_14 = arith.constant 0 : index
    %c0_15 = arith.constant 0 : index
    %22 = vector.load %arg5[%c0_14, %c0_15] : memref<192x32xf32, #tpu.memory_space<vmem>>, vector<192x32xf32>
    %23 = vector.broadcast %18 : vector<1x32xf32> to vector<192x32xf32>
    %24 = arith.mulf %22, %23 : vector<192x32xf32>
    %c0_16 = arith.constant 0 : index
    %c0_17 = arith.constant 0 : index
    %25 = vector.load %arg6[%c0_16, %c0_17] : memref<192x1xf32, #tpu.memory_space<vmem>>, vector<192x1xf32>
    %cst_18 = arith.constant dense<0.000000e+00> : vector<192x1xf32>
    %26 = tpu.matmul %22, %21, %cst_18 {dimension_numbers = #tpu.dot_dimension_numbers<[1], [1], [0], [0], [0, 0, 1, 0], [], []>, precision = #tpu.contract_precision<fp32>} : vector<192x32xf32>, vector<1x32xf32>, vector<192x1xf32> -> vector<192x1xf32>
    %27 = arith.addf %25, %26 : vector<192x1xf32>
    %cst_19 = arith.constant dense<0.000000e+00> : vector<192x256xf32>
    %28 = tpu.matmul %24, %1, %cst_19 {dimension_numbers = #tpu.dot_dimension_numbers<[1], [0], [0], [1], [0, 0, 1, 1], [], []>, precision = #tpu.contract_precision<fp32>} : vector<192x32xf32>, vector<32x256xf32>, vector<192x256xf32> -> vector<192x256xf32>
    %29 = vector.broadcast %27 : vector<192x1xf32> to vector<192x256xf32>
    %30 = arith.addf %28, %29 : vector<192x256xf32>
    %31 = vector.extract_strided_slice %30 {offsets = [0, 0], sizes = [32, 256], strides = [1, 1]} : vector<192x256xf32> to vector<32x256xf32>
    %32 = vector.extract_strided_slice %30 {offsets = [32, 0], sizes = [32, 256], strides = [1, 1]} : vector<192x256xf32> to vector<32x256xf32>
    %33 = vector.extract_strided_slice %30 {offsets = [64, 0], sizes = [32, 256], strides = [1, 1]} : vector<192x256xf32> to vector<32x256xf32>
    %34 = vector.extract_strided_slice %30 {offsets = [96, 0], sizes = [32, 256], strides = [1, 1]} : vector<192x256xf32> to vector<32x256xf32>
    %35 = vector.extract_strided_slice %30 {offsets = [128, 0], sizes = [32, 256], strides = [1, 1]} : vector<192x256xf32> to vector<32x256xf32>
    %36 = vector.extract_strided_slice %30 {offsets = [160, 0], sizes = [32, 256], strides = [1, 1]} : vector<192x256xf32> to vector<32x256xf32>
    %cst_20 = arith.constant dense<0.000000e+00> : vector<32x4xf32>
    %37 = tpu.matmul %1, %2, %cst_20 {dimension_numbers = #tpu.dot_dimension_numbers<[1], [1], [0], [0], [0, 0, 1, 0], [], []>, precision = #tpu.contract_precision<fp32>} : vector<32x256xf32>, vector<4x256xf32>, vector<32x4xf32> -> vector<32x4xf32>
    %cst_21 = arith.constant 1.562500e-02 : f32
    %38 = vector.broadcast %cst_21 : f32 to vector<32x4xf32>
    %39 = arith.mulf %37, %38 : vector<32x4xf32>
    %c0_22 = arith.constant 0 : index
    %c0_23 = arith.constant 0 : index
    %40 = vector.load %arg7[%c0_22, %c0_23] : memref<16x32xf32, #tpu.memory_space<vmem>>, vector<16x32xf32>
    %41 = vector.broadcast %18 : vector<1x32xf32> to vector<16x32xf32>
    %42 = arith.mulf %40, %41 : vector<16x32xf32>
    %c0_24 = arith.constant 0 : index
    %c0_25 = arith.constant 0 : index
    %43 = vector.load %arg8[%c0_24, %c0_25] : memref<16x1xf32, #tpu.memory_space<vmem>>, vector<16x1xf32>
    %c0_26 = arith.constant 0 : index
    %c0_27 = arith.constant 0 : index
    %44 = vector.load %arg7[%c0_26, %c0_27] : memref<16x32xf32, #tpu.memory_space<vmem>>, vector<16x32xf32>
    %cst_28 = arith.constant dense<0.000000e+00> : vector<16x1xf32>
    %45 = tpu.matmul %44, %21, %cst_28 {dimension_numbers = #tpu.dot_dimension_numbers<[1], [1], [0], [0], [0, 0, 1, 0], [], []>, precision = #tpu.contract_precision<fp32>} : vector<16x32xf32>, vector<1x32xf32>, vector<16x1xf32> -> vector<16x1xf32>
    %46 = arith.addf %43, %45 : vector<16x1xf32>
    %cst_29 = arith.constant dense<0.000000e+00> : vector<16x4xf32>
    %47 = tpu.matmul %42, %39, %cst_29 {dimension_numbers = #tpu.dot_dimension_numbers<[1], [0], [0], [1], [0, 0, 1, 1], [], []>, precision = #tpu.contract_precision<fp32>} : vector<16x32xf32>, vector<32x4xf32>, vector<16x4xf32> -> vector<16x4xf32>
    %48 = vector.broadcast %46 : vector<16x1xf32> to vector<16x4xf32>
    %49 = arith.addf %47, %48 : vector<16x4xf32>
    %cst_30 = arith.constant 0.000000e+00 : f32
    %50 = vector.broadcast %cst_30 : f32 to vector<16x4xf32>
    %51 = arith.maximumf %49, %50 : vector<16x4xf32>
    %c0_31 = arith.constant 0 : index
    %c0_32 = arith.constant 0 : index
    %52 = vector.load %arg9[%c0_31, %c0_32] : memref<32x16xf32, #tpu.memory_space<vmem>>, vector<32x16xf32>
    %cst_33 = arith.constant dense<0.000000e+00> : vector<32x4xf32>
    %53 = tpu.matmul %52, %51, %cst_33 {dimension_numbers = #tpu.dot_dimension_numbers<[1], [0], [0], [1], [0, 0, 1, 1], [], []>, precision = #tpu.contract_precision<fp32>} : vector<32x16xf32>, vector<16x4xf32>, vector<32x4xf32> -> vector<32x4xf32>
    %c0_34 = arith.constant 0 : index
    %c0_35 = arith.constant 0 : index
    %54 = vector.load %arg10[%c0_34, %c0_35] : memref<32x1xf32, #tpu.memory_space<vmem>>, vector<32x1xf32>
    %55 = vector.broadcast %54 : vector<32x1xf32> to vector<32x4xf32>
    %56 = arith.addf %53, %55 : vector<32x4xf32>
    %57 = arith.negf %56 : vector<32x4xf32>
    %58 = math.exp %57 : vector<32x4xf32>
    %cst_36 = arith.constant 1.000000e+00 : f32
    %59 = vector.broadcast %cst_36 : f32 to vector<32x4xf32>
    %60 = arith.addf %59, %58 : vector<32x4xf32>
    %61 = arith.divf %59, %60 : vector<32x4xf32>
    %c0_37 = arith.constant 0 : index
    %c0_38 = arith.constant 0 : index
    %62 = vector.load %arg12[%c0_37, %c0_38] : memref<4x256xf32, #tpu.memory_space<vmem>>, vector<4x256xf32>
    %cst_39 = arith.constant dense<0.000000e+00> : vector<32x256xf32>
    %63 = tpu.matmul %61, %62, %cst_39 {dimension_numbers = #tpu.dot_dimension_numbers<[1], [0], [0], [1], [0, 0, 1, 1], [], []>, precision = #tpu.contract_precision<fp32>} : vector<32x4xf32>, vector<4x256xf32>, vector<32x256xf32> -> vector<32x256xf32>
    %cst_40 = arith.constant dense<0.000000e+00> : vector<32x256xf32>
    %64 = tpu.matmul %61, %2, %cst_40 {dimension_numbers = #tpu.dot_dimension_numbers<[1], [0], [0], [1], [0, 0, 1, 1], [], []>, precision = #tpu.contract_precision<fp32>} : vector<32x4xf32>, vector<4x256xf32>, vector<32x256xf32> -> vector<32x256xf32>
    %65 = arith.mulf %31, %35 : vector<32x256xf32>
    %cst_41 = arith.constant dense<0.000000e+00> : vector<32x4xf32>
    %66 = tpu.matmul %65, %2, %cst_41 {dimension_numbers = #tpu.dot_dimension_numbers<[1], [1], [0], [0], [0, 0, 1, 0], [], []>, precision = #tpu.contract_precision<fp32>} : vector<32x256xf32>, vector<4x256xf32>, vector<32x4xf32> -> vector<32x4xf32>
    %cst_42 = arith.constant 1.250000e-01 : f32
    %67 = vector.broadcast %cst_42 : f32 to vector<32x4xf32>
    %68 = arith.mulf %66, %67 : vector<32x4xf32>
    %c64_i32 = arith.constant 64 : i32
    %69 = tpu.dynamic_rotate %35 by %c64_i32 dim 1 : vector<32x256xf32>, i32 -> vector<32x256xf32>
    %70 = arith.mulf %31, %69 : vector<32x256xf32>
    %cst_43 = arith.constant dense<0.000000e+00> : vector<32x4xf32>
    %71 = tpu.matmul %70, %2, %cst_43 {dimension_numbers = #tpu.dot_dimension_numbers<[1], [1], [0], [0], [0, 0, 1, 0], [], []>, precision = #tpu.contract_precision<fp32>} : vector<32x256xf32>, vector<4x256xf32>, vector<32x4xf32> -> vector<32x4xf32>
    %cst_44 = arith.constant 1.250000e-01 : f32
    %72 = vector.broadcast %cst_44 : f32 to vector<32x4xf32>
    %73 = arith.mulf %71, %72 : vector<32x4xf32>
    %c128_i32 = arith.constant 128 : i32
    %74 = tpu.dynamic_rotate %35 by %c128_i32 dim 1 : vector<32x256xf32>, i32 -> vector<32x256xf32>
    %75 = arith.mulf %31, %74 : vector<32x256xf32>
    %cst_45 = arith.constant dense<0.000000e+00> : vector<32x4xf32>
    %76 = tpu.matmul %75, %2, %cst_45 {dimension_numbers = #tpu.dot_dimension_numbers<[1], [1], [0], [0], [0, 0, 1, 0], [], []>, precision = #tpu.contract_precision<fp32>} : vector<32x256xf32>, vector<4x256xf32>, vector<32x4xf32> -> vector<32x4xf32>
    %cst_46 = arith.constant 1.250000e-01 : f32
    %77 = vector.broadcast %cst_46 : f32 to vector<32x4xf32>
    %78 = arith.mulf %76, %77 : vector<32x4xf32>
    %c192_i32 = arith.constant 192 : i32
    %79 = tpu.dynamic_rotate %35 by %c192_i32 dim 1 : vector<32x256xf32>, i32 -> vector<32x256xf32>
    %80 = arith.mulf %31, %79 : vector<32x256xf32>
    %cst_47 = arith.constant dense<0.000000e+00> : vector<32x4xf32>
    %81 = tpu.matmul %80, %2, %cst_47 {dimension_numbers = #tpu.dot_dimension_numbers<[1], [1], [0], [0], [0, 0, 1, 0], [], []>, precision = #tpu.contract_precision<fp32>} : vector<32x256xf32>, vector<4x256xf32>, vector<32x4xf32> -> vector<32x4xf32>
    %cst_48 = arith.constant 1.250000e-01 : f32
    %82 = vector.broadcast %cst_48 : f32 to vector<32x4xf32>
    %83 = arith.mulf %81, %82 : vector<32x4xf32>
    %84 = arith.maximumf %68, %73 : vector<32x4xf32>
    %85 = arith.maximumf %84, %78 : vector<32x4xf32>
    %86 = arith.maximumf %85, %83 : vector<32x4xf32>
    %87 = arith.subf %68, %86 : vector<32x4xf32>
    %88 = math.exp %87 : vector<32x4xf32>
    %89 = arith.subf %73, %86 : vector<32x4xf32>
    %90 = math.exp %89 : vector<32x4xf32>
    %91 = arith.addf %88, %90 : vector<32x4xf32>
    %92 = arith.subf %78, %86 : vector<32x4xf32>
    %93 = math.exp %92 : vector<32x4xf32>
    %94 = arith.addf %91, %93 : vector<32x4xf32>
    %95 = arith.subf %83, %86 : vector<32x4xf32>
    %96 = math.exp %95 : vector<32x4xf32>
    %97 = arith.addf %94, %96 : vector<32x4xf32>
    %cst_49 = arith.constant 1.000000e+00 : f32
    %98 = vector.broadcast %cst_49 : f32 to vector<32x4xf32>
    %99 = arith.divf %98, %97 : vector<32x4xf32>
    %100 = arith.subf %68, %86 : vector<32x4xf32>
    %101 = math.exp %100 : vector<32x4xf32>
    %102 = arith.mulf %101, %99 : vector<32x4xf32>
    %cst_50 = arith.constant dense<0.000000e+00> : vector<32x256xf32>
    %103 = tpu.matmul %102, %2, %cst_50 {dimension_numbers = #tpu.dot_dimension_numbers<[1], [0], [0], [1], [0, 0, 1, 1], [], []>, precision = #tpu.contract_precision<fp32>} : vector<32x4xf32>, vector<4x256xf32>, vector<32x256xf32> -> vector<32x256xf32>
    %104 = arith.mulf %103, %33 : vector<32x256xf32>
    %105 = arith.subf %73, %86 : vector<32x4xf32>
    %106 = math.exp %105 : vector<32x4xf32>
    %107 = arith.mulf %106, %99 : vector<32x4xf32>
    %c64_i32_51 = arith.constant 64 : i32
    %108 = tpu.dynamic_rotate %33 by %c64_i32_51 dim 1 : vector<32x256xf32>, i32 -> vector<32x256xf32>
    %cst_52 = arith.constant dense<0.000000e+00> : vector<32x256xf32>
    %109 = tpu.matmul %107, %2, %cst_52 {dimension_numbers = #tpu.dot_dimension_numbers<[1], [0], [0], [1], [0, 0, 1, 1], [], []>, precision = #tpu.contract_precision<fp32>} : vector<32x4xf32>, vector<4x256xf32>, vector<32x256xf32> -> vector<32x256xf32>
    %110 = arith.mulf %109, %108 : vector<32x256xf32>
    %111 = arith.addf %104, %110 : vector<32x256xf32>
    %112 = arith.subf %78, %86 : vector<32x4xf32>
    %113 = math.exp %112 : vector<32x4xf32>
    %114 = arith.mulf %113, %99 : vector<32x4xf32>
    %c128_i32_53 = arith.constant 128 : i32
    %115 = tpu.dynamic_rotate %33 by %c128_i32_53 dim 1 : vector<32x256xf32>, i32 -> vector<32x256xf32>
    %cst_54 = arith.constant dense<0.000000e+00> : vector<32x256xf32>
    %116 = tpu.matmul %114, %2, %cst_54 {dimension_numbers = #tpu.dot_dimension_numbers<[1], [0], [0], [1], [0, 0, 1, 1], [], []>, precision = #tpu.contract_precision<fp32>} : vector<32x4xf32>, vector<4x256xf32>, vector<32x256xf32> -> vector<32x256xf32>
    %117 = arith.mulf %116, %115 : vector<32x256xf32>
    %118 = arith.addf %111, %117 : vector<32x256xf32>
    %119 = arith.subf %83, %86 : vector<32x4xf32>
    %120 = math.exp %119 : vector<32x4xf32>
    %121 = arith.mulf %120, %99 : vector<32x4xf32>
    %c192_i32_55 = arith.constant 192 : i32
    %122 = tpu.dynamic_rotate %33 by %c192_i32_55 dim 1 : vector<32x256xf32>, i32 -> vector<32x256xf32>
    %cst_56 = arith.constant dense<0.000000e+00> : vector<32x256xf32>
    %123 = tpu.matmul %121, %2, %cst_56 {dimension_numbers = #tpu.dot_dimension_numbers<[1], [0], [0], [1], [0, 0, 1, 1], [], []>, precision = #tpu.contract_precision<fp32>} : vector<32x4xf32>, vector<4x256xf32>, vector<32x256xf32> -> vector<32x256xf32>
    %124 = arith.mulf %123, %122 : vector<32x256xf32>
    %125 = arith.addf %118, %124 : vector<32x256xf32>
    %cst_57 = arith.constant dense<0.000000e+00> : vector<32x32xf32>
    %126 = tpu.matmul %34, %32, %cst_57 {dimension_numbers = #tpu.dot_dimension_numbers<[1], [1], [0], [0], [0, 0, 1, 0], [], []>, precision = #tpu.contract_precision<fp32>} : vector<32x256xf32>, vector<32x256xf32>, vector<32x32xf32> -> vector<32x32xf32>
    %cst_58 = arith.constant 6.250000e-02 : f32
    %127 = vector.broadcast %cst_58 : f32 to vector<32x32xf32>
    %128 = arith.mulf %126, %127 : vector<32x32xf32>
    %cst_59 = arith.constant dense<0xFF800000> : vector<32xf32>
    %129 = vector.multi_reduction <maximumf>, %128, %cst_59 [1] : vector<32x32xf32> to vector<32xf32>
    %130 = vector.shape_cast %129 : vector<32xf32> to vector<32x1xf32>
    %131 = vector.broadcast %130 : vector<32x1xf32> to vector<32x32xf32>
    %132 = arith.subf %128, %131 : vector<32x32xf32>
    %133 = math.exp %132 : vector<32x32xf32>
    %cst_60 = arith.constant dense<0.000000e+00> : vector<32xf32>
    %134 = vector.multi_reduction <add>, %133, %cst_60 [1] : vector<32x32xf32> to vector<32xf32>
    %135 = vector.shape_cast %134 : vector<32xf32> to vector<32x1xf32>
    %136 = vector.broadcast %135 : vector<32x1xf32> to vector<32x32xf32>
    %137 = arith.divf %133, %136 : vector<32x32xf32>
    %cst_61 = arith.constant dense<0.000000e+00> : vector<32x256xf32>
    %138 = tpu.matmul %137, %36, %cst_61 {dimension_numbers = #tpu.dot_dimension_numbers<[1], [0], [0], [1], [0, 0, 1, 1], [], []>, precision = #tpu.contract_precision<fp32>} : vector<32x32xf32>, vector<32x256xf32>, vector<32x256xf32> -> vector<32x256xf32>
    %139 = arith.mulf %125, %63 : vector<32x256xf32>
    %c0_62 = arith.constant 0 : index
    %c0_63 = arith.constant 0 : index
    %c0_64 = arith.constant 0 : index
    %140 = vector.load %arg13[%c0_62, %c0_63, %c0_64] : memref<1x32x256xf32, #tpu.memory_space<vmem>>, vector<1x32x256xf32>
    %141 = vector.shape_cast %140 : vector<1x32x256xf32> to vector<32x256xf32>
    %142 = vector.shape_cast %139 : vector<32x256xf32> to vector<1x32x256xf32>
    tpu.vector_store %arg13[%c0_62, %c0_63, %c0_64], %142 {strides = array<i32>} : memref<1x32x256xf32, #tpu.memory_space<vmem>>, vector<1x32x256xf32>,
    %143 = arith.mulf %138, %64 : vector<32x256xf32>
    %144 = arith.addf %143, %1 : vector<32x256xf32>
    %c0_65 = arith.constant 0 : index
    %c0_66 = arith.constant 0 : index
    %c0_67 = arith.constant 0 : index
    %145 = vector.load %arg14[%c0_65, %c0_66, %c0_67] : memref<1x32x256xf32, #tpu.memory_space<vmem>>, vector<1x32x256xf32>
    %146 = vector.shape_cast %145 : vector<1x32x256xf32> to vector<32x256xf32>
    %147 = vector.shape_cast %144 : vector<32x256xf32> to vector<1x32x256xf32>
    tpu.vector_store %arg14[%c0_65, %c0_66, %c0_67], %147 {strides = array<i32>} : memref<1x32x256xf32, #tpu.memory_space<vmem>>, vector<1x32x256xf32>,
    return
  }
  func.func @transform_0(%arg0: i32) -> (i32, i32, i32) {
    %c0_i32 = arith.constant 0 : i32
    %c0_i32_0 = arith.constant 0 : i32
    %c0_i32_1 = arith.constant 0 : i32
    return %arg0, %c0_i32, %c0_i32_0 : i32, i32, i32
  }
  func.func @transform_1(%arg0: i32) -> (i32, i32) {
    %c0_i32 = arith.constant 0 : i32
    %c0_i32_0 = arith.constant 0 : i32
    %c0_i32_1 = arith.constant 0 : i32
    return %c0_i32, %c0_i32_0 : i32, i32
  }
  func.func @transform_2(%arg0: i32) -> (i32, i32) {
    %c0_i32 = arith.constant 0 : i32
    %c0_i32_0 = arith.constant 0 : i32
    %c0_i32_1 = arith.constant 0 : i32
    return %c0_i32, %c0_i32_0 : i32, i32
  }
  func.func @transform_3(%arg0: i32) -> (i32, i32) {
    %c0_i32 = arith.constant 0 : i32
    %c0_i32_0 = arith.constant 0 : i32
    %c0_i32_1 = arith.constant 0 : i32
    return %c0_i32, %c0_i32_0 : i32, i32
  }
  func.func @transform_4(%arg0: i32) -> (i32, i32) {
    %c0_i32 = arith.constant 0 : i32
    %c0_i32_0 = arith.constant 0 : i32
    %c0_i32_1 = arith.constant 0 : i32
    return %c0_i32, %c0_i32_0 : i32, i32
  }
  func.func @transform_5(%arg0: i32) -> (i32, i32) {
    %c0_i32 = arith.constant 0 : i32
    %c0_i32_0 = arith.constant 0 : i32
    %c0_i32_1 = arith.constant 0 : i32
    return %c0_i32, %c0_i32_0 : i32, i32
  }
  func.func @transform_6(%arg0: i32) -> (i32, i32) {
    %c0_i32 = arith.constant 0 : i32
    %c0_i32_0 = arith.constant 0 : i32
    %c0_i32_1 = arith.constant 0 : i32
    return %c0_i32, %c0_i32_0 : i32, i32
  }
  func.func @transform_7(%arg0: i32) -> (i32, i32) {
    %c0_i32 = arith.constant 0 : i32
    %c0_i32_0 = arith.constant 0 : i32
    %c0_i32_1 = arith.constant 0 : i32
    return %c0_i32, %c0_i32_0 : i32, i32
  }
  func.func @transform_8(%arg0: i32) -> (i32, i32) {
    %c0_i32 = arith.constant 0 : i32
    %c0_i32_0 = arith.constant 0 : i32
    %c0_i32_1 = arith.constant 0 : i32
    return %c0_i32, %c0_i32_0 : i32, i32
  }
  func.func @transform_9(%arg0: i32) -> (i32, i32) {
    %c0_i32 = arith.constant 0 : i32
    %c0_i32_0 = arith.constant 0 : i32
    %c0_i32_1 = arith.constant 0 : i32
    return %c0_i32, %c0_i32_0 : i32, i32
  }
  func.func @transform_10(%arg0: i32) -> (i32, i32) {
    %c0_i32 = arith.constant 0 : i32
    %c0_i32_0 = arith.constant 0 : i32
    %c0_i32_1 = arith.constant 0 : i32
    return %c0_i32, %c0_i32_0 : i32, i32
  }
  func.func @transform_11(%arg0: i32) -> (i32, i32) {
    %c0_i32 = arith.constant 0 : i32
    %c0_i32_0 = arith.constant 0 : i32
    %c0_i32_1 = arith.constant 0 : i32
    return %c0_i32, %c0_i32_0 : i32, i32
  }
  func.func @transform_12(%arg0: i32) -> (i32, i32, i32) {
    %c0_i32 = arith.constant 0 : i32
    %c0_i32_0 = arith.constant 0 : i32
    %c0_i32_1 = arith.constant 0 : i32
    return %arg0, %c0_i32, %c0_i32_0 : i32, i32, i32
  }
  func.func @transform_13(%arg0: i32) -> (i32, i32, i32) {
    %c0_i32 = arith.constant 0 : i32
    %c0_i32_0 = arith.constant 0 : i32
    %c0_i32_1 = arith.constant 0 : i32
    return %arg0, %c0_i32, %c0_i32_0 : i32, i32, i32
  }
}

</mosaic_0001>

<llo_original>
// kernel: attention_block_pallas.1
$region0: #{attention_block_pallas.1}
  #allocation0 [shape = 'u32[]', space=smem, size = 0x4, offset = 0x4, fixed_abs, tag = 'smem constant byte address 0x4 - core index']
  #allocation1 [shape = 'u32[72,128]{1,0:T(1,128)}', space=vmem, size = 0x9000, scoped, tag = 'internal scratch']
  %s0 = inlined_call_operand.vmem [shape: f32[2,32,256], index: 0, kind: input, shape index: {}]
  %s1 = inlined_call_operand.vmem [shape: f32[1,32], index: 1, kind: input, shape index: {}]
  %s2 = inlined_call_operand.vmem [shape: f32[1,32], index: 2, kind: input, shape index: {}]
  %s3 = inlined_call_operand.vmem [shape: f32[32,32], index: 3, kind: input, shape index: {}]
  %s4 = inlined_call_operand.vmem [shape: f32[192,32], index: 4, kind: input, shape index: {}]
  %s5 = inlined_call_operand.vmem [shape: f32[192,1], index: 5, kind: input, shape index: {}]
  %s6 = inlined_call_operand.vmem [shape: f32[16,32], index: 6, kind: input, shape index: {}]
  %s7 = inlined_call_operand.vmem [shape: f32[16,1], index: 7, kind: input, shape index: {}]
  %s8 = inlined_call_operand.vmem [shape: f32[32,16], index: 8, kind: input, shape index: {}]
  %s9 = inlined_call_operand.vmem [shape: f32[32,1], index: 9, kind: input, shape index: {}]
  %s10 = inlined_call_operand.vmem [shape: f32[4,256], index: 10, kind: input, shape index: {}]
  %s11 = inlined_call_operand.vmem [shape: f32[4,256], index: 11, kind: input, shape index: {}]
  %s12 = inlined_call_operand.vmem [shape: f32[2,32,256], index: 12, kind: output, shape index: {0}]
  %s13 = inlined_call_operand.vmem [shape: f32[2,32,256], index: 13, kind: output, shape index: {1}]
  %14 = xla_tuple %s12, %s13
  %s15 = sld [smem:[#allocation0]]
  $region89: #{attention_block_pallas.1} parent=0
    _
  %s17 = ssub.s32 1, %s15
  %s18 = scalar_select 0, %s17, %s15
  loop: start=0, step=1, limit=4
  $region2: #{attention_block_pallas.1} parent=0 // loop_pre_header
    _
  $region3: #{attention_block_pallas.1} parent=0 // loop_header
    %s20 = sphi 0, %s24
    %p21 = scmp.ge.s32.totalorder %s20, 4
    %s30 = sphi 0, %s32
    %s33 = sphi 0, %s30
    %s34 = sphi 0, %s33
    %s50 = sphi 0, %s34
    %s54 = sphi 0, %s54
    %s56 = sphi 0, %s54
    %s57 = sphi 0, %s56
    %s71 = sphi 0, %s57
    %s75 = sphi 0, %s75
    %s77 = sphi 0, %s75
    %s78 = sphi 0, %s77
    %s92 = sphi 0, %s78
    %s96 = sphi 0, %s96
    %s98 = sphi 0, %s96
    %s99 = sphi 0, %s98
    %s113 = sphi 0, %s99
    %s117 = sphi 0, %s117
    %s119 = sphi 0, %s117
    %s120 = sphi 0, %s119
    %s134 = sphi 0, %s120
    %s138 = sphi 0, %s138
    %s140 = sphi 0, %s138
    %s141 = sphi 0, %s140
    %s155 = sphi 0, %s141
    %s159 = sphi 0, %s159
    %s161 = sphi 0, %s159
    %s162 = sphi 0, %s161
    %s176 = sphi 0, %s162
    %s180 = sphi 0, %s180
    %s182 = sphi 0, %s180
    %s183 = sphi 0, %s182
    %s197 = sphi 0, %s183
    %s201 = sphi 0, %s201
    %s203 = sphi 0, %s201
    %s204 = sphi 0, %s203
    %s218 = sphi 0, %s204
    %s222 = sphi 0, %s222
    %s224 = sphi 0, %s222
    %s225 = sphi 0, %s224
    %s239 = sphi 0, %s225
    %s243 = sphi 0, %s243
    %s245 = sphi 0, %s243
    %s246 = sphi 0, %s245
    %s260 = sphi 0, %s246
    %s264 = sphi 0, %s264
    %s266 = sphi 0, %s264
    %s267 = sphi 0, %s266
    %s281 = sphi 0, %s267
    %s287 = sphi 0, %s289
    %s290 = sphi 0, %s287
    %s291 = sphi 0, %s290
    %s307 = sphi 0, %s291
    %s313 = sphi 0, %s315
    %s316 = sphi 0, %s313
    %s317 = sphi 0, %s316
    %s333 = sphi 0, %s317
  $region4: #{attention_block_pallas.1} parent=0 // loop_header_branch
    %23 = sbr.rel (%p21) target = $region8
  $region5: #{attention_block_pallas.1} parent=0 // loop_body
    %s25 = ssub.s32 %s20, 1
    %s26 = ssub.s32 %s20, 2
    %s27 = sadd.s32 %s20, 1
    %s28 = ssub.s32 %s20, %s27
    %p29 = scmp.eq.s32.totalorder %s28, 0
    %s31 = sadd.s32 %s30, 1
    %s32 = scalar_select %p29, %s30, %s31
    %p35 = pneg %p29
    %p36 = scmp.eq.s32.totalorder %s20, 1
    %p37 = por %p35, %p36
    %p38 = scmp.ne.s32.totalorder %s30, %s33
    %p39 = scmp.eq.s32.totalorder %s20, 0
    %p40 = por %p38, %p39
    %p41 = scmp.ne.s32.totalorder %s30, %s33
    %p42 = scmp.eq.s32.totalorder %s25, 1
    %p43 = por %p41, %p42
    %p44 = scmp.ne.s32.totalorder %s33, %s34
    %p45 = scmp.eq.s32.totalorder %s25, 0
    %p46 = por %p44, %p45
    %p47 = scmp.ne.s32.totalorder %s33, %s34
    %p48 = scmp.eq.s32.totalorder %s26, 1
    %p49 = por %p47, %p48
    %p51 = scmp.ne.s32.totalorder %s34, %s50
    %p52 = scmp.eq.s32.totalorder %s26, 0
    %p53 = por %p51, %p52
    %s55 = sadd.s32 %s54, 1
    %p58 = scmp.eq.s32.totalorder %s20, 1
    %p59 = scmp.ne.s32.totalorder %s54, %s56
    %p60 = scmp.eq.s32.totalorder %s20, 0
    %p61 = por %p59, %p60
    %p62 = scmp.ne.s32.totalorder %s54, %s56
    %p63 = scmp.eq.s32.totalorder %s25, 1
    %p64 = por %p62, %p63
    %p65 = scmp.ne.s32.totalorder %s56, %s57
    %p66 = scmp.eq.s32.totalorder %s25, 0
    %p67 = por %p65, %p66
    %p68 = scmp.ne.s32.totalorder %s56, %s57
    %p69 = scmp.eq.s32.totalorder %s26, 1
    %p70 = por %p68, %p69
    %p72 = scmp.ne.s32.totalorder %s57, %s71
    %p73 = scmp.eq.s32.totalorder %s26, 0
    %p74 = por %p72, %p73
    %s76 = sadd.s32 %s75, 1
    %p79 = scmp.eq.s32.totalorder %s20, 1
    %p80 = scmp.ne.s32.totalorder %s75, %s77
    %p81 = scmp.eq.s32.totalorder %s20, 0
    %p82 = por %p80, %p81
    %p83 = scmp.ne.s32.totalorder %s75, %s77
    %p84 = scmp.eq.s32.totalorder %s25, 1
    %p85 = por %p83, %p84
    %p86 = scmp.ne.s32.totalorder %s77, %s78
    %p87 = scmp.eq.s32.totalorder %s25, 0
    %p88 = por %p86, %p87
    %p89 = scmp.ne.s32.totalorder %s77, %s78
    %p90 = scmp.eq.s32.totalorder %s26, 1
    %p91 = por %p89, %p90
    %p93 = scmp.ne.s32.totalorder %s78, %s92
    %p94 = scmp.eq.s32.totalorder %s26, 0
    %p95 = por %p93, %p94
    %s97 = sadd.s32 %s96, 1
    %p100 = scmp.eq.s32.totalorder %s20, 1
    %p101 = scmp.ne.s32.totalorder %s96, %s98
    %p102 = scmp.eq.s32.totalorder %s20, 0
    %p103 = por %p101, %p102
    %p104 = scmp.ne.s32.totalorder %s96, %s98
    %p105 = scmp.eq.s32.totalorder %s25, 1
    %p106 = por %p104, %p105
    %p107 = scmp.ne.s32.totalorder %s98, %s99
    %p108 = scmp.eq.s32.totalorder %s25, 0
    %p109 = por %p107, %p108
    %p110 = scmp.ne.s32.totalorder %s98, %s99
    %p111 = scmp.eq.s32.totalorder %s26, 1
    %p112 = por %p110, %p111
    %p114 = scmp.ne.s32.totalorder %s99, %s113
    %p115 = scmp.eq.s32.totalorder %s26, 0
    %p116 = por %p114, %p115
    %s118 = sadd.s32 %s117, 1
    %p121 = scmp.eq.s32.totalorder %s20, 1
    %p122 = scmp.ne.s32.totalorder %s117, %s119
    %p123 = scmp.eq.s32.totalorder %s20, 0
    %p124 = por %p122, %p123
    %p125 = scmp.ne.s32.totalorder %s117, %s119
    %p126 = scmp.eq.s32.totalorder %s25, 1
    %p127 = por %p125, %p126
    %p128 = scmp.ne.s32.totalorder %s119, %s120
    %p129 = scmp.eq.s32.totalorder %s25, 0
    %p130 = por %p128, %p129
    %p131 = scmp.ne.s32.totalorder %s119, %s120
    %p132 = scmp.eq.s32.totalorder %s26, 1
    %p133 = por %p131, %p132
    %p135 = scmp.ne.s32.totalorder %s120, %s134
    %p136 = scmp.eq.s32.totalorder %s26, 0
    %p137 = por %p135, %p136
    %s139 = sadd.s32 %s138, 1
    %p142 = scmp.eq.s32.totalorder %s20, 1
    %p143 = scmp.ne.s32.totalorder %s138, %s140
    %p144 = scmp.eq.s32.totalorder %s20, 0
    %p145 = por %p143, %p144
    %p146 = scmp.ne.s32.totalorder %s138, %s140
    %p147 = scmp.eq.s32.totalorder %s25, 1
    %p148 = por %p146, %p147
    %p149 = scmp.ne.s32.totalorder %s140, %s141
    %p150 = scmp.eq.s32.totalorder %s25, 0
    %p151 = por %p149, %p150
    %p152 = scmp.ne.s32.totalorder %s140, %s141
    %p153 = scmp.eq.s32.totalorder %s26, 1
    %p154 = por %p152, %p153
    %p156 = scmp.ne.s32.totalorder %s141, %s155
    %p157 = scmp.eq.s32.totalorder %s26, 0
    %p158 = por %p156, %p157
    %s160 = sadd.s32 %s159, 1
    %p163 = scmp.eq.s32.totalorder %s20, 1
    %p164 = scmp.ne.s32.totalorder %s159, %s161
    %p165 = scmp.eq.s32.totalorder %s20, 0
    %p166 = por %p164, %p165
    %p167 = scmp.ne.s32.totalorder %s159, %s161
    %p168 = scmp.eq.s32.totalorder %s25, 1
    %p169 = por %p167, %p168
    %p170 = scmp.ne.s32.totalorder %s161, %s162
    %p171 = scmp.eq.s32.totalorder %s25, 0
    %p172 = por %p170, %p171
    %p173 = scmp.ne.s32.totalorder %s161, %s162
    %p174 = scmp.eq.s32.totalorder %s26, 1
    %p175 = por %p173, %p174
    %p177 = scmp.ne.s32.totalorder %s162, %s176
    %p178 = scmp.eq.s32.totalorder %s26, 0
    %p179 = por %p177, %p178
    %s181 = sadd.s32 %s180, 1
    %p184 = scmp.eq.s32.totalorder %s20, 1
    %p185 = scmp.ne.s32.totalorder %s180, %s182
    %p186 = scmp.eq.s32.totalorder %s20, 0
    %p187 = por %p185, %p186
    %p188 = scmp.ne.s32.totalorder %s180, %s182
    %p189 = scmp.eq.s32.totalorder %s25, 1
    %p190 = por %p188, %p189
    %p191 = scmp.ne.s32.totalorder %s182, %s183
    %p192 = scmp.eq.s32.totalorder %s25, 0
    %p193 = por %p191, %p192
    %p194 = scmp.ne.s32.totalorder %s182, %s183
    %p195 = scmp.eq.s32.totalorder %s26, 1
    %p196 = por %p194, %p195
    %p198 = scmp.ne.s32.totalorder %s183, %s197
    %p199 = scmp.eq.s32.totalorder %s26, 0
    %p200 = por %p198, %p199
    %s202 = sadd.s32 %s201, 1
    %p205 = scmp.eq.s32.totalorder %s20, 1
    %p206 = scmp.ne.s32.totalorder %s201, %s203
    %p207 = scmp.eq.s32.totalorder %s20, 0
    %p208 = por %p206, %p207
    %p209 = scmp.ne.s32.totalorder %s201, %s203
    %p210 = scmp.eq.s32.totalorder %s25, 1
    %p211 = por %p209, %p210
    %p212 = scmp.ne.s32.totalorder %s203, %s204
    %p213 = scmp.eq.s32.totalorder %s25, 0
    %p214 = por %p212, %p213
    %p215 = scmp.ne.s32.totalorder %s203, %s204
    %p216 = scmp.eq.s32.totalorder %s26, 1
    %p217 = por %p215, %p216
    %p219 = scmp.ne.s32.totalorder %s204, %s218
    %p220 = scmp.eq.s32.totalorder %s26, 0
    %p221 = por %p219, %p220
    %s223 = sadd.s32 %s222, 1
    %p226 = scmp.eq.s32.totalorder %s20, 1
    %p227 = scmp.ne.s32.totalorder %s222, %s224
    %p228 = scmp.eq.s32.totalorder %s20, 0
    %p229 = por %p227, %p228
    %p230 = scmp.ne.s32.totalorder %s222, %s224
    %p231 = scmp.eq.s32.totalorder %s25, 1
    %p232 = por %p230, %p231
    %p233 = scmp.ne.s32.totalorder %s224, %s225
    %p234 = scmp.eq.s32.totalorder %s25, 0
    %p235 = por %p233, %p234
    %p236 = scmp.ne.s32.totalorder %s224, %s225
    %p237 = scmp.eq.s32.totalorder %s26, 1
    %p238 = por %p236, %p237
    %p240 = scmp.ne.s32.totalorder %s225, %s239
    %p241 = scmp.eq.s32.totalorder %s26, 0
    %p242 = por %p240, %p241
    %s244 = sadd.s32 %s243, 1
    %p247 = scmp.eq.s32.totalorder %s20, 1
    %p248 = scmp.ne.s32.totalorder %s243, %s245
    %p249 = scmp.eq.s32.totalorder %s20, 0
    %p250 = por %p248, %p249
    %p251 = scmp.ne.s32.totalorder %s243, %s245
    %p252 = scmp.eq.s32.totalorder %s25, 1
    %p253 = por %p251, %p252
    %p254 = scmp.ne.s32.totalorder %s245, %s246
    %p255 = scmp.eq.s32.totalorder %s25, 0
    %p256 = por %p254, %p255
    %p257 = scmp.ne.s32.totalorder %s245, %s246
    %p258 = scmp.eq.s32.totalorder %s26, 1
    %p259 = por %p257, %p258
    %p261 = scmp.ne.s32.totalorder %s246, %s260
    %p262 = scmp.eq.s32.totalorder %s26, 0
    %p263 = por %p261, %p262
    %s265 = sadd.s32 %s264, 1
    %p268 = scmp.eq.s32.totalorder %s20, 1
    %p269 = scmp.ne.s32.totalorder %s264, %s266
    %p270 = scmp.eq.s32.totalorder %s20, 0
    %p271 = por %p269, %p270
    %p272 = scmp.ne.s32.totalorder %s264, %s266
    %p273 = scmp.eq.s32.totalorder %s25, 1
    %p274 = por %p272, %p273
    %p275 = scmp.ne.s32.totalorder %s266, %s267
    %p276 = scmp.eq.s32.totalorder %s25, 0
    %p277 = por %p275, %p276
    %p278 = scmp.ne.s32.totalorder %s266, %s267
    %p279 = scmp.eq.s32.totalorder %s26, 1
    %p280 = por %p278, %p279
    %p282 = scmp.ne.s32.totalorder %s267, %s281
    %p283 = scmp.eq.s32.totalorder %s26, 0
    %p284 = por %p282, %p283
    %s285 = ssub.s32 %s20, %s27
    %p286 = scmp.eq.s32.totalorder %s285, 0
    %s288 = sadd.s32 %s287, 1
    %s289 = scalar_select %p286, %s287, %s288
    %p292 = pneg %p286
    %p293 = scmp.eq.s32.totalorder %s20, 1
    %p294 = por %p292, %p293
    %p295 = scmp.ne.s32.totalorder %s287, %s290
    %p296 = scmp.eq.s32.totalorder %s20, 0
    %p297 = por %p295, %p296
    %p298 = scmp.ne.s32.totalorder %s287, %s290
    %p299 = scmp.eq.s32.totalorder %s25, 1
    %p300 = por %p298, %p299
    %p301 = scmp.ne.s32.totalorder %s290, %s291
    %p302 = scmp.eq.s32.totalorder %s25, 0
    %p303 = por %p301, %p302
    %p304 = scmp.ne.s32.totalorder %s290, %s291
    %p305 = scmp.eq.s32.totalorder %s26, 1
    %p306 = por %p304, %p305
    %p308 = scmp.ne.s32.totalorder %s291, %s307
    %p309 = scmp.eq.s32.totalorder %s26, 0
    %p310 = por %p308, %p309
    %s311 = ssub.s32 %s20, %s27
    %p312 = scmp.eq.s32.totalorder %s311, 0
    %s314 = sadd.s32 %s313, 1
    %s315 = scalar_select %p312, %s313, %s314
    %p318 = pneg %p312
    %p319 = scmp.eq.s32.totalorder %s20, 1
    %p320 = por %p318, %p319
    %p321 = scmp.ne.s32.totalorder %s313, %s316
    %p322 = scmp.eq.s32.totalorder %s20, 0
    %p323 = por %p321, %p322
    %p324 = scmp.ne.s32.totalorder %s313, %s316
    %p325 = scmp.eq.s32.totalorder %s25, 1
    %p326 = por %p324, %p325
    %p327 = scmp.ne.s32.totalorder %s316, %s317
    %p328 = scmp.eq.s32.totalorder %s25, 0
    %p329 = por %p327, %p328
    %p330 = scmp.ne.s32.totalorder %s316, %s317
    %p331 = scmp.eq.s32.totalorder %s26, 1
    %p332 = por %p330, %p331
    %p334 = scmp.ne.s32.totalorder %s317, %s333
    %p335 = scmp.eq.s32.totalorder %s26, 0
    %p336 = por %p334, %p335
    %p337 = scmp.le.s32.totalorder 1, %s20
    %p338 = scmp.lt.s32.totalorder %s20, 3
    %p339 = pnand %p337, %p338
    %p340 = pneg %p339
    // Predicated region
    $region9: #{attention_block_pallas.1} parent=5 // pred_check
      _
    $region10: #{attention_block_pallas.1} parent=5 // pred_check_branch
      %342 = sbr.rel (%p339) target = $region12
    $region11: #{attention_block_pallas.1} parent=5 // pred_region
      %s343 = ssub.s32 %s20, 1
      // Predicated region
      $region13: #{attention_block_pallas.1} parent=11 // pred_check
        %p344 = pneg %p67
      $region14: #{attention_block_pallas.1} parent=11 // pred_check_branch
        %346 = sbr.rel (%p344) target = $region16
      $region15: #{attention_block_pallas.1} parent=11 // pred_region
        _
      $region16: #{attention_block_pallas.1} parent=11 // pred_fallthru
        _
      // Predicated region
      $region17: #{attention_block_pallas.1} parent=11 // pred_check
        %p347 = pneg %p88
      $region18: #{attention_block_pallas.1} parent=11 // pred_check_branch
        %349 = sbr.rel (%p347) target = $region20
      $region19: #{attention_block_pallas.1} parent=11 // pred_region
        _
      $region20: #{attention_block_pallas.1} parent=11 // pred_fallthru
        _
      // Predicated region
      $region21: #{attention_block_pallas.1} parent=11 // pred_check
        %p350 = pneg %p109
      $region22: #{attention_block_pallas.1} parent=11 // pred_check_branch
        %352 = sbr.rel (%p350) target = $region24
      $region23: #{attention_block_pallas.1} parent=11 // pred_region
        _
      $region24: #{attention_block_pallas.1} parent=11 // pred_fallthru
        _
      // Predicated region
      $region25: #{attention_block_pallas.1} parent=11 // pred_check
        %p353 = pneg %p130
      $region26: #{attention_block_pallas.1} parent=11 // pred_check_branch
        %355 = sbr.rel (%p353) target = $region28
      $region27: #{attention_block_pallas.1} parent=11 // pred_region
        _
      $region28: #{attention_block_pallas.1} parent=11 // pred_fallthru
        _
      // Predicated region
      $region29: #{attention_block_pallas.1} parent=11 // pred_check
        %p356 = pneg %p151
      $region30: #{attention_block_pallas.1} parent=11 // pred_check_branch
        %358 = sbr.rel (%p356) target = $region32
      $region31: #{attention_block_pallas.1} parent=11 // pred_region
        _
      $region32: #{attention_block_pallas.1} parent=11 // pred_fallthru
        _
      // Predicated region
      $region33: #{attention_block_pallas.1} parent=11 // pred_check
        %p359 = pneg %p172
      $region34: #{attention_block_pallas.1} parent=11 // pred_check_branch
        %361 = sbr.rel (%p359) target = $region36
      $region35: #{attention_block_pallas.1} parent=11 // pred_region
        _
      $region36: #{attention_block_pallas.1} parent=11 // pred_fallthru
        _
      // Predicated region
      $region37: #{attention_block_pallas.1} parent=11 // pred_check
        %p362 = pneg %p193
      $region38: #{attention_block_pallas.1} parent=11 // pred_check_branch
        %364 = sbr.rel (%p362) target = $region40
      $region39: #{attention_block_pallas.1} parent=11 // pred_region
        _
      $region40: #{attention_block_pallas.1} parent=11 // pred_fallthru
        _
      // Predicated region
      $region41: #{attention_block_pallas.1} parent=11 // pred_check
        %p365 = pneg %p214
      $region42: #{attention_block_pallas.1} parent=11 // pred_check_branch
        %367 = sbr.rel (%p365) target = $region44
      $region43: #{attention_block_pallas.1} parent=11 // pred_region
        _
      $region44: #{attention_block_pallas.1} parent=11 // pred_fallthru
        _
      // Predicated region
      $region45: #{attention_block_pallas.1} parent=11 // pred_check
        %p368 = pneg %p235
      $region46: #{attention_block_pallas.1} parent=11 // pred_check_branch
        %370 = sbr.rel (%p368) target = $region48
      $region47: #{attention_block_pallas.1} parent=11 // pred_region
        _
      $region48: #{attention_block_pallas.1} parent=11 // pred_fallthru
        _
      // Predicated region
      $region49: #{attention_block_pallas.1} parent=11 // pred_check
        %p371 = pneg %p256
      $region50: #{attention_block_pallas.1} parent=11 // pred_check_branch
        %373 = sbr.rel (%p371) target = $region52
      $region51: #{attention_block_pallas.1} parent=11 // pred_region
        _
      $region52: #{attention_block_pallas.1} parent=11 // pred_fallthru
        _
      // Predicated region
      $region53: #{attention_block_pallas.1} parent=11 // pred_check
        %p374 = pneg %p277
      $region54: #{attention_block_pallas.1} parent=11 // pred_check_branch
        %376 = sbr.rel (%p374) target = $region56
      $region55: #{attention_block_pallas.1} parent=11 // pred_region
        _
      $region56: #{attention_block_pallas.1} parent=11 // pred_fallthru
        _
    $region12: #{attention_block_pallas.1} parent=5 // pred_fallthru
      _
    %p377 = scmp.lt.s32.totalorder %s20, 2
    // Predicated region
    $region57: #{attention_block_pallas.1} parent=5 // pred_check
      %p378 = pneg %p377
    $region58: #{attention_block_pallas.1} parent=5 // pred_check_branch
      %380 = sbr.rel (%p378) target = $region60
    $region59: #{attention_block_pallas.1} parent=5 // pred_region
      // Predicated region
      $region61: #{attention_block_pallas.1} parent=59 // pred_check
        %p381 = pneg %p40
      $region62: #{attention_block_pallas.1} parent=59 // pred_check_branch
        %383 = sbr.rel (%p381) target = $region64
      $region63: #{attention_block_pallas.1} parent=59 // pred_region
        %p384 = scmp.lt.s32.totalorder %s20, 1
        %s385 = scalar_select %p384, %s20, 1
        %s386 = smul.addr %s385, 8
        %s387 = smul.addr %s386, 8
        %s388 = scalar_lea.vmem %s0, %s387
      $region64: #{attention_block_pallas.1} parent=59 // pred_fallthru
        _
    $region60: #{attention_block_pallas.1} parent=5 // pred_fallthru
      _
    %p389 = scmp.le.s32.totalorder 1, %s20
    %p390 = scmp.lt.s32.totalorder %s20, 3
    %p391 = pnand %p389, %p390
    %p392 = pneg %p391
    // Predicated region
    $region65: #{attention_block_pallas.1} parent=5 // pred_check
      _
    $region66: #{attention_block_pallas.1} parent=5 // pred_check_branch
      %394 = sbr.rel (%p391) target = $region68
    $region67: #{attention_block_pallas.1} parent=5 // pred_region
      %s395 = ssub.s32 %s20, 1
      %p396 = scmp.lt.s32.totalorder %s25, 1
      %s397 = scalar_select %p396, %s25, 1
      %s398 = smul.addr %s397, 8
      %s399 = smul.addr %s398, 8
      %s400 = scalar_lea.vmem %s0, %s399
      %p401 = pneg %p46
      %p402 = pneg %p43
      %p403 = pneg %p67
      %p404 = pneg %p64
      %p405 = pneg %p88
      %p406 = pneg %p85
      %p407 = pneg %p109
      %p408 = pneg %p106
      %p409 = pneg %p130
      %p410 = pneg %p127
      %p411 = pneg %p151
      %p412 = pneg %p148
      %p413 = pneg %p172
      %p414 = pneg %p169
      %p415 = pneg %p193
      %p416 = pneg %p190
      %p417 = pneg %p214
      %p418 = pneg %p211
      %p419 = pneg %p235
      %p420 = pneg %p232
      %p421 = pneg %p256
      %p422 = pneg %p253
      %p423 = pneg %p277
      %p424 = pneg %p274
      %p425 = pneg %p303
      %p426 = pneg %p300
      %p427 = scmp.lt.s32.totalorder %s25, 1
      %s428 = scalar_select %p427, %s25, 1
      %s429 = smul.addr %s428, 8
      %s430 = smul.addr %s429, 8
      %s431 = scalar_lea.vmem %s12, %s430
      %p432 = pneg %p329
      %p433 = pneg %p326
      %p434 = scmp.lt.s32.totalorder %s25, 1
      %s435 = scalar_select %p434, %s25, 1
      %s436 = smul.addr %s435, 8
      %s437 = smul.addr %s436, 8
      %s438 = scalar_lea.vmem %s13, %s437
      %p439 = scmp.lt.s32.totalorder %s25, 1
      %s440 = scalar_select %p439, %s25, 1
      %s441 = smul.addr %s440, 8
      %s442 = smul.addr %s441, 8
      %s443 = scalar_lea.vmem %s0, %s442
      %p444 = scmp.lt.s32.totalorder %s25, 1
      %s445 = scalar_select %p444, %s25, 1
      %s446 = smul.addr %s445, 8
      %s447 = smul.addr %s446, 8
      %s448 = scalar_lea.vmem %s12, %s447
      %p449 = scmp.lt.s32.totalorder %s25, 1
      %s450 = scalar_select %p449, %s25, 1
      %s451 = smul.addr %s450, 8
      %s452 = smul.addr %s451, 8
      %s453 = scalar_lea.vmem %s13, %s452
      %v454 = vld [vmem:[%s443] sm:$0xff]
      %v455 = vld [vmem:[%s443 + $0x8] sm:$0xff]
      %v456 = vld [vmem:[%s443 + $0x10] sm:$0xff]
      %v457 = vld [vmem:[%s443 + $0x18] sm:$0xff]
      %v458 = vld [vmem:[%s443 + $0x20] sm:$0xff]
      %v459 = vld [vmem:[%s443 + $0x28] sm:$0xff]
      %v460 = vld [vmem:[%s443 + $0x30] sm:$0xff]
      %v461 = vld [vmem:[%s443 + $0x38] sm:$0xff]
      %v462 = vld [vmem:[%s10] sm:$0xff]
      %463 = vmatpush.xpose.msra.mxu0 0.0
      %464 = vmatpush.xpose.msra.mxu0 0.0
      %465 = vmatpush.xpose.msra.mxu0 0.0
      %466 = vmatpush.xpose.msra.mxu0 0.0
      %467 = vmatpush.xpose.msra.mxu0 0.0
      %468 = vmatpush.xpose.msra.mxu0 0.0
      %469 = vmatpush.xpose.msra.mxu0 0.0
      %470 = vmatpush.xpose.msra.mxu0 0.0
      %471 = vmatpush.xpose.msra.mxu0 0.0
      %472 = vmatpush.xpose.msra.mxu0 0.0
      %473 = vmatpush.xpose.msra.mxu0 0.0
      %474 = vmatpush.xpose.msra.mxu0 0.0
      %v475 = vand.u32 %v460, 4294901760
      %476 = vmatpush.xpose.msra.mxu0 %v475
      %v477 = vand.u32 %v458, 4294901760
      %478 = vmatpush.xpose.msra.mxu0 %v477
      %v479 = vand.u32 %v456, 4294901760
      %480 = vmatpush.xpose.msra.mxu0 %v479
      %v481 = vand.u32 %v454, 4294901760
      %482 = vmatpush.xpose.msra.mxu0 %v481
      %483 = vmatmul.f32.gmra.mxu0 0.0
      %v484 = vpop.f32.mrf.mxu0
      %v485 = vadd.f32 0.0, %v484
      %486 = vdwg.mxu0
      %487 = vmatpush.xpose.msra.mxu0 0.0
      %488 = vmatpush.xpose.msra.mxu0 0.0
      %489 = vmatpush.xpose.msra.mxu0 0.0
      %490 = vmatpush.xpose.msra.mxu0 0.0
      %491 = vmatpush.xpose.msra.mxu0 0.0
      %492 = vmatpush.xpose.msra.mxu0 0.0
      %493 = vmatpush.xpose.msra.mxu0 0.0
      %494 = vmatpush.xpose.msra.mxu0 0.0
      %495 = vmatpush.xpose.msra.mxu0 0.0
      %496 = vmatpush.xpose.msra.mxu0 0.0
      %497 = vmatpush.xpose.msra.mxu0 0.0
      %498 = vmatpush.xpose.msra.mxu0 0.0
      %v499 = vand.u32 %v460, 4294901760
      %v500 = vsub.f32 %v460, %v499
      %v501 = vand.u32 %v500, 4294901760
      %v502 = vsub.f32 %v500, %v501
      %v503 = vand.u32 %v502, 4294901760
      %504 = vmatpush.xpose.msra.mxu0 %v503
      %v505 = vand.u32 %v458, 4294901760
      %v506 = vsub.f32 %v458, %v505
      %v507 = vand.u32 %v506, 4294901760
      %v508 = vsub.f32 %v506, %v507
      %v509 = vand.u32 %v508, 4294901760
      %510 = vmatpush.xpose.msra.mxu0 %v509
      %v511 = vand.u32 %v456, 4294901760
      %v512 = vsub.f32 %v456, %v511
      %v513 = vand.u32 %v512, 4294901760
      %v514 = vsub.f32 %v512, %v513
      %v515 = vand.u32 %v514, 4294901760
      %516 = vmatpush.xpose.msra.mxu0 %v515
      %v517 = vand.u32 %v454, 4294901760
      %v518 = vsub.f32 %v454, %v517
      %v519 = vand.u32 %v518, 4294901760
      %v520 = vsub.f32 %v518, %v519
      %v521 = vand.u32 %v520, 4294901760
      %522 = vmatpush.xpose.msra.mxu0 %v521
      %523 = vmatmul.f32.gmra.mxu0 1.0
      %v524 = vpop.f32.mrf.mxu0
      %v525 = vadd.f32 %v485, %v524
      %526 = vdwg.mxu0
      %527 = vmatpush.xpose.msra.mxu0 0.0
      %528 = vmatpush.xpose.msra.mxu0 0.0
      %529 = vmatpush.xpose.msra.mxu0 0.0
      %530 = vmatpush.xpose.msra.mxu0 0.0
      %531 = vmatpush.xpose.msra.mxu0 0.0
      %532 = vmatpush.xpose.msra.mxu0 0.0
      %533 = vmatpush.xpose.msra.mxu0 0.0
      %534 = vmatpush.xpose.msra.mxu0 0.0
      %535 = vmatpush.xpose.msra.mxu0 0.0
      %536 = vmatpush.xpose.msra.mxu0 0.0
      %537 = vmatpush.xpose.msra.mxu0 0.0
      %538 = vmatpush.xpose.msra.mxu0 0.0
      %v539 = vand.u32 %v460, 4294901760
      %v540 = vsub.f32 %v460, %v539
      %541 = vmatpush.xpose.msra.mxu0 %v540
      %v542 = vand.u32 %v458, 4294901760
      %v543 = vsub.f32 %v458, %v542
      %544 = vmatpush.xpose.msra.mxu0 %v543
      %v545 = vand.u32 %v456, 4294901760
      %v546 = vsub.f32 %v456, %v545
      %547 = vmatpush.xpose.msra.mxu0 %v546
      %v548 = vand.u32 %v454, 4294901760
      %v549 = vsub.f32 %v454, %v548
      %550 = vmatpush.xpose.msra.mxu0 %v549
      %551 = vmatmul.f32.gmra.mxu0 0.0
      %v552 = vpop.f32.mrf.mxu0
      %v553 = vadd.f32 %v525, %v552
      %554 = vdwg.mxu0
      %555 = vmatpush.xpose.msra.mxu0 0.0
      %556 = vmatpush.xpose.msra.mxu0 0.0
      %557 = vmatpush.xpose.msra.mxu0 0.0
      %558 = vmatpush.xpose.msra.mxu0 0.0
      %559 = vmatpush.xpose.msra.mxu0 0.0
      %560 = vmatpush.xpose.msra.mxu0 0.0
      %561 = vmatpush.xpose.msra.mxu0 0.0
      %562 = vmatpush.xpose.msra.mxu0 0.0
      %563 = vmatpush.xpose.msra.mxu0 0.0
      %564 = vmatpush.xpose.msra.mxu0 0.0
      %565 = vmatpush.xpose.msra.mxu0 0.0
      %566 = vmatpush.xpose.msra.mxu0 0.0
      %v567 = vand.u32 %v460, 4294901760
      %568 = vmatpush.xpose.msra.mxu0 %v567
      %v569 = vand.u32 %v458, 4294901760
      %570 = vmatpush.xpose.msra.mxu0 %v569
      %v571 = vand.u32 %v456, 4294901760
      %572 = vmatpush.xpose.msra.mxu0 %v571
      %v573 = vand.u32 %v454, 4294901760
      %574 = vmatpush.xpose.msra.mxu0 %v573
      %575 = vmatmul.f32.gmra.mxu0 0.0
      %v576 = vpop.f32.mrf.mxu0
      %v577 = vadd.f32 %v553, %v576
      %578 = vdwg.mxu0
      %579 = vmatpush.xpose.msra.mxu0 0.0
      %580 = vmatpush.xpose.msra.mxu0 0.0
      %581 = vmatpush.xpose.msra.mxu0 0.0
      %582 = vmatpush.xpose.msra.mxu0 0.0
      %583 = vmatpush.xpose.msra.mxu0 0.0
      %584 = vmatpush.xpose.msra.mxu0 0.0
      %585 = vmatpush.xpose.msra.mxu0 0.0
      %586 = vmatpush.xpose.msra.mxu0 0.0
      %587 = vmatpush.xpose.msra.mxu0 0.0
      %588 = vmatpush.xpose.msra.mxu0 0.0
      %589 = vmatpush.xpose.msra.mxu0 0.0
      %590 = vmatpush.xpose.msra.mxu0 0.0
      %v591 = vand.u32 %v460, 4294901760
      %v592 = vsub.f32 %v460, %v591
      %v593 = vand.u32 %v592, 4294901760
      %594 = vmatpush.xpose.msra.mxu0 %v593
      %v595 = vand.u32 %v458, 4294901760
      %v596 = vsub.f32 %v458, %v595
      %v597 = vand.u32 %v596, 4294901760
      %598 = vmatpush.xpose.msra.mxu0 %v597
      %v599 = vand.u32 %v456, 4294901760
      %v600 = vsub.f32 %v456, %v599
      %v601 = vand.u32 %v600, 4294901760
      %602 = vmatpush.xpose.msra.mxu0 %v601
      %v603 = vand.u32 %v454, 4294901760
      %v604 = vsub.f32 %v454, %v603
      %v605 = vand.u32 %v604, 4294901760
      %606 = vmatpush.xpose.msra.mxu0 %v605
      %607 = vmatmul.f32.gmra.mxu0 1.0
      %v608 = vpop.f32.mrf.mxu0
      %v609 = vadd.f32 %v577, %v608
      %610 = vdwg.mxu0
      %611 = vmatpush.xpose.msra.mxu0 0.0
      %612 = vmatpush.xpose.msra.mxu0 0.0
      %613 = vmatpush.xpose.msra.mxu0 0.0
      %614 = vmatpush.xpose.msra.mxu0 0.0
      %615 = vmatpush.xpose.msra.mxu0 0.0
      %616 = vmatpush.xpose.msra.mxu0 0.0
      %617 = vmatpush.xpose.msra.mxu0 0.0
      %618 = vmatpush.xpose.msra.mxu0 0.0
      %619 = vmatpush.xpose.msra.mxu0 0.0
      %620 = vmatpush.xpose.msra.mxu0 0.0
      %621 = vmatpush.xpose.msra.mxu0 0.0
      %622 = vmatpush.xpose.msra.mxu0 0.0
      %v623 = vand.u32 %v460, 4294901760
      %624 = vmatpush.xpose.msra.mxu0 %v623
      %v625 = vand.u32 %v458, 4294901760
      %626 = vmatpush.xpose.msra.mxu0 %v625
      %v627 = vand.u32 %v456, 4294901760
      %628 = vmatpush.xpose.msra.mxu0 %v627
      %v629 = vand.u32 %v454, 4294901760
      %630 = vmatpush.xpose.msra.mxu0 %v629
      %631 = vmatmul.f32.gmra.mxu0 1.0
      %v632 = vpop.f32.mrf.mxu0
      %v633 = vadd.f32 %v609, %v632
      %634 = vdwg.mxu0
      %635 = vmatpush.xpose.msra.mxu0 0.0
      %636 = vmatpush.xpose.msra.mxu0 0.0
      %637 = vmatpush.xpose.msra.mxu0 0.0
      %638 = vmatpush.xpose.msra.mxu0 0.0
      %639 = vmatpush.xpose.msra.mxu0 0.0
      %640 = vmatpush.xpose.msra.mxu0 0.0
      %641 = vmatpush.xpose.msra.mxu0 0.0
      %642 = vmatpush.xpose.msra.mxu0 0.0
      %643 = vmatpush.xpose.msra.mxu0 0.0
      %644 = vmatpush.xpose.msra.mxu0 0.0
      %645 = vmatpush.xpose.msra.mxu0 0.0
      %646 = vmatpush.xpose.msra.mxu0 0.0
      %v647 = vand.u32 %v461, 4294901760
      %648 = vmatpush.xpose.msra.mxu0 %v647
      %v649 = vand.u32 %v459, 4294901760
      %650 = vmatpush.xpose.msra.mxu0 %v649
      %v651 = vand.u32 %v457, 4294901760
      %652 = vmatpush.xpose.msra.mxu0 %v651
      %v653 = vand.u32 %v455, 4294901760
      %654 = vmatpush.xpose.msra.mxu0 %v653
      %655 = vmatmul.f32.gmra.mxu0 0.0
      %v656 = vpop.f32.mrf.mxu0
      %v657 = vadd.f32 %v633, %v656
      %658 = vdwg.mxu0
      %659 = vmatpush.xpose.msra.mxu0 0.0
      %660 = vmatpush.xpose.msra.mxu0 0.0
      %661 = vmatpush.xpose.msra.mxu0 0.0
      %662 = vmatpush.xpose.msra.mxu0 0.0
      %663 = vmatpush.xpose.msra.mxu0 0.0
      %664 = vmatpush.xpose.msra.mxu0 0.0
      %665 = vmatpush.xpose.msra.mxu0 0.0
      %666 = vmatpush.xpose.msra.mxu0 0.0
      %667 = vmatpush.xpose.msra.mxu0 0.0
      %668 = vmatpush.xpose.msra.mxu0 0.0
      %669 = vmatpush.xpose.msra.mxu0 0.0
      %670 = vmatpush.xpose.msra.mxu0 0.0
      %v671 = vand.u32 %v461, 4294901760
      %v672 = vsub.f32 %v461, %v671
      %v673 = vand.u32 %v672, 4294901760
      %v674 = vsub.f32 %v672, %v673
      %v675 = vand.u32 %v674, 4294901760
      %676 = vmatpush.xpose.msra.mxu0 %v675
      %v677 = vand.u32 %v459, 4294901760
      %v678 = vsub.f32 %v459, %v677
      %v679 = vand.u32 %v678, 4294901760
      %v680 = vsub.f32 %v678, %v679
      %v681 = vand.u32 %v680, 4294901760
      %682 = vmatpush.xpose.msra.mxu0 %v681
      %v683 = vand.u32 %v457, 4294901760
      %v684 = vsub.f32 %v457, %v683
      %v685 = vand.u32 %v684, 4294901760
      %v686 = vsub.f32 %v684, %v685
      %v687 = vand.u32 %v686, 4294901760
      %688 = vmatpush.xpose.msra.mxu0 %v687
      %v689 = vand.u32 %v455, 4294901760
      %v690 = vsub.f32 %v455, %v689
      %v691 = vand.u32 %v690, 4294901760
      %v692 = vsub.f32 %v690, %v691
      %v693 = vand.u32 %v692, 4294901760
      %694 = vmatpush.xpose.msra.mxu0 %v693
      %695 = vmatmul.f32.gmra.mxu0 1.0
      %v696 = vpop.f32.mrf.mxu0
      %v697 = vadd.f32 %v657, %v696
      %698 = vdwg.mxu0
      %699 = vmatpush.xpose.msra.mxu0 0.0
      %700 = vmatpush.xpose.msra.mxu0 0.0
      %701 = vmatpush.xpose.msra.mxu0 0.0
      %702 = vmatpush.xpose.msra.mxu0 0.0
      %703 = vmatpush.xpose.msra.mxu0 0.0
      %704 = vmatpush.xpose.msra.mxu0 0.0
      %705 = vmatpush.xpose.msra.mxu0 0.0
      %706 = vmatpush.xpose.msra.mxu0 0.0
      %707 = vmatpush.xpose.msra.mxu0 0.0
      %708 = vmatpush.xpose.msra.mxu0 0.0
      %709 = vmatpush.xpose.msra.mxu0 0.0
      %710 = vmatpush.xpose.msra.mxu0 0.0
      %v711 = vand.u32 %v461, 4294901760
      %v712 = vsub.f32 %v461, %v711
      %713 = vmatpush.xpose.msra.mxu0 %v712
      %v714 = vand.u32 %v459, 4294901760
      %v715 = vsub.f32 %v459, %v714
      %716 = vmatpush.xpose.msra.mxu0 %v715
      %v717 = vand.u32 %v457, 4294901760
      %v718 = vsub.f32 %v457, %v717
      %719 = vmatpush.xpose.msra.mxu0 %v718
      %v720 = vand.u32 %v455, 4294901760
      %v721 = vsub.f32 %v455, %v720
      %722 = vmatpush.xpose.msra.mxu0 %v721
      %723 = vmatmul.f32.gmra.mxu0 0.0
      %v724 = vpop.f32.mrf.mxu0
      %v725 = vadd.f32 %v697, %v724
      %726 = vdwg.mxu0
      %727 = vmatpush.xpose.msra.mxu0 0.0
      %728 = vmatpush.xpose.msra.mxu0 0.0
      %729 = vmatpush.xpose.msra.mxu0 0.0
      %730 = vmatpush.xpose.msra.mxu0 0.0
      %731 = vmatpush.xpose.msra.mxu0 0.0
      %732 = vmatpush.xpose.msra.mxu0 0.0
      %733 = vmatpush.xpose.msra.mxu0 0.0
      %734 = vmatpush.xpose.msra.mxu0 0.0
      %735 = vmatpush.xpose.msra.mxu0 0.0
      %736 = vmatpush.xpose.msra.mxu0 0.0
      %737 = vmatpush.xpose.msra.mxu0 0.0
      %738 = vmatpush.xpose.msra.mxu0 0.0
      %v739 = vand.u32 %v461, 4294901760
      %740 = vmatpush.xpose.msra.mxu0 %v739
      %v741 = vand.u32 %v459, 4294901760
      %742 = vmatpush.xpose.msra.mxu0 %v741
      %v743 = vand.u32 %v457, 4294901760
      %744 = vmatpush.xpose.msra.mxu0 %v743
      %v745 = vand.u32 %v455, 4294901760
      %746 = vmatpush.xpose.msra.mxu0 %v745
      %747 = vmatmul.f32.gmra.mxu0 0.0
      %v748 = vpop.f32.mrf.mxu0
      %v749 = vadd.f32 %v725, %v748
      %750 = vdwg.mxu0
      %751 = vmatpush.xpose.msra.mxu0 0.0
      %752 = vmatpush.xpose.msra.mxu0 0.0
      %753 = vmatpush.xpose.msra.mxu0 0.0
      %754 = vmatpush.xpose.msra.mxu0 0.0
      %755 = vmatpush.xpose.msra.mxu0 0.0
      %756 = vmatpush.xpose.msra.mxu0 0.0
      %757 = vmatpush.xpose.msra.mxu0 0.0
      %758 = vmatpush.xpose.msra.mxu0 0.0
      %759 = vmatpush.xpose.msra.mxu0 0.0
      %760 = vmatpush.xpose.msra.mxu0 0.0
      %761 = vmatpush.xpose.msra.mxu0 0.0
      %762 = vmatpush.xpose.msra.mxu0 0.0
      %v763 = vand.u32 %v461, 4294901760
      %v764 = vsub.f32 %v461, %v763
      %v765 = vand.u32 %v764, 4294901760
      %766 = vmatpush.xpose.msra.mxu0 %v765
      %v767 = vand.u32 %v459, 4294901760
      %v768 = vsub.f32 %v459, %v767
      %v769 = vand.u32 %v768, 4294901760
      %770 = vmatpush.xpose.msra.mxu0 %v769
      %v771 = vand.u32 %v457, 4294901760
      %v772 = vsub.f32 %v457, %v771
      %v773 = vand.u32 %v772, 4294901760
      %774 = vmatpush.xpose.msra.mxu0 %v773
      %v775 = vand.u32 %v455, 4294901760
      %v776 = vsub.f32 %v455, %v775
      %v777 = vand.u32 %v776, 4294901760
      %778 = vmatpush.xpose.msra.mxu0 %v777
      %779 = vmatmul.f32.gmra.mxu0 1.0
      %v780 = vpop.f32.mrf.mxu0
      %v781 = vadd.f32 %v749, %v780
      %782 = vdwg.mxu0
      %783 = vmatpush.xpose.msra.mxu0 0.0
      %784 = vmatpush.xpose.msra.mxu0 0.0
      %785 = vmatpush.xpose.msra.mxu0 0.0
      %786 = vmatpush.xpose.msra.mxu0 0.0
      %787 = vmatpush.xpose.msra.mxu0 0.0
      %788 = vmatpush.xpose.msra.mxu0 0.0
      %789 = vmatpush.xpose.msra.mxu0 0.0
      %790 = vmatpush.xpose.msra.mxu0 0.0
      %791 = vmatpush.xpose.msra.mxu0 0.0
      %792 = vmatpush.xpose.msra.mxu0 0.0
      %793 = vmatpush.xpose.msra.mxu0 0.0
      %794 = vmatpush.xpose.msra.mxu0 0.0
      %v795 = vand.u32 %v461, 4294901760
      %796 = vmatpush.xpose.msra.mxu0 %v795
      %v797 = vand.u32 %v459, 4294901760
      %798 = vmatpush.xpose.msra.mxu0 %v797
      %v799 = vand.u32 %v457, 4294901760
      %800 = vmatpush.xpose.msra.mxu0 %v799
      %v801 = vand.u32 %v455, 4294901760
      %802 = vmatpush.xpose.msra.mxu0 %v801
      %803 = vmatmul.f32.gmra.mxu0 1.0
      %v804 = vpop.f32.mrf.mxu0
      %v805 = vadd.f32 %v781, %v804
      %806 = vdwg.mxu0
      %v807 = vmul.f32 %v454, %v454
      %v808 = vmul.f32 %v455, %v455
      %v809 = vmul.f32 %v456, %v456
      %v810 = vmul.f32 %v457, %v457
      %v811 = vmul.f32 %v458, %v458
      %v812 = vmul.f32 %v459, %v459
      %v813 = vmul.f32 %v460, %v460
      %v814 = vmul.f32 %v461, %v461
      %815 = vmatpush.xpose.msra.mxu0 0.0
      %816 = vmatpush.xpose.msra.mxu0 0.0
      %817 = vmatpush.xpose.msra.mxu0 0.0
      %818 = vmatpush.xpose.msra.mxu0 0.0
      %819 = vmatpush.xpose.msra.mxu0 0.0
      %820 = vmatpush.xpose.msra.mxu0 0.0
      %821 = vmatpush.xpose.msra.mxu0 0.0
      %822 = vmatpush.xpose.msra.mxu0 0.0
      %823 = vmatpush.xpose.msra.mxu0 0.0
      %824 = vmatpush.xpose.msra.mxu0 0.0
      %825 = vmatpush.xpose.msra.mxu0 0.0
      %826 = vmatpush.xpose.msra.mxu0 0.0
      %v827 = vand.u32 %v813, 4294901760
      %828 = vmatpush.xpose.msra.mxu0 %v827
      %v829 = vand.u32 %v811, 4294901760
      %830 = vmatpush.xpose.msra.mxu0 %v829
      %v831 = vand.u32 %v809, 4294901760
      %832 = vmatpush.xpose.msra.mxu0 %v831
      %v833 = vand.u32 %v807, 4294901760
      %834 = vmatpush.xpose.msra.mxu0 %v833
      %835 = vmatmul.f32.gmra.mxu0 0.0
      %v836 = vpop.f32.mrf.mxu0
      %v837 = vadd.f32 0.0, %v836
      %838 = vdwg.mxu0
      %839 = vmatpush.xpose.msra.mxu0 0.0
      %840 = vmatpush.xpose.msra.mxu0 0.0
      %841 = vmatpush.xpose.msra.mxu0 0.0
      %842 = vmatpush.xpose.msra.mxu0 0.0
      %843 = vmatpush.xpose.msra.mxu0 0.0
      %844 = vmatpush.xpose.msra.mxu0 0.0
      %845 = vmatpush.xpose.msra.mxu0 0.0
      %846 = vmatpush.xpose.msra.mxu0 0.0
      %847 = vmatpush.xpose.msra.mxu0 0.0
      %848 = vmatpush.xpose.msra.mxu0 0.0
      %849 = vmatpush.xpose.msra.mxu0 0.0
      %850 = vmatpush.xpose.msra.mxu0 0.0
      %v851 = vand.u32 %v813, 4294901760
      %v852 = vsub.f32 %v813, %v851
      %v853 = vand.u32 %v852, 4294901760
      %v854 = vsub.f32 %v852, %v853
      %v855 = vand.u32 %v854, 4294901760
      %856 = vmatpush.xpose.msra.mxu0 %v855
      %v857 = vand.u32 %v811, 4294901760
      %v858 = vsub.f32 %v811, %v857
      %v859 = vand.u32 %v858, 4294901760
      %v860 = vsub.f32 %v858, %v859
      %v861 = vand.u32 %v860, 4294901760
      %862 = vmatpush.xpose.msra.mxu0 %v861
      %v863 = vand.u32 %v809, 4294901760
      %v864 = vsub.f32 %v809, %v863
      %v865 = vand.u32 %v864, 4294901760
      %v866 = vsub.f32 %v864, %v865
      %v867 = vand.u32 %v866, 4294901760
      %868 = vmatpush.xpose.msra.mxu0 %v867
      %v869 = vand.u32 %v807, 4294901760
      %v870 = vsub.f32 %v807, %v869
      %v871 = vand.u32 %v870, 4294901760
      %v872 = vsub.f32 %v870, %v871
      %v873 = vand.u32 %v872, 4294901760
      %874 = vmatpush.xpose.msra.mxu0 %v873
      %875 = vmatmul.f32.gmra.mxu0 1.0
      %v876 = vpop.f32.mrf.mxu0
      %v877 = vadd.f32 %v837, %v876
      %878 = vdwg.mxu0
      %879 = vmatpush.xpose.msra.mxu0 0.0
      %880 = vmatpush.xpose.msra.mxu0 0.0
      %881 = vmatpush.xpose.msra.mxu0 0.0
      %882 = vmatpush.xpose.msra.mxu0 0.0
      %883 = vmatpush.xpose.msra.mxu0 0.0
      %884 = vmatpush.xpose.msra.mxu0 0.0
      %885 = vmatpush.xpose.msra.mxu0 0.0
      %886 = vmatpush.xpose.msra.mxu0 0.0
      %887 = vmatpush.xpose.msra.mxu0 0.0
      %888 = vmatpush.xpose.msra.mxu0 0.0
      %889 = vmatpush.xpose.msra.mxu0 0.0
      %890 = vmatpush.xpose.msra.mxu0 0.0
      %v891 = vand.u32 %v813, 4294901760
      %v892 = vsub.f32 %v813, %v891
      %893 = vmatpush.xpose.msra.mxu0 %v892
      %v894 = vand.u32 %v811, 4294901760
      %v895 = vsub.f32 %v811, %v894
      %896 = vmatpush.xpose.msra.mxu0 %v895
      %v897 = vand.u32 %v809, 4294901760
      %v898 = vsub.f32 %v809, %v897
      %899 = vmatpush.xpose.msra.mxu0 %v898
      %v900 = vand.u32 %v807, 4294901760
      %v901 = vsub.f32 %v807, %v900
      %902 = vmatpush.xpose.msra.mxu0 %v901
      %903 = vmatmul.f32.gmra.mxu0 0.0
      %v904 = vpop.f32.mrf.mxu0
      %v905 = vadd.f32 %v877, %v904
      %906 = vdwg.mxu0
      %907 = vmatpush.xpose.msra.mxu0 0.0
      %908 = vmatpush.xpose.msra.mxu0 0.0
      %909 = vmatpush.xpose.msra.mxu0 0.0
      %910 = vmatpush.xpose.msra.mxu0 0.0
      %911 = vmatpush.xpose.msra.mxu0 0.0
      %912 = vmatpush.xpose.msra.mxu0 0.0
      %913 = vmatpush.xpose.msra.mxu0 0.0
      %914 = vmatpush.xpose.msra.mxu0 0.0
      %915 = vmatpush.xpose.msra.mxu0 0.0
      %916 = vmatpush.xpose.msra.mxu0 0.0
      %917 = vmatpush.xpose.msra.mxu0 0.0
      %918 = vmatpush.xpose.msra.mxu0 0.0
      %v919 = vand.u32 %v813, 4294901760
      %920 = vmatpush.xpose.msra.mxu0 %v919
      %v921 = vand.u32 %v811, 4294901760
      %922 = vmatpush.xpose.msra.mxu0 %v921
      %v923 = vand.u32 %v809, 4294901760
      %924 = vmatpush.xpose.msra.mxu0 %v923
      %v925 = vand.u32 %v807, 4294901760
      %926 = vmatpush.xpose.msra.mxu0 %v925
      %927 = vmatmul.f32.gmra.mxu0 0.0
      %v928 = vpop.f32.mrf.mxu0
      %v929 = vadd.f32 %v905, %v928
      %930 = vdwg.mxu0
      %931 = vmatpush.xpose.msra.mxu0 0.0
      %932 = vmatpush.xpose.msra.mxu0 0.0
      %933 = vmatpush.xpose.msra.mxu0 0.0
      %934 = vmatpush.xpose.msra.mxu0 0.0
      %935 = vmatpush.xpose.msra.mxu0 0.0
      %936 = vmatpush.xpose.msra.mxu0 0.0
      %937 = vmatpush.xpose.msra.mxu0 0.0
      %938 = vmatpush.xpose.msra.mxu0 0.0
      %939 = vmatpush.xpose.msra.mxu0 0.0
      %940 = vmatpush.xpose.msra.mxu0 0.0
      %941 = vmatpush.xpose.msra.mxu0 0.0
      %942 = vmatpush.xpose.msra.mxu0 0.0
      %v943 = vand.u32 %v813, 4294901760
      %v944 = vsub.f32 %v813, %v943
      %v945 = vand.u32 %v944, 4294901760
      %946 = vmatpush.xpose.msra.mxu0 %v945
      %v947 = vand.u32 %v811, 4294901760
      %v948 = vsub.f32 %v811, %v947
      %v949 = vand.u32 %v948, 4294901760
      %950 = vmatpush.xpose.msra.mxu0 %v949
      %v951 = vand.u32 %v809, 4294901760
      %v952 = vsub.f32 %v809, %v951
      %v953 = vand.u32 %v952, 4294901760
      %954 = vmatpush.xpose.msra.mxu0 %v953
      %v955 = vand.u32 %v807, 4294901760
      %v956 = vsub.f32 %v807, %v955
      %v957 = vand.u32 %v956, 4294901760
      %958 = vmatpush.xpose.msra.mxu0 %v957
      %959 = vmatmul.f32.gmra.mxu0 1.0
      %v960 = vpop.f32.mrf.mxu0
      %v961 = vadd.f32 %v929, %v960
      %962 = vdwg.mxu0
      %963 = vmatpush.xpose.msra.mxu0 0.0
      %964 = vmatpush.xpose.msra.mxu0 0.0
      %965 = vmatpush.xpose.msra.mxu0 0.0
      %966 = vmatpush.xpose.msra.mxu0 0.0
      %967 = vmatpush.xpose.msra.mxu0 0.0
      %968 = vmatpush.xpose.msra.mxu0 0.0
      %969 = vmatpush.xpose.msra.mxu0 0.0
      %970 = vmatpush.xpose.msra.mxu0 0.0
      %971 = vmatpush.xpose.msra.mxu0 0.0
      %972 = vmatpush.xpose.msra.mxu0 0.0
      %973 = vmatpush.xpose.msra.mxu0 0.0
      %974 = vmatpush.xpose.msra.mxu0 0.0
      %v975 = vand.u32 %v813, 4294901760
      %976 = vmatpush.xpose.msra.mxu0 %v975
      %v977 = vand.u32 %v811, 4294901760
      %978 = vmatpush.xpose.msra.mxu0 %v977
      %v979 = vand.u32 %v809, 4294901760
      %980 = vmatpush.xpose.msra.mxu0 %v979
      %v981 = vand.u32 %v807, 4294901760
      %982 = vmatpush.xpose.msra.mxu0 %v981
      %983 = vmatmul.f32.gmra.mxu0 1.0
      %v984 = vpop.f32.mrf.mxu0
      %v985 = vadd.f32 %v961, %v984
      %986 = vdwg.mxu0
      %987 = vmatpush.xpose.msra.mxu0 0.0
      %988 = vmatpush.xpose.msra.mxu0 0.0
      %989 = vmatpush.xpose.msra.mxu0 0.0
      %990 = vmatpush.xpose.msra.mxu0 0.0
      %991 = vmatpush.xpose.msra.mxu0 0.0
      %992 = vmatpush.xpose.msra.mxu0 0.0
      %993 = vmatpush.xpose.msra.mxu0 0.0
      %994 = vmatpush.xpose.msra.mxu0 0.0
      %995 = vmatpush.xpose.msra.mxu0 0.0
      %996 = vmatpush.xpose.msra.mxu0 0.0
      %997 = vmatpush.xpose.msra.mxu0 0.0
      %998 = vmatpush.xpose.msra.mxu0 0.0
      %v999 = vand.u32 %v814, 4294901760
      %1000 = vmatpush.xpose.msra.mxu0 %v999
      %v1001 = vand.u32 %v812, 4294901760
      %1002 = vmatpush.xpose.msra.mxu0 %v1001
      %v1003 = vand.u32 %v810, 4294901760
      %1004 = vmatpush.xpose.msra.mxu0 %v1003
      %v1005 = vand.u32 %v808, 4294901760
      %1006 = vmatpush.xpose.msra.mxu0 %v1005
      %1007 = vmatmul.f32.gmra.mxu0 0.0
      %v1008 = vpop.f32.mrf.mxu0
      %v1009 = vadd.f32 %v985, %v1008
      %1010 = vdwg.mxu0
      %1011 = vmatpush.xpose.msra.mxu0 0.0
      %1012 = vmatpush.xpose.msra.mxu0 0.0
      %1013 = vmatpush.xpose.msra.mxu0 0.0
      %1014 = vmatpush.xpose.msra.mxu0 0.0
      %1015 = vmatpush.xpose.msra.mxu0 0.0
      %1016 = vmatpush.xpose.msra.mxu0 0.0
      %1017 = vmatpush.xpose.msra.mxu0 0.0
      %1018 = vmatpush.xpose.msra.mxu0 0.0
      %1019 = vmatpush.xpose.msra.mxu0 0.0
      %1020 = vmatpush.xpose.msra.mxu0 0.0
      %1021 = vmatpush.xpose.msra.mxu0 0.0
      %1022 = vmatpush.xpose.msra.mxu0 0.0
      %v1023 = vand.u32 %v814, 4294901760
      %v1024 = vsub.f32 %v814, %v1023
      %v1025 = vand.u32 %v1024, 4294901760
      %v1026 = vsub.f32 %v1024, %v1025
      %v1027 = vand.u32 %v1026, 4294901760
      %1028 = vmatpush.xpose.msra.mxu0 %v1027
      %v1029 = vand.u32 %v812, 4294901760
      %v1030 = vsub.f32 %v812, %v1029
      %v1031 = vand.u32 %v1030, 4294901760
      %v1032 = vsub.f32 %v1030, %v1031
      %v1033 = vand.u32 %v1032, 4294901760
      %1034 = vmatpush.xpose.msra.mxu0 %v1033
      %v1035 = vand.u32 %v810, 4294901760
      %v1036 = vsub.f32 %v810, %v1035
      %v1037 = vand.u32 %v1036, 4294901760
      %v1038 = vsub.f32 %v1036, %v1037
      %v1039 = vand.u32 %v1038, 4294901760
      %1040 = vmatpush.xpose.msra.mxu0 %v1039
      %v1041 = vand.u32 %v808, 4294901760
      %v1042 = vsub.f32 %v808, %v1041
      %v1043 = vand.u32 %v1042, 4294901760
      %v1044 = vsub.f32 %v1042, %v1043
      %v1045 = vand.u32 %v1044, 4294901760
      %1046 = vmatpush.xpose.msra.mxu0 %v1045
      %1047 = vmatmul.f32.gmra.mxu0 1.0
      %v1048 = vpop.f32.mrf.mxu0
      %v1049 = vadd.f32 %v1009, %v1048
      %1050 = vdwg.mxu0
      %1051 = vmatpush.xpose.msra.mxu0 0.0
      %1052 = vmatpush.xpose.msra.mxu0 0.0
      %1053 = vmatpush.xpose.msra.mxu0 0.0
      %1054 = vmatpush.xpose.msra.mxu0 0.0
      %1055 = vmatpush.xpose.msra.mxu0 0.0
      %1056 = vmatpush.xpose.msra.mxu0 0.0
      %1057 = vmatpush.xpose.msra.mxu0 0.0
      %1058 = vmatpush.xpose.msra.mxu0 0.0
      %1059 = vmatpush.xpose.msra.mxu0 0.0
      %1060 = vmatpush.xpose.msra.mxu0 0.0
      %1061 = vmatpush.xpose.msra.mxu0 0.0
      %1062 = vmatpush.xpose.msra.mxu0 0.0
      %v1063 = vand.u32 %v814, 4294901760
      %v1064 = vsub.f32 %v814, %v1063
      %1065 = vmatpush.xpose.msra.mxu0 %v1064
      %v1066 = vand.u32 %v812, 4294901760
      %v1067 = vsub.f32 %v812, %v1066
      %1068 = vmatpush.xpose.msra.mxu0 %v1067
      %v1069 = vand.u32 %v810, 4294901760
      %v1070 = vsub.f32 %v810, %v1069
      %1071 = vmatpush.xpose.msra.mxu0 %v1070
      %v1072 = vand.u32 %v808, 4294901760
      %v1073 = vsub.f32 %v808, %v1072
      %1074 = vmatpush.xpose.msra.mxu0 %v1073
      %1075 = vmatmul.f32.gmra.mxu0 0.0
      %v1076 = vpop.f32.mrf.mxu0
      %v1077 = vadd.f32 %v1049, %v1076
      %1078 = vdwg.mxu0
      %1079 = vmatpush.xpose.msra.mxu0 0.0
      %1080 = vmatpush.xpose.msra.mxu0 0.0
      %1081 = vmatpush.xpose.msra.mxu0 0.0
      %1082 = vmatpush.xpose.msra.mxu0 0.0
      %1083 = vmatpush.xpose.msra.mxu0 0.0
      %1084 = vmatpush.xpose.msra.mxu0 0.0
      %1085 = vmatpush.xpose.msra.mxu0 0.0
      %1086 = vmatpush.xpose.msra.mxu0 0.0
      %1087 = vmatpush.xpose.msra.mxu0 0.0
      %1088 = vmatpush.xpose.msra.mxu0 0.0
      %1089 = vmatpush.xpose.msra.mxu0 0.0
      %1090 = vmatpush.xpose.msra.mxu0 0.0
      %v1091 = vand.u32 %v814, 4294901760
      %1092 = vmatpush.xpose.msra.mxu0 %v1091
      %v1093 = vand.u32 %v812, 4294901760
      %1094 = vmatpush.xpose.msra.mxu0 %v1093
      %v1095 = vand.u32 %v810, 4294901760
      %1096 = vmatpush.xpose.msra.mxu0 %v1095
      %v1097 = vand.u32 %v808, 4294901760
      %1098 = vmatpush.xpose.msra.mxu0 %v1097
      %1099 = vmatmul.f32.gmra.mxu0 0.0
      %v1100 = vpop.f32.mrf.mxu0
      %v1101 = vadd.f32 %v1077, %v1100
      %1102 = vdwg.mxu0
      %1103 = vmatpush.xpose.msra.mxu0 0.0
      %1104 = vmatpush.xpose.msra.mxu0 0.0
      %1105 = vmatpush.xpose.msra.mxu0 0.0
      %1106 = vmatpush.xpose.msra.mxu0 0.0
      %1107 = vmatpush.xpose.msra.mxu0 0.0
      %1108 = vmatpush.xpose.msra.mxu0 0.0
      %1109 = vmatpush.xpose.msra.mxu0 0.0
      %1110 = vmatpush.xpose.msra.mxu0 0.0
      %1111 = vmatpush.xpose.msra.mxu0 0.0
      %1112 = vmatpush.xpose.msra.mxu0 0.0
      %1113 = vmatpush.xpose.msra.mxu0 0.0
      %1114 = vmatpush.xpose.msra.mxu0 0.0
      %v1115 = vand.u32 %v814, 4294901760
      %v1116 = vsub.f32 %v814, %v1115
      %v1117 = vand.u32 %v1116, 4294901760
      %1118 = vmatpush.xpose.msra.mxu0 %v1117
      %v1119 = vand.u32 %v812, 4294901760
      %v1120 = vsub.f32 %v812, %v1119
      %v1121 = vand.u32 %v1120, 4294901760
      %1122 = vmatpush.xpose.msra.mxu0 %v1121
      %v1123 = vand.u32 %v810, 4294901760
      %v1124 = vsub.f32 %v810, %v1123
      %v1125 = vand.u32 %v1124, 4294901760
      %1126 = vmatpush.xpose.msra.mxu0 %v1125
      %v1127 = vand.u32 %v808, 4294901760
      %v1128 = vsub.f32 %v808, %v1127
      %v1129 = vand.u32 %v1128, 4294901760
      %1130 = vmatpush.xpose.msra.mxu0 %v1129
      %1131 = vmatmul.f32.gmra.mxu0 1.0
      %v1132 = vpop.f32.mrf.mxu0
      %v1133 = vadd.f32 %v1101, %v1132
      %1134 = vdwg.mxu0
      %1135 = vmatpush.xpose.msra.mxu0 0.0
      %1136 = vmatpush.xpose.msra.mxu0 0.0
      %1137 = vmatpush.xpose.msra.mxu0 0.0
      %1138 = vmatpush.xpose.msra.mxu0 0.0
      %1139 = vmatpush.xpose.msra.mxu0 0.0
      %1140 = vmatpush.xpose.msra.mxu0 0.0
      %1141 = vmatpush.xpose.msra.mxu0 0.0
      %1142 = vmatpush.xpose.msra.mxu0 0.0
      %1143 = vmatpush.xpose.msra.mxu0 0.0
      %1144 = vmatpush.xpose.msra.mxu0 0.0
      %1145 = vmatpush.xpose.msra.mxu0 0.0
      %1146 = vmatpush.xpose.msra.mxu0 0.0
      %v1147 = vand.u32 %v814, 4294901760
      %1148 = vmatpush.xpose.msra.mxu0 %v1147
      %v1149 = vand.u32 %v812, 4294901760
      %1150 = vmatpush.xpose.msra.mxu0 %v1149
      %v1151 = vand.u32 %v810, 4294901760
      %1152 = vmatpush.xpose.msra.mxu0 %v1151
      %v1153 = vand.u32 %v808, 4294901760
      %1154 = vmatpush.xpose.msra.mxu0 %v1153
      %1155 = vmatmul.f32.gmra.mxu0 1.0
      %v1156 = vpop.f32.mrf.mxu0
      %v1157 = vadd.f32 %v1133, %v1156
      %1158 = vdwg.mxu0
      %v1160 = vrot.slane %v1157, 7
      %vm1162 = vcmask 1040384
      %v1163 = vsel %vm1162, %v805, %v1160
      %v1164 = vld [vmem:[%s3] sm:$0xff]
      %v1165 = vld [vmem:[%s3 + $0x8] sm:$0xff]
      %v1166 = vld [vmem:[%s3 + $0x10] sm:$0xff]
      %v1167 = vld [vmem:[%s3 + $0x18] sm:$0xff]
      %vm1168 = vcmask 261120
      %v1170 = vsel %vm1168, %v1163, 0
      %1172 = vmatpush.msra.mxu0 0.0
      %1173 = vmatpush.msra.mxu0 0.0
      %1174 = vmatpush.msra.mxu0 0.0
      %1175 = vmatpush.msra.mxu0 0.0
      %1176 = vmatpush.msra.mxu0 0.0
      %1177 = vmatpush.msra.mxu0 0.0
      %1178 = vmatpush.msra.mxu0 0.0
      %1179 = vmatpush.msra.mxu0 0.0
      %1180 = vmatpush.msra.mxu0 0.0
      %1181 = vmatpush.msra.mxu0 0.0
      %1182 = vmatpush.msra.mxu0 0.0
      %1183 = vmatpush.msra.mxu0 0.0
      %v1184 = vand.u32 %v1167, 4294901760
      %1185 = vmatpush.msra.mxu0 %v1184
      %v1186 = vand.u32 %v1166, 4294901760
      %1187 = vmatpush.msra.mxu0 %v1186
      %v1188 = vand.u32 %v1165, 4294901760
      %1189 = vmatpush.msra.mxu0 %v1188
      %v1190 = vand.u32 %v1164, 4294901760
      %1191 = vmatpush.msra.mxu0 %v1190
      %v1192 = vand.u32 %v1170, 4294901760
      %v1193 = vsub.f32 %v1170, %v1192
      %v1194 = vand.u32 %v1193, 4294901760
      %v1195 = vsub.f32 %v1193, %v1194
      %v1196 = vand.u32 %v1195, 4294901760
      %1197 = vmatmul.f32.gmra.mxu0 %v1196
      %v1198 = vpop.f32.mrf.mxu0
      %v1199 = vadd.f32 0.0, %v1198
      %1200 = vdwg.mxu0
      %1201 = vmatpush.msra.mxu0 0.0
      %1202 = vmatpush.msra.mxu0 0.0
      %1203 = vmatpush.msra.mxu0 0.0
      %1204 = vmatpush.msra.mxu0 0.0
      %1205 = vmatpush.msra.mxu0 0.0
      %1206 = vmatpush.msra.mxu0 0.0
      %1207 = vmatpush.msra.mxu0 0.0
      %1208 = vmatpush.msra.mxu0 0.0
      %1209 = vmatpush.msra.mxu0 0.0
      %1210 = vmatpush.msra.mxu0 0.0
      %1211 = vmatpush.msra.mxu0 0.0
      %1212 = vmatpush.msra.mxu0 0.0
      %v1213 = vand.u32 %v1167, 4294901760
      %v1214 = vsub.f32 %v1167, %v1213
      %v1215 = vand.u32 %v1214, 4294901760
      %v1216 = vsub.f32 %v1214, %v1215
      %v1217 = vand.u32 %v1216, 4294901760
      %1218 = vmatpush.msra.mxu0 %v1217
      %v1219 = vand.u32 %v1166, 4294901760
      %v1220 = vsub.f32 %v1166, %v1219
      %v1221 = vand.u32 %v1220, 4294901760
      %v1222 = vsub.f32 %v1220, %v1221
      %v1223 = vand.u32 %v1222, 4294901760
      %1224 = vmatpush.msra.mxu0 %v1223
      %v1225 = vand.u32 %v1165, 4294901760
      %v1226 = vsub.f32 %v1165, %v1225
      %v1227 = vand.u32 %v1226, 4294901760
      %v1228 = vsub.f32 %v1226, %v1227
      %v1229 = vand.u32 %v1228, 4294901760
      %1230 = vmatpush.msra.mxu0 %v1229
      %v1231 = vand.u32 %v1164, 4294901760
      %v1232 = vsub.f32 %v1164, %v1231
      %v1233 = vand.u32 %v1232, 4294901760
      %v1234 = vsub.f32 %v1232, %v1233
      %v1235 = vand.u32 %v1234, 4294901760
      %1236 = vmatpush.msra.mxu0 %v1235
      %v1237 = vand.u32 %v1170, 4294901760
      %1238 = vmatmul.f32.gmra.mxu0 %v1237
      %v1239 = vpop.f32.mrf.mxu0
      %v1240 = vadd.f32 %v1199, %v1239
      %1241 = vdwg.mxu0
      %1242 = vmatpush.msra.mxu0 0.0
      %1243 = vmatpush.msra.mxu0 0.0
      %1244 = vmatpush.msra.mxu0 0.0
      %1245 = vmatpush.msra.mxu0 0.0
      %1246 = vmatpush.msra.mxu0 0.0
      %1247 = vmatpush.msra.mxu0 0.0
      %1248 = vmatpush.msra.mxu0 0.0
      %1249 = vmatpush.msra.mxu0 0.0
      %1250 = vmatpush.msra.mxu0 0.0
      %1251 = vmatpush.msra.mxu0 0.0
      %1252 = vmatpush.msra.mxu0 0.0
      %1253 = vmatpush.msra.mxu0 0.0
      %v1254 = vand.u32 %v1167, 4294901760
      %v1255 = vsub.f32 %v1167, %v1254
      %1256 = vmatpush.msra.mxu0 %v1255
      %v1257 = vand.u32 %v1166, 4294901760
      %v1258 = vsub.f32 %v1166, %v1257
      %1259 = vmatpush.msra.mxu0 %v1258
      %v1260 = vand.u32 %v1165, 4294901760
      %v1261 = vsub.f32 %v1165, %v1260
      %1262 = vmatpush.msra.mxu0 %v1261
      %v1263 = vand.u32 %v1164, 4294901760
      %v1264 = vsub.f32 %v1164, %v1263
      %1265 = vmatpush.msra.mxu0 %v1264
      %v1266 = vand.u32 %v1170, 4294901760
      %v1267 = vsub.f32 %v1170, %v1266
      %1268 = vmatmul.f32.gmra.mxu0 %v1267
      %v1269 = vpop.f32.mrf.mxu0
      %v1270 = vadd.f32 %v1240, %v1269
      %1271 = vdwg.mxu0
      %1272 = vmatpush.msra.mxu0 0.0
      %1273 = vmatpush.msra.mxu0 0.0
      %1274 = vmatpush.msra.mxu0 0.0
      %1275 = vmatpush.msra.mxu0 0.0
      %1276 = vmatpush.msra.mxu0 0.0
      %1277 = vmatpush.msra.mxu0 0.0
      %1278 = vmatpush.msra.mxu0 0.0
      %1279 = vmatpush.msra.mxu0 0.0
      %1280 = vmatpush.msra.mxu0 0.0
      %1281 = vmatpush.msra.mxu0 0.0
      %1282 = vmatpush.msra.mxu0 0.0
      %1283 = vmatpush.msra.mxu0 0.0
      %v1284 = vand.u32 %v1167, 4294901760
      %1285 = vmatpush.msra.mxu0 %v1284
      %v1286 = vand.u32 %v1166, 4294901760
      %1287 = vmatpush.msra.mxu0 %v1286
      %v1288 = vand.u32 %v1165, 4294901760
      %1289 = vmatpush.msra.mxu0 %v1288
      %v1290 = vand.u32 %v1164, 4294901760
      %1291 = vmatpush.msra.mxu0 %v1290
      %v1292 = vand.u32 %v1170, 4294901760
      %v1293 = vsub.f32 %v1170, %v1292
      %v1294 = vand.u32 %v1293, 4294901760
      %1295 = vmatmul.f32.gmra.mxu0 %v1294
      %v1296 = vpop.f32.mrf.mxu0
      %v1297 = vadd.f32 %v1270, %v1296
      %1298 = vdwg.mxu0
      %1299 = vmatpush.msra.mxu0 0.0
      %1300 = vmatpush.msra.mxu0 0.0
      %1301 = vmatpush.msra.mxu0 0.0
      %1302 = vmatpush.msra.mxu0 0.0
      %1303 = vmatpush.msra.mxu0 0.0
      %1304 = vmatpush.msra.mxu0 0.0
      %1305 = vmatpush.msra.mxu0 0.0
      %1306 = vmatpush.msra.mxu0 0.0
      %1307 = vmatpush.msra.mxu0 0.0
      %1308 = vmatpush.msra.mxu0 0.0
      %1309 = vmatpush.msra.mxu0 0.0
      %1310 = vmatpush.msra.mxu0 0.0
      %v1311 = vand.u32 %v1167, 4294901760
      %v1312 = vsub.f32 %v1167, %v1311
      %v1313 = vand.u32 %v1312, 4294901760
      %1314 = vmatpush.msra.mxu0 %v1313
      %v1315 = vand.u32 %v1166, 4294901760
      %v1316 = vsub.f32 %v1166, %v1315
      %v1317 = vand.u32 %v1316, 4294901760
      %1318 = vmatpush.msra.mxu0 %v1317
      %v1319 = vand.u32 %v1165, 4294901760
      %v1320 = vsub.f32 %v1165, %v1319
      %v1321 = vand.u32 %v1320, 4294901760
      %1322 = vmatpush.msra.mxu0 %v1321
      %v1323 = vand.u32 %v1164, 4294901760
      %v1324 = vsub.f32 %v1164, %v1323
      %v1325 = vand.u32 %v1324, 4294901760
      %1326 = vmatpush.msra.mxu0 %v1325
      %v1327 = vand.u32 %v1170, 4294901760
      %1328 = vmatmul.f32.gmra.mxu0 %v1327
      %v1329 = vpop.f32.mrf.mxu0
      %v1330 = vadd.f32 %v1297, %v1329
      %1331 = vdwg.mxu0
      %1332 = vmatpush.msra.mxu0 0.0
      %1333 = vmatpush.msra.mxu0 0.0
      %1334 = vmatpush.msra.mxu0 0.0
      %1335 = vmatpush.msra.mxu0 0.0
      %1336 = vmatpush.msra.mxu0 0.0
      %1337 = vmatpush.msra.mxu0 0.0
      %1338 = vmatpush.msra.mxu0 0.0
      %1339 = vmatpush.msra.mxu0 0.0
      %1340 = vmatpush.msra.mxu0 0.0
      %1341 = vmatpush.msra.mxu0 0.0
      %1342 = vmatpush.msra.mxu0 0.0
      %1343 = vmatpush.msra.mxu0 0.0
      %v1344 = vand.u32 %v1167, 4294901760
      %1345 = vmatpush.msra.mxu0 %v1344
      %v1346 = vand.u32 %v1166, 4294901760
      %1347 = vmatpush.msra.mxu0 %v1346
      %v1348 = vand.u32 %v1165, 4294901760
      %1349 = vmatpush.msra.mxu0 %v1348
      %v1350 = vand.u32 %v1164, 4294901760
      %1351 = vmatpush.msra.mxu0 %v1350
      %v1352 = vand.u32 %v1170, 4294901760
      %1353 = vmatmul.f32.gmra.mxu0 %v1352
      %v1354 = vpop.f32.mrf.mxu0
      %v1355 = vadd.f32 %v1330, %v1354
      %1356 = vdwg.mxu0
      %v1357 = vmul.f32 %v1355, %v1355
      %v1359 = vrot.slane %v1357, 7
      %v1361 = vsub.f32 %v1355, %v1359
      %v1362 = vadd.f32 %v1361, 1e-05
      %v1363 = vrsqrt.pop %v1362
      %v1364 = vmul.f32 %v1363, %v1362
      %v1365 = vmul.f32 %v1364, %v1363
      %v1366 = vmul.f32 0.5, %v1365
      %v1367 = vsub.f32 1.5, %v1366
      %v1368 = vmul.f32 %v1363, %v1367
      %vm1369 = vweird.f32 %v1362
      %vm1370 = vweird.f32 %v1363
      %vm1371 = vmor %vm1369, %vm1370
      %v1372 = vsel %vm1371, %v1363, %v1368
      %v1373 = vld [vmem:[%s1] sm:$0x1]
      %v1375 = vperm.slane %v1373, 0
      %v1377 = vmul.f32 %v1372, %v1375
      %v1378 = vld [vmem:[%s2] sm:$0x1]
      %v1380 = vrot.slane %v1377, 1
      %v1382 = vmul.f32 %v1355, %v1380
      %v1383 = vsub.f32 %v1378, %v1382
      %v1384 = vld [vmem:[%s4] sm:$0xff]
      %v1385 = vld [vmem:[%s4 + $0x8] sm:$0xff]
      %v1386 = vld [vmem:[%s4 + $0x10] sm:$0xff]
      %v1387 = vld [vmem:[%s4 + $0x18] sm:$0xff]
      %v1388 = vld [vmem:[%s4 + $0x20] sm:$0xff]
      %v1389 = vld [vmem:[%s4 + $0x28] sm:$0xff]
      %v1390 = vld [vmem:[%s4 + $0x30] sm:$0xff]
      %v1391 = vld [vmem:[%s4 + $0x38] sm:$0xff]
      %v1392 = vld [vmem:[%s4 + $0x40] sm:$0xff]
      %v1393 = vld [vmem:[%s4 + $0x48] sm:$0xff]
      %v1394 = vld [vmem:[%s4 + $0x50] sm:$0xff]
      %v1395 = vld [vmem:[%s4 + $0x58] sm:$0xff]
      %v1396 = vld [vmem:[%s4 + $0x60] sm:$0xff]
      %v1397 = vld [vmem:[%s4 + $0x68] sm:$0xff]
      %v1398 = vld [vmem:[%s4 + $0x70] sm:$0xff]
      %v1399 = vld [vmem:[%s4 + $0x78] sm:$0xff]
      %v1400 = vld [vmem:[%s4 + $0x80] sm:$0xff]
      %v1401 = vld [vmem:[%s4 + $0x88] sm:$0xff]
      %v1402 = vld [vmem:[%s4 + $0x90] sm:$0xff]
      %v1403 = vld [vmem:[%s4 + $0x98] sm:$0xff]
      %v1404 = vld [vmem:[%s4 + $0xa0] sm:$0xff]
      %v1405 = vld [vmem:[%s4 + $0xa8] sm:$0xff]
      %v1406 = vld [vmem:[%s4 + $0xb0] sm:$0xff]
      %v1407 = vld [vmem:[%s4 + $0xb8] sm:$0xff]
      %v1408 = vperm.slane %v1377, 1
      %v1409 = vmul.f32 %v1384, %v1408
      %v1410 = vmul.f32 %v1385, %v1408
      %v1411 = vmul.f32 %v1386, %v1408
      %v1412 = vmul.f32 %v1387, %v1408
      %v1413 = vmul.f32 %v1388, %v1408
      %v1414 = vmul.f32 %v1389, %v1408
      %v1415 = vmul.f32 %v1390, %v1408
      %v1416 = vmul.f32 %v1391, %v1408
      %v1417 = vmul.f32 %v1392, %v1408
      %v1418 = vmul.f32 %v1393, %v1408
      %v1419 = vmul.f32 %v1394, %v1408
      %v1420 = vmul.f32 %v1395, %v1408
      %v1421 = vmul.f32 %v1396, %v1408
      %v1422 = vmul.f32 %v1397, %v1408
      %v1423 = vmul.f32 %v1398, %v1408
      %v1424 = vmul.f32 %v1399, %v1408
      %v1425 = vmul.f32 %v1400, %v1408
      %v1426 = vmul.f32 %v1401, %v1408
      %v1427 = vmul.f32 %v1402, %v1408
      %v1428 = vmul.f32 %v1403, %v1408
      %v1429 = vmul.f32 %v1404, %v1408
      %v1430 = vmul.f32 %v1405, %v1408
      %v1431 = vmul.f32 %v1406, %v1408
      %v1432 = vmul.f32 %v1407, %v1408
      %v1433 = vld [vmem:[%s5] sm:$0xff]
      %v1434 = vld [vmem:[%s5 + $0x8] sm:$0xff]
      %v1435 = vld [vmem:[%s5 + $0x10] sm:$0xff]
      %v1436 = vld [vmem:[%s5 + $0x18] sm:$0xff]
      %v1437 = vld [vmem:[%s5 + $0x20] sm:$0xff]
      %v1438 = vld [vmem:[%s5 + $0x28] sm:$0xff]
      %v1439 = vld [vmem:[%s5 + $0x30] sm:$0xff]
      %v1440 = vld [vmem:[%s5 + $0x38] sm:$0xff]
      %v1441 = vld [vmem:[%s5 + $0x40] sm:$0xff]
      %v1442 = vld [vmem:[%s5 + $0x48] sm:$0xff]
      %v1443 = vld [vmem:[%s5 + $0x50] sm:$0xff]
      %v1444 = vld [vmem:[%s5 + $0x58] sm:$0xff]
      %v1445 = vld [vmem:[%s5 + $0x60] sm:$0xff]
      %v1446 = vld [vmem:[%s5 + $0x68] sm:$0xff]
      %v1447 = vld [vmem:[%s5 + $0x70] sm:$0xff]
      %v1448 = vld [vmem:[%s5 + $0x78] sm:$0xff]
      %v1449 = vld [vmem:[%s5 + $0x80] sm:$0xff]
      %v1450 = vld [vmem:[%s5 + $0x88] sm:$0xff]
      %v1451 = vld [vmem:[%s5 + $0x90] sm:$0xff]
      %v1452 = vld [vmem:[%s5 + $0x98] sm:$0xff]
      %v1453 = vld [vmem:[%s5 + $0xa0] sm:$0xff]
      %v1454 = vld [vmem:[%s5 + $0xa8] sm:$0xff]
      %v1455 = vld [vmem:[%s5 + $0xb0] sm:$0xff]
      %v1456 = vld [vmem:[%s5 + $0xb8] sm:$0xff]
      %v1458 = vperm.slane %v1383, 0
      %v1460 = vmul.f32 %v1384, %v1458
      %v1461 = vmul.f32 %v1385, %v1458
      %v1462 = vmul.f32 %v1386, %v1458
      %v1463 = vmul.f32 %v1387, %v1458
      %v1464 = vmul.f32 %v1388, %v1458
      %v1465 = vmul.f32 %v1389, %v1458
      %v1466 = vmul.f32 %v1390, %v1458
      %v1467 = vmul.f32 %v1391, %v1458
      %v1468 = vmul.f32 %v1392, %v1458
      %v1469 = vmul.f32 %v1393, %v1458
      %v1470 = vmul.f32 %v1394, %v1458
      %v1471 = vmul.f32 %v1395, %v1458
      %v1472 = vmul.f32 %v1396, %v1458
      %v1473 = vmul.f32 %v1397, %v1458
      %v1474 = vmul.f32 %v1398, %v1458
      %v1475 = vmul.f32 %v1399, %v1458
      %v1476 = vmul.f32 %v1400, %v1458
      %v1477 = vmul.f32 %v1401, %v1458
      %v1478 = vmul.f32 %v1402, %v1458
      %v1479 = vmul.f32 %v1403, %v1458
      %v1480 = vmul.f32 %v1404, %v1458
      %v1481 = vmul.f32 %v1405, %v1458
      %v1482 = vmul.f32 %v1406, %v1458
      %v1483 = vmul.f32 %v1407, %v1458
      %v1484 = vsel %vm1168, %v1460, 0.0
      %1485 = vadd.xlane.f32.xlu0 %v1484
      %v1486 = vpop.xlane.xlu0 %1485
      %v1487 = vsel %vm1168, %v1461, 0.0
      %1488 = vadd.xlane.f32.xlu0 %v1487
      %v1489 = vpop.xlane.xlu0 %1488
      %v1490 = vsel %vm1168, %v1462, 0.0
      %1491 = vadd.xlane.f32.xlu0 %v1490
      %v1492 = vpop.xlane.xlu0 %1491
      %v1493 = vsel %vm1168, %v1463, 0.0
      %1494 = vadd.xlane.f32.xlu0 %v1493
      %v1495 = vpop.xlane.xlu0 %1494
      %v1496 = vsel %vm1168, %v1464, 0.0
      %1497 = vadd.xlane.f32.xlu0 %v1496
      %v1498 = vpop.xlane.xlu0 %1497
      %v1499 = vsel %vm1168, %v1465, 0.0
      %1500 = vadd.xlane.f32.xlu0 %v1499
      %v1501 = vpop.xlane.xlu0 %1500
      %v1502 = vsel %vm1168, %v1466, 0.0
      %1503 = vadd.xlane.f32.xlu0 %v1502
      %v1504 = vpop.xlane.xlu0 %1503
      %v1505 = vsel %vm1168, %v1467, 0.0
      %1506 = vadd.xlane.f32.xlu0 %v1505
      %v1507 = vpop.xlane.xlu0 %1506
      %v1508 = vsel %vm1168, %v1468, 0.0
      %1509 = vadd.xlane.f32.xlu0 %v1508
      %v1510 = vpop.xlane.xlu0 %1509
      %v1511 = vsel %vm1168, %v1469, 0.0
      %1512 = vadd.xlane.f32.xlu0 %v1511
      %v1513 = vpop.xlane.xlu0 %1512
      %v1514 = vsel %vm1168, %v1470, 0.0
      %1515 = vadd.xlane.f32.xlu0 %v1514
      %v1516 = vpop.xlane.xlu0 %1515
      %v1517 = vsel %vm1168, %v1471, 0.0
      %1518 = vadd.xlane.f32.xlu0 %v1517
      %v1519 = vpop.xlane.xlu0 %1518
      %v1520 = vsel %vm1168, %v1472, 0.0
      %1521 = vadd.xlane.f32.xlu0 %v1520
      %v1522 = vpop.xlane.xlu0 %1521
      %v1523 = vsel %vm1168, %v1473, 0.0
      %1524 = vadd.xlane.f32.xlu0 %v1523
      %v1525 = vpop.xlane.xlu0 %1524
      %v1526 = vsel %vm1168, %v1474, 0.0
      %1527 = vadd.xlane.f32.xlu0 %v1526
      %v1528 = vpop.xlane.xlu0 %1527
      %v1529 = vsel %vm1168, %v1475, 0.0
      %1530 = vadd.xlane.f32.xlu0 %v1529
      %v1531 = vpop.xlane.xlu0 %1530
      %v1532 = vsel %vm1168, %v1476, 0.0
      %1533 = vadd.xlane.f32.xlu0 %v1532
      %v1534 = vpop.xlane.xlu0 %1533
      %v1535 = vsel %vm1168, %v1477, 0.0
      %1536 = vadd.xlane.f32.xlu0 %v1535
      %v1537 = vpop.xlane.xlu0 %1536
      %v1538 = vsel %vm1168, %v1478, 0.0
      %1539 = vadd.xlane.f32.xlu0 %v1538
      %v1540 = vpop.xlane.xlu0 %1539
      %v1541 = vsel %vm1168, %v1479, 0.0
      %1542 = vadd.xlane.f32.xlu0 %v1541
      %v1543 = vpop.xlane.xlu0 %1542
      %v1544 = vsel %vm1168, %v1480, 0.0
      %1545 = vadd.xlane.f32.xlu0 %v1544
      %v1546 = vpop.xlane.xlu0 %1545
      %v1547 = vsel %vm1168, %v1481, 0.0
      %1548 = vadd.xlane.f32.xlu0 %v1547
      %v1549 = vpop.xlane.xlu0 %1548
      %v1550 = vsel %vm1168, %v1482, 0.0
      %1551 = vadd.xlane.f32.xlu0 %v1550
      %v1552 = vpop.xlane.xlu0 %1551
      %v1553 = vsel %vm1168, %v1483, 0.0
      %1554 = vadd.xlane.f32.xlu0 %v1553
      %v1555 = vpop.xlane.xlu0 %1554
      %v1556 = vadd.f32 %v1433, %v1486
      %v1557 = vadd.f32 %v1434, %v1489
      %v1558 = vadd.f32 %v1435, %v1492
      %v1559 = vadd.f32 %v1436, %v1495
      %v1560 = vadd.f32 %v1437, %v1498
      %v1561 = vadd.f32 %v1438, %v1501
      %v1562 = vadd.f32 %v1439, %v1504
      %v1563 = vadd.f32 %v1440, %v1507
      %v1564 = vadd.f32 %v1441, %v1510
      %v1565 = vadd.f32 %v1442, %v1513
      %v1566 = vadd.f32 %v1443, %v1516
      %v1567 = vadd.f32 %v1444, %v1519
      %v1568 = vadd.f32 %v1445, %v1522
      %v1569 = vadd.f32 %v1446, %v1525
      %v1570 = vadd.f32 %v1447, %v1528
      %v1571 = vadd.f32 %v1448, %v1531
      %v1572 = vadd.f32 %v1449, %v1534
      %v1573 = vadd.f32 %v1450, %v1537
      %v1574 = vadd.f32 %v1451, %v1540
      %v1575 = vadd.f32 %v1452, %v1543
      %v1576 = vadd.f32 %v1453, %v1546
      %v1577 = vadd.f32 %v1454, %v1549
      %v1578 = vadd.f32 %v1455, %v1552
      %v1579 = vadd.f32 %v1456, %v1555
      %1581 = vset.pattern.permute.xlu0 0
      %1582 = vperm.xlu0 %1581, %v1556
      %v1583 = vpop.permute.xlu0 %1582
      %1586 = vset.pattern.permute.xlu0 0
      %1587 = vperm.xlu0 %1586, %v1557
      %v1588 = vpop.permute.xlu0 %1587
      %1591 = vset.pattern.permute.xlu0 0
      %1592 = vperm.xlu0 %1591, %v1558
      %v1593 = vpop.permute.xlu0 %1592
      %1596 = vset.pattern.permute.xlu0 0
      %1597 = vperm.xlu0 %1596, %v1559
      %v1598 = vpop.permute.xlu0 %1597
      %1601 = vset.pattern.permute.xlu0 0
      %1602 = vperm.xlu0 %1601, %v1560
      %v1603 = vpop.permute.xlu0 %1602
      %1606 = vset.pattern.permute.xlu0 0
      %1607 = vperm.xlu0 %1606, %v1561
      %v1608 = vpop.permute.xlu0 %1607
      %1611 = vset.pattern.permute.xlu0 0
      %1612 = vperm.xlu0 %1611, %v1562
      %v1613 = vpop.permute.xlu0 %1612
      %1616 = vset.pattern.permute.xlu0 0
      %1617 = vperm.xlu0 %1616, %v1563
      %v1618 = vpop.permute.xlu0 %1617
      %1621 = vset.pattern.permute.xlu0 0
      %1622 = vperm.xlu0 %1621, %v1564
      %v1623 = vpop.permute.xlu0 %1622
      %1626 = vset.pattern.permute.xlu0 0
      %1627 = vperm.xlu0 %1626, %v1565
      %v1628 = vpop.permute.xlu0 %1627
      %1631 = vset.pattern.permute.xlu0 0
      %1632 = vperm.xlu0 %1631, %v1566
      %v1633 = vpop.permute.xlu0 %1632
      %1636 = vset.pattern.permute.xlu0 0
      %1637 = vperm.xlu0 %1636, %v1567
      %v1638 = vpop.permute.xlu0 %1637
      %1641 = vset.pattern.permute.xlu0 0
      %1642 = vperm.xlu0 %1641, %v1568
      %v1643 = vpop.permute.xlu0 %1642
      %1646 = vset.pattern.permute.xlu0 0
      %1647 = vperm.xlu0 %1646, %v1569
      %v1648 = vpop.permute.xlu0 %1647
      %1651 = vset.pattern.permute.xlu0 0
      %1652 = vperm.xlu0 %1651, %v1570
      %v1653 = vpop.permute.xlu0 %1652
      %1656 = vset.pattern.permute.xlu0 0
      %1657 = vperm.xlu0 %1656, %v1571
      %v1658 = vpop.permute.xlu0 %1657
      %1661 = vset.pattern.permute.xlu0 0
      %1662 = vperm.xlu0 %1661, %v1572
      %v1663 = vpop.permute.xlu0 %1662
      %1666 = vset.pattern.permute.xlu0 0
      %1667 = vperm.xlu0 %1666, %v1573
      %v1668 = vpop.permute.xlu0 %1667
      %1671 = vset.pattern.permute.xlu0 0
      %1672 = vperm.xlu0 %1671, %v1574
      %v1673 = vpop.permute.xlu0 %1672
      %1676 = vset.pattern.permute.xlu0 0
      %1677 = vperm.xlu0 %1676, %v1575
      %v1678 = vpop.permute.xlu0 %1677
      %1681 = vset.pattern.permute.xlu0 0
      %1682 = vperm.xlu0 %1681, %v1576
      %v1683 = vpop.permute.xlu0 %1682
      %1686 = vset.pattern.permute.xlu0 0
      %1687 = vperm.xlu0 %1686, %v1577
      %v1688 = vpop.permute.xlu0 %1687
      %1691 = vset.pattern.permute.xlu0 0
      %1692 = vperm.xlu0 %1691, %v1578
      %v1693 = vpop.permute.xlu0 %1692
      %1696 = vset.pattern.permute.xlu0 0
      %1697 = vperm.xlu0 %1696, %v1579
      %v1698 = vpop.permute.xlu0 %1697
      %v1701 = vsel %vm1168, %v1409, 0
      %v1704 = vsel %vm1168, %v1410, 0
      %v1707 = vsel %vm1168, %v1411, 0
      %v1710 = vsel %vm1168, %v1412, 0
      %v1713 = vsel %vm1168, %v1413, 0
      %v1716 = vsel %vm1168, %v1414, 0
      %v1719 = vsel %vm1168, %v1415, 0
      %v1722 = vsel %vm1168, %v1416, 0
      %v1725 = vsel %vm1168, %v1417, 0
      %v1728 = vsel %vm1168, %v1418, 0
      %v1731 = vsel %vm1168, %v1419, 0
      %v1734 = vsel %vm1168, %v1420, 0
      %v1737 = vsel %vm1168, %v1421, 0
      %v1740 = vsel %vm1168, %v1422, 0
      %v1743 = vsel %vm1168, %v1423, 0
      %v1746 = vsel %vm1168, %v1424, 0
      %v1749 = vsel %vm1168, %v1425, 0
      %v1752 = vsel %vm1168, %v1426, 0
      %v1755 = vsel %vm1168, %v1427, 0
      %v1758 = vsel %vm1168, %v1428, 0
      %v1761 = vsel %vm1168, %v1429, 0
      %v1764 = vsel %vm1168, %v1430, 0
      %v1767 = vsel %vm1168, %v1431, 0
      %v1770 = vsel %vm1168, %v1432, 0
      %1772 = vmatpush.msra.mxu0 0.0
      %1773 = vmatpush.msra.mxu0 0.0
      %1774 = vmatpush.msra.mxu0 0.0
      %1775 = vmatpush.msra.mxu0 0.0
      %1776 = vmatpush.msra.mxu0 0.0
      %1777 = vmatpush.msra.mxu0 0.0
      %1778 = vmatpush.msra.mxu0 0.0
      %1779 = vmatpush.msra.mxu0 0.0
      %1780 = vmatpush.msra.mxu0 0.0
      %1781 = vmatpush.msra.mxu0 0.0
      %1782 = vmatpush.msra.mxu0 0.0
      %1783 = vmatpush.msra.mxu0 0.0
      %v1784 = vand.u32 %v460, 4294901760
      %1785 = vmatpush.msra.mxu0 %v1784
      %v1786 = vand.u32 %v458, 4294901760
      %1787 = vmatpush.msra.mxu0 %v1786
      %v1788 = vand.u32 %v456, 4294901760
      %1789 = vmatpush.msra.mxu0 %v1788
      %v1790 = vand.u32 %v454, 4294901760
      %1791 = vmatpush.msra.mxu0 %v1790
      %v1792 = vand.u32 %v1701, 4294901760
      %v1793 = vsub.f32 %v1701, %v1792
      %v1794 = vand.u32 %v1793, 4294901760
      %v1795 = vsub.f32 %v1793, %v1794
      %v1796 = vand.u32 %v1795, 4294901760
      %1797 = vmatmul.f32.gmra.mxu0 %v1796
      %v1798 = vpop.f32.mrf.mxu0
      %v1799 = vadd.f32 %v1583, %v1798
      %v1800 = vand.u32 %v1704, 4294901760
      %v1801 = vsub.f32 %v1704, %v1800
      %v1802 = vand.u32 %v1801, 4294901760
      %v1803 = vsub.f32 %v1801, %v1802
      %v1804 = vand.u32 %v1803, 4294901760
      %1805 = vmatmul.f32.gmra.mxu0 %v1804
      %v1806 = vpop.f32.mrf.mxu0
      %v1807 = vadd.f32 %v1588, %v1806
      %v1808 = vand.u32 %v1707, 4294901760
      %v1809 = vsub.f32 %v1707, %v1808
      %v1810 = vand.u32 %v1809, 4294901760
      %v1811 = vsub.f32 %v1809, %v1810
      %v1812 = vand.u32 %v1811, 4294901760
      %1813 = vmatmul.f32.gmra.mxu0 %v1812
      %v1814 = vpop.f32.mrf.mxu0
      %v1815 = vadd.f32 %v1593, %v1814
      %v1816 = vand.u32 %v1710, 4294901760
      %v1817 = vsub.f32 %v1710, %v1816
      %v1818 = vand.u32 %v1817, 4294901760
      %v1819 = vsub.f32 %v1817, %v1818
      %v1820 = vand.u32 %v1819, 4294901760
      %1821 = vmatmul.f32.gmra.mxu0 %v1820
      %v1822 = vpop.f32.mrf.mxu0
      %v1823 = vadd.f32 %v1598, %v1822
      %v1824 = vand.u32 %v1713, 4294901760
      %v1825 = vsub.f32 %v1713, %v1824
      %v1826 = vand.u32 %v1825, 4294901760
      %v1827 = vsub.f32 %v1825, %v1826
      %v1828 = vand.u32 %v1827, 4294901760
      %1829 = vmatmul.f32.gmra.mxu0 %v1828
      %v1830 = vpop.f32.mrf.mxu0
      %v1831 = vadd.f32 %v1603, %v1830
      %v1832 = vand.u32 %v1716, 4294901760
      %v1833 = vsub.f32 %v1716, %v1832
      %v1834 = vand.u32 %v1833, 4294901760
      %v1835 = vsub.f32 %v1833, %v1834
      %v1836 = vand.u32 %v1835, 4294901760
      %1837 = vmatmul.f32.gmra.mxu0 %v1836
      %v1838 = vpop.f32.mrf.mxu0
      %v1839 = vadd.f32 %v1608, %v1838
      %v1840 = vand.u32 %v1719, 4294901760
      %v1841 = vsub.f32 %v1719, %v1840
      %v1842 = vand.u32 %v1841, 4294901760
      %v1843 = vsub.f32 %v1841, %v1842
      %v1844 = vand.u32 %v1843, 4294901760
      %1845 = vmatmul.f32.gmra.mxu0 %v1844
      %v1846 = vpop.f32.mrf.mxu0
      %v1847 = vadd.f32 %v1613, %v1846
      %v1848 = vand.u32 %v1722, 4294901760
      %v1849 = vsub.f32 %v1722, %v1848
      %v1850 = vand.u32 %v1849, 4294901760
      %v1851 = vsub.f32 %v1849, %v1850
      %v1852 = vand.u32 %v1851, 4294901760
      %1853 = vmatmul.f32.gmra.mxu0 %v1852
      %v1854 = vpop.f32.mrf.mxu0
      %v1855 = vadd.f32 %v1618, %v1854
      %v1856 = vand.u32 %v1725, 4294901760
      %v1857 = vsub.f32 %v1725, %v1856
      %v1858 = vand.u32 %v1857, 4294901760
      %v1859 = vsub.f32 %v1857, %v1858
      %v1860 = vand.u32 %v1859, 4294901760
      %1861 = vmatmul.f32.gmra.mxu0 %v1860
      %v1862 = vpop.f32.mrf.mxu0
      %v1863 = vadd.f32 %v1623, %v1862
      %v1864 = vand.u32 %v1728, 4294901760
      %v1865 = vsub.f32 %v1728, %v1864
      %v1866 = vand.u32 %v1865, 4294901760
      %v1867 = vsub.f32 %v1865, %v1866
      %v1868 = vand.u32 %v1867, 4294901760
      %1869 = vmatmul.f32.gmra.mxu0 %v1868
      %v1870 = vpop.f32.mrf.mxu0
      %v1871 = vadd.f32 %v1628, %v1870
      %v1872 = vand.u32 %v1731, 4294901760
      %v1873 = vsub.f32 %v1731, %v1872
      %v1874 = vand.u32 %v1873, 4294901760
      %v1875 = vsub.f32 %v1873, %v1874
      %v1876 = vand.u32 %v1875, 4294901760
      %1877 = vmatmul.f32.gmra.mxu0 %v1876
      %v1878 = vpop.f32.mrf.mxu0
      %v1879 = vadd.f32 %v1633, %v1878
      %v1880 = vand.u32 %v1734, 4294901760
      %v1881 = vsub.f32 %v1734, %v1880
      %v1882 = vand.u32 %v1881, 4294901760
      %v1883 = vsub.f32 %v1881, %v1882
      %v1884 = vand.u32 %v1883, 4294901760
      %1885 = vmatmul.f32.gmra.mxu0 %v1884
      %v1886 = vpop.f32.mrf.mxu0
      %v1887 = vadd.f32 %v1638, %v1886
      %v1888 = vand.u32 %v1737, 4294901760
      %v1889 = vsub.f32 %v1737, %v1888
      %v1890 = vand.u32 %v1889, 4294901760
      %v1891 = vsub.f32 %v1889, %v1890
      %v1892 = vand.u32 %v1891, 4294901760
      %1893 = vmatmul.f32.gmra.mxu0 %v1892
      %v1894 = vpop.f32.mrf.mxu0
      %v1895 = vadd.f32 %v1643, %v1894
      %v1896 = vand.u32 %v1740, 4294901760
      %v1897 = vsub.f32 %v1740, %v1896
      %v1898 = vand.u32 %v1897, 4294901760
      %v1899 = vsub.f32 %v1897, %v1898
      %v1900 = vand.u32 %v1899, 4294901760
      %1901 = vmatmul.f32.gmra.mxu0 %v1900
      %v1902 = vpop.f32.mrf.mxu0
      %v1903 = vadd.f32 %v1648, %v1902
      %v1904 = vand.u32 %v1743, 4294901760
      %v1905 = vsub.f32 %v1743, %v1904
      %v1906 = vand.u32 %v1905, 4294901760
      %v1907 = vsub.f32 %v1905, %v1906
      %v1908 = vand.u32 %v1907, 4294901760
      %1909 = vmatmul.f32.gmra.mxu0 %v1908
      %v1910 = vpop.f32.mrf.mxu0
      %v1911 = vadd.f32 %v1653, %v1910
      %v1912 = vand.u32 %v1746, 4294901760
      %v1913 = vsub.f32 %v1746, %v1912
      %v1914 = vand.u32 %v1913, 4294901760
      %v1915 = vsub.f32 %v1913, %v1914
      %v1916 = vand.u32 %v1915, 4294901760
      %1917 = vmatmul.f32.gmra.mxu0 %v1916
      %v1918 = vpop.f32.mrf.mxu0
      %v1919 = vadd.f32 %v1658, %v1918
      %v1920 = vand.u32 %v1749, 4294901760
      %v1921 = vsub.f32 %v1749, %v1920
      %v1922 = vand.u32 %v1921, 4294901760
      %v1923 = vsub.f32 %v1921, %v1922
      %v1924 = vand.u32 %v1923, 4294901760
      %1925 = vmatmul.f32.gmra.mxu0 %v1924
      %v1926 = vpop.f32.mrf.mxu0
      %v1927 = vadd.f32 %v1663, %v1926
      %v1928 = vand.u32 %v1752, 4294901760
      %v1929 = vsub.f32 %v1752, %v1928
      %v1930 = vand.u32 %v1929, 4294901760
      %v1931 = vsub.f32 %v1929, %v1930
      %v1932 = vand.u32 %v1931, 4294901760
      %1933 = vmatmul.f32.gmra.mxu0 %v1932
      %v1934 = vpop.f32.mrf.mxu0
      %v1935 = vadd.f32 %v1668, %v1934
      %v1936 = vand.u32 %v1755, 4294901760
      %v1937 = vsub.f32 %v1755, %v1936
      %v1938 = vand.u32 %v1937, 4294901760
      %v1939 = vsub.f32 %v1937, %v1938
      %v1940 = vand.u32 %v1939, 4294901760
      %1941 = vmatmul.f32.gmra.mxu0 %v1940
      %v1942 = vpop.f32.mrf.mxu0
      %v1943 = vadd.f32 %v1673, %v1942
      %v1944 = vand.u32 %v1758, 4294901760
      %v1945 = vsub.f32 %v1758, %v1944
      %v1946 = vand.u32 %v1945, 4294901760
      %v1947 = vsub.f32 %v1945, %v1946
      %v1948 = vand.u32 %v1947, 4294901760
      %1949 = vmatmul.f32.gmra.mxu0 %v1948
      %v1950 = vpop.f32.mrf.mxu0
      %v1951 = vadd.f32 %v1678, %v1950
      %v1952 = vand.u32 %v1761, 4294901760
      %v1953 = vsub.f32 %v1761, %v1952
      %v1954 = vand.u32 %v1953, 4294901760
      %v1955 = vsub.f32 %v1953, %v1954
      %v1956 = vand.u32 %v1955, 4294901760
      %1957 = vmatmul.f32.gmra.mxu0 %v1956
      %v1958 = vpop.f32.mrf.mxu0
      %v1959 = vadd.f32 %v1683, %v1958
      %v1960 = vand.u32 %v1764, 4294901760
      %v1961 = vsub.f32 %v1764, %v1960
      %v1962 = vand.u32 %v1961, 4294901760
      %v1963 = vsub.f32 %v1961, %v1962
      %v1964 = vand.u32 %v1963, 4294901760
      %1965 = vmatmul.f32.gmra.mxu0 %v1964
      %v1966 = vpop.f32.mrf.mxu0
      %v1967 = vadd.f32 %v1688, %v1966
      %v1968 = vand.u32 %v1767, 4294901760
      %v1969 = vsub.f32 %v1767, %v1968
      %v1970 = vand.u32 %v1969, 4294901760
      %v1971 = vsub.f32 %v1969, %v1970
      %v1972 = vand.u32 %v1971, 4294901760
      %1973 = vmatmul.f32.gmra.mxu0 %v1972
      %v1974 = vpop.f32.mrf.mxu0
      %v1975 = vadd.f32 %v1693, %v1974
      %v1976 = vand.u32 %v1770, 4294901760
      %v1977 = vsub.f32 %v1770, %v1976
      %v1978 = vand.u32 %v1977, 4294901760
      %v1979 = vsub.f32 %v1977, %v1978
      %v1980 = vand.u32 %v1979, 4294901760
      %1981 = vmatmul.f32.gmra.mxu0 %v1980
      %v1982 = vpop.f32.mrf.mxu0
      %v1983 = vadd.f32 %v1698, %v1982
      %1984 = vdwg.mxu0
      %1985 = vmatpush.msra.mxu0 0.0
      %1986 = vmatpush.msra.mxu0 0.0
      %1987 = vmatpush.msra.mxu0 0.0
      %1988 = vmatpush.msra.mxu0 0.0
      %1989 = vmatpush.msra.mxu0 0.0
      %1990 = vmatpush.msra.mxu0 0.0
      %1991 = vmatpush.msra.mxu0 0.0
      %1992 = vmatpush.msra.mxu0 0.0
      %1993 = vmatpush.msra.mxu0 0.0
      %1994 = vmatpush.msra.mxu0 0.0
      %1995 = vmatpush.msra.mxu0 0.0
      %1996 = vmatpush.msra.mxu0 0.0
      %v1997 = vand.u32 %v460, 4294901760
      %v1998 = vsub.f32 %v460, %v1997
      %v1999 = vand.u32 %v1998, 4294901760
      %v2000 = vsub.f32 %v1998, %v1999
      %v2001 = vand.u32 %v2000, 4294901760
      %2002 = vmatpush.msra.mxu0 %v2001
      %v2003 = vand.u32 %v458, 4294901760
      %v2004 = vsub.f32 %v458, %v2003
      %v2005 = vand.u32 %v2004, 4294901760
      %v2006 = vsub.f32 %v2004, %v2005
      %v2007 = vand.u32 %v2006, 4294901760
      %2008 = vmatpush.msra.mxu0 %v2007
      %v2009 = vand.u32 %v456, 4294901760
      %v2010 = vsub.f32 %v456, %v2009
      %v2011 = vand.u32 %v2010, 4294901760
      %v2012 = vsub.f32 %v2010, %v2011
      %v2013 = vand.u32 %v2012, 4294901760
      %2014 = vmatpush.msra.mxu0 %v2013
      %v2015 = vand.u32 %v454, 4294901760
      %v2016 = vsub.f32 %v454, %v2015
      %v2017 = vand.u32 %v2016, 4294901760
      %v2018 = vsub.f32 %v2016, %v2017
      %v2019 = vand.u32 %v2018, 4294901760
      %2020 = vmatpush.msra.mxu0 %v2019
      %v2021 = vand.u32 %v1701, 4294901760
      %2022 = vmatmul.f32.gmra.mxu0 %v2021
      %v2023 = vpop.f32.mrf.mxu0
      %v2024 = vadd.f32 %v1799, %v2023
      %v2025 = vand.u32 %v1704, 4294901760
      %2026 = vmatmul.f32.gmra.mxu0 %v2025
      %v2027 = vpop.f32.mrf.mxu0
      %v2028 = vadd.f32 %v1807, %v2027
      %v2029 = vand.u32 %v1707, 4294901760
      %2030 = vmatmul.f32.gmra.mxu0 %v2029
      %v2031 = vpop.f32.mrf.mxu0
      %v2032 = vadd.f32 %v1815, %v2031
      %v2033 = vand.u32 %v1710, 4294901760
      %2034 = vmatmul.f32.gmra.mxu0 %v2033
      %v2035 = vpop.f32.mrf.mxu0
      %v2036 = vadd.f32 %v1823, %v2035
      %v2037 = vand.u32 %v1713, 4294901760
      %2038 = vmatmul.f32.gmra.mxu0 %v2037
      %v2039 = vpop.f32.mrf.mxu0
      %v2040 = vadd.f32 %v1831, %v2039
      %v2041 = vand.u32 %v1716, 4294901760
      %2042 = vmatmul.f32.gmra.mxu0 %v2041
      %v2043 = vpop.f32.mrf.mxu0
      %v2044 = vadd.f32 %v1839, %v2043
      %v2045 = vand.u32 %v1719, 4294901760
      %2046 = vmatmul.f32.gmra.mxu0 %v2045
      %v2047 = vpop.f32.mrf.mxu0
      %v2048 = vadd.f32 %v1847, %v2047
      %v2049 = vand.u32 %v1722, 4294901760
      %2050 = vmatmul.f32.gmra.mxu0 %v2049
      %v2051 = vpop.f32.mrf.mxu0
      %v2052 = vadd.f32 %v1855, %v2051
      %v2053 = vand.u32 %v1725, 4294901760
      %2054 = vmatmul.f32.gmra.mxu0 %v2053
      %v2055 = vpop.f32.mrf.mxu0
      %v2056 = vadd.f32 %v1863, %v2055
      %v2057 = vand.u32 %v1728, 4294901760
      %2058 = vmatmul.f32.gmra.mxu0 %v2057
      %v2059 = vpop.f32.mrf.mxu0
      %v2060 = vadd.f32 %v1871, %v2059
      %v2061 = vand.u32 %v1731, 4294901760
      %2062 = vmatmul.f32.gmra.mxu0 %v2061
      %v2063 = vpop.f32.mrf.mxu0
      %v2064 = vadd.f32 %v1879, %v2063
      %v2065 = vand.u32 %v1734, 4294901760
      %2066 = vmatmul.f32.gmra.mxu0 %v2065
      %v2067 = vpop.f32.mrf.mxu0
      %v2068 = vadd.f32 %v1887, %v2067
      %v2069 = vand.u32 %v1737, 4294901760
      %2070 = vmatmul.f32.gmra.mxu0 %v2069
      %v2071 = vpop.f32.mrf.mxu0
      %v2072 = vadd.f32 %v1895, %v2071
      %v2073 = vand.u32 %v1740, 4294901760
      %2074 = vmatmul.f32.gmra.mxu0 %v2073
      %v2075 = vpop.f32.mrf.mxu0
      %v2076 = vadd.f32 %v1903, %v2075
      %v2077 = vand.u32 %v1743, 4294901760
      %2078 = vmatmul.f32.gmra.mxu0 %v2077
      %v2079 = vpop.f32.mrf.mxu0
      %v2080 = vadd.f32 %v1911, %v2079
      %v2081 = vand.u32 %v1746, 4294901760
      %2082 = vmatmul.f32.gmra.mxu0 %v2081
      %v2083 = vpop.f32.mrf.mxu0
      %v2084 = vadd.f32 %v1919, %v2083
      %v2085 = vand.u32 %v1749, 4294901760
      %2086 = vmatmul.f32.gmra.mxu0 %v2085
      %v2087 = vpop.f32.mrf.mxu0
      %v2088 = vadd.f32 %v1927, %v2087
      %v2089 = vand.u32 %v1752, 4294901760
      %2090 = vmatmul.f32.gmra.mxu0 %v2089
      %v2091 = vpop.f32.mrf.mxu0
      %v2092 = vadd.f32 %v1935, %v2091
      %v2093 = vand.u32 %v1755, 4294901760
      %2094 = vmatmul.f32.gmra.mxu0 %v2093
      %v2095 = vpop.f32.mrf.mxu0
      %v2096 = vadd.f32 %v1943, %v2095
      %v2097 = vand.u32 %v1758, 4294901760
      %2098 = vmatmul.f32.gmra.mxu0 %v2097
      %v2099 = vpop.f32.mrf.mxu0
      %v2100 = vadd.f32 %v1951, %v2099
      %v2101 = vand.u32 %v1761, 4294901760
      %2102 = vmatmul.f32.gmra.mxu0 %v2101
      %v2103 = vpop.f32.mrf.mxu0
      %v2104 = vadd.f32 %v1959, %v2103
      %v2105 = vand.u32 %v1764, 4294901760
      %2106 = vmatmul.f32.gmra.mxu0 %v2105
      %v2107 = vpop.f32.mrf.mxu0
      %v2108 = vadd.f32 %v1967, %v2107
      %v2109 = vand.u32 %v1767, 4294901760
      %2110 = vmatmul.f32.gmra.mxu0 %v2109
      %v2111 = vpop.f32.mrf.mxu0
      %v2112 = vadd.f32 %v1975, %v2111
      %v2113 = vand.u32 %v1770, 4294901760
      %2114 = vmatmul.f32.gmra.mxu0 %v2113
      %v2115 = vpop.f32.mrf.mxu0
      %v2116 = vadd.f32 %v1983, %v2115
      %2117 = vdwg.mxu0
      %2118 = vmatpush.msra.mxu0 0.0
      %2119 = vmatpush.msra.mxu0 0.0
      %2120 = vmatpush.msra.mxu0 0.0
      %2121 = vmatpush.msra.mxu0 0.0
      %2122 = vmatpush.msra.mxu0 0.0
      %2123 = vmatpush.msra.mxu0 0.0
      %2124 = vmatpush.msra.mxu0 0.0
      %2125 = vmatpush.msra.mxu0 0.0
      %2126 = vmatpush.msra.mxu0 0.0
      %2127 = vmatpush.msra.mxu0 0.0
      %2128 = vmatpush.msra.mxu0 0.0
      %2129 = vmatpush.msra.mxu0 0.0
      %v2130 = vand.u32 %v460, 4294901760
      %v2131 = vsub.f32 %v460, %v2130
      %2132 = vmatpush.msra.mxu0 %v2131
      %v2133 = vand.u32 %v458, 4294901760
      %v2134 = vsub.f32 %v458, %v2133
      %2135 = vmatpush.msra.mxu0 %v2134
      %v2136 = vand.u32 %v456, 4294901760
      %v2137 = vsub.f32 %v456, %v2136
      %2138 = vmatpush.msra.mxu0 %v2137
      %v2139 = vand.u32 %v454, 4294901760
      %v2140 = vsub.f32 %v454, %v2139
      %2141 = vmatpush.msra.mxu0 %v2140
      %v2142 = vand.u32 %v1701, 4294901760
      %v2143 = vsub.f32 %v1701, %v2142
      %2144 = vmatmul.f32.gmra.mxu0 %v2143
      %v2145 = vpop.f32.mrf.mxu0
      %v2146 = vadd.f32 %v2024, %v2145
      %v2147 = vand.u32 %v1704, 4294901760
      %v2148 = vsub.f32 %v1704, %v2147
      %2149 = vmatmul.f32.gmra.mxu0 %v2148
      %v2150 = vpop.f32.mrf.mxu0
      %v2151 = vadd.f32 %v2028, %v2150
      %v2152 = vand.u32 %v1707, 4294901760
      %v2153 = vsub.f32 %v1707, %v2152
      %2154 = vmatmul.f32.gmra.mxu0 %v2153
      %v2155 = vpop.f32.mrf.mxu0
      %v2156 = vadd.f32 %v2032, %v2155
      %v2157 = vand.u32 %v1710, 4294901760
      %v2158 = vsub.f32 %v1710, %v2157
      %2159 = vmatmul.f32.gmra.mxu0 %v2158
      %v2160 = vpop.f32.mrf.mxu0
      %v2161 = vadd.f32 %v2036, %v2160
      %v2162 = vand.u32 %v1713, 4294901760
      %v2163 = vsub.f32 %v1713, %v2162
      %2164 = vmatmul.f32.gmra.mxu0 %v2163
      %v2165 = vpop.f32.mrf.mxu0
      %v2166 = vadd.f32 %v2040, %v2165
      %v2167 = vand.u32 %v1716, 4294901760
      %v2168 = vsub.f32 %v1716, %v2167
      %2169 = vmatmul.f32.gmra.mxu0 %v2168
      %v2170 = vpop.f32.mrf.mxu0
      %v2171 = vadd.f32 %v2044, %v2170
      %v2172 = vand.u32 %v1719, 4294901760
      %v2173 = vsub.f32 %v1719, %v2172
      %2174 = vmatmul.f32.gmra.mxu0 %v2173
      %v2175 = vpop.f32.mrf.mxu0
      %v2176 = vadd.f32 %v2048, %v2175
      %v2177 = vand.u32 %v1722, 4294901760
      %v2178 = vsub.f32 %v1722, %v2177
      %2179 = vmatmul.f32.gmra.mxu0 %v2178
      %v2180 = vpop.f32.mrf.mxu0
      %v2181 = vadd.f32 %v2052, %v2180
      %v2182 = vand.u32 %v1725, 4294901760
      %v2183 = vsub.f32 %v1725, %v2182
      %2184 = vmatmul.f32.gmra.mxu0 %v2183
      %v2185 = vpop.f32.mrf.mxu0
      %v2186 = vadd.f32 %v2056, %v2185
      %v2187 = vand.u32 %v1728, 4294901760
      %v2188 = vsub.f32 %v1728, %v2187
      %2189 = vmatmul.f32.gmra.mxu0 %v2188
      %v2190 = vpop.f32.mrf.mxu0
      %v2191 = vadd.f32 %v2060, %v2190
      %v2192 = vand.u32 %v1731, 4294901760
      %v2193 = vsub.f32 %v1731, %v2192
      %2194 = vmatmul.f32.gmra.mxu0 %v2193
      %v2195 = vpop.f32.mrf.mxu0
      %v2196 = vadd.f32 %v2064, %v2195
      %v2197 = vand.u32 %v1734, 4294901760
      %v2198 = vsub.f32 %v1734, %v2197
      %2199 = vmatmul.f32.gmra.mxu0 %v2198
      %v2200 = vpop.f32.mrf.mxu0
      %v2201 = vadd.f32 %v2068, %v2200
      %v2202 = vand.u32 %v1737, 4294901760
      %v2203 = vsub.f32 %v1737, %v2202
      %2204 = vmatmul.f32.gmra.mxu0 %v2203
      %v2205 = vpop.f32.mrf.mxu0
      %v2206 = vadd.f32 %v2072, %v2205
      %v2207 = vand.u32 %v1740, 4294901760
      %v2208 = vsub.f32 %v1740, %v2207
      %2209 = vmatmul.f32.gmra.mxu0 %v2208
      %v2210 = vpop.f32.mrf.mxu0
      %v2211 = vadd.f32 %v2076, %v2210
      %v2212 = vand.u32 %v1743, 4294901760
      %v2213 = vsub.f32 %v1743, %v2212
      %2214 = vmatmul.f32.gmra.mxu0 %v2213
      %v2215 = vpop.f32.mrf.mxu0
      %v2216 = vadd.f32 %v2080, %v2215
      %v2217 = vand.u32 %v1746, 4294901760
      %v2218 = vsub.f32 %v1746, %v2217
      %2219 = vmatmul.f32.gmra.mxu0 %v2218
      %v2220 = vpop.f32.mrf.mxu0
      %v2221 = vadd.f32 %v2084, %v2220
      %v2222 = vand.u32 %v1749, 4294901760
      %v2223 = vsub.f32 %v1749, %v2222
      %2224 = vmatmul.f32.gmra.mxu0 %v2223
      %v2225 = vpop.f32.mrf.mxu0
      %v2226 = vadd.f32 %v2088, %v2225
      %v2227 = vand.u32 %v1752, 4294901760
      %v2228 = vsub.f32 %v1752, %v2227
      %2229 = vmatmul.f32.gmra.mxu0 %v2228
      %v2230 = vpop.f32.mrf.mxu0
      %v2231 = vadd.f32 %v2092, %v2230
      %v2232 = vand.u32 %v1755, 4294901760
      %v2233 = vsub.f32 %v1755, %v2232
      %2234 = vmatmul.f32.gmra.mxu0 %v2233
      %v2235 = vpop.f32.mrf.mxu0
      %v2236 = vadd.f32 %v2096, %v2235
      %v2237 = vand.u32 %v1758, 4294901760
      %v2238 = vsub.f32 %v1758, %v2237
      %2239 = vmatmul.f32.gmra.mxu0 %v2238
      %v2240 = vpop.f32.mrf.mxu0
      %v2241 = vadd.f32 %v2100, %v2240
      %v2242 = vand.u32 %v1761, 4294901760
      %v2243 = vsub.f32 %v1761, %v2242
      %2244 = vmatmul.f32.gmra.mxu0 %v2243
      %v2245 = vpop.f32.mrf.mxu0
      %v2246 = vadd.f32 %v2104, %v2245
      %v2247 = vand.u32 %v1764, 4294901760
      %v2248 = vsub.f32 %v1764, %v2247
      %2249 = vmatmul.f32.gmra.mxu0 %v2248
      %v2250 = vpop.f32.mrf.mxu0
      %v2251 = vadd.f32 %v2108, %v2250
      %v2252 = vand.u32 %v1767, 4294901760
      %v2253 = vsub.f32 %v1767, %v2252
      %2254 = vmatmul.f32.gmra.mxu0 %v2253
      %v2255 = vpop.f32.mrf.mxu0
      %v2256 = vadd.f32 %v2112, %v2255
      %v2257 = vand.u32 %v1770, 4294901760
      %v2258 = vsub.f32 %v1770, %v2257
      %2259 = vmatmul.f32.gmra.mxu0 %v2258
      %v2260 = vpop.f32.mrf.mxu0
      %v2261 = vadd.f32 %v2116, %v2260
      %2262 = vdwg.mxu0
      %2263 = vmatpush.msra.mxu0 0.0
      %2264 = vmatpush.msra.mxu0 0.0
      %2265 = vmatpush.msra.mxu0 0.0
      %2266 = vmatpush.msra.mxu0 0.0
      %2267 = vmatpush.msra.mxu0 0.0
      %2268 = vmatpush.msra.mxu0 0.0
      %2269 = vmatpush.msra.mxu0 0.0
      %2270 = vmatpush.msra.mxu0 0.0
      %2271 = vmatpush.msra.mxu0 0.0
      %2272 = vmatpush.msra.mxu0 0.0
      %2273 = vmatpush.msra.mxu0 0.0
      %2274 = vmatpush.msra.mxu0 0.0
      %v2275 = vand.u32 %v460, 4294901760
      %2276 = vmatpush.msra.mxu0 %v2275
      %v2277 = vand.u32 %v458, 4294901760
      %2278 = vmatpush.msra.mxu0 %v2277
      %v2279 = vand.u32 %v456, 4294901760
      %2280 = vmatpush.msra.mxu0 %v2279
      %v2281 = vand.u32 %v454, 4294901760
      %2282 = vmatpush.msra.mxu0 %v2281
      %v2283 = vand.u32 %v1701, 4294901760
      %v2284 = vsub.f32 %v1701, %v2283
      %v2285 = vand.u32 %v2284, 4294901760
      %2286 = vmatmul.f32.gmra.mxu0 %v2285
      %v2287 = vpop.f32.mrf.mxu0
      %v2288 = vadd.f32 %v2146, %v2287
      %v2289 = vand.u32 %v1704, 4294901760
      %v2290 = vsub.f32 %v1704, %v2289
      %v2291 = vand.u32 %v2290, 4294901760
      %2292 = vmatmul.f32.gmra.mxu0 %v2291
      %v2293 = vpop.f32.mrf.mxu0
      %v2294 = vadd.f32 %v2151, %v2293
      %v2295 = vand.u32 %v1707, 4294901760
      %v2296 = vsub.f32 %v1707, %v2295
      %v2297 = vand.u32 %v2296, 4294901760
      %2298 = vmatmul.f32.gmra.mxu0 %v2297
      %v2299 = vpop.f32.mrf.mxu0
      %v2300 = vadd.f32 %v2156, %v2299
      %v2301 = vand.u32 %v1710, 4294901760
      %v2302 = vsub.f32 %v1710, %v2301
      %v2303 = vand.u32 %v2302, 4294901760
      %2304 = vmatmul.f32.gmra.mxu0 %v2303
      %v2305 = vpop.f32.mrf.mxu0
      %v2306 = vadd.f32 %v2161, %v2305
      %v2307 = vand.u32 %v1713, 4294901760
      %v2308 = vsub.f32 %v1713, %v2307
      %v2309 = vand.u32 %v2308, 4294901760
      %2310 = vmatmul.f32.gmra.mxu0 %v2309
      %v2311 = vpop.f32.mrf.mxu0
      %v2312 = vadd.f32 %v2166, %v2311
      %v2313 = vand.u32 %v1716, 4294901760
      %v2314 = vsub.f32 %v1716, %v2313
      %v2315 = vand.u32 %v2314, 4294901760
      %2316 = vmatmul.f32.gmra.mxu0 %v2315
      %v2317 = vpop.f32.mrf.mxu0
      %v2318 = vadd.f32 %v2171, %v2317
      %v2319 = vand.u32 %v1719, 4294901760
      %v2320 = vsub.f32 %v1719, %v2319
      %v2321 = vand.u32 %v2320, 4294901760
      %2322 = vmatmul.f32.gmra.mxu0 %v2321
      %v2323 = vpop.f32.mrf.mxu0
      %v2324 = vadd.f32 %v2176, %v2323
      %v2325 = vand.u32 %v1722, 4294901760
      %v2326 = vsub.f32 %v1722, %v2325
      %v2327 = vand.u32 %v2326, 4294901760
      %2328 = vmatmul.f32.gmra.mxu0 %v2327
      %v2329 = vpop.f32.mrf.mxu0
      %v2330 = vadd.f32 %v2181, %v2329
      %v2331 = vand.u32 %v1725, 4294901760
      %v2332 = vsub.f32 %v1725, %v2331
      %v2333 = vand.u32 %v2332, 4294901760
      %2334 = vmatmul.f32.gmra.mxu0 %v2333
      %v2335 = vpop.f32.mrf.mxu0
      %v2336 = vadd.f32 %v2186, %v2335
      %v2337 = vand.u32 %v1728, 4294901760
      %v2338 = vsub.f32 %v1728, %v2337
      %v2339 = vand.u32 %v2338, 4294901760
      %2340 = vmatmul.f32.gmra.mxu0 %v2339
      %v2341 = vpop.f32.mrf.mxu0
      %v2342 = vadd.f32 %v2191, %v2341
      %v2343 = vand.u32 %v1731, 4294901760
      %v2344 = vsub.f32 %v1731, %v2343
      %v2345 = vand.u32 %v2344, 4294901760
      %2346 = vmatmul.f32.gmra.mxu0 %v2345
      %v2347 = vpop.f32.mrf.mxu0
      %v2348 = vadd.f32 %v2196, %v2347
      %v2349 = vand.u32 %v1734, 4294901760
      %v2350 = vsub.f32 %v1734, %v2349
      %v2351 = vand.u32 %v2350, 4294901760
      %2352 = vmatmul.f32.gmra.mxu0 %v2351
      %v2353 = vpop.f32.mrf.mxu0
      %v2354 = vadd.f32 %v2201, %v2353
      %v2355 = vand.u32 %v1737, 4294901760
      %v2356 = vsub.f32 %v1737, %v2355
      %v2357 = vand.u32 %v2356, 4294901760
      %2358 = vmatmul.f32.gmra.mxu0 %v2357
      %v2359 = vpop.f32.mrf.mxu0
      %v2360 = vadd.f32 %v2206, %v2359
      %v2361 = vand.u32 %v1740, 4294901760
      %v2362 = vsub.f32 %v1740, %v2361
      %v2363 = vand.u32 %v2362, 4294901760
      %2364 = vmatmul.f32.gmra.mxu0 %v2363
      %v2365 = vpop.f32.mrf.mxu0
      %v2366 = vadd.f32 %v2211, %v2365
      %v2367 = vand.u32 %v1743, 4294901760
      %v2368 = vsub.f32 %v1743, %v2367
      %v2369 = vand.u32 %v2368, 4294901760
      %2370 = vmatmul.f32.gmra.mxu0 %v2369
      %v2371 = vpop.f32.mrf.mxu0
      %v2372 = vadd.f32 %v2216, %v2371
      %v2373 = vand.u32 %v1746, 4294901760
      %v2374 = vsub.f32 %v1746, %v2373
      %v2375 = vand.u32 %v2374, 4294901760
      %2376 = vmatmul.f32.gmra.mxu0 %v2375
      %v2377 = vpop.f32.mrf.mxu0
      %v2378 = vadd.f32 %v2221, %v2377
      %v2379 = vand.u32 %v1749, 4294901760
      %v2380 = vsub.f32 %v1749, %v2379
      %v2381 = vand.u32 %v2380, 4294901760
      %2382 = vmatmul.f32.gmra.mxu0 %v2381
      %v2383 = vpop.f32.mrf.mxu0
      %v2384 = vadd.f32 %v2226, %v2383
      %v2385 = vand.u32 %v1752, 4294901760
      %v2386 = vsub.f32 %v1752, %v2385
      %v2387 = vand.u32 %v2386, 4294901760
      %2388 = vmatmul.f32.gmra.mxu0 %v2387
      %v2389 = vpop.f32.mrf.mxu0
      %v2390 = vadd.f32 %v2231, %v2389
      %v2391 = vand.u32 %v1755, 4294901760
      %v2392 = vsub.f32 %v1755, %v2391
      %v2393 = vand.u32 %v2392, 4294901760
      %2394 = vmatmul.f32.gmra.mxu0 %v2393
      %v2395 = vpop.f32.mrf.mxu0
      %v2396 = vadd.f32 %v2236, %v2395
      %v2397 = vand.u32 %v1758, 4294901760
      %v2398 = vsub.f32 %v1758, %v2397
      %v2399 = vand.u32 %v2398, 4294901760
      %2400 = vmatmul.f32.gmra.mxu0 %v2399
      %v2401 = vpop.f32.mrf.mxu0
      %v2402 = vadd.f32 %v2241, %v2401
      %v2403 = vand.u32 %v1761, 4294901760
      %v2404 = vsub.f32 %v1761, %v2403
      %v2405 = vand.u32 %v2404, 4294901760
      %2406 = vmatmul.f32.gmra.mxu0 %v2405
      %v2407 = vpop.f32.mrf.mxu0
      %v2408 = vadd.f32 %v2246, %v2407
      %v2409 = vand.u32 %v1764, 4294901760
      %v2410 = vsub.f32 %v1764, %v2409
      %v2411 = vand.u32 %v2410, 4294901760
      %2412 = vmatmul.f32.gmra.mxu0 %v2411
      %v2413 = vpop.f32.mrf.mxu0
      %v2414 = vadd.f32 %v2251, %v2413
      %v2415 = vand.u32 %v1767, 4294901760
      %v2416 = vsub.f32 %v1767, %v2415
      %v2417 = vand.u32 %v2416, 4294901760
      %2418 = vmatmul.f32.gmra.mxu0 %v2417
      %v2419 = vpop.f32.mrf.mxu0
      %v2420 = vadd.f32 %v2256, %v2419
      %v2421 = vand.u32 %v1770, 4294901760
      %v2422 = vsub.f32 %v1770, %v2421
      %v2423 = vand.u32 %v2422, 4294901760
      %2424 = vmatmul.f32.gmra.mxu0 %v2423
      %v2425 = vpop.f32.mrf.mxu0
      %v2426 = vadd.f32 %v2261, %v2425
      %2427 = vdwg.mxu0
      %2428 = vmatpush.msra.mxu0 0.0
      %2429 = vmatpush.msra.mxu0 0.0
      %2430 = vmatpush.msra.mxu0 0.0
      %2431 = vmatpush.msra.mxu0 0.0
      %2432 = vmatpush.msra.mxu0 0.0
      %2433 = vmatpush.msra.mxu0 0.0
      %2434 = vmatpush.msra.mxu0 0.0
      %2435 = vmatpush.msra.mxu0 0.0
      %2436 = vmatpush.msra.mxu0 0.0
      %2437 = vmatpush.msra.mxu0 0.0
      %2438 = vmatpush.msra.mxu0 0.0
      %2439 = vmatpush.msra.mxu0 0.0
      %v2440 = vand.u32 %v460, 4294901760
      %v2441 = vsub.f32 %v460, %v2440
      %v2442 = vand.u32 %v2441, 4294901760
      %2443 = vmatpush.msra.mxu0 %v2442
      %v2444 = vand.u32 %v458, 4294901760
      %v2445 = vsub.f32 %v458, %v2444
      %v2446 = vand.u32 %v2445, 4294901760
      %2447 = vmatpush.msra.mxu0 %v2446
      %v2448 = vand.u32 %v456, 4294901760
      %v2449 = vsub.f32 %v456, %v2448
      %v2450 = vand.u32 %v2449, 4294901760
      %2451 = vmatpush.msra.mxu0 %v2450
      %v2452 = vand.u32 %v454, 4294901760
      %v2453 = vsub.f32 %v454, %v2452
      %v2454 = vand.u32 %v2453, 4294901760
      %2455 = vmatpush.msra.mxu0 %v2454
      %v2456 = vand.u32 %v1701, 4294901760
      %2457 = vmatmul.f32.gmra.mxu0 %v2456
      %v2458 = vpop.f32.mrf.mxu0
      %v2459 = vadd.f32 %v2288, %v2458
      %v2460 = vand.u32 %v1704, 4294901760
      %2461 = vmatmul.f32.gmra.mxu0 %v2460
      %v2462 = vpop.f32.mrf.mxu0
      %v2463 = vadd.f32 %v2294, %v2462
      %v2464 = vand.u32 %v1707, 4294901760
      %2465 = vmatmul.f32.gmra.mxu0 %v2464
      %v2466 = vpop.f32.mrf.mxu0
      %v2467 = vadd.f32 %v2300, %v2466
      %v2468 = vand.u32 %v1710, 4294901760
      %2469 = vmatmul.f32.gmra.mxu0 %v2468
      %v2470 = vpop.f32.mrf.mxu0
      %v2471 = vadd.f32 %v2306, %v2470
      %v2472 = vand.u32 %v1713, 4294901760
      %2473 = vmatmul.f32.gmra.mxu0 %v2472
      %v2474 = vpop.f32.mrf.mxu0
      %v2475 = vadd.f32 %v2312, %v2474
      %v2476 = vand.u32 %v1716, 4294901760
      %2477 = vmatmul.f32.gmra.mxu0 %v2476
      %v2478 = vpop.f32.mrf.mxu0
      %v2479 = vadd.f32 %v2318, %v2478
      %v2480 = vand.u32 %v1719, 4294901760
      %2481 = vmatmul.f32.gmra.mxu0 %v2480
      %v2482 = vpop.f32.mrf.mxu0
      %v2483 = vadd.f32 %v2324, %v2482
      %v2484 = vand.u32 %v1722, 4294901760
      %2485 = vmatmul.f32.gmra.mxu0 %v2484
      %v2486 = vpop.f32.mrf.mxu0
      %v2487 = vadd.f32 %v2330, %v2486
      %v2488 = vand.u32 %v1725, 4294901760
      %2489 = vmatmul.f32.gmra.mxu0 %v2488
      %v2490 = vpop.f32.mrf.mxu0
      %v2491 = vadd.f32 %v2336, %v2490
      %v2492 = vand.u32 %v1728, 4294901760
      %2493 = vmatmul.f32.gmra.mxu0 %v2492
      %v2494 = vpop.f32.mrf.mxu0
      %v2495 = vadd.f32 %v2342, %v2494
      %v2496 = vand.u32 %v1731, 4294901760
      %2497 = vmatmul.f32.gmra.mxu0 %v2496
      %v2498 = vpop.f32.mrf.mxu0
      %v2499 = vadd.f32 %v2348, %v2498
      %v2500 = vand.u32 %v1734, 4294901760
      %2501 = vmatmul.f32.gmra.mxu0 %v2500
      %v2502 = vpop.f32.mrf.mxu0
      %v2503 = vadd.f32 %v2354, %v2502
      %v2504 = vand.u32 %v1737, 4294901760
      %2505 = vmatmul.f32.gmra.mxu0 %v2504
      %v2506 = vpop.f32.mrf.mxu0
      %v2507 = vadd.f32 %v2360, %v2506
      %v2508 = vand.u32 %v1740, 4294901760
      %2509 = vmatmul.f32.gmra.mxu0 %v2508
      %v2510 = vpop.f32.mrf.mxu0
      %v2511 = vadd.f32 %v2366, %v2510
      %v2512 = vand.u32 %v1743, 4294901760
      %2513 = vmatmul.f32.gmra.mxu0 %v2512
      %v2514 = vpop.f32.mrf.mxu0
      %v2515 = vadd.f32 %v2372, %v2514
      %v2516 = vand.u32 %v1746, 4294901760
      %2517 = vmatmul.f32.gmra.mxu0 %v2516
      %v2518 = vpop.f32.mrf.mxu0
      %v2519 = vadd.f32 %v2378, %v2518
      %v2520 = vand.u32 %v1749, 4294901760
      %2521 = vmatmul.f32.gmra.mxu0 %v2520
      %v2522 = vpop.f32.mrf.mxu0
      %v2523 = vadd.f32 %v2384, %v2522
      %v2524 = vand.u32 %v1752, 4294901760
      %2525 = vmatmul.f32.gmra.mxu0 %v2524
      %v2526 = vpop.f32.mrf.mxu0
      %v2527 = vadd.f32 %v2390, %v2526
      %v2528 = vand.u32 %v1755, 4294901760
      %2529 = vmatmul.f32.gmra.mxu0 %v2528
      %v2530 = vpop.f32.mrf.mxu0
      %v2531 = vadd.f32 %v2396, %v2530
      %v2532 = vand.u32 %v1758, 4294901760
      %2533 = vmatmul.f32.gmra.mxu0 %v2532
      %v2534 = vpop.f32.mrf.mxu0
      %v2535 = vadd.f32 %v2402, %v2534
      %v2536 = vand.u32 %v1761, 4294901760
      %2537 = vmatmul.f32.gmra.mxu0 %v2536
      %v2538 = vpop.f32.mrf.mxu0
      %v2539 = vadd.f32 %v2408, %v2538
      %v2540 = vand.u32 %v1764, 4294901760
      %2541 = vmatmul.f32.gmra.mxu0 %v2540
      %v2542 = vpop.f32.mrf.mxu0
      %v2543 = vadd.f32 %v2414, %v2542
      %v2544 = vand.u32 %v1767, 4294901760
      %2545 = vmatmul.f32.gmra.mxu0 %v2544
      %v2546 = vpop.f32.mrf.mxu0
      %v2547 = vadd.f32 %v2420, %v2546
      %v2548 = vand.u32 %v1770, 4294901760
      %2549 = vmatmul.f32.gmra.mxu0 %v2548
      %v2550 = vpop.f32.mrf.mxu0
      %v2551 = vadd.f32 %v2426, %v2550
      %2552 = vdwg.mxu0
      %2553 = vmatpush.msra.mxu0 0.0
      %2554 = vmatpush.msra.mxu0 0.0
      %2555 = vmatpush.msra.mxu0 0.0
      %2556 = vmatpush.msra.mxu0 0.0
      %2557 = vmatpush.msra.mxu0 0.0
      %2558 = vmatpush.msra.mxu0 0.0
      %2559 = vmatpush.msra.mxu0 0.0
      %2560 = vmatpush.msra.mxu0 0.0
      %2561 = vmatpush.msra.mxu0 0.0
      %2562 = vmatpush.msra.mxu0 0.0
      %2563 = vmatpush.msra.mxu0 0.0
      %2564 = vmatpush.msra.mxu0 0.0
      %v2565 = vand.u32 %v460, 4294901760
      %2566 = vmatpush.msra.mxu0 %v2565
      %v2567 = vand.u32 %v458, 4294901760
      %2568 = vmatpush.msra.mxu0 %v2567
      %v2569 = vand.u32 %v456, 4294901760
      %2570 = vmatpush.msra.mxu0 %v2569
      %v2571 = vand.u32 %v454, 4294901760
      %2572 = vmatpush.msra.mxu0 %v2571
      %v2573 = vand.u32 %v1701, 4294901760
      %2574 = vmatmul.f32.gmra.mxu0 %v2573
      %v2575 = vpop.f32.mrf.mxu0
      %v2576 = vadd.f32 %v2459, %v2575
      %v2577 = vand.u32 %v1704, 4294901760
      %2578 = vmatmul.f32.gmra.mxu0 %v2577
      %v2579 = vpop.f32.mrf.mxu0
      %v2580 = vadd.f32 %v2463, %v2579
      %v2581 = vand.u32 %v1707, 4294901760
      %2582 = vmatmul.f32.gmra.mxu0 %v2581
      %v2583 = vpop.f32.mrf.mxu0
      %v2584 = vadd.f32 %v2467, %v2583
      %v2585 = vand.u32 %v1710, 4294901760
      %2586 = vmatmul.f32.gmra.mxu0 %v2585
      %v2587 = vpop.f32.mrf.mxu0
      %v2588 = vadd.f32 %v2471, %v2587
      %v2589 = vand.u32 %v1713, 4294901760
      %2590 = vmatmul.f32.gmra.mxu0 %v2589
      %v2591 = vpop.f32.mrf.mxu0
      %v2592 = vadd.f32 %v2475, %v2591
      %v2593 = vand.u32 %v1716, 4294901760
      %2594 = vmatmul.f32.gmra.mxu0 %v2593
      %v2595 = vpop.f32.mrf.mxu0
      %v2596 = vadd.f32 %v2479, %v2595
      %v2597 = vand.u32 %v1719, 4294901760
      %2598 = vmatmul.f32.gmra.mxu0 %v2597
      %v2599 = vpop.f32.mrf.mxu0
      %v2600 = vadd.f32 %v2483, %v2599
      %v2601 = vand.u32 %v1722, 4294901760
      %2602 = vmatmul.f32.gmra.mxu0 %v2601
      %v2603 = vpop.f32.mrf.mxu0
      %v2604 = vadd.f32 %v2487, %v2603
      %v2605 = vand.u32 %v1725, 4294901760
      %2606 = vmatmul.f32.gmra.mxu0 %v2605
      %v2607 = vpop.f32.mrf.mxu0
      %v2608 = vadd.f32 %v2491, %v2607
      %v2609 = vand.u32 %v1728, 4294901760
      %2610 = vmatmul.f32.gmra.mxu0 %v2609
      %v2611 = vpop.f32.mrf.mxu0
      %v2612 = vadd.f32 %v2495, %v2611
      %v2613 = vand.u32 %v1731, 4294901760
      %2614 = vmatmul.f32.gmra.mxu0 %v2613
      %v2615 = vpop.f32.mrf.mxu0
      %v2616 = vadd.f32 %v2499, %v2615
      %v2617 = vand.u32 %v1734, 4294901760
      %2618 = vmatmul.f32.gmra.mxu0 %v2617
      %v2619 = vpop.f32.mrf.mxu0
      %v2620 = vadd.f32 %v2503, %v2619
      %v2621 = vand.u32 %v1737, 4294901760
      %2622 = vmatmul.f32.gmra.mxu0 %v2621
      %v2623 = vpop.f32.mrf.mxu0
      %v2624 = vadd.f32 %v2507, %v2623
      %v2625 = vand.u32 %v1740, 4294901760
      %2626 = vmatmul.f32.gmra.mxu0 %v2625
      %v2627 = vpop.f32.mrf.mxu0
      %v2628 = vadd.f32 %v2511, %v2627
      %v2629 = vand.u32 %v1743, 4294901760
      %2630 = vmatmul.f32.gmra.mxu0 %v2629
      %v2631 = vpop.f32.mrf.mxu0
      %v2632 = vadd.f32 %v2515, %v2631
      %v2633 = vand.u32 %v1746, 4294901760
      %2634 = vmatmul.f32.gmra.mxu0 %v2633
      %v2635 = vpop.f32.mrf.mxu0
      %v2636 = vadd.f32 %v2519, %v2635
      %v2637 = vand.u32 %v1749, 4294901760
      %2638 = vmatmul.f32.gmra.mxu0 %v2637
      %v2639 = vpop.f32.mrf.mxu0
      %v2640 = vadd.f32 %v2523, %v2639
      %v2641 = vand.u32 %v1752, 4294901760
      %2642 = vmatmul.f32.gmra.mxu0 %v2641
      %v2643 = vpop.f32.mrf.mxu0
      %v2644 = vadd.f32 %v2527, %v2643
      %v2645 = vand.u32 %v1755, 4294901760
      %2646 = vmatmul.f32.gmra.mxu0 %v2645
      %v2647 = vpop.f32.mrf.mxu0
      %v2648 = vadd.f32 %v2531, %v2647
      %v2649 = vand.u32 %v1758, 4294901760
      %2650 = vmatmul.f32.gmra.mxu0 %v2649
      %v2651 = vpop.f32.mrf.mxu0
      %v2652 = vadd.f32 %v2535, %v2651
      %v2653 = vand.u32 %v1761, 4294901760
      %2654 = vmatmul.f32.gmra.mxu0 %v2653
      %v2655 = vpop.f32.mrf.mxu0
      %v2656 = vadd.f32 %v2539, %v2655
      %v2657 = vand.u32 %v1764, 4294901760
      %2658 = vmatmul.f32.gmra.mxu0 %v2657
      %v2659 = vpop.f32.mrf.mxu0
      %v2660 = vadd.f32 %v2543, %v2659
      %v2661 = vand.u32 %v1767, 4294901760
      %2662 = vmatmul.f32.gmra.mxu0 %v2661
      %v2663 = vpop.f32.mrf.mxu0
      %v2664 = vadd.f32 %v2547, %v2663
      %v2665 = vand.u32 %v1770, 4294901760
      %2666 = vmatmul.f32.gmra.mxu0 %v2665
      %v2667 = vpop.f32.mrf.mxu0
      %v2668 = vadd.f32 %v2551, %v2667
      %2669 = vdwg.mxu0
      %2670 = vmatpush.msra.mxu0 0.0
      %2671 = vmatpush.msra.mxu0 0.0
      %2672 = vmatpush.msra.mxu0 0.0
      %2673 = vmatpush.msra.mxu0 0.0
      %2674 = vmatpush.msra.mxu0 0.0
      %2675 = vmatpush.msra.mxu0 0.0
      %2676 = vmatpush.msra.mxu0 0.0
      %2677 = vmatpush.msra.mxu0 0.0
      %2678 = vmatpush.msra.mxu0 0.0
      %2679 = vmatpush.msra.mxu0 0.0
      %2680 = vmatpush.msra.mxu0 0.0
      %2681 = vmatpush.msra.mxu0 0.0
      %v2682 = vand.u32 %v461, 4294901760
      %2683 = vmatpush.msra.mxu0 %v2682
      %v2684 = vand.u32 %v459, 4294901760
      %2685 = vmatpush.msra.mxu0 %v2684
      %v2686 = vand.u32 %v457, 4294901760
      %2687 = vmatpush.msra.mxu0 %v2686
      %v2688 = vand.u32 %v455, 4294901760
      %2689 = vmatpush.msra.mxu0 %v2688
      %v2690 = vand.u32 %v1701, 4294901760
      %v2691 = vsub.f32 %v1701, %v2690
      %v2692 = vand.u32 %v2691, 4294901760
      %v2693 = vsub.f32 %v2691, %v2692
      %v2694 = vand.u32 %v2693, 4294901760
      %2695 = vmatmul.f32.gmra.mxu0 %v2694
      %v2696 = vpop.f32.mrf.mxu0
      %v2697 = vadd.f32 %v1583, %v2696
      %v2698 = vand.u32 %v1704, 4294901760
      %v2699 = vsub.f32 %v1704, %v2698
      %v2700 = vand.u32 %v2699, 4294901760
      %v2701 = vsub.f32 %v2699, %v2700
      %v2702 = vand.u32 %v2701, 4294901760
      %2703 = vmatmul.f32.gmra.mxu0 %v2702
      %v2704 = vpop.f32.mrf.mxu0
      %v2705 = vadd.f32 %v1588, %v2704
      %v2706 = vand.u32 %v1707, 4294901760
      %v2707 = vsub.f32 %v1707, %v2706
      %v2708 = vand.u32 %v2707, 4294901760
      %v2709 = vsub.f32 %v2707, %v2708
      %v2710 = vand.u32 %v2709, 4294901760
      %2711 = vmatmul.f32.gmra.mxu0 %v2710
      %v2712 = vpop.f32.mrf.mxu0
      %v2713 = vadd.f32 %v1593, %v2712
      %v2714 = vand.u32 %v1710, 4294901760
      %v2715 = vsub.f32 %v1710, %v2714
      %v2716 = vand.u32 %v2715, 4294901760
      %v2717 = vsub.f32 %v2715, %v2716
      %v2718 = vand.u32 %v2717, 4294901760
      %2719 = vmatmul.f32.gmra.mxu0 %v2718
      %v2720 = vpop.f32.mrf.mxu0
      %v2721 = vadd.f32 %v1598, %v2720
      %v2722 = vand.u32 %v1713, 4294901760
      %v2723 = vsub.f32 %v1713, %v2722
      %v2724 = vand.u32 %v2723, 4294901760
      %v2725 = vsub.f32 %v2723, %v2724
      %v2726 = vand.u32 %v2725, 4294901760
      %2727 = vmatmul.f32.gmra.mxu0 %v2726
      %v2728 = vpop.f32.mrf.mxu0
      %v2729 = vadd.f32 %v1603, %v2728
      %v2730 = vand.u32 %v1716, 4294901760
      %v2731 = vsub.f32 %v1716, %v2730
      %v2732 = vand.u32 %v2731, 4294901760
      %v2733 = vsub.f32 %v2731, %v2732
      %v2734 = vand.u32 %v2733, 4294901760
      %2735 = vmatmul.f32.gmra.mxu0 %v2734
      %v2736 = vpop.f32.mrf.mxu0
      %v2737 = vadd.f32 %v1608, %v2736
      %v2738 = vand.u32 %v1719, 4294901760
      %v2739 = vsub.f32 %v1719, %v2738
      %v2740 = vand.u32 %v2739, 4294901760
      %v2741 = vsub.f32 %v2739, %v2740
      %v2742 = vand.u32 %v2741, 4294901760
      %2743 = vmatmul.f32.gmra.mxu0 %v2742
      %v2744 = vpop.f32.mrf.mxu0
      %v2745 = vadd.f32 %v1613, %v2744
      %v2746 = vand.u32 %v1722, 4294901760
      %v2747 = vsub.f32 %v1722, %v2746
      %v2748 = vand.u32 %v2747, 4294901760
      %v2749 = vsub.f32 %v2747, %v2748
      %v2750 = vand.u32 %v2749, 4294901760
      %2751 = vmatmul.f32.gmra.mxu0 %v2750
      %v2752 = vpop.f32.mrf.mxu0
      %v2753 = vadd.f32 %v1618, %v2752
      %v2754 = vand.u32 %v1725, 4294901760
      %v2755 = vsub.f32 %v1725, %v2754
      %v2756 = vand.u32 %v2755, 4294901760
      %v2757 = vsub.f32 %v2755, %v2756
      %v2758 = vand.u32 %v2757, 4294901760
      %2759 = vmatmul.f32.gmra.mxu0 %v2758
      %v2760 = vpop.f32.mrf.mxu0
      %v2761 = vadd.f32 %v1623, %v2760
      %v2762 = vand.u32 %v1728, 4294901760
      %v2763 = vsub.f32 %v1728, %v2762
      %v2764 = vand.u32 %v2763, 4294901760
      %v2765 = vsub.f32 %v2763, %v2764
      %v2766 = vand.u32 %v2765, 4294901760
      %2767 = vmatmul.f32.gmra.mxu0 %v2766
      %v2768 = vpop.f32.mrf.mxu0
      %v2769 = vadd.f32 %v1628, %v2768
      %v2770 = vand.u32 %v1731, 4294901760
      %v2771 = vsub.f32 %v1731, %v2770
      %v2772 = vand.u32 %v2771, 4294901760
      %v2773 = vsub.f32 %v2771, %v2772
      %v2774 = vand.u32 %v2773, 4294901760
      %2775 = vmatmul.f32.gmra.mxu0 %v2774
      %v2776 = vpop.f32.mrf.mxu0
      %v2777 = vadd.f32 %v1633, %v2776
      %v2778 = vand.u32 %v1734, 4294901760
      %v2779 = vsub.f32 %v1734, %v2778
      %v2780 = vand.u32 %v2779, 4294901760
      %v2781 = vsub.f32 %v2779, %v2780
      %v2782 = vand.u32 %v2781, 4294901760
      %2783 = vmatmul.f32.gmra.mxu0 %v2782
      %v2784 = vpop.f32.mrf.mxu0
      %v2785 = vadd.f32 %v1638, %v2784
      %v2786 = vand.u32 %v1737, 4294901760
      %v2787 = vsub.f32 %v1737, %v2786
      %v2788 = vand.u32 %v2787, 4294901760
      %v2789 = vsub.f32 %v2787, %v2788
      %v2790 = vand.u32 %v2789, 4294901760
      %2791 = vmatmul.f32.gmra.mxu0 %v2790
      %v2792 = vpop.f32.mrf.mxu0
      %v2793 = vadd.f32 %v1643, %v2792
      %v2794 = vand.u32 %v1740, 4294901760
      %v2795 = vsub.f32 %v1740, %v2794
      %v2796 = vand.u32 %v2795, 4294901760
      %v2797 = vsub.f32 %v2795, %v2796
      %v2798 = vand.u32 %v2797, 4294901760
      %2799 = vmatmul.f32.gmra.mxu0 %v2798
      %v2800 = vpop.f32.mrf.mxu0
      %v2801 = vadd.f32 %v1648, %v2800
      %v2802 = vand.u32 %v1743, 4294901760
      %v2803 = vsub.f32 %v1743, %v2802
      %v2804 = vand.u32 %v2803, 4294901760
      %v2805 = vsub.f32 %v2803, %v2804
      %v2806 = vand.u32 %v2805, 4294901760
      %2807 = vmatmul.f32.gmra.mxu0 %v2806
      %v2808 = vpop.f32.mrf.mxu0
      %v2809 = vadd.f32 %v1653, %v2808
      %v2810 = vand.u32 %v1746, 4294901760
      %v2811 = vsub.f32 %v1746, %v2810
      %v2812 = vand.u32 %v2811, 4294901760
      %v2813 = vsub.f32 %v2811, %v2812
      %v2814 = vand.u32 %v2813, 4294901760
      %2815 = vmatmul.f32.gmra.mxu0 %v2814
      %v2816 = vpop.f32.mrf.mxu0
      %v2817 = vadd.f32 %v1658, %v2816
      %v2818 = vand.u32 %v1749, 4294901760
      %v2819 = vsub.f32 %v1749, %v2818
      %v2820 = vand.u32 %v2819, 4294901760
      %v2821 = vsub.f32 %v2819, %v2820
      %v2822 = vand.u32 %v2821, 4294901760
      %2823 = vmatmul.f32.gmra.mxu0 %v2822
      %v2824 = vpop.f32.mrf.mxu0
      %v2825 = vadd.f32 %v1663, %v2824
      %v2826 = vand.u32 %v1752, 4294901760
      %v2827 = vsub.f32 %v1752, %v2826
      %v2828 = vand.u32 %v2827, 4294901760
      %v2829 = vsub.f32 %v2827, %v2828
      %v2830 = vand.u32 %v2829, 4294901760
      %2831 = vmatmul.f32.gmra.mxu0 %v2830
      %v2832 = vpop.f32.mrf.mxu0
      %v2833 = vadd.f32 %v1668, %v2832
      %v2834 = vand.u32 %v1755, 4294901760
      %v2835 = vsub.f32 %v1755, %v2834
      %v2836 = vand.u32 %v2835, 4294901760
      %v2837 = vsub.f32 %v2835, %v2836
      %v2838 = vand.u32 %v2837, 4294901760
      %2839 = vmatmul.f32.gmra.mxu0 %v2838
      %v2840 = vpop.f32.mrf.mxu0
      %v2841 = vadd.f32 %v1673, %v2840
      %v2842 = vand.u32 %v1758, 4294901760
      %v2843 = vsub.f32 %v1758, %v2842
      %v2844 = vand.u32 %v2843, 4294901760
      %v2845 = vsub.f32 %v2843, %v2844
      %v2846 = vand.u32 %v2845, 4294901760
      %2847 = vmatmul.f32.gmra.mxu0 %v2846
      %v2848 = vpop.f32.mrf.mxu0
      %v2849 = vadd.f32 %v1678, %v2848
      %v2850 = vand.u32 %v1761, 4294901760
      %v2851 = vsub.f32 %v1761, %v2850
      %v2852 = vand.u32 %v2851, 4294901760
      %v2853 = vsub.f32 %v2851, %v2852
      %v2854 = vand.u32 %v2853, 4294901760
      %2855 = vmatmul.f32.gmra.mxu0 %v2854
      %v2856 = vpop.f32.mrf.mxu0
      %v2857 = vadd.f32 %v1683, %v2856
      %v2858 = vand.u32 %v1764, 4294901760
      %v2859 = vsub.f32 %v1764, %v2858
      %v2860 = vand.u32 %v2859, 4294901760
      %v2861 = vsub.f32 %v2859, %v2860
      %v2862 = vand.u32 %v2861, 4294901760
      %2863 = vmatmul.f32.gmra.mxu0 %v2862
      %v2864 = vpop.f32.mrf.mxu0
      %v2865 = vadd.f32 %v1688, %v2864
      %v2866 = vand.u32 %v1767, 4294901760
      %v2867 = vsub.f32 %v1767, %v2866
      %v2868 = vand.u32 %v2867, 4294901760
      %v2869 = vsub.f32 %v2867, %v2868
      %v2870 = vand.u32 %v2869, 4294901760
      %2871 = vmatmul.f32.gmra.mxu0 %v2870
      %v2872 = vpop.f32.mrf.mxu0
      %v2873 = vadd.f32 %v1693, %v2872
      %v2874 = vand.u32 %v1770, 4294901760
      %v2875 = vsub.f32 %v1770, %v2874
      %v2876 = vand.u32 %v2875, 4294901760
      %v2877 = vsub.f32 %v2875, %v2876
      %v2878 = vand.u32 %v2877, 4294901760
      %2879 = vmatmul.f32.gmra.mxu0 %v2878
      %v2880 = vpop.f32.mrf.mxu0
      %v2881 = vadd.f32 %v1698, %v2880
      %2882 = vdwg.mxu0
      %2883 = vmatpush.msra.mxu0 0.0
      %2884 = vmatpush.msra.mxu0 0.0
      %2885 = vmatpush.msra.mxu0 0.0
      %2886 = vmatpush.msra.mxu0 0.0
      %2887 = vmatpush.msra.mxu0 0.0
      %2888 = vmatpush.msra.mxu0 0.0
      %2889 = vmatpush.msra.mxu0 0.0
      %2890 = vmatpush.msra.mxu0 0.0
      %2891 = vmatpush.msra.mxu0 0.0
      %2892 = vmatpush.msra.mxu0 0.0
      %2893 = vmatpush.msra.mxu0 0.0
      %2894 = vmatpush.msra.mxu0 0.0
      %v2895 = vand.u32 %v461, 4294901760
      %v2896 = vsub.f32 %v461, %v2895
      %v2897 = vand.u32 %v2896, 4294901760
      %v2898 = vsub.f32 %v2896, %v2897
      %v2899 = vand.u32 %v2898, 4294901760
      %2900 = vmatpush.msra.mxu0 %v2899
      %v2901 = vand.u32 %v459, 4294901760
      %v2902 = vsub.f32 %v459, %v2901
      %v2903 = vand.u32 %v2902, 4294901760
      %v2904 = vsub.f32 %v2902, %v2903
      %v2905 = vand.u32 %v2904, 4294901760
      %2906 = vmatpush.msra.mxu0 %v2905
      %v2907 = vand.u32 %v457, 4294901760
      %v2908 = vsub.f32 %v457, %v2907
      %v2909 = vand.u32 %v2908, 4294901760
      %v2910 = vsub.f32 %v2908, %v2909
      %v2911 = vand.u32 %v2910, 4294901760
      %2912 = vmatpush.msra.mxu0 %v2911
      %v2913 = vand.u32 %v455, 4294901760
      %v2914 = vsub.f32 %v455, %v2913
      %v2915 = vand.u32 %v2914, 4294901760
      %v2916 = vsub.f32 %v2914, %v2915
      %v2917 = vand.u32 %v2916, 4294901760
      %2918 = vmatpush.msra.mxu0 %v2917
      %v2919 = vand.u32 %v1701, 4294901760
      %2920 = vmatmul.f32.gmra.mxu0 %v2919
      %v2921 = vpop.f32.mrf.mxu0
      %v2922 = vadd.f32 %v2697, %v2921
      %v2923 = vand.u32 %v1704, 4294901760
      %2924 = vmatmul.f32.gmra.mxu0 %v2923
      %v2925 = vpop.f32.mrf.mxu0
      %v2926 = vadd.f32 %v2705, %v2925
      %v2927 = vand.u32 %v1707, 4294901760
      %2928 = vmatmul.f32.gmra.mxu0 %v2927
      %v2929 = vpop.f32.mrf.mxu0
      %v2930 = vadd.f32 %v2713, %v2929
      %v2931 = vand.u32 %v1710, 4294901760
      %2932 = vmatmul.f32.gmra.mxu0 %v2931
      %v2933 = vpop.f32.mrf.mxu0
      %v2934 = vadd.f32 %v2721, %v2933
      %v2935 = vand.u32 %v1713, 4294901760
      %2936 = vmatmul.f32.gmra.mxu0 %v2935
      %v2937 = vpop.f32.mrf.mxu0
      %v2938 = vadd.f32 %v2729, %v2937
      %v2939 = vand.u32 %v1716, 4294901760
      %2940 = vmatmul.f32.gmra.mxu0 %v2939
      %v2941 = vpop.f32.mrf.mxu0
      %v2942 = vadd.f32 %v2737, %v2941
      %v2943 = vand.u32 %v1719, 4294901760
      %2944 = vmatmul.f32.gmra.mxu0 %v2943
      %v2945 = vpop.f32.mrf.mxu0
      %v2946 = vadd.f32 %v2745, %v2945
      %v2947 = vand.u32 %v1722, 4294901760
      %2948 = vmatmul.f32.gmra.mxu0 %v2947
      %v2949 = vpop.f32.mrf.mxu0
      %v2950 = vadd.f32 %v2753, %v2949
      %v2951 = vand.u32 %v1725, 4294901760
      %2952 = vmatmul.f32.gmra.mxu0 %v2951
      %v2953 = vpop.f32.mrf.mxu0
      %v2954 = vadd.f32 %v2761, %v2953
      %v2955 = vand.u32 %v1728, 4294901760
      %2956 = vmatmul.f32.gmra.mxu0 %v2955
      %v2957 = vpop.f32.mrf.mxu0
      %v2958 = vadd.f32 %v2769, %v2957
      %v2959 = vand.u32 %v1731, 4294901760
      %2960 = vmatmul.f32.gmra.mxu0 %v2959
      %v2961 = vpop.f32.mrf.mxu0
      %v2962 = vadd.f32 %v2777, %v2961
      %v2963 = vand.u32 %v1734, 4294901760
      %2964 = vmatmul.f32.gmra.mxu0 %v2963
      %v2965 = vpop.f32.mrf.mxu0
      %v2966 = vadd.f32 %v2785, %v2965
      %v2967 = vand.u32 %v1737, 4294901760
      %2968 = vmatmul.f32.gmra.mxu0 %v2967
      %v2969 = vpop.f32.mrf.mxu0
      %v2970 = vadd.f32 %v2793, %v2969
      %v2971 = vand.u32 %v1740, 4294901760
      %2972 = vmatmul.f32.gmra.mxu0 %v2971
      %v2973 = vpop.f32.mrf.mxu0
      %v2974 = vadd.f32 %v2801, %v2973
      %v2975 = vand.u32 %v1743, 4294901760
      %2976 = vmatmul.f32.gmra.mxu0 %v2975
      %v2977 = vpop.f32.mrf.mxu0
      %v2978 = vadd.f32 %v2809, %v2977
      %v2979 = vand.u32 %v1746, 4294901760
      %2980 = vmatmul.f32.gmra.mxu0 %v2979
      %v2981 = vpop.f32.mrf.mxu0
      %v2982 = vadd.f32 %v2817, %v2981
      %v2983 = vand.u32 %v1749, 4294901760
      %2984 = vmatmul.f32.gmra.mxu0 %v2983
      %v2985 = vpop.f32.mrf.mxu0
      %v2986 = vadd.f32 %v2825, %v2985
      %v2987 = vand.u32 %v1752, 4294901760
      %2988 = vmatmul.f32.gmra.mxu0 %v2987
      %v2989 = vpop.f32.mrf.mxu0
      %v2990 = vadd.f32 %v2833, %v2989
      %v2991 = vand.u32 %v1755, 4294901760
      %2992 = vmatmul.f32.gmra.mxu0 %v2991
      %v2993 = vpop.f32.mrf.mxu0
      %v2994 = vadd.f32 %v2841, %v2993
      %v2995 = vand.u32 %v1758, 4294901760
      %2996 = vmatmul.f32.gmra.mxu0 %v2995
      %v2997 = vpop.f32.mrf.mxu0
      %v2998 = vadd.f32 %v2849, %v2997
      %v2999 = vand.u32 %v1761, 4294901760
      %3000 = vmatmul.f32.gmra.mxu0 %v2999
      %v3001 = vpop.f32.mrf.mxu0
      %v3002 = vadd.f32 %v2857, %v3001
      %v3003 = vand.u32 %v1764, 4294901760
      %3004 = vmatmul.f32.gmra.mxu0 %v3003
      %v3005 = vpop.f32.mrf.mxu0
      %v3006 = vadd.f32 %v2865, %v3005
      %v3007 = vand.u32 %v1767, 4294901760
      %3008 = vmatmul.f32.gmra.mxu0 %v3007
      %v3009 = vpop.f32.mrf.mxu0
      %v3010 = vadd.f32 %v2873, %v3009
      %v3011 = vand.u32 %v1770, 4294901760
      %3012 = vmatmul.f32.gmra.mxu0 %v3011
      %v3013 = vpop.f32.mrf.mxu0
      %v3014 = vadd.f32 %v2881, %v3013
      %3015 = vdwg.mxu0
      %3016 = vmatpush.msra.mxu0 0.0
      %3017 = vmatpush.msra.mxu0 0.0
      %3018 = vmatpush.msra.mxu0 0.0
      %3019 = vmatpush.msra.mxu0 0.0
      %3020 = vmatpush.msra.mxu0 0.0
      %3021 = vmatpush.msra.mxu0 0.0
      %3022 = vmatpush.msra.mxu0 0.0
      %3023 = vmatpush.msra.mxu0 0.0
      %3024 = vmatpush.msra.mxu0 0.0
      %3025 = vmatpush.msra.mxu0 0.0
      %3026 = vmatpush.msra.mxu0 0.0
      %3027 = vmatpush.msra.mxu0 0.0
      %v3028 = vand.u32 %v461, 4294901760
      %v3029 = vsub.f32 %v461, %v3028
      %3030 = vmatpush.msra.mxu0 %v3029
      %v3031 = vand.u32 %v459, 4294901760
      %v3032 = vsub.f32 %v459, %v3031
      %3033 = vmatpush.msra.mxu0 %v3032
      %v3034 = vand.u32 %v457, 4294901760
      %v3035 = vsub.f32 %v457, %v3034
      %3036 = vmatpush.msra.mxu0 %v3035
      %v3037 = vand.u32 %v455, 4294901760
      %v3038 = vsub.f32 %v455, %v3037
      %3039 = vmatpush.msra.mxu0 %v3038
      %v3040 = vand.u32 %v1701, 4294901760
      %v3041 = vsub.f32 %v1701, %v3040
      %3042 = vmatmul.f32.gmra.mxu0 %v3041
      %v3043 = vpop.f32.mrf.mxu0
      %v3044 = vadd.f32 %v2922, %v3043
      %v3045 = vand.u32 %v1704, 4294901760
      %v3046 = vsub.f32 %v1704, %v3045
      %3047 = vmatmul.f32.gmra.mxu0 %v3046
      %v3048 = vpop.f32.mrf.mxu0
      %v3049 = vadd.f32 %v2926, %v3048
      %v3050 = vand.u32 %v1707, 4294901760
      %v3051 = vsub.f32 %v1707, %v3050
      %3052 = vmatmul.f32.gmra.mxu0 %v3051
      %v3053 = vpop.f32.mrf.mxu0
      %v3054 = vadd.f32 %v2930, %v3053
      %v3055 = vand.u32 %v1710, 4294901760
      %v3056 = vsub.f32 %v1710, %v3055
      %3057 = vmatmul.f32.gmra.mxu0 %v3056
      %v3058 = vpop.f32.mrf.mxu0
      %v3059 = vadd.f32 %v2934, %v3058
      %v3060 = vand.u32 %v1713, 4294901760
      %v3061 = vsub.f32 %v1713, %v3060
      %3062 = vmatmul.f32.gmra.mxu0 %v3061
      %v3063 = vpop.f32.mrf.mxu0
      %v3064 = vadd.f32 %v2938, %v3063
      %v3065 = vand.u32 %v1716, 4294901760
      %v3066 = vsub.f32 %v1716, %v3065
      %3067 = vmatmul.f32.gmra.mxu0 %v3066
      %v3068 = vpop.f32.mrf.mxu0
      %v3069 = vadd.f32 %v2942, %v3068
      %v3070 = vand.u32 %v1719, 4294901760
      %v3071 = vsub.f32 %v1719, %v3070
      %3072 = vmatmul.f32.gmra.mxu0 %v3071
      %v3073 = vpop.f32.mrf.mxu0
      %v3074 = vadd.f32 %v2946, %v3073
      %v3075 = vand.u32 %v1722, 4294901760
      %v3076 = vsub.f32 %v1722, %v3075
      %3077 = vmatmul.f32.gmra.mxu0 %v3076
      %v3078 = vpop.f32.mrf.mxu0
      %v3079 = vadd.f32 %v2950, %v3078
      %v3080 = vand.u32 %v1725, 4294901760
      %v3081 = vsub.f32 %v1725, %v3080
      %3082 = vmatmul.f32.gmra.mxu0 %v3081
      %v3083 = vpop.f32.mrf.mxu0
      %v3084 = vadd.f32 %v2954, %v3083
      %v3085 = vand.u32 %v1728, 4294901760
      %v3086 = vsub.f32 %v1728, %v3085
      %3087 = vmatmul.f32.gmra.mxu0 %v3086
      %v3088 = vpop.f32.mrf.mxu0
      %v3089 = vadd.f32 %v2958, %v3088
      %v3090 = vand.u32 %v1731, 4294901760
      %v3091 = vsub.f32 %v1731, %v3090
      %3092 = vmatmul.f32.gmra.mxu0 %v3091
      %v3093 = vpop.f32.mrf.mxu0
      %v3094 = vadd.f32 %v2962, %v3093
      %v3095 = vand.u32 %v1734, 4294901760
      %v3096 = vsub.f32 %v1734, %v3095
      %3097 = vmatmul.f32.gmra.mxu0 %v3096
      %v3098 = vpop.f32.mrf.mxu0
      %v3099 = vadd.f32 %v2966, %v3098
      %v3100 = vand.u32 %v1737, 4294901760
      %v3101 = vsub.f32 %v1737, %v3100
      %3102 = vmatmul.f32.gmra.mxu0 %v3101
      %v3103 = vpop.f32.mrf.mxu0
      %v3104 = vadd.f32 %v2970, %v3103
      %v3105 = vand.u32 %v1740, 4294901760
      %v3106 = vsub.f32 %v1740, %v3105
      %3107 = vmatmul.f32.gmra.mxu0 %v3106
      %v3108 = vpop.f32.mrf.mxu0
      %v3109 = vadd.f32 %v2974, %v3108
      %v3110 = vand.u32 %v1743, 4294901760
      %v3111 = vsub.f32 %v1743, %v3110
      %3112 = vmatmul.f32.gmra.mxu0 %v3111
      %v3113 = vpop.f32.mrf.mxu0
      %v3114 = vadd.f32 %v2978, %v3113
      %v3115 = vand.u32 %v1746, 4294901760
      %v3116 = vsub.f32 %v1746, %v3115
      %3117 = vmatmul.f32.gmra.mxu0 %v3116
      %v3118 = vpop.f32.mrf.mxu0
      %v3119 = vadd.f32 %v2982, %v3118
      %v3120 = vand.u32 %v1749, 4294901760
      %v3121 = vsub.f32 %v1749, %v3120
      %3122 = vmatmul.f32.gmra.mxu0 %v3121
      %v3123 = vpop.f32.mrf.mxu0
      %v3124 = vadd.f32 %v2986, %v3123
      %v3125 = vand.u32 %v1752, 4294901760
      %v3126 = vsub.f32 %v1752, %v3125
      %3127 = vmatmul.f32.gmra.mxu0 %v3126
      %v3128 = vpop.f32.mrf.mxu0
      %v3129 = vadd.f32 %v2990, %v3128
      %v3130 = vand.u32 %v1755, 4294901760
      %v3131 = vsub.f32 %v1755, %v3130
      %3132 = vmatmul.f32.gmra.mxu0 %v3131
      %v3133 = vpop.f32.mrf.mxu0
      %v3134 = vadd.f32 %v2994, %v3133
      %v3135 = vand.u32 %v1758, 4294901760
      %v3136 = vsub.f32 %v1758, %v3135
      %3137 = vmatmul.f32.gmra.mxu0 %v3136
      %v3138 = vpop.f32.mrf.mxu0
      %v3139 = vadd.f32 %v2998, %v3138
      %v3140 = vand.u32 %v1761, 4294901760
      %v3141 = vsub.f32 %v1761, %v3140
      %3142 = vmatmul.f32.gmra.mxu0 %v3141
      %v3143 = vpop.f32.mrf.mxu0
      %v3144 = vadd.f32 %v3002, %v3143
      %v3145 = vand.u32 %v1764, 4294901760
      %v3146 = vsub.f32 %v1764, %v3145
      %3147 = vmatmul.f32.gmra.mxu0 %v3146
      %v3148 = vpop.f32.mrf.mxu0
      %v3149 = vadd.f32 %v3006, %v3148
      %v3150 = vand.u32 %v1767, 4294901760
      %v3151 = vsub.f32 %v1767, %v3150
      %3152 = vmatmul.f32.gmra.mxu0 %v3151
      %v3153 = vpop.f32.mrf.mxu0
      %v3154 = vadd.f32 %v3010, %v3153
      %v3155 = vand.u32 %v1770, 4294901760
      %v3156 = vsub.f32 %v1770, %v3155
      %3157 = vmatmul.f32.gmra.mxu0 %v3156
      %v3158 = vpop.f32.mrf.mxu0
      %v3159 = vadd.f32 %v3014, %v3158
      %3160 = vdwg.mxu0
      %3161 = vmatpush.msra.mxu0 0.0
      %3162 = vmatpush.msra.mxu0 0.0
      %3163 = vmatpush.msra.mxu0 0.0
      %3164 = vmatpush.msra.mxu0 0.0
      %3165 = vmatpush.msra.mxu0 0.0
      %3166 = vmatpush.msra.mxu0 0.0
      %3167 = vmatpush.msra.mxu0 0.0
      %3168 = vmatpush.msra.mxu0 0.0
      %3169 = vmatpush.msra.mxu0 0.0
      %3170 = vmatpush.msra.mxu0 0.0
      %3171 = vmatpush.msra.mxu0 0.0
      %3172 = vmatpush.msra.mxu0 0.0
      %v3173 = vand.u32 %v461, 4294901760
      %3174 = vmatpush.msra.mxu0 %v3173
      %v3175 = vand.u32 %v459, 4294901760
      %3176 = vmatpush.msra.mxu0 %v3175
      %v3177 = vand.u32 %v457, 4294901760
      %3178 = vmatpush.msra.mxu0 %v3177
      %v3179 = vand.u32 %v455, 4294901760
      %3180 = vmatpush.msra.mxu0 %v3179
      %v3181 = vand.u32 %v1701, 4294901760
      %v3182 = vsub.f32 %v1701, %v3181
      %v3183 = vand.u32 %v3182, 4294901760
      %3184 = vmatmul.f32.gmra.mxu0 %v3183
      %v3185 = vpop.f32.mrf.mxu0
      %v3186 = vadd.f32 %v3044, %v3185
      %v3187 = vand.u32 %v1704, 4294901760
      %v3188 = vsub.f32 %v1704, %v3187
      %v3189 = vand.u32 %v3188, 4294901760
      %3190 = vmatmul.f32.gmra.mxu0 %v3189
      %v3191 = vpop.f32.mrf.mxu0
      %v3192 = vadd.f32 %v3049, %v3191
      %v3193 = vand.u32 %v1707, 4294901760
      %v3194 = vsub.f32 %v1707, %v3193
      %v3195 = vand.u32 %v3194, 4294901760
      %3196 = vmatmul.f32.gmra.mxu0 %v3195
      %v3197 = vpop.f32.mrf.mxu0
      %v3198 = vadd.f32 %v3054, %v3197
      %v3199 = vand.u32 %v1710, 4294901760
      %v3200 = vsub.f32 %v1710, %v3199
      %v3201 = vand.u32 %v3200, 4294901760
      %3202 = vmatmul.f32.gmra.mxu0 %v3201
      %v3203 = vpop.f32.mrf.mxu0
      %v3204 = vadd.f32 %v3059, %v3203
      %v3205 = vand.u32 %v1713, 4294901760
      %v3206 = vsub.f32 %v1713, %v3205
      %v3207 = vand.u32 %v3206, 4294901760
      %3208 = vmatmul.f32.gmra.mxu0 %v3207
      %v3209 = vpop.f32.mrf.mxu0
      %v3210 = vadd.f32 %v3064, %v3209
      %v3211 = vand.u32 %v1716, 4294901760
      %v3212 = vsub.f32 %v1716, %v3211
      %v3213 = vand.u32 %v3212, 4294901760
      %3214 = vmatmul.f32.gmra.mxu0 %v3213
      %v3215 = vpop.f32.mrf.mxu0
      %v3216 = vadd.f32 %v3069, %v3215
      %v3217 = vand.u32 %v1719, 4294901760
      %v3218 = vsub.f32 %v1719, %v3217
      %v3219 = vand.u32 %v3218, 4294901760
      %3220 = vmatmul.f32.gmra.mxu0 %v3219
      %v3221 = vpop.f32.mrf.mxu0
      %v3222 = vadd.f32 %v3074, %v3221
      %v3223 = vand.u32 %v1722, 4294901760
      %v3224 = vsub.f32 %v1722, %v3223
      %v3225 = vand.u32 %v3224, 4294901760
      %3226 = vmatmul.f32.gmra.mxu0 %v3225
      %v3227 = vpop.f32.mrf.mxu0
      %v3228 = vadd.f32 %v3079, %v3227
      %v3229 = vand.u32 %v1725, 4294901760
      %v3230 = vsub.f32 %v1725, %v3229
      %v3231 = vand.u32 %v3230, 4294901760
      %3232 = vmatmul.f32.gmra.mxu0 %v3231
      %v3233 = vpop.f32.mrf.mxu0
      %v3234 = vadd.f32 %v3084, %v3233
      %v3235 = vand.u32 %v1728, 4294901760
      %v3236 = vsub.f32 %v1728, %v3235
      %v3237 = vand.u32 %v3236, 4294901760
      %3238 = vmatmul.f32.gmra.mxu0 %v3237
      %v3239 = vpop.f32.mrf.mxu0
      %v3240 = vadd.f32 %v3089, %v3239
      %v3241 = vand.u32 %v1731, 4294901760
      %v3242 = vsub.f32 %v1731, %v3241
      %v3243 = vand.u32 %v3242, 4294901760
      %3244 = vmatmul.f32.gmra.mxu0 %v3243
      %v3245 = vpop.f32.mrf.mxu0
      %v3246 = vadd.f32 %v3094, %v3245
      %v3247 = vand.u32 %v1734, 4294901760
      %v3248 = vsub.f32 %v1734, %v3247
      %v3249 = vand.u32 %v3248, 4294901760
      %3250 = vmatmul.f32.gmra.mxu0 %v3249
      %v3251 = vpop.f32.mrf.mxu0
      %v3252 = vadd.f32 %v3099, %v3251
      %v3253 = vand.u32 %v1737, 4294901760
      %v3254 = vsub.f32 %v1737, %v3253
      %v3255 = vand.u32 %v3254, 4294901760
      %3256 = vmatmul.f32.gmra.mxu0 %v3255
      %v3257 = vpop.f32.mrf.mxu0
      %v3258 = vadd.f32 %v3104, %v3257
      %v3259 = vand.u32 %v1740, 4294901760
      %v3260 = vsub.f32 %v1740, %v3259
      %v3261 = vand.u32 %v3260, 4294901760
      %3262 = vmatmul.f32.gmra.mxu0 %v3261
      %v3263 = vpop.f32.mrf.mxu0
      %v3264 = vadd.f32 %v3109, %v3263
      %v3265 = vand.u32 %v1743, 4294901760
      %v3266 = vsub.f32 %v1743, %v3265
      %v3267 = vand.u32 %v3266, 4294901760
      %3268 = vmatmul.f32.gmra.mxu0 %v3267
      %v3269 = vpop.f32.mrf.mxu0
      %v3270 = vadd.f32 %v3114, %v3269
      %v3271 = vand.u32 %v1746, 4294901760
      %v3272 = vsub.f32 %v1746, %v3271
      %v3273 = vand.u32 %v3272, 4294901760
      %3274 = vmatmul.f32.gmra.mxu0 %v3273
      %v3275 = vpop.f32.mrf.mxu0
      %v3276 = vadd.f32 %v3119, %v3275
      %v3277 = vand.u32 %v1749, 4294901760
      %v3278 = vsub.f32 %v1749, %v3277
      %v3279 = vand.u32 %v3278, 4294901760
      %3280 = vmatmul.f32.gmra.mxu0 %v3279
      %v3281 = vpop.f32.mrf.mxu0
      %v3282 = vadd.f32 %v3124, %v3281
      %v3283 = vand.u32 %v1752, 4294901760
      %v3284 = vsub.f32 %v1752, %v3283
      %v3285 = vand.u32 %v3284, 4294901760
      %3286 = vmatmul.f32.gmra.mxu0 %v3285
      %v3287 = vpop.f32.mrf.mxu0
      %v3288 = vadd.f32 %v3129, %v3287
      %v3289 = vand.u32 %v1755, 4294901760
      %v3290 = vsub.f32 %v1755, %v3289
      %v3291 = vand.u32 %v3290, 4294901760
      %3292 = vmatmul.f32.gmra.mxu0 %v3291
      %v3293 = vpop.f32.mrf.mxu0
      %v3294 = vadd.f32 %v3134, %v3293
      %v3295 = vand.u32 %v1758, 4294901760
      %v3296 = vsub.f32 %v1758, %v3295
      %v3297 = vand.u32 %v3296, 4294901760
      %3298 = vmatmul.f32.gmra.mxu0 %v3297
      %v3299 = vpop.f32.mrf.mxu0
      %v3300 = vadd.f32 %v3139, %v3299
      %v3301 = vand.u32 %v1761, 4294901760
      %v3302 = vsub.f32 %v1761, %v3301
      %v3303 = vand.u32 %v3302, 4294901760
      %3304 = vmatmul.f32.gmra.mxu0 %v3303
      %v3305 = vpop.f32.mrf.mxu0
      %v3306 = vadd.f32 %v3144, %v3305
      %v3307 = vand.u32 %v1764, 4294901760
      %v3308 = vsub.f32 %v1764, %v3307
      %v3309 = vand.u32 %v3308, 4294901760
      %3310 = vmatmul.f32.gmra.mxu0 %v3309
      %v3311 = vpop.f32.mrf.mxu0
      %v3312 = vadd.f32 %v3149, %v3311
      %v3313 = vand.u32 %v1767, 4294901760
      %v3314 = vsub.f32 %v1767, %v3313
      %v3315 = vand.u32 %v3314, 4294901760
      %3316 = vmatmul.f32.gmra.mxu0 %v3315
      %v3317 = vpop.f32.mrf.mxu0
      %v3318 = vadd.f32 %v3154, %v3317
      %v3319 = vand.u32 %v1770, 4294901760
      %v3320 = vsub.f32 %v1770, %v3319
      %v3321 = vand.u32 %v3320, 4294901760
      %3322 = vmatmul.f32.gmra.mxu0 %v3321
      %v3323 = vpop.f32.mrf.mxu0
      %v3324 = vadd.f32 %v3159, %v3323
      %3325 = vdwg.mxu0
      %3326 = vmatpush.msra.mxu0 0.0
      %3327 = vmatpush.msra.mxu0 0.0
      %3328 = vmatpush.msra.mxu0 0.0
      %3329 = vmatpush.msra.mxu0 0.0
      %3330 = vmatpush.msra.mxu0 0.0
      %3331 = vmatpush.msra.mxu0 0.0
      %3332 = vmatpush.msra.mxu0 0.0
      %3333 = vmatpush.msra.mxu0 0.0
      %3334 = vmatpush.msra.mxu0 0.0
      %3335 = vmatpush.msra.mxu0 0.0
      %3336 = vmatpush.msra.mxu0 0.0
      %3337 = vmatpush.msra.mxu0 0.0
      %v3338 = vand.u32 %v461, 4294901760
      %v3339 = vsub.f32 %v461, %v3338
      %v3340 = vand.u32 %v3339, 4294901760
      %3341 = vmatpush.msra.mxu0 %v3340
      %v3342 = vand.u32 %v459, 4294901760
      %v3343 = vsub.f32 %v459, %v3342
      %v3344 = vand.u32 %v3343, 4294901760
      %3345 = vmatpush.msra.mxu0 %v3344
      %v3346 = vand.u32 %v457, 4294901760
      %v3347 = vsub.f32 %v457, %v3346
      %v3348 = vand.u32 %v3347, 4294901760
      %3349 = vmatpush.msra.mxu0 %v3348
      %v3350 = vand.u32 %v455, 4294901760
      %v3351 = vsub.f32 %v455, %v3350
      %v3352 = vand.u32 %v3351, 4294901760
      %3353 = vmatpush.msra.mxu0 %v3352
      %v3354 = vand.u32 %v1701, 4294901760
      %3355 = vmatmul.f32.gmra.mxu0 %v3354
      %v3356 = vpop.f32.mrf.mxu0
      %v3357 = vadd.f32 %v3186, %v3356
      %v3358 = vand.u32 %v1704, 4294901760
      %3359 = vmatmul.f32.gmra.mxu0 %v3358
      %v3360 = vpop.f32.mrf.mxu0
      %v3361 = vadd.f32 %v3192, %v3360
      %v3362 = vand.u32 %v1707, 4294901760
      %3363 = vmatmul.f32.gmra.mxu0 %v3362
      %v3364 = vpop.f32.mrf.mxu0
      %v3365 = vadd.f32 %v3198, %v3364
      %v3366 = vand.u32 %v1710, 4294901760
      %3367 = vmatmul.f32.gmra.mxu0 %v3366
      %v3368 = vpop.f32.mrf.mxu0
      %v3369 = vadd.f32 %v3204, %v3368
      %v3370 = vand.u32 %v1713, 4294901760
      %3371 = vmatmul.f32.gmra.mxu0 %v3370
      %v3372 = vpop.f32.mrf.mxu0
      %v3373 = vadd.f32 %v3210, %v3372
      %v3374 = vand.u32 %v1716, 4294901760
      %3375 = vmatmul.f32.gmra.mxu0 %v3374
      %v3376 = vpop.f32.mrf.mxu0
      %v3377 = vadd.f32 %v3216, %v3376
      %v3378 = vand.u32 %v1719, 4294901760
      %3379 = vmatmul.f32.gmra.mxu0 %v3378
      %v3380 = vpop.f32.mrf.mxu0
      %v3381 = vadd.f32 %v3222, %v3380
      %v3382 = vand.u32 %v1722, 4294901760
      %3383 = vmatmul.f32.gmra.mxu0 %v3382
      %v3384 = vpop.f32.mrf.mxu0
      %v3385 = vadd.f32 %v3228, %v3384
      %v3386 = vand.u32 %v1725, 4294901760
      %3387 = vmatmul.f32.gmra.mxu0 %v3386
      %v3388 = vpop.f32.mrf.mxu0
      %v3389 = vadd.f32 %v3234, %v3388
      %v3390 = vand.u32 %v1728, 4294901760
      %3391 = vmatmul.f32.gmra.mxu0 %v3390
      %v3392 = vpop.f32.mrf.mxu0
      %v3393 = vadd.f32 %v3240, %v3392
      %v3394 = vand.u32 %v1731, 4294901760
      %3395 = vmatmul.f32.gmra.mxu0 %v3394
      %v3396 = vpop.f32.mrf.mxu0
      %v3397 = vadd.f32 %v3246, %v3396
      %v3398 = vand.u32 %v1734, 4294901760
      %3399 = vmatmul.f32.gmra.mxu0 %v3398
      %v3400 = vpop.f32.mrf.mxu0
      %v3401 = vadd.f32 %v3252, %v3400
      %v3402 = vand.u32 %v1737, 4294901760
      %3403 = vmatmul.f32.gmra.mxu0 %v3402
      %v3404 = vpop.f32.mrf.mxu0
      %v3405 = vadd.f32 %v3258, %v3404
      %v3406 = vand.u32 %v1740, 4294901760
      %3407 = vmatmul.f32.gmra.mxu0 %v3406
      %v3408 = vpop.f32.mrf.mxu0
      %v3409 = vadd.f32 %v3264, %v3408
      %v3410 = vand.u32 %v1743, 4294901760
      %3411 = vmatmul.f32.gmra.mxu0 %v3410
      %v3412 = vpop.f32.mrf.mxu0
      %v3413 = vadd.f32 %v3270, %v3412
      %v3414 = vand.u32 %v1746, 4294901760
      %3415 = vmatmul.f32.gmra.mxu0 %v3414
      %v3416 = vpop.f32.mrf.mxu0
      %v3417 = vadd.f32 %v3276, %v3416
      %v3418 = vand.u32 %v1749, 4294901760
      %3419 = vmatmul.f32.gmra.mxu0 %v3418
      %v3420 = vpop.f32.mrf.mxu0
      %v3421 = vadd.f32 %v3282, %v3420
      %v3422 = vand.u32 %v1752, 4294901760
      %3423 = vmatmul.f32.gmra.mxu0 %v3422
      %v3424 = vpop.f32.mrf.mxu0
      %v3425 = vadd.f32 %v3288, %v3424
      %v3426 = vand.u32 %v1755, 4294901760
      %3427 = vmatmul.f32.gmra.mxu0 %v3426
      %v3428 = vpop.f32.mrf.mxu0
      %v3429 = vadd.f32 %v3294, %v3428
      %v3430 = vand.u32 %v1758, 4294901760
      %3431 = vmatmul.f32.gmra.mxu0 %v3430
      %v3432 = vpop.f32.mrf.mxu0
      %v3433 = vadd.f32 %v3300, %v3432
      %v3434 = vand.u32 %v1761, 4294901760
      %3435 = vmatmul.f32.gmra.mxu0 %v3434
      %v3436 = vpop.f32.mrf.mxu0
      %v3437 = vadd.f32 %v3306, %v3436
      %v3438 = vand.u32 %v1764, 4294901760
      %3439 = vmatmul.f32.gmra.mxu0 %v3438
      %v3440 = vpop.f32.mrf.mxu0
      %v3441 = vadd.f32 %v3312, %v3440
      %v3442 = vand.u32 %v1767, 4294901760
      %3443 = vmatmul.f32.gmra.mxu0 %v3442
      %v3444 = vpop.f32.mrf.mxu0
      %v3445 = vadd.f32 %v3318, %v3444
      %v3446 = vand.u32 %v1770, 4294901760
      %3447 = vmatmul.f32.gmra.mxu0 %v3446
      %v3448 = vpop.f32.mrf.mxu0
      %v3449 = vadd.f32 %v3324, %v3448
      %3450 = vdwg.mxu0
      %3451 = vmatpush.msra.mxu0 0.0
      %3452 = vmatpush.msra.mxu0 0.0
      %3453 = vmatpush.msra.mxu0 0.0
      %3454 = vmatpush.msra.mxu0 0.0
      %3455 = vmatpush.msra.mxu0 0.0
      %3456 = vmatpush.msra.mxu0 0.0
      %3457 = vmatpush.msra.mxu0 0.0
      %3458 = vmatpush.msra.mxu0 0.0
      %3459 = vmatpush.msra.mxu0 0.0
      %3460 = vmatpush.msra.mxu0 0.0
      %3461 = vmatpush.msra.mxu0 0.0
      %3462 = vmatpush.msra.mxu0 0.0
      %v3463 = vand.u32 %v461, 4294901760
      %3464 = vmatpush.msra.mxu0 %v3463
      %v3465 = vand.u32 %v459, 4294901760
      %3466 = vmatpush.msra.mxu0 %v3465
      %v3467 = vand.u32 %v457, 4294901760
      %3468 = vmatpush.msra.mxu0 %v3467
      %v3469 = vand.u32 %v455, 4294901760
      %3470 = vmatpush.msra.mxu0 %v3469
      %v3471 = vand.u32 %v1701, 4294901760
      %3472 = vmatmul.f32.gmra.mxu0 %v3471
      %v3473 = vpop.f32.mrf.mxu0
      %v3474 = vadd.f32 %v3357, %v3473
      %v3475 = vand.u32 %v1704, 4294901760
      %3476 = vmatmul.f32.gmra.mxu0 %v3475
      %v3477 = vpop.f32.mrf.mxu0
      %v3478 = vadd.f32 %v3361, %v3477
      %v3479 = vand.u32 %v1707, 4294901760
      %3480 = vmatmul.f32.gmra.mxu0 %v3479
      %v3481 = vpop.f32.mrf.mxu0
      %v3482 = vadd.f32 %v3365, %v3481
      %v3483 = vand.u32 %v1710, 4294901760
      %3484 = vmatmul.f32.gmra.mxu0 %v3483
      %v3485 = vpop.f32.mrf.mxu0
      %v3486 = vadd.f32 %v3369, %v3485
      %v3487 = vand.u32 %v1713, 4294901760
      %3488 = vmatmul.f32.gmra.mxu0 %v3487
      %v3489 = vpop.f32.mrf.mxu0
      %v3490 = vadd.f32 %v3373, %v3489
      %v3491 = vand.u32 %v1716, 4294901760
      %3492 = vmatmul.f32.gmra.mxu0 %v3491
      %v3493 = vpop.f32.mrf.mxu0
      %v3494 = vadd.f32 %v3377, %v3493
      %v3495 = vand.u32 %v1719, 4294901760
      %3496 = vmatmul.f32.gmra.mxu0 %v3495
      %v3497 = vpop.f32.mrf.mxu0
      %v3498 = vadd.f32 %v3381, %v3497
      %v3499 = vand.u32 %v1722, 4294901760
      %3500 = vmatmul.f32.gmra.mxu0 %v3499
      %v3501 = vpop.f32.mrf.mxu0
      %v3502 = vadd.f32 %v3385, %v3501
      %v3503 = vand.u32 %v1725, 4294901760
      %3504 = vmatmul.f32.gmra.mxu0 %v3503
      %v3505 = vpop.f32.mrf.mxu0
      %v3506 = vadd.f32 %v3389, %v3505
      %v3507 = vand.u32 %v1728, 4294901760
      %3508 = vmatmul.f32.gmra.mxu0 %v3507
      %v3509 = vpop.f32.mrf.mxu0
      %v3510 = vadd.f32 %v3393, %v3509
      %v3511 = vand.u32 %v1731, 4294901760
      %3512 = vmatmul.f32.gmra.mxu0 %v3511
      %v3513 = vpop.f32.mrf.mxu0
      %v3514 = vadd.f32 %v3397, %v3513
      %v3515 = vand.u32 %v1734, 4294901760
      %3516 = vmatmul.f32.gmra.mxu0 %v3515
      %v3517 = vpop.f32.mrf.mxu0
      %v3518 = vadd.f32 %v3401, %v3517
      %v3519 = vand.u32 %v1737, 4294901760
      %3520 = vmatmul.f32.gmra.mxu0 %v3519
      %v3521 = vpop.f32.mrf.mxu0
      %v3522 = vadd.f32 %v3405, %v3521
      %v3523 = vand.u32 %v1740, 4294901760
      %3524 = vmatmul.f32.gmra.mxu0 %v3523
      %v3525 = vpop.f32.mrf.mxu0
      %v3526 = vadd.f32 %v3409, %v3525
      %v3527 = vand.u32 %v1743, 4294901760
      %3528 = vmatmul.f32.gmra.mxu0 %v3527
      %v3529 = vpop.f32.mrf.mxu0
      %v3530 = vadd.f32 %v3413, %v3529
      %v3531 = vand.u32 %v1746, 4294901760
      %3532 = vmatmul.f32.gmra.mxu0 %v3531
      %v3533 = vpop.f32.mrf.mxu0
      %v3534 = vadd.f32 %v3417, %v3533
      %v3535 = vand.u32 %v1749, 4294901760
      %3536 = vmatmul.f32.gmra.mxu0 %v3535
      %v3537 = vpop.f32.mrf.mxu0
      %v3538 = vadd.f32 %v3421, %v3537
      %v3539 = vand.u32 %v1752, 4294901760
      %3540 = vmatmul.f32.gmra.mxu0 %v3539
      %v3541 = vpop.f32.mrf.mxu0
      %v3542 = vadd.f32 %v3425, %v3541
      %v3543 = vand.u32 %v1755, 4294901760
      %3544 = vmatmul.f32.gmra.mxu0 %v3543
      %v3545 = vpop.f32.mrf.mxu0
      %v3546 = vadd.f32 %v3429, %v3545
      %v3547 = vand.u32 %v1758, 4294901760
      %3548 = vmatmul.f32.gmra.mxu0 %v3547
      %v3549 = vpop.f32.mrf.mxu0
      %v3550 = vadd.f32 %v3433, %v3549
      %v3551 = vand.u32 %v1761, 4294901760
      %3552 = vmatmul.f32.gmra.mxu0 %v3551
      %v3553 = vpop.f32.mrf.mxu0
      %v3554 = vadd.f32 %v3437, %v3553
      %v3555 = vand.u32 %v1764, 4294901760
      %3556 = vmatmul.f32.gmra.mxu0 %v3555
      %v3557 = vpop.f32.mrf.mxu0
      %v3558 = vadd.f32 %v3441, %v3557
      %v3559 = vand.u32 %v1767, 4294901760
      %3560 = vmatmul.f32.gmra.mxu0 %v3559
      %v3561 = vpop.f32.mrf.mxu0
      %v3562 = vadd.f32 %v3445, %v3561
      %v3563 = vand.u32 %v1770, 4294901760
      %3564 = vmatmul.f32.gmra.mxu0 %v3563
      %v3565 = vpop.f32.mrf.mxu0
      %v3566 = vadd.f32 %v3449, %v3565
      %3567 = vdwg.mxu0
      %3569 = vst [vmem:[#allocation1] ss:$2 sm:$0xff] %v462
      %v3570 = vld.sshfl [vmem:[#allocation1] sm:$0xff pattern:$0x75316420]
      %v3571 = vld.sshfl [vmem:[#allocation1 + $0x8] sm:$0xff pattern:$0x75316420]
      %3574 = vmatpush.xpose.msra.mxu0 0.0
      %3575 = vmatpush.xpose.msra.mxu0 0.0
      %3576 = vmatpush.xpose.msra.mxu0 0.0
      %3577 = vmatpush.xpose.msra.mxu0 0.0
      %3578 = vmatpush.xpose.msra.mxu0 0.0
      %3579 = vmatpush.xpose.msra.mxu0 0.0
      %3580 = vmatpush.xpose.msra.mxu0 0.0
      %3581 = vmatpush.xpose.msra.mxu0 0.0
      %3582 = vmatpush.xpose.msra.mxu0 0.0
      %3583 = vmatpush.xpose.msra.mxu0 0.0
      %3584 = vmatpush.xpose.msra.mxu0 0.0
      %3585 = vmatpush.xpose.msra.mxu0 0.0
      %3586 = vmatpush.xpose.msra.mxu0 0.0
      %3587 = vmatpush.xpose.msra.mxu0 0.0
      %3588 = vmatpush.xpose.msra.mxu0 0.0
      %v3589 = vand.u32 %v3570, 4294901760
      %3590 = vmatpush.xpose.msra.mxu0 %v3589
      %v3591 = vand.u32 %v454, 4294901760
      %v3592 = vsub.f32 %v454, %v3591
      %v3593 = vand.u32 %v3592, 4294901760
      %v3594 = vsub.f32 %v3592, %v3593
      %v3595 = vand.u32 %v3594, 4294901760
      %3596 = vmatmul.f32.gmra.mxu0 %v3595
      %v3597 = vpop.f32.mrf.mxu0
      %v3598 = vadd.f32 0.0, %v3597
      %v3599 = vand.u32 %v456, 4294901760
      %v3600 = vsub.f32 %v456, %v3599
      %v3601 = vand.u32 %v3600, 4294901760
      %v3602 = vsub.f32 %v3600, %v3601
      %v3603 = vand.u32 %v3602, 4294901760
      %3604 = vmatmul.f32.gmra.mxu0 %v3603
      %v3605 = vpop.f32.mrf.mxu0
      %v3606 = vadd.f32 0.0, %v3605
      %v3607 = vand.u32 %v458, 4294901760
      %v3608 = vsub.f32 %v458, %v3607
      %v3609 = vand.u32 %v3608, 4294901760
      %v3610 = vsub.f32 %v3608, %v3609
      %v3611 = vand.u32 %v3610, 4294901760
      %3612 = vmatmul.f32.gmra.mxu0 %v3611
      %v3613 = vpop.f32.mrf.mxu0
      %v3614 = vadd.f32 0.0, %v3613
      %v3615 = vand.u32 %v460, 4294901760
      %v3616 = vsub.f32 %v460, %v3615
      %v3617 = vand.u32 %v3616, 4294901760
      %v3618 = vsub.f32 %v3616, %v3617
      %v3619 = vand.u32 %v3618, 4294901760
      %3620 = vmatmul.f32.gmra.mxu0 %v3619
      %v3621 = vpop.f32.mrf.mxu0
      %v3622 = vadd.f32 0.0, %v3621
      %3623 = vdwg.mxu0
      %3624 = vmatpush.xpose.msra.mxu0 0.0
      %3625 = vmatpush.xpose.msra.mxu0 0.0
      %3626 = vmatpush.xpose.msra.mxu0 0.0
      %3627 = vmatpush.xpose.msra.mxu0 0.0
      %3628 = vmatpush.xpose.msra.mxu0 0.0
      %3629 = vmatpush.xpose.msra.mxu0 0.0
      %3630 = vmatpush.xpose.msra.mxu0 0.0
      %3631 = vmatpush.xpose.msra.mxu0 0.0
      %3632 = vmatpush.xpose.msra.mxu0 0.0
      %3633 = vmatpush.xpose.msra.mxu0 0.0
      %3634 = vmatpush.xpose.msra.mxu0 0.0
      %3635 = vmatpush.xpose.msra.mxu0 0.0
      %3636 = vmatpush.xpose.msra.mxu0 0.0
      %3637 = vmatpush.xpose.msra.mxu0 0.0
      %3638 = vmatpush.xpose.msra.mxu0 0.0
      %v3639 = vand.u32 %v3570, 4294901760
      %v3640 = vsub.f32 %v3570, %v3639
      %v3641 = vand.u32 %v3640, 4294901760
      %v3642 = vsub.f32 %v3640, %v3641
      %v3643 = vand.u32 %v3642, 4294901760
      %3644 = vmatpush.xpose.msra.mxu0 %v3643
      %v3645 = vand.u32 %v454, 4294901760
      %3646 = vmatmul.f32.gmra.mxu0 %v3645
      %v3647 = vpop.f32.mrf.mxu0
      %v3648 = vadd.f32 %v3598, %v3647
      %v3649 = vand.u32 %v456, 4294901760
      %3650 = vmatmul.f32.gmra.mxu0 %v3649
      %v3651 = vpop.f32.mrf.mxu0
      %v3652 = vadd.f32 %v3606, %v3651
      %v3653 = vand.u32 %v458, 4294901760
      %3654 = vmatmul.f32.gmra.mxu0 %v3653
      %v3655 = vpop.f32.mrf.mxu0
      %v3656 = vadd.f32 %v3614, %v3655
      %v3657 = vand.u32 %v460, 4294901760
      %3658 = vmatmul.f32.gmra.mxu0 %v3657
      %v3659 = vpop.f32.mrf.mxu0
      %v3660 = vadd.f32 %v3622, %v3659
      %3661 = vdwg.mxu0
      %3662 = vmatpush.xpose.msra.mxu0 0.0
      %3663 = vmatpush.xpose.msra.mxu0 0.0
      %3664 = vmatpush.xpose.msra.mxu0 0.0
      %3665 = vmatpush.xpose.msra.mxu0 0.0
      %3666 = vmatpush.xpose.msra.mxu0 0.0
      %3667 = vmatpush.xpose.msra.mxu0 0.0
      %3668 = vmatpush.xpose.msra.mxu0 0.0
      %3669 = vmatpush.xpose.msra.mxu0 0.0
      %3670 = vmatpush.xpose.msra.mxu0 0.0
      %3671 = vmatpush.xpose.msra.mxu0 0.0
      %3672 = vmatpush.xpose.msra.mxu0 0.0
      %3673 = vmatpush.xpose.msra.mxu0 0.0
      %3674 = vmatpush.xpose.msra.mxu0 0.0
      %3675 = vmatpush.xpose.msra.mxu0 0.0
      %3676 = vmatpush.xpose.msra.mxu0 0.0
      %v3677 = vand.u32 %v3570, 4294901760
      %v3678 = vsub.f32 %v3570, %v3677
      %3679 = vmatpush.xpose.msra.mxu0 %v3678
      %v3680 = vand.u32 %v454, 4294901760
      %v3681 = vsub.f32 %v454, %v3680
      %3682 = vmatmul.f32.gmra.mxu0 %v3681
      %v3683 = vpop.f32.mrf.mxu0
      %v3684 = vadd.f32 %v3648, %v3683
      %v3685 = vand.u32 %v456, 4294901760
      %v3686 = vsub.f32 %v456, %v3685
      %3687 = vmatmul.f32.gmra.mxu0 %v3686
      %v3688 = vpop.f32.mrf.mxu0
      %v3689 = vadd.f32 %v3652, %v3688
      %v3690 = vand.u32 %v458, 4294901760
      %v3691 = vsub.f32 %v458, %v3690
      %3692 = vmatmul.f32.gmra.mxu0 %v3691
      %v3693 = vpop.f32.mrf.mxu0
      %v3694 = vadd.f32 %v3656, %v3693
      %v3695 = vand.u32 %v460, 4294901760
      %v3696 = vsub.f32 %v460, %v3695
      %3697 = vmatmul.f32.gmra.mxu0 %v3696
      %v3698 = vpop.f32.mrf.mxu0
      %v3699 = vadd.f32 %v3660, %v3698
      %3700 = vdwg.mxu0
      %3701 = vmatpush.xpose.msra.mxu0 0.0
      %3702 = vmatpush.xpose.msra.mxu0 0.0
      %3703 = vmatpush.xpose.msra.mxu0 0.0
      %3704 = vmatpush.xpose.msra.mxu0 0.0
      %3705 = vmatpush.xpose.msra.mxu0 0.0
      %3706 = vmatpush.xpose.msra.mxu0 0.0
      %3707 = vmatpush.xpose.msra.mxu0 0.0
      %3708 = vmatpush.xpose.msra.mxu0 0.0
      %3709 = vmatpush.xpose.msra.mxu0 0.0
      %3710 = vmatpush.xpose.msra.mxu0 0.0
      %3711 = vmatpush.xpose.msra.mxu0 0.0
      %3712 = vmatpush.xpose.msra.mxu0 0.0
      %3713 = vmatpush.xpose.msra.mxu0 0.0
      %3714 = vmatpush.xpose.msra.mxu0 0.0
      %3715 = vmatpush.xpose.msra.mxu0 0.0
      %v3716 = vand.u32 %v3570, 4294901760
      %3717 = vmatpush.xpose.msra.mxu0 %v3716
      %v3718 = vand.u32 %v454, 4294901760
      %v3719 = vsub.f32 %v454, %v3718
      %v3720 = vand.u32 %v3719, 4294901760
      %3721 = vmatmul.f32.gmra.mxu0 %v3720
      %v3722 = vpop.f32.mrf.mxu0
      %v3723 = vadd.f32 %v3684, %v3722
      %v3724 = vand.u32 %v456, 4294901760
      %v3725 = vsub.f32 %v456, %v3724
      %v3726 = vand.u32 %v3725, 4294901760
      %3727 = vmatmul.f32.gmra.mxu0 %v3726
      %v3728 = vpop.f32.mrf.mxu0
      %v3729 = vadd.f32 %v3689, %v3728
      %v3730 = vand.u32 %v458, 4294901760
      %v3731 = vsub.f32 %v458, %v3730
      %v3732 = vand.u32 %v3731, 4294901760
      %3733 = vmatmul.f32.gmra.mxu0 %v3732
      %v3734 = vpop.f32.mrf.mxu0
      %v3735 = vadd.f32 %v3694, %v3734
      %v3736 = vand.u32 %v460, 4294901760
      %v3737 = vsub.f32 %v460, %v3736
      %v3738 = vand.u32 %v3737, 4294901760
      %3739 = vmatmul.f32.gmra.mxu0 %v3738
      %v3740 = vpop.f32.mrf.mxu0
      %v3741 = vadd.f32 %v3699, %v3740
      %3742 = vdwg.mxu0
      %3743 = vmatpush.xpose.msra.mxu0 0.0
      %3744 = vmatpush.xpose.msra.mxu0 0.0
      %3745 = vmatpush.xpose.msra.mxu0 0.0
      %3746 = vmatpush.xpose.msra.mxu0 0.0
      %3747 = vmatpush.xpose.msra.mxu0 0.0
      %3748 = vmatpush.xpose.msra.mxu0 0.0
      %3749 = vmatpush.xpose.msra.mxu0 0.0
      %3750 = vmatpush.xpose.msra.mxu0 0.0
      %3751 = vmatpush.xpose.msra.mxu0 0.0
      %3752 = vmatpush.xpose.msra.mxu0 0.0
      %3753 = vmatpush.xpose.msra.mxu0 0.0
      %3754 = vmatpush.xpose.msra.mxu0 0.0
      %3755 = vmatpush.xpose.msra.mxu0 0.0
      %3756 = vmatpush.xpose.msra.mxu0 0.0
      %3757 = vmatpush.xpose.msra.mxu0 0.0
      %v3758 = vand.u32 %v3570, 4294901760
      %v3759 = vsub.f32 %v3570, %v3758
      %v3760 = vand.u32 %v3759, 4294901760
      %3761 = vmatpush.xpose.msra.mxu0 %v3760
      %v3762 = vand.u32 %v454, 4294901760
      %3763 = vmatmul.f32.gmra.mxu0 %v3762
      %v3764 = vpop.f32.mrf.mxu0
      %v3765 = vadd.f32 %v3723, %v3764
      %v3766 = vand.u32 %v456, 4294901760
      %3767 = vmatmul.f32.gmra.mxu0 %v3766
      %v3768 = vpop.f32.mrf.mxu0
      %v3769 = vadd.f32 %v3729, %v3768
      %v3770 = vand.u32 %v458, 4294901760
      %3771 = vmatmul.f32.gmra.mxu0 %v3770
      %v3772 = vpop.f32.mrf.mxu0
      %v3773 = vadd.f32 %v3735, %v3772
      %v3774 = vand.u32 %v460, 4294901760
      %3775 = vmatmul.f32.gmra.mxu0 %v3774
      %v3776 = vpop.f32.mrf.mxu0
      %v3777 = vadd.f32 %v3741, %v3776
      %3778 = vdwg.mxu0
      %3779 = vmatpush.xpose.msra.mxu0 0.0
      %3780 = vmatpush.xpose.msra.mxu0 0.0
      %3781 = vmatpush.xpose.msra.mxu0 0.0
      %3782 = vmatpush.xpose.msra.mxu0 0.0
      %3783 = vmatpush.xpose.msra.mxu0 0.0
      %3784 = vmatpush.xpose.msra.mxu0 0.0
      %3785 = vmatpush.xpose.msra.mxu0 0.0
      %3786 = vmatpush.xpose.msra.mxu0 0.0
      %3787 = vmatpush.xpose.msra.mxu0 0.0
      %3788 = vmatpush.xpose.msra.mxu0 0.0
      %3789 = vmatpush.xpose.msra.mxu0 0.0
      %3790 = vmatpush.xpose.msra.mxu0 0.0
      %3791 = vmatpush.xpose.msra.mxu0 0.0
      %3792 = vmatpush.xpose.msra.mxu0 0.0
      %3793 = vmatpush.xpose.msra.mxu0 0.0
      %v3794 = vand.u32 %v3570, 4294901760
      %3795 = vmatpush.xpose.msra.mxu0 %v3794
      %v3796 = vand.u32 %v454, 4294901760
      %3797 = vmatmul.f32.gmra.mxu0 %v3796
      %v3798 = vpop.f32.mrf.mxu0
      %v3799 = vadd.f32 %v3765, %v3798
      %v3800 = vand.u32 %v456, 4294901760
      %3801 = vmatmul.f32.gmra.mxu0 %v3800
      %v3802 = vpop.f32.mrf.mxu0
      %v3803 = vadd.f32 %v3769, %v3802
      %v3804 = vand.u32 %v458, 4294901760
      %3805 = vmatmul.f32.gmra.mxu0 %v3804
      %v3806 = vpop.f32.mrf.mxu0
      %v3807 = vadd.f32 %v3773, %v3806
      %v3808 = vand.u32 %v460, 4294901760
      %3809 = vmatmul.f32.gmra.mxu0 %v3808
      %v3810 = vpop.f32.mrf.mxu0
      %v3811 = vadd.f32 %v3777, %v3810
      %3812 = vdwg.mxu0
      %3813 = vmatpush.xpose.msra.mxu0 0.0
      %3814 = vmatpush.xpose.msra.mxu0 0.0
      %3815 = vmatpush.xpose.msra.mxu0 0.0
      %3816 = vmatpush.xpose.msra.mxu0 0.0
      %3817 = vmatpush.xpose.msra.mxu0 0.0
      %3818 = vmatpush.xpose.msra.mxu0 0.0
      %3819 = vmatpush.xpose.msra.mxu0 0.0
      %3820 = vmatpush.xpose.msra.mxu0 0.0
      %3821 = vmatpush.xpose.msra.mxu0 0.0
      %3822 = vmatpush.xpose.msra.mxu0 0.0
      %3823 = vmatpush.xpose.msra.mxu0 0.0
      %3824 = vmatpush.xpose.msra.mxu0 0.0
      %3825 = vmatpush.xpose.msra.mxu0 0.0
      %3826 = vmatpush.xpose.msra.mxu0 0.0
      %3827 = vmatpush.xpose.msra.mxu0 0.0
      %v3828 = vand.u32 %v3571, 4294901760
      %3829 = vmatpush.xpose.msra.mxu0 %v3828
      %v3830 = vand.u32 %v455, 4294901760
      %v3831 = vsub.f32 %v455, %v3830
      %v3832 = vand.u32 %v3831, 4294901760
      %v3833 = vsub.f32 %v3831, %v3832
      %v3834 = vand.u32 %v3833, 4294901760
      %3835 = vmatmul.f32.gmra.mxu0 %v3834
      %v3836 = vpop.f32.mrf.mxu0
      %v3837 = vadd.f32 %v3799, %v3836
      %v3838 = vand.u32 %v457, 4294901760
      %v3839 = vsub.f32 %v457, %v3838
      %v3840 = vand.u32 %v3839, 4294901760
      %v3841 = vsub.f32 %v3839, %v3840
      %v3842 = vand.u32 %v3841, 4294901760
      %3843 = vmatmul.f32.gmra.mxu0 %v3842
      %v3844 = vpop.f32.mrf.mxu0
      %v3845 = vadd.f32 %v3803, %v3844
      %v3846 = vand.u32 %v459, 4294901760
      %v3847 = vsub.f32 %v459, %v3846
      %v3848 = vand.u32 %v3847, 4294901760
      %v3849 = vsub.f32 %v3847, %v3848
      %v3850 = vand.u32 %v3849, 4294901760
      %3851 = vmatmul.f32.gmra.mxu0 %v3850
      %v3852 = vpop.f32.mrf.mxu0
      %v3853 = vadd.f32 %v3807, %v3852
      %v3854 = vand.u32 %v461, 4294901760
      %v3855 = vsub.f32 %v461, %v3854
      %v3856 = vand.u32 %v3855, 4294901760
      %v3857 = vsub.f32 %v3855, %v3856
      %v3858 = vand.u32 %v3857, 4294901760
      %3859 = vmatmul.f32.gmra.mxu0 %v3858
      %v3860 = vpop.f32.mrf.mxu0
      %v3861 = vadd.f32 %v3811, %v3860
      %3862 = vdwg.mxu0
      %3863 = vmatpush.xpose.msra.mxu0 0.0
      %3864 = vmatpush.xpose.msra.mxu0 0.0
      %3865 = vmatpush.xpose.msra.mxu0 0.0
      %3866 = vmatpush.xpose.msra.mxu0 0.0
      %3867 = vmatpush.xpose.msra.mxu0 0.0
      %3868 = vmatpush.xpose.msra.mxu0 0.0
      %3869 = vmatpush.xpose.msra.mxu0 0.0
      %3870 = vmatpush.xpose.msra.mxu0 0.0
      %3871 = vmatpush.xpose.msra.mxu0 0.0
      %3872 = vmatpush.xpose.msra.mxu0 0.0
      %3873 = vmatpush.xpose.msra.mxu0 0.0
      %3874 = vmatpush.xpose.msra.mxu0 0.0
      %3875 = vmatpush.xpose.msra.mxu0 0.0
      %3876 = vmatpush.xpose.msra.mxu0 0.0
      %3877 = vmatpush.xpose.msra.mxu0 0.0
      %v3878 = vand.u32 %v3571, 4294901760
      %v3879 = vsub.f32 %v3571, %v3878
      %v3880 = vand.u32 %v3879, 4294901760
      %v3881 = vsub.f32 %v3879, %v3880
      %v3882 = vand.u32 %v3881, 4294901760
      %3883 = vmatpush.xpose.msra.mxu0 %v3882
      %v3884 = vand.u32 %v455, 4294901760
      %3885 = vmatmul.f32.gmra.mxu0 %v3884
      %v3886 = vpop.f32.mrf.mxu0
      %v3887 = vadd.f32 %v3837, %v3886
      %v3888 = vand.u32 %v457, 4294901760
      %3889 = vmatmul.f32.gmra.mxu0 %v3888
      %v3890 = vpop.f32.mrf.mxu0
      %v3891 = vadd.f32 %v3845, %v3890
      %v3892 = vand.u32 %v459, 4294901760
      %3893 = vmatmul.f32.gmra.mxu0 %v3892
      %v3894 = vpop.f32.mrf.mxu0
      %v3895 = vadd.f32 %v3853, %v3894
      %v3896 = vand.u32 %v461, 4294901760
      %3897 = vmatmul.f32.gmra.mxu0 %v3896
      %v3898 = vpop.f32.mrf.mxu0
      %v3899 = vadd.f32 %v3861, %v3898
      %3900 = vdwg.mxu0
      %3901 = vmatpush.xpose.msra.mxu0 0.0
      %3902 = vmatpush.xpose.msra.mxu0 0.0
      %3903 = vmatpush.xpose.msra.mxu0 0.0
      %3904 = vmatpush.xpose.msra.mxu0 0.0
      %3905 = vmatpush.xpose.msra.mxu0 0.0
      %3906 = vmatpush.xpose.msra.mxu0 0.0
      %3907 = vmatpush.xpose.msra.mxu0 0.0
      %3908 = vmatpush.xpose.msra.mxu0 0.0
      %3909 = vmatpush.xpose.msra.mxu0 0.0
      %3910 = vmatpush.xpose.msra.mxu0 0.0
      %3911 = vmatpush.xpose.msra.mxu0 0.0
      %3912 = vmatpush.xpose.msra.mxu0 0.0
      %3913 = vmatpush.xpose.msra.mxu0 0.0
      %3914 = vmatpush.xpose.msra.mxu0 0.0
      %3915 = vmatpush.xpose.msra.mxu0 0.0
      %v3916 = vand.u32 %v3571, 4294901760
      %v3917 = vsub.f32 %v3571, %v3916
      %3918 = vmatpush.xpose.msra.mxu0 %v3917
      %v3919 = vand.u32 %v455, 4294901760
      %v3920 = vsub.f32 %v455, %v3919
      %3921 = vmatmul.f32.gmra.mxu0 %v3920
      %v3922 = vpop.f32.mrf.mxu0
      %v3923 = vadd.f32 %v3887, %v3922
      %v3924 = vand.u32 %v457, 4294901760
      %v3925 = vsub.f32 %v457, %v3924
      %3926 = vmatmul.f32.gmra.mxu0 %v3925
      %v3927 = vpop.f32.mrf.mxu0
      %v3928 = vadd.f32 %v3891, %v3927
      %v3929 = vand.u32 %v459, 4294901760
      %v3930 = vsub.f32 %v459, %v3929
      %3931 = vmatmul.f32.gmra.mxu0 %v3930
      %v3932 = vpop.f32.mrf.mxu0
      %v3933 = vadd.f32 %v3895, %v3932
      %v3934 = vand.u32 %v461, 4294901760
      %v3935 = vsub.f32 %v461, %v3934
      %3936 = vmatmul.f32.gmra.mxu0 %v3935
      %v3937 = vpop.f32.mrf.mxu0
      %v3938 = vadd.f32 %v3899, %v3937
      %3939 = vdwg.mxu0
      %3940 = vmatpush.xpose.msra.mxu0 0.0
      %3941 = vmatpush.xpose.msra.mxu0 0.0
      %3942 = vmatpush.xpose.msra.mxu0 0.0
      %3943 = vmatpush.xpose.msra.mxu0 0.0
      %3944 = vmatpush.xpose.msra.mxu0 0.0
      %3945 = vmatpush.xpose.msra.mxu0 0.0
      %3946 = vmatpush.xpose.msra.mxu0 0.0
      %3947 = vmatpush.xpose.msra.mxu0 0.0
      %3948 = vmatpush.xpose.msra.mxu0 0.0
      %3949 = vmatpush.xpose.msra.mxu0 0.0
      %3950 = vmatpush.xpose.msra.mxu0 0.0
      %3951 = vmatpush.xpose.msra.mxu0 0.0
      %3952 = vmatpush.xpose.msra.mxu0 0.0
      %3953 = vmatpush.xpose.msra.mxu0 0.0
      %3954 = vmatpush.xpose.msra.mxu0 0.0
      %v3955 = vand.u32 %v3571, 4294901760
      %3956 = vmatpush.xpose.msra.mxu0 %v3955
      %v3957 = vand.u32 %v455, 4294901760
      %v3958 = vsub.f32 %v455, %v3957
      %v3959 = vand.u32 %v3958, 4294901760
      %3960 = vmatmul.f32.gmra.mxu0 %v3959
      %v3961 = vpop.f32.mrf.mxu0
      %v3962 = vadd.f32 %v3923, %v3961
      %v3963 = vand.u32 %v457, 4294901760
      %v3964 = vsub.f32 %v457, %v3963
      %v3965 = vand.u32 %v3964, 4294901760
      %3966 = vmatmul.f32.gmra.mxu0 %v3965
      %v3967 = vpop.f32.mrf.mxu0
      %v3968 = vadd.f32 %v3928, %v3967
      %v3969 = vand.u32 %v459, 4294901760
      %v3970 = vsub.f32 %v459, %v3969
      %v3971 = vand.u32 %v3970, 4294901760
      %3972 = vmatmul.f32.gmra.mxu0 %v3971
      %v3973 = vpop.f32.mrf.mxu0
      %v3974 = vadd.f32 %v3933, %v3973
      %v3975 = vand.u32 %v461, 4294901760
      %v3976 = vsub.f32 %v461, %v3975
      %v3977 = vand.u32 %v3976, 4294901760
      %3978 = vmatmul.f32.gmra.mxu0 %v3977
      %v3979 = vpop.f32.mrf.mxu0
      %v3980 = vadd.f32 %v3938, %v3979
      %3981 = vdwg.mxu0
      %3982 = vmatpush.xpose.msra.mxu0 0.0
      %3983 = vmatpush.xpose.msra.mxu0 0.0
      %3984 = vmatpush.xpose.msra.mxu0 0.0
      %3985 = vmatpush.xpose.msra.mxu0 0.0
      %3986 = vmatpush.xpose.msra.mxu0 0.0
      %3987 = vmatpush.xpose.msra.mxu0 0.0
      %3988 = vmatpush.xpose.msra.mxu0 0.0
      %3989 = vmatpush.xpose.msra.mxu0 0.0
      %3990 = vmatpush.xpose.msra.mxu0 0.0
      %3991 = vmatpush.xpose.msra.mxu0 0.0
      %3992 = vmatpush.xpose.msra.mxu0 0.0
      %3993 = vmatpush.xpose.msra.mxu0 0.0
      %3994 = vmatpush.xpose.msra.mxu0 0.0
      %3995 = vmatpush.xpose.msra.mxu0 0.0
      %3996 = vmatpush.xpose.msra.mxu0 0.0
      %v3997 = vand.u32 %v3571, 4294901760
      %v3998 = vsub.f32 %v3571, %v3997
      %v3999 = vand.u32 %v3998, 4294901760
      %4000 = vmatpush.xpose.msra.mxu0 %v3999
      %v4001 = vand.u32 %v455, 4294901760
      %4002 = vmatmul.f32.gmra.mxu0 %v4001
      %v4003 = vpop.f32.mrf.mxu0
      %v4004 = vadd.f32 %v3962, %v4003
      %v4005 = vand.u32 %v457, 4294901760
      %4006 = vmatmul.f32.gmra.mxu0 %v4005
      %v4007 = vpop.f32.mrf.mxu0
      %v4008 = vadd.f32 %v3968, %v4007
      %v4009 = vand.u32 %v459, 4294901760
      %4010 = vmatmul.f32.gmra.mxu0 %v4009
      %v4011 = vpop.f32.mrf.mxu0
      %v4012 = vadd.f32 %v3974, %v4011
      %v4013 = vand.u32 %v461, 4294901760
      %4014 = vmatmul.f32.gmra.mxu0 %v4013
      %v4015 = vpop.f32.mrf.mxu0
      %v4016 = vadd.f32 %v3980, %v4015
      %4017 = vdwg.mxu0
      %4018 = vmatpush.xpose.msra.mxu0 0.0
      %4019 = vmatpush.xpose.msra.mxu0 0.0
      %4020 = vmatpush.xpose.msra.mxu0 0.0
      %4021 = vmatpush.xpose.msra.mxu0 0.0
      %4022 = vmatpush.xpose.msra.mxu0 0.0
      %4023 = vmatpush.xpose.msra.mxu0 0.0
      %4024 = vmatpush.xpose.msra.mxu0 0.0
      %4025 = vmatpush.xpose.msra.mxu0 0.0
      %4026 = vmatpush.xpose.msra.mxu0 0.0
      %4027 = vmatpush.xpose.msra.mxu0 0.0
      %4028 = vmatpush.xpose.msra.mxu0 0.0
      %4029 = vmatpush.xpose.msra.mxu0 0.0
      %4030 = vmatpush.xpose.msra.mxu0 0.0
      %4031 = vmatpush.xpose.msra.mxu0 0.0
      %4032 = vmatpush.xpose.msra.mxu0 0.0
      %v4033 = vand.u32 %v3571, 4294901760
      %4034 = vmatpush.xpose.msra.mxu0 %v4033
      %v4035 = vand.u32 %v455, 4294901760
      %4036 = vmatmul.f32.gmra.mxu0 %v4035
      %v4037 = vpop.f32.mrf.mxu0
      %v4038 = vadd.f32 %v4004, %v4037
      %v4039 = vand.u32 %v457, 4294901760
      %4040 = vmatmul.f32.gmra.mxu0 %v4039
      %v4041 = vpop.f32.mrf.mxu0
      %v4042 = vadd.f32 %v4008, %v4041
      %v4043 = vand.u32 %v459, 4294901760
      %4044 = vmatmul.f32.gmra.mxu0 %v4043
      %v4045 = vpop.f32.mrf.mxu0
      %v4046 = vadd.f32 %v4012, %v4045
      %v4047 = vand.u32 %v461, 4294901760
      %4048 = vmatmul.f32.gmra.mxu0 %v4047
      %v4049 = vpop.f32.mrf.mxu0
      %v4050 = vadd.f32 %v4016, %v4049
      %4051 = vdwg.mxu0
      %v4052 = vmul.f32 %v4038, 0.015625
      %v4053 = vmul.f32 %v4042, 0.015625
      %v4054 = vmul.f32 %v4046, 0.015625
      %v4055 = vmul.f32 %v4050, 0.015625
      %v4056 = vld [vmem:[%s6] sm:$0xff]
      %v4057 = vld [vmem:[%s6 + $0x8] sm:$0xff]
      %v4058 = vmul.f32 %v4056, %v1408
      %v4059 = vmul.f32 %v4057, %v1408
      %v4060 = vld [vmem:[%s7] sm:$0xff]
      %v4061 = vld [vmem:[%s7 + $0x8] sm:$0xff]
      %v4062 = vmul.f32 %v4056, %v1458
      %v4063 = vmul.f32 %v4057, %v1458
      %v4064 = vsel %vm1168, %v4062, 0.0
      %4065 = vadd.xlane.f32.xlu0 %v4064
      %v4066 = vpop.xlane.xlu0 %4065
      %v4067 = vsel %vm1168, %v4063, 0.0
      %4068 = vadd.xlane.f32.xlu0 %v4067
      %v4069 = vpop.xlane.xlu0 %4068
      %v4070 = vadd.f32 %v4060, %v4066
      %v4071 = vadd.f32 %v4061, %v4069
      %4073 = vset.pattern.permute.xlu0 0
      %4074 = vperm.xlu0 %4073, %v4070
      %v4075 = vpop.permute.xlu0 %4074
      %4078 = vset.pattern.permute.xlu0 0
      %4079 = vperm.xlu0 %4078, %v4071
      %v4080 = vpop.permute.xlu0 %4079
      %v4083 = vsel %vm1168, %v4058, 0
      %v4086 = vsel %vm1168, %v4059, 0
      %4088 = vmatpush.msra.mxu0 0.0
      %4089 = vmatpush.msra.mxu0 0.0
      %4090 = vmatpush.msra.mxu0 0.0
      %4091 = vmatpush.msra.mxu0 0.0
      %4092 = vmatpush.msra.mxu0 0.0
      %4093 = vmatpush.msra.mxu0 0.0
      %4094 = vmatpush.msra.mxu0 0.0
      %4095 = vmatpush.msra.mxu0 0.0
      %4096 = vmatpush.msra.mxu0 0.0
      %4097 = vmatpush.msra.mxu0 0.0
      %4098 = vmatpush.msra.mxu0 0.0
      %4099 = vmatpush.msra.mxu0 0.0
      %v4100 = vand.u32 %v4055, 4294901760
      %4101 = vmatpush.msra.mxu0 %v4100
      %v4102 = vand.u32 %v4054, 4294901760
      %4103 = vmatpush.msra.mxu0 %v4102
      %v4104 = vand.u32 %v4053, 4294901760
      %4105 = vmatpush.msra.mxu0 %v4104
      %v4106 = vand.u32 %v4052, 4294901760
      %4107 = vmatpush.msra.mxu0 %v4106
      %v4108 = vand.u32 %v4083, 4294901760
      %v4109 = vsub.f32 %v4083, %v4108
      %v4110 = vand.u32 %v4109, 4294901760
      %v4111 = vsub.f32 %v4109, %v4110
      %v4112 = vand.u32 %v4111, 4294901760
      %4113 = vmatmul.f32.gmra.mxu0 %v4112
      %v4114 = vpop.f32.mrf.mxu0
      %v4115 = vadd.f32 %v4075, %v4114
      %v4116 = vand.u32 %v4086, 4294901760
      %v4117 = vsub.f32 %v4086, %v4116
      %v4118 = vand.u32 %v4117, 4294901760
      %v4119 = vsub.f32 %v4117, %v4118
      %v4120 = vand.u32 %v4119, 4294901760
      %4121 = vmatmul.f32.gmra.mxu0 %v4120
      %v4122 = vpop.f32.mrf.mxu0
      %v4123 = vadd.f32 %v4080, %v4122
      %4124 = vdwg.mxu0
      %4125 = vmatpush.msra.mxu0 0.0
      %4126 = vmatpush.msra.mxu0 0.0
      %4127 = vmatpush.msra.mxu0 0.0
      %4128 = vmatpush.msra.mxu0 0.0
      %4129 = vmatpush.msra.mxu0 0.0
      %4130 = vmatpush.msra.mxu0 0.0
      %4131 = vmatpush.msra.mxu0 0.0
      %4132 = vmatpush.msra.mxu0 0.0
      %4133 = vmatpush.msra.mxu0 0.0
      %4134 = vmatpush.msra.mxu0 0.0
      %4135 = vmatpush.msra.mxu0 0.0
      %4136 = vmatpush.msra.mxu0 0.0
      %v4137 = vand.u32 %v4055, 4294901760
      %v4138 = vsub.f32 %v4055, %v4137
      %v4139 = vand.u32 %v4138, 4294901760
      %v4140 = vsub.f32 %v4138, %v4139
      %v4141 = vand.u32 %v4140, 4294901760
      %4142 = vmatpush.msra.mxu0 %v4141
      %v4143 = vand.u32 %v4054, 4294901760
      %v4144 = vsub.f32 %v4054, %v4143
      %v4145 = vand.u32 %v4144, 4294901760
      %v4146 = vsub.f32 %v4144, %v4145
      %v4147 = vand.u32 %v4146, 4294901760
      %4148 = vmatpush.msra.mxu0 %v4147
      %v4149 = vand.u32 %v4053, 4294901760
      %v4150 = vsub.f32 %v4053, %v4149
      %v4151 = vand.u32 %v4150, 4294901760
      %v4152 = vsub.f32 %v4150, %v4151
      %v4153 = vand.u32 %v4152, 4294901760
      %4154 = vmatpush.msra.mxu0 %v4153
      %v4155 = vand.u32 %v4052, 4294901760
      %v4156 = vsub.f32 %v4052, %v4155
      %v4157 = vand.u32 %v4156, 4294901760
      %v4158 = vsub.f32 %v4156, %v4157
      %v4159 = vand.u32 %v4158, 4294901760
      %4160 = vmatpush.msra.mxu0 %v4159
      %v4161 = vand.u32 %v4083, 4294901760
      %4162 = vmatmul.f32.gmra.mxu0 %v4161
      %v4163 = vpop.f32.mrf.mxu0
      %v4164 = vadd.f32 %v4115, %v4163
      %v4165 = vand.u32 %v4086, 4294901760
      %4166 = vmatmul.f32.gmra.mxu0 %v4165
      %v4167 = vpop.f32.mrf.mxu0
      %v4168 = vadd.f32 %v4123, %v4167
      %4169 = vdwg.mxu0
      %4170 = vmatpush.msra.mxu0 0.0
      %4171 = vmatpush.msra.mxu0 0.0
      %4172 = vmatpush.msra.mxu0 0.0
      %4173 = vmatpush.msra.mxu0 0.0
      %4174 = vmatpush.msra.mxu0 0.0
      %4175 = vmatpush.msra.mxu0 0.0
      %4176 = vmatpush.msra.mxu0 0.0
      %4177 = vmatpush.msra.mxu0 0.0
      %4178 = vmatpush.msra.mxu0 0.0
      %4179 = vmatpush.msra.mxu0 0.0
      %4180 = vmatpush.msra.mxu0 0.0
      %4181 = vmatpush.msra.mxu0 0.0
      %v4182 = vand.u32 %v4055, 4294901760
      %v4183 = vsub.f32 %v4055, %v4182
      %4184 = vmatpush.msra.mxu0 %v4183
      %v4185 = vand.u32 %v4054, 4294901760
      %v4186 = vsub.f32 %v4054, %v4185
      %4187 = vmatpush.msra.mxu0 %v4186
      %v4188 = vand.u32 %v4053, 4294901760
      %v4189 = vsub.f32 %v4053, %v4188
      %4190 = vmatpush.msra.mxu0 %v4189
      %v4191 = vand.u32 %v4052, 4294901760
      %v4192 = vsub.f32 %v4052, %v4191
      %4193 = vmatpush.msra.mxu0 %v4192
      %v4194 = vand.u32 %v4083, 4294901760
      %v4195 = vsub.f32 %v4083, %v4194
      %4196 = vmatmul.f32.gmra.mxu0 %v4195
      %v4197 = vpop.f32.mrf.mxu0
      %v4198 = vadd.f32 %v4164, %v4197
      %v4199 = vand.u32 %v4086, 4294901760
      %v4200 = vsub.f32 %v4086, %v4199
      %4201 = vmatmul.f32.gmra.mxu0 %v4200
      %v4202 = vpop.f32.mrf.mxu0
      %v4203 = vadd.f32 %v4168, %v4202
      %4204 = vdwg.mxu0
      %4205 = vmatpush.msra.mxu0 0.0
      %4206 = vmatpush.msra.mxu0 0.0
      %4207 = vmatpush.msra.mxu0 0.0
      %4208 = vmatpush.msra.mxu0 0.0
      %4209 = vmatpush.msra.mxu0 0.0
      %4210 = vmatpush.msra.mxu0 0.0
      %4211 = vmatpush.msra.mxu0 0.0
      %4212 = vmatpush.msra.mxu0 0.0
      %4213 = vmatpush.msra.mxu0 0.0
      %4214 = vmatpush.msra.mxu0 0.0
      %4215 = vmatpush.msra.mxu0 0.0
      %4216 = vmatpush.msra.mxu0 0.0
      %v4217 = vand.u32 %v4055, 4294901760
      %4218 = vmatpush.msra.mxu0 %v4217
      %v4219 = vand.u32 %v4054, 4294901760
      %4220 = vmatpush.msra.mxu0 %v4219
      %v4221 = vand.u32 %v4053, 4294901760
      %4222 = vmatpush.msra.mxu0 %v4221
      %v4223 = vand.u32 %v4052, 4294901760
      %4224 = vmatpush.msra.mxu0 %v4223
      %v4225 = vand.u32 %v4083, 4294901760
      %v4226 = vsub.f32 %v4083, %v4225
      %v4227 = vand.u32 %v4226, 4294901760
      %4228 = vmatmul.f32.gmra.mxu0 %v4227
      %v4229 = vpop.f32.mrf.mxu0
      %v4230 = vadd.f32 %v4198, %v4229
      %v4231 = vand.u32 %v4086, 4294901760
      %v4232 = vsub.f32 %v4086, %v4231
      %v4233 = vand.u32 %v4232, 4294901760
      %4234 = vmatmul.f32.gmra.mxu0 %v4233
      %v4235 = vpop.f32.mrf.mxu0
      %v4236 = vadd.f32 %v4203, %v4235
      %4237 = vdwg.mxu0
      %4238 = vmatpush.msra.mxu0 0.0
      %4239 = vmatpush.msra.mxu0 0.0
      %4240 = vmatpush.msra.mxu0 0.0
      %4241 = vmatpush.msra.mxu0 0.0
      %4242 = vmatpush.msra.mxu0 0.0
      %4243 = vmatpush.msra.mxu0 0.0
      %4244 = vmatpush.msra.mxu0 0.0
      %4245 = vmatpush.msra.mxu0 0.0
      %4246 = vmatpush.msra.mxu0 0.0
      %4247 = vmatpush.msra.mxu0 0.0
      %4248 = vmatpush.msra.mxu0 0.0
      %4249 = vmatpush.msra.mxu0 0.0
      %v4250 = vand.u32 %v4055, 4294901760
      %v4251 = vsub.f32 %v4055, %v4250
      %v4252 = vand.u32 %v4251, 4294901760
      %4253 = vmatpush.msra.mxu0 %v4252
      %v4254 = vand.u32 %v4054, 4294901760
      %v4255 = vsub.f32 %v4054, %v4254
      %v4256 = vand.u32 %v4255, 4294901760
      %4257 = vmatpush.msra.mxu0 %v4256
      %v4258 = vand.u32 %v4053, 4294901760
      %v4259 = vsub.f32 %v4053, %v4258
      %v4260 = vand.u32 %v4259, 4294901760
      %4261 = vmatpush.msra.mxu0 %v4260
      %v4262 = vand.u32 %v4052, 4294901760
      %v4263 = vsub.f32 %v4052, %v4262
      %v4264 = vand.u32 %v4263, 4294901760
      %4265 = vmatpush.msra.mxu0 %v4264
      %v4266 = vand.u32 %v4083, 4294901760
      %4267 = vmatmul.f32.gmra.mxu0 %v4266
      %v4268 = vpop.f32.mrf.mxu0
      %v4269 = vadd.f32 %v4230, %v4268
      %v4270 = vand.u32 %v4086, 4294901760
      %4271 = vmatmul.f32.gmra.mxu0 %v4270
      %v4272 = vpop.f32.mrf.mxu0
      %v4273 = vadd.f32 %v4236, %v4272
      %4274 = vdwg.mxu0
      %4275 = vmatpush.msra.mxu0 0.0
      %4276 = vmatpush.msra.mxu0 0.0
      %4277 = vmatpush.msra.mxu0 0.0
      %4278 = vmatpush.msra.mxu0 0.0
      %4279 = vmatpush.msra.mxu0 0.0
      %4280 = vmatpush.msra.mxu0 0.0
      %4281 = vmatpush.msra.mxu0 0.0
      %4282 = vmatpush.msra.mxu0 0.0
      %4283 = vmatpush.msra.mxu0 0.0
      %4284 = vmatpush.msra.mxu0 0.0
      %4285 = vmatpush.msra.mxu0 0.0
      %4286 = vmatpush.msra.mxu0 0.0
      %v4287 = vand.u32 %v4055, 4294901760
      %4288 = vmatpush.msra.mxu0 %v4287
      %v4289 = vand.u32 %v4054, 4294901760
      %4290 = vmatpush.msra.mxu0 %v4289
      %v4291 = vand.u32 %v4053, 4294901760
      %4292 = vmatpush.msra.mxu0 %v4291
      %v4293 = vand.u32 %v4052, 4294901760
      %4294 = vmatpush.msra.mxu0 %v4293
      %v4295 = vand.u32 %v4083, 4294901760
      %4296 = vmatmul.f32.gmra.mxu0 %v4295
      %v4297 = vpop.f32.mrf.mxu0
      %v4298 = vadd.f32 %v4269, %v4297
      %v4299 = vand.u32 %v4086, 4294901760
      %4300 = vmatmul.f32.gmra.mxu0 %v4299
      %v4301 = vpop.f32.mrf.mxu0
      %v4302 = vadd.f32 %v4273, %v4301
      %4303 = vdwg.mxu0
      %v4304 = vmax.f32 %v4298, 0.0
      %v4305 = vmax.f32 %v4302, 0.0
      %v4306 = vld [vmem:[%s8] sm:$0xff]
      %v4307 = vld [vmem:[%s8 + $0x8] sm:$0xff]
      %v4308 = vld [vmem:[%s8 + $0x10] sm:$0xff]
      %v4309 = vld [vmem:[%s8 + $0x18] sm:$0xff]
      %v4310 = vld [vmem:[%s9] sm:$0xff]
      %v4311 = vld [vmem:[%s9 + $0x8] sm:$0xff]
      %v4312 = vld [vmem:[%s9 + $0x10] sm:$0xff]
      %v4313 = vld [vmem:[%s9 + $0x18] sm:$0xff]
      %4315 = vset.pattern.permute.xlu0 0
      %4316 = vperm.xlu0 %4315, %v4310
      %v4317 = vpop.permute.xlu0 %4316
      %4320 = vset.pattern.permute.xlu0 0
      %4321 = vperm.xlu0 %4320, %v4311
      %v4322 = vpop.permute.xlu0 %4321
      %4325 = vset.pattern.permute.xlu0 0
      %4326 = vperm.xlu0 %4325, %v4312
      %v4327 = vpop.permute.xlu0 %4326
      %4330 = vset.pattern.permute.xlu0 0
      %4331 = vperm.xlu0 %4330, %v4313
      %v4332 = vpop.permute.xlu0 %4331
      %vm4334 = vcmask 130048
      %v4336 = vsel %vm4334, %v4306, 0
      %v4339 = vsel %vm4334, %v4307, 0
      %v4342 = vsel %vm4334, %v4308, 0
      %v4345 = vsel %vm4334, %v4309, 0
      %4347 = vmatpush.msra.mxu0 0.0
      %4348 = vmatpush.msra.mxu0 0.0
      %4349 = vmatpush.msra.mxu0 0.0
      %4350 = vmatpush.msra.mxu0 0.0
      %4351 = vmatpush.msra.mxu0 0.0
      %4352 = vmatpush.msra.mxu0 0.0
      %4353 = vmatpush.msra.mxu0 0.0
      %4354 = vmatpush.msra.mxu0 0.0
      %4355 = vmatpush.msra.mxu0 0.0
      %4356 = vmatpush.msra.mxu0 0.0
      %4357 = vmatpush.msra.mxu0 0.0
      %4358 = vmatpush.msra.mxu0 0.0
      %4359 = vmatpush.msra.mxu0 0.0
      %4360 = vmatpush.msra.mxu0 0.0
      %v4361 = vand.u32 %v4305, 4294901760
      %4362 = vmatpush.msra.mxu0 %v4361
      %v4363 = vand.u32 %v4304, 4294901760
      %4364 = vmatpush.msra.mxu0 %v4363
      %v4365 = vand.u32 %v4336, 4294901760
      %v4366 = vsub.f32 %v4336, %v4365
      %v4367 = vand.u32 %v4366, 4294901760
      %v4368 = vsub.f32 %v4366, %v4367
      %v4369 = vand.u32 %v4368, 4294901760
      %4370 = vmatmul.f32.gmra.mxu0 %v4369
      %v4371 = vpop.f32.mrf.mxu0
      %v4372 = vadd.f32 %v4317, %v4371
      %v4373 = vand.u32 %v4339, 4294901760
      %v4374 = vsub.f32 %v4339, %v4373
      %v4375 = vand.u32 %v4374, 4294901760
      %v4376 = vsub.f32 %v4374, %v4375
      %v4377 = vand.u32 %v4376, 4294901760
      %4378 = vmatmul.f32.gmra.mxu0 %v4377
      %v4379 = vpop.f32.mrf.mxu0
      %v4380 = vadd.f32 %v4322, %v4379
      %v4381 = vand.u32 %v4342, 4294901760
      %v4382 = vsub.f32 %v4342, %v4381
      %v4383 = vand.u32 %v4382, 4294901760
      %v4384 = vsub.f32 %v4382, %v4383
      %v4385 = vand.u32 %v4384, 4294901760
      %4386 = vmatmul.f32.gmra.mxu0 %v4385
      %v4387 = vpop.f32.mrf.mxu0
      %v4388 = vadd.f32 %v4327, %v4387
      %v4389 = vand.u32 %v4345, 4294901760
      %v4390 = vsub.f32 %v4345, %v4389
      %v4391 = vand.u32 %v4390, 4294901760
      %v4392 = vsub.f32 %v4390, %v4391
      %v4393 = vand.u32 %v4392, 4294901760
      %4394 = vmatmul.f32.gmra.mxu0 %v4393
      %v4395 = vpop.f32.mrf.mxu0
      %v4396 = vadd.f32 %v4332, %v4395
      %4397 = vdwg.mxu0
      %4398 = vmatpush.msra.mxu0 0.0
      %4399 = vmatpush.msra.mxu0 0.0
      %4400 = vmatpush.msra.mxu0 0.0
      %4401 = vmatpush.msra.mxu0 0.0
      %4402 = vmatpush.msra.mxu0 0.0
      %4403 = vmatpush.msra.mxu0 0.0
      %4404 = vmatpush.msra.mxu0 0.0
      %4405 = vmatpush.msra.mxu0 0.0
      %4406 = vmatpush.msra.mxu0 0.0
      %4407 = vmatpush.msra.mxu0 0.0
      %4408 = vmatpush.msra.mxu0 0.0
      %4409 = vmatpush.msra.mxu0 0.0
      %4410 = vmatpush.msra.mxu0 0.0
      %4411 = vmatpush.msra.mxu0 0.0
      %v4412 = vand.u32 %v4305, 4294901760
      %v4413 = vsub.f32 %v4305, %v4412
      %v4414 = vand.u32 %v4413, 4294901760
      %v4415 = vsub.f32 %v4413, %v4414
      %v4416 = vand.u32 %v4415, 4294901760
      %4417 = vmatpush.msra.mxu0 %v4416
      %v4418 = vand.u32 %v4304, 4294901760
      %v4419 = vsub.f32 %v4304, %v4418
      %v4420 = vand.u32 %v4419, 4294901760
      %v4421 = vsub.f32 %v4419, %v4420
      %v4422 = vand.u32 %v4421, 4294901760
      %4423 = vmatpush.msra.mxu0 %v4422
      %v4424 = vand.u32 %v4336, 4294901760
      %4425 = vmatmul.f32.gmra.mxu0 %v4424
      %v4426 = vpop.f32.mrf.mxu0
      %v4427 = vadd.f32 %v4372, %v4426
      %v4428 = vand.u32 %v4339, 4294901760
      %4429 = vmatmul.f32.gmra.mxu0 %v4428
      %v4430 = vpop.f32.mrf.mxu0
      %v4431 = vadd.f32 %v4380, %v4430
      %v4432 = vand.u32 %v4342, 4294901760
      %4433 = vmatmul.f32.gmra.mxu0 %v4432
      %v4434 = vpop.f32.mrf.mxu0
      %v4435 = vadd.f32 %v4388, %v4434
      %v4436 = vand.u32 %v4345, 4294901760
      %4437 = vmatmul.f32.gmra.mxu0 %v4436
      %v4438 = vpop.f32.mrf.mxu0
      %v4439 = vadd.f32 %v4396, %v4438
      %4440 = vdwg.mxu0
      %4441 = vmatpush.msra.mxu0 0.0
      %4442 = vmatpush.msra.mxu0 0.0
      %4443 = vmatpush.msra.mxu0 0.0
      %4444 = vmatpush.msra.mxu0 0.0
      %4445 = vmatpush.msra.mxu0 0.0
      %4446 = vmatpush.msra.mxu0 0.0
      %4447 = vmatpush.msra.mxu0 0.0
      %4448 = vmatpush.msra.mxu0 0.0
      %4449 = vmatpush.msra.mxu0 0.0
      %4450 = vmatpush.msra.mxu0 0.0
      %4451 = vmatpush.msra.mxu0 0.0
      %4452 = vmatpush.msra.mxu0 0.0
      %4453 = vmatpush.msra.mxu0 0.0
      %4454 = vmatpush.msra.mxu0 0.0
      %v4455 = vand.u32 %v4305, 4294901760
      %v4456 = vsub.f32 %v4305, %v4455
      %4457 = vmatpush.msra.mxu0 %v4456
      %v4458 = vand.u32 %v4304, 4294901760
      %v4459 = vsub.f32 %v4304, %v4458
      %4460 = vmatpush.msra.mxu0 %v4459
      %v4461 = vand.u32 %v4336, 4294901760
      %v4462 = vsub.f32 %v4336, %v4461
      %4463 = vmatmul.f32.gmra.mxu0 %v4462
      %v4464 = vpop.f32.mrf.mxu0
      %v4465 = vadd.f32 %v4427, %v4464
      %v4466 = vand.u32 %v4339, 4294901760
      %v4467 = vsub.f32 %v4339, %v4466
      %4468 = vmatmul.f32.gmra.mxu0 %v4467
      %v4469 = vpop.f32.mrf.mxu0
      %v4470 = vadd.f32 %v4431, %v4469
      %v4471 = vand.u32 %v4342, 4294901760
      %v4472 = vsub.f32 %v4342, %v4471
      %4473 = vmatmul.f32.gmra.mxu0 %v4472
      %v4474 = vpop.f32.mrf.mxu0
      %v4475 = vadd.f32 %v4435, %v4474
      %v4476 = vand.u32 %v4345, 4294901760
      %v4477 = vsub.f32 %v4345, %v4476
      %4478 = vmatmul.f32.gmra.mxu0 %v4477
      %v4479 = vpop.f32.mrf.mxu0
      %v4480 = vadd.f32 %v4439, %v4479
      %4481 = vdwg.mxu0
      %4482 = vmatpush.msra.mxu0 0.0
      %4483 = vmatpush.msra.mxu0 0.0
      %4484 = vmatpush.msra.mxu0 0.0
      %4485 = vmatpush.msra.mxu0 0.0
      %4486 = vmatpush.msra.mxu0 0.0
      %4487 = vmatpush.msra.mxu0 0.0
      %4488 = vmatpush.msra.mxu0 0.0
      %4489 = vmatpush.msra.mxu0 0.0
      %4490 = vmatpush.msra.mxu0 0.0
      %4491 = vmatpush.msra.mxu0 0.0
      %4492 = vmatpush.msra.mxu0 0.0
      %4493 = vmatpush.msra.mxu0 0.0
      %4494 = vmatpush.msra.mxu0 0.0
      %4495 = vmatpush.msra.mxu0 0.0
      %v4496 = vand.u32 %v4305, 4294901760
      %4497 = vmatpush.msra.mxu0 %v4496
      %v4498 = vand.u32 %v4304, 4294901760
      %4499 = vmatpush.msra.mxu0 %v4498
      %v4500 = vand.u32 %v4336, 4294901760
      %v4501 = vsub.f32 %v4336, %v4500
      %v4502 = vand.u32 %v4501, 4294901760
      %4503 = vmatmul.f32.gmra.mxu0 %v4502
      %v4504 = vpop.f32.mrf.mxu0
      %v4505 = vadd.f32 %v4465, %v4504
      %v4506 = vand.u32 %v4339, 4294901760
      %v4507 = vsub.f32 %v4339, %v4506
      %v4508 = vand.u32 %v4507, 4294901760
      %4509 = vmatmul.f32.gmra.mxu0 %v4508
      %v4510 = vpop.f32.mrf.mxu0
      %v4511 = vadd.f32 %v4470, %v4510
      %v4512 = vand.u32 %v4342, 4294901760
      %v4513 = vsub.f32 %v4342, %v4512
      %v4514 = vand.u32 %v4513, 4294901760
      %4515 = vmatmul.f32.gmra.mxu0 %v4514
      %v4516 = vpop.f32.mrf.mxu0
      %v4517 = vadd.f32 %v4475, %v4516
      %v4518 = vand.u32 %v4345, 4294901760
      %v4519 = vsub.f32 %v4345, %v4518
      %v4520 = vand.u32 %v4519, 4294901760
      %4521 = vmatmul.f32.gmra.mxu0 %v4520
      %v4522 = vpop.f32.mrf.mxu0
      %v4523 = vadd.f32 %v4480, %v4522
      %4524 = vdwg.mxu0
      %4525 = vmatpush.msra.mxu0 0.0
      %4526 = vmatpush.msra.mxu0 0.0
      %4527 = vmatpush.msra.mxu0 0.0
      %4528 = vmatpush.msra.mxu0 0.0
      %4529 = vmatpush.msra.mxu0 0.0
      %4530 = vmatpush.msra.mxu0 0.0
      %4531 = vmatpush.msra.mxu0 0.0
      %4532 = vmatpush.msra.mxu0 0.0
      %4533 = vmatpush.msra.mxu0 0.0
      %4534 = vmatpush.msra.mxu0 0.0
      %4535 = vmatpush.msra.mxu0 0.0
      %4536 = vmatpush.msra.mxu0 0.0
      %4537 = vmatpush.msra.mxu0 0.0
      %4538 = vmatpush.msra.mxu0 0.0
      %v4539 = vand.u32 %v4305, 4294901760
      %v4540 = vsub.f32 %v4305, %v4539
      %v4541 = vand.u32 %v4540, 4294901760
      %4542 = vmatpush.msra.mxu0 %v4541
      %v4543 = vand.u32 %v4304, 4294901760
      %v4544 = vsub.f32 %v4304, %v4543
      %v4545 = vand.u32 %v4544, 4294901760
      %4546 = vmatpush.msra.mxu0 %v4545
      %v4547 = vand.u32 %v4336, 4294901760
      %4548 = vmatmul.f32.gmra.mxu0 %v4547
      %v4549 = vpop.f32.mrf.mxu0
      %v4550 = vadd.f32 %v4505, %v4549
      %v4551 = vand.u32 %v4339, 4294901760
      %4552 = vmatmul.f32.gmra.mxu0 %v4551
      %v4553 = vpop.f32.mrf.mxu0
      %v4554 = vadd.f32 %v4511, %v4553
      %v4555 = vand.u32 %v4342, 4294901760
      %4556 = vmatmul.f32.gmra.mxu0 %v4555
      %v4557 = vpop.f32.mrf.mxu0
      %v4558 = vadd.f32 %v4517, %v4557
      %v4559 = vand.u32 %v4345, 4294901760
      %4560 = vmatmul.f32.gmra.mxu0 %v4559
      %v4561 = vpop.f32.mrf.mxu0
      %v4562 = vadd.f32 %v4523, %v4561
      %4563 = vdwg.mxu0
      %4564 = vmatpush.msra.mxu0 0.0
      %4565 = vmatpush.msra.mxu0 0.0
      %4566 = vmatpush.msra.mxu0 0.0
      %4567 = vmatpush.msra.mxu0 0.0
      %4568 = vmatpush.msra.mxu0 0.0
      %4569 = vmatpush.msra.mxu0 0.0
      %4570 = vmatpush.msra.mxu0 0.0
      %4571 = vmatpush.msra.mxu0 0.0
      %4572 = vmatpush.msra.mxu0 0.0
      %4573 = vmatpush.msra.mxu0 0.0
      %4574 = vmatpush.msra.mxu0 0.0
      %4575 = vmatpush.msra.mxu0 0.0
      %4576 = vmatpush.msra.mxu0 0.0
      %4577 = vmatpush.msra.mxu0 0.0
      %v4578 = vand.u32 %v4305, 4294901760
      %4579 = vmatpush.msra.mxu0 %v4578
      %v4580 = vand.u32 %v4304, 4294901760
      %4581 = vmatpush.msra.mxu0 %v4580
      %v4582 = vand.u32 %v4336, 4294901760
      %4583 = vmatmul.f32.gmra.mxu0 %v4582
      %v4584 = vpop.f32.mrf.mxu0
      %v4585 = vadd.f32 %v4550, %v4584
      %v4586 = vand.u32 %v4339, 4294901760
      %4587 = vmatmul.f32.gmra.mxu0 %v4586
      %v4588 = vpop.f32.mrf.mxu0
      %v4589 = vadd.f32 %v4554, %v4588
      %v4590 = vand.u32 %v4342, 4294901760
      %4591 = vmatmul.f32.gmra.mxu0 %v4590
      %v4592 = vpop.f32.mrf.mxu0
      %v4593 = vadd.f32 %v4558, %v4592
      %v4594 = vand.u32 %v4345, 4294901760
      %4595 = vmatmul.f32.gmra.mxu0 %v4594
      %v4596 = vpop.f32.mrf.mxu0
      %v4597 = vadd.f32 %v4562, %v4596
      %4598 = vdwg.mxu0
      %v4599 = vxor.u32 %v4585, 2147483648
      %v4600 = vxor.u32 %v4589, 2147483648
      %v4601 = vxor.u32 %v4593, 2147483648
      %v4602 = vxor.u32 %v4597, 2147483648
      %v4603 = vmul.f32 %v4599, 1.442695
      %v4604 = vpow.pop %v4603
      %v4605 = vmul.f32 %v4600, 1.442695
      %v4606 = vpow.pop %v4605
      %v4607 = vmul.f32 %v4601, 1.442695
      %v4608 = vpow.pop %v4607
      %v4609 = vmul.f32 %v4602, 1.442695
      %v4610 = vpow.pop %v4609
      %v4611 = vadd.f32 %v4604, 1.0
      %v4612 = vadd.f32 %v4606, 1.0
      %v4613 = vadd.f32 %v4608, 1.0
      %v4614 = vadd.f32 %v4610, 1.0
      %v4615 = vrcp.pop %v4611
      %v4616 = vmul.f32 %v4611, %v4615
      %v4617 = vsub.f32 1.0, %v4616
      %v4618 = vmul.f32 %v4615, %v4617
      %v4619 = vadd.f32 %v4615, %v4618
      %vm4620 = vweird.f32 %v4611
      %vm4621 = vweird.f32 %v4615
      %vm4622 = vmor %vm4620, %vm4621
      %v4623 = vsel %vm4622, %v4615, %v4619
      %v4624 = vand.u32 2147483647, %v4611
      %vm4625 = vcmp.eq.f32.partialorder %v4624, 8.507059e+37
      %v4626 = vand.u32 %v4611, 2147483648
      %v4627 = vor.u32 1.1754944e-38, %v4626
      %v4628 = vsel %vm4625, %v4627, %v4623
      %v4629 = vmul.f32 1.0, %v4628
      %v4630 = vrcp.pop %v4612
      %v4631 = vmul.f32 %v4612, %v4630
      %v4632 = vsub.f32 1.0, %v4631
      %v4633 = vmul.f32 %v4630, %v4632
      %v4634 = vadd.f32 %v4630, %v4633
      %vm4635 = vweird.f32 %v4612
      %vm4636 = vweird.f32 %v4630
      %vm4637 = vmor %vm4635, %vm4636
      %v4638 = vsel %vm4637, %v4630, %v4634
      %v4639 = vand.u32 2147483647, %v4612
      %vm4640 = vcmp.eq.f32.partialorder %v4639, 8.507059e+37
      %v4641 = vand.u32 %v4612, 2147483648
      %v4642 = vor.u32 1.1754944e-38, %v4641
      %v4643 = vsel %vm4640, %v4642, %v4638
      %v4644 = vmul.f32 1.0, %v4643
      %v4645 = vrcp.pop %v4613
      %v4646 = vmul.f32 %v4613, %v4645
      %v4647 = vsub.f32 1.0, %v4646
      %v4648 = vmul.f32 %v4645, %v4647
      %v4649 = vadd.f32 %v4645, %v4648
      %vm4650 = vweird.f32 %v4613
      %vm4651 = vweird.f32 %v4645
      %vm4652 = vmor %vm4650, %vm4651
      %v4653 = vsel %vm4652, %v4645, %v4649
      %v4654 = vand.u32 2147483647, %v4613
      %vm4655 = vcmp.eq.f32.partialorder %v4654, 8.507059e+37
      %v4656 = vand.u32 %v4613, 2147483648
      %v4657 = vor.u32 1.1754944e-38, %v4656
      %v4658 = vsel %vm4655, %v4657, %v4653
      %v4659 = vmul.f32 1.0, %v4658
      %v4660 = vrcp.pop %v4614
      %v4661 = vmul.f32 %v4614, %v4660
      %v4662 = vsub.f32 1.0, %v4661
      %v4663 = vmul.f32 %v4660, %v4662
      %v4664 = vadd.f32 %v4660, %v4663
      %vm4665 = vweird.f32 %v4614
      %vm4666 = vweird.f32 %v4660
      %vm4667 = vmor %vm4665, %vm4666
      %v4668 = vsel %vm4667, %v4660, %v4664
      %v4669 = vand.u32 2147483647, %v4614
      %vm4670 = vcmp.eq.f32.partialorder %v4669, 8.507059e+37
      %v4671 = vand.u32 %v4614, 2147483648
      %v4672 = vor.u32 1.1754944e-38, %v4671
      %v4673 = vsel %vm4670, %v4672, %v4668
      %v4674 = vmul.f32 1.0, %v4673
      %v4675 = vld [vmem:[%s11] sm:$0xff]
      %4677 = vst [vmem:[#allocation1] ss:$2 sm:$0xff] %v4675
      %v4678 = vld.sshfl [vmem:[#allocation1] sm:$0xff pattern:$0x75316420]
      %v4679 = vld.sshfl [vmem:[#allocation1 + $0x8] sm:$0xff pattern:$0x75316420]
      %vm4680 = vcmask 31744
      %v4682 = vsel %vm4680, %v4629, 0
      %v4685 = vsel %vm4680, %v4644, 0
      %v4688 = vsel %vm4680, %v4659, 0
      %v4691 = vsel %vm4680, %v4674, 0
      %vm4693 = vcmask 1043456
      %v4694 = vsel %vm4693, %v4678, 0
      %v4696 = vsel %vm4693, %v4679, 0
      %4698 = vmatpush.msra.mxu0 0.0
      %4699 = vmatpush.msra.mxu0 0.0
      %4700 = vmatpush.msra.mxu0 0.0
      %4701 = vmatpush.msra.mxu0 0.0
      %4702 = vmatpush.msra.mxu0 0.0
      %4703 = vmatpush.msra.mxu0 0.0
      %4704 = vmatpush.msra.mxu0 0.0
      %4705 = vmatpush.msra.mxu0 0.0
      %4706 = vmatpush.msra.mxu0 0.0
      %4707 = vmatpush.msra.mxu0 0.0
      %4708 = vmatpush.msra.mxu0 0.0
      %4709 = vmatpush.msra.mxu0 0.0
      %4710 = vmatpush.msra.mxu0 0.0
      %4711 = vmatpush.msra.mxu0 0.0
      %4712 = vmatpush.msra.mxu0 0.0
      %v4713 = vand.u32 %v4694, 4294901760
      %4714 = vmatpush.msra.mxu0 %v4713
      %v4715 = vand.u32 %v4682, 4294901760
      %v4716 = vsub.f32 %v4682, %v4715
      %v4717 = vand.u32 %v4716, 4294901760
      %v4718 = vsub.f32 %v4716, %v4717
      %v4719 = vand.u32 %v4718, 4294901760
      %4720 = vmatmul.f32.gmra.mxu0 %v4719
      %v4721 = vpop.f32.mrf.mxu0
      %v4722 = vadd.f32 0.0, %v4721
      %v4723 = vand.u32 %v4685, 4294901760
      %v4724 = vsub.f32 %v4685, %v4723
      %v4725 = vand.u32 %v4724, 4294901760
      %v4726 = vsub.f32 %v4724, %v4725
      %v4727 = vand.u32 %v4726, 4294901760
      %4728 = vmatmul.f32.gmra.mxu0 %v4727
      %v4729 = vpop.f32.mrf.mxu0
      %v4730 = vadd.f32 0.0, %v4729
      %v4731 = vand.u32 %v4688, 4294901760
      %v4732 = vsub.f32 %v4688, %v4731
      %v4733 = vand.u32 %v4732, 4294901760
      %v4734 = vsub.f32 %v4732, %v4733
      %v4735 = vand.u32 %v4734, 4294901760
      %4736 = vmatmul.f32.gmra.mxu0 %v4735
      %v4737 = vpop.f32.mrf.mxu0
      %v4738 = vadd.f32 0.0, %v4737
      %v4739 = vand.u32 %v4691, 4294901760
      %v4740 = vsub.f32 %v4691, %v4739
      %v4741 = vand.u32 %v4740, 4294901760
      %v4742 = vsub.f32 %v4740, %v4741
      %v4743 = vand.u32 %v4742, 4294901760
      %4744 = vmatmul.f32.gmra.mxu0 %v4743
      %v4745 = vpop.f32.mrf.mxu0
      %v4746 = vadd.f32 0.0, %v4745
      %4747 = vdwg.mxu0
      %4748 = vmatpush.msra.mxu0 0.0
      %4749 = vmatpush.msra.mxu0 0.0
      %4750 = vmatpush.msra.mxu0 0.0
      %4751 = vmatpush.msra.mxu0 0.0
      %4752 = vmatpush.msra.mxu0 0.0
      %4753 = vmatpush.msra.mxu0 0.0
      %4754 = vmatpush.msra.mxu0 0.0
      %4755 = vmatpush.msra.mxu0 0.0
      %4756 = vmatpush.msra.mxu0 0.0
      %4757 = vmatpush.msra.mxu0 0.0
      %4758 = vmatpush.msra.mxu0 0.0
      %4759 = vmatpush.msra.mxu0 0.0
      %4760 = vmatpush.msra.mxu0 0.0
      %4761 = vmatpush.msra.mxu0 0.0
      %4762 = vmatpush.msra.mxu0 0.0
      %v4763 = vand.u32 %v4694, 4294901760
      %v4764 = vsub.f32 %v4694, %v4763
      %v4765 = vand.u32 %v4764, 4294901760
      %v4766 = vsub.f32 %v4764, %v4765
      %v4767 = vand.u32 %v4766, 4294901760
      %4768 = vmatpush.msra.mxu0 %v4767
      %v4769 = vand.u32 %v4682, 4294901760
      %4770 = vmatmul.f32.gmra.mxu0 %v4769
      %v4771 = vpop.f32.mrf.mxu0
      %v4772 = vadd.f32 %v4722, %v4771
      %v4773 = vand.u32 %v4685, 4294901760
      %4774 = vmatmul.f32.gmra.mxu0 %v4773
      %v4775 = vpop.f32.mrf.mxu0
      %v4776 = vadd.f32 %v4730, %v4775
      %v4777 = vand.u32 %v4688, 4294901760
      %4778 = vmatmul.f32.gmra.mxu0 %v4777
      %v4779 = vpop.f32.mrf.mxu0
      %v4780 = vadd.f32 %v4738, %v4779
      %v4781 = vand.u32 %v4691, 4294901760
      %4782 = vmatmul.f32.gmra.mxu0 %v4781
      %v4783 = vpop.f32.mrf.mxu0
      %v4784 = vadd.f32 %v4746, %v4783
      %4785 = vdwg.mxu0
      %4786 = vmatpush.msra.mxu0 0.0
      %4787 = vmatpush.msra.mxu0 0.0
      %4788 = vmatpush.msra.mxu0 0.0
      %4789 = vmatpush.msra.mxu0 0.0
      %4790 = vmatpush.msra.mxu0 0.0
      %4791 = vmatpush.msra.mxu0 0.0
      %4792 = vmatpush.msra.mxu0 0.0
      %4793 = vmatpush.msra.mxu0 0.0
      %4794 = vmatpush.msra.mxu0 0.0
      %4795 = vmatpush.msra.mxu0 0.0
      %4796 = vmatpush.msra.mxu0 0.0
      %4797 = vmatpush.msra.mxu0 0.0
      %4798 = vmatpush.msra.mxu0 0.0
      %4799 = vmatpush.msra.mxu0 0.0
      %4800 = vmatpush.msra.mxu0 0.0
      %v4801 = vand.u32 %v4694, 4294901760
      %v4802 = vsub.f32 %v4694, %v4801
      %4803 = vmatpush.msra.mxu0 %v4802
      %v4804 = vand.u32 %v4682, 4294901760
      %v4805 = vsub.f32 %v4682, %v4804
      %4806 = vmatmul.f32.gmra.mxu0 %v4805
      %v4807 = vpop.f32.mrf.mxu0
      %v4808 = vadd.f32 %v4772, %v4807
      %v4809 = vand.u32 %v4685, 4294901760
      %v4810 = vsub.f32 %v4685, %v4809
      %4811 = vmatmul.f32.gmra.mxu0 %v4810
      %v4812 = vpop.f32.mrf.mxu0
      %v4813 = vadd.f32 %v4776, %v4812
      %v4814 = vand.u32 %v4688, 4294901760
      %v4815 = vsub.f32 %v4688, %v4814
      %4816 = vmatmul.f32.gmra.mxu0 %v4815
      %v4817 = vpop.f32.mrf.mxu0
      %v4818 = vadd.f32 %v4780, %v4817
      %v4819 = vand.u32 %v4691, 4294901760
      %v4820 = vsub.f32 %v4691, %v4819
      %4821 = vmatmul.f32.gmra.mxu0 %v4820
      %v4822 = vpop.f32.mrf.mxu0
      %v4823 = vadd.f32 %v4784, %v4822
      %4824 = vdwg.mxu0
      %4825 = vmatpush.msra.mxu0 0.0
      %4826 = vmatpush.msra.mxu0 0.0
      %4827 = vmatpush.msra.mxu0 0.0
      %4828 = vmatpush.msra.mxu0 0.0
      %4829 = vmatpush.msra.mxu0 0.0
      %4830 = vmatpush.msra.mxu0 0.0
      %4831 = vmatpush.msra.mxu0 0.0
      %4832 = vmatpush.msra.mxu0 0.0
      %4833 = vmatpush.msra.mxu0 0.0
      %4834 = vmatpush.msra.mxu0 0.0
      %4835 = vmatpush.msra.mxu0 0.0
      %4836 = vmatpush.msra.mxu0 0.0
      %4837 = vmatpush.msra.mxu0 0.0
      %4838 = vmatpush.msra.mxu0 0.0
      %4839 = vmatpush.msra.mxu0 0.0
      %v4840 = vand.u32 %v4694, 4294901760
      %4841 = vmatpush.msra.mxu0 %v4840
      %v4842 = vand.u32 %v4682, 4294901760
      %v4843 = vsub.f32 %v4682, %v4842
      %v4844 = vand.u32 %v4843, 4294901760
      %4845 = vmatmul.f32.gmra.mxu0 %v4844
      %v4846 = vpop.f32.mrf.mxu0
      %v4847 = vadd.f32 %v4808, %v4846
      %v4848 = vand.u32 %v4685, 4294901760
      %v4849 = vsub.f32 %v4685, %v4848
      %v4850 = vand.u32 %v4849, 4294901760
      %4851 = vmatmul.f32.gmra.mxu0 %v4850
      %v4852 = vpop.f32.mrf.mxu0
      %v4853 = vadd.f32 %v4813, %v4852
      %v4854 = vand.u32 %v4688, 4294901760
      %v4855 = vsub.f32 %v4688, %v4854
      %v4856 = vand.u32 %v4855, 4294901760
      %4857 = vmatmul.f32.gmra.mxu0 %v4856
      %v4858 = vpop.f32.mrf.mxu0
      %v4859 = vadd.f32 %v4818, %v4858
      %v4860 = vand.u32 %v4691, 4294901760
      %v4861 = vsub.f32 %v4691, %v4860
      %v4862 = vand.u32 %v4861, 4294901760
      %4863 = vmatmul.f32.gmra.mxu0 %v4862
      %v4864 = vpop.f32.mrf.mxu0
      %v4865 = vadd.f32 %v4823, %v4864
      %4866 = vdwg.mxu0
      %4867 = vmatpush.msra.mxu0 0.0
      %4868 = vmatpush.msra.mxu0 0.0
      %4869 = vmatpush.msra.mxu0 0.0
      %4870 = vmatpush.msra.mxu0 0.0
      %4871 = vmatpush.msra.mxu0 0.0
      %4872 = vmatpush.msra.mxu0 0.0
      %4873 = vmatpush.msra.mxu0 0.0
      %4874 = vmatpush.msra.mxu0 0.0
      %4875 = vmatpush.msra.mxu0 0.0
      %4876 = vmatpush.msra.mxu0 0.0
      %4877 = vmatpush.msra.mxu0 0.0
      %4878 = vmatpush.msra.mxu0 0.0
      %4879 = vmatpush.msra.mxu0 0.0
      %4880 = vmatpush.msra.mxu0 0.0
      %4881 = vmatpush.msra.mxu0 0.0
      %v4882 = vand.u32 %v4694, 4294901760
      %v4883 = vsub.f32 %v4694, %v4882
      %v4884 = vand.u32 %v4883, 4294901760
      %4885 = vmatpush.msra.mxu0 %v4884
      %v4886 = vand.u32 %v4682, 4294901760
      %4887 = vmatmul.f32.gmra.mxu0 %v4886
      %v4888 = vpop.f32.mrf.mxu0
      %v4889 = vadd.f32 %v4847, %v4888
      %v4890 = vand.u32 %v4685, 4294901760
      %4891 = vmatmul.f32.gmra.mxu0 %v4890
      %v4892 = vpop.f32.mrf.mxu0
      %v4893 = vadd.f32 %v4853, %v4892
      %v4894 = vand.u32 %v4688, 4294901760
      %4895 = vmatmul.f32.gmra.mxu0 %v4894
      %v4896 = vpop.f32.mrf.mxu0
      %v4897 = vadd.f32 %v4859, %v4896
      %v4898 = vand.u32 %v4691, 4294901760
      %4899 = vmatmul.f32.gmra.mxu0 %v4898
      %v4900 = vpop.f32.mrf.mxu0
      %v4901 = vadd.f32 %v4865, %v4900
      %4902 = vdwg.mxu0
      %4903 = vmatpush.msra.mxu0 0.0
      %4904 = vmatpush.msra.mxu0 0.0
      %4905 = vmatpush.msra.mxu0 0.0
      %4906 = vmatpush.msra.mxu0 0.0
      %4907 = vmatpush.msra.mxu0 0.0
      %4908 = vmatpush.msra.mxu0 0.0
      %4909 = vmatpush.msra.mxu0 0.0
      %4910 = vmatpush.msra.mxu0 0.0
      %4911 = vmatpush.msra.mxu0 0.0
      %4912 = vmatpush.msra.mxu0 0.0
      %4913 = vmatpush.msra.mxu0 0.0
      %4914 = vmatpush.msra.mxu0 0.0
      %4915 = vmatpush.msra.mxu0 0.0
      %4916 = vmatpush.msra.mxu0 0.0
      %4917 = vmatpush.msra.mxu0 0.0
      %v4918 = vand.u32 %v4694, 4294901760
      %4919 = vmatpush.msra.mxu0 %v4918
      %v4920 = vand.u32 %v4682, 4294901760
      %4921 = vmatmul.f32.gmra.mxu0 %v4920
      %v4922 = vpop.f32.mrf.mxu0
      %v4923 = vadd.f32 %v4889, %v4922
      %v4924 = vand.u32 %v4685, 4294901760
      %4925 = vmatmul.f32.gmra.mxu0 %v4924
      %v4926 = vpop.f32.mrf.mxu0
      %v4927 = vadd.f32 %v4893, %v4926
      %v4928 = vand.u32 %v4688, 4294901760
      %4929 = vmatmul.f32.gmra.mxu0 %v4928
      %v4930 = vpop.f32.mrf.mxu0
      %v4931 = vadd.f32 %v4897, %v4930
      %v4932 = vand.u32 %v4691, 4294901760
      %4933 = vmatmul.f32.gmra.mxu0 %v4932
      %v4934 = vpop.f32.mrf.mxu0
      %v4935 = vadd.f32 %v4901, %v4934
      %4936 = vdwg.mxu0
      %4937 = vmatpush.msra.mxu0 0.0
      %4938 = vmatpush.msra.mxu0 0.0
      %4939 = vmatpush.msra.mxu0 0.0
      %4940 = vmatpush.msra.mxu0 0.0
      %4941 = vmatpush.msra.mxu0 0.0
      %4942 = vmatpush.msra.mxu0 0.0
      %4943 = vmatpush.msra.mxu0 0.0
      %4944 = vmatpush.msra.mxu0 0.0
      %4945 = vmatpush.msra.mxu0 0.0
      %4946 = vmatpush.msra.mxu0 0.0
      %4947 = vmatpush.msra.mxu0 0.0
      %4948 = vmatpush.msra.mxu0 0.0
      %4949 = vmatpush.msra.mxu0 0.0
      %4950 = vmatpush.msra.mxu0 0.0
      %4951 = vmatpush.msra.mxu0 0.0
      %v4952 = vand.u32 %v4696, 4294901760
      %4953 = vmatpush.msra.mxu0 %v4952
      %v4954 = vand.u32 %v4682, 4294901760
      %v4955 = vsub.f32 %v4682, %v4954
      %v4956 = vand.u32 %v4955, 4294901760
      %v4957 = vsub.f32 %v4955, %v4956
      %v4958 = vand.u32 %v4957, 4294901760
      %4959 = vmatmul.f32.gmra.mxu0 %v4958
      %v4960 = vpop.f32.mrf.mxu0
      %v4961 = vadd.f32 0.0, %v4960
      %v4962 = vand.u32 %v4685, 4294901760
      %v4963 = vsub.f32 %v4685, %v4962
      %v4964 = vand.u32 %v4963, 4294901760
      %v4965 = vsub.f32 %v4963, %v4964
      %v4966 = vand.u32 %v4965, 4294901760
      %4967 = vmatmul.f32.gmra.mxu0 %v4966
      %v4968 = vpop.f32.mrf.mxu0
      %v4969 = vadd.f32 0.0, %v4968
      %v4970 = vand.u32 %v4688, 4294901760
      %v4971 = vsub.f32 %v4688, %v4970
      %v4972 = vand.u32 %v4971, 4294901760
      %v4973 = vsub.f32 %v4971, %v4972
      %v4974 = vand.u32 %v4973, 4294901760
      %4975 = vmatmul.f32.gmra.mxu0 %v4974
      %v4976 = vpop.f32.mrf.mxu0
      %v4977 = vadd.f32 0.0, %v4976
      %v4978 = vand.u32 %v4691, 4294901760
      %v4979 = vsub.f32 %v4691, %v4978
      %v4980 = vand.u32 %v4979, 4294901760
      %v4981 = vsub.f32 %v4979, %v4980
      %v4982 = vand.u32 %v4981, 4294901760
      %4983 = vmatmul.f32.gmra.mxu0 %v4982
      %v4984 = vpop.f32.mrf.mxu0
      %v4985 = vadd.f32 0.0, %v4984
      %4986 = vdwg.mxu0
      %4987 = vmatpush.msra.mxu0 0.0
      %4988 = vmatpush.msra.mxu0 0.0
      %4989 = vmatpush.msra.mxu0 0.0
      %4990 = vmatpush.msra.mxu0 0.0
      %4991 = vmatpush.msra.mxu0 0.0
      %4992 = vmatpush.msra.mxu0 0.0
      %4993 = vmatpush.msra.mxu0 0.0
      %4994 = vmatpush.msra.mxu0 0.0
      %4995 = vmatpush.msra.mxu0 0.0
      %4996 = vmatpush.msra.mxu0 0.0
      %4997 = vmatpush.msra.mxu0 0.0
      %4998 = vmatpush.msra.mxu0 0.0
      %4999 = vmatpush.msra.mxu0 0.0
      %5000 = vmatpush.msra.mxu0 0.0
      %5001 = vmatpush.msra.mxu0 0.0
      %v5002 = vand.u32 %v4696, 4294901760
      %v5003 = vsub.f32 %v4696, %v5002
      %v5004 = vand.u32 %v5003, 4294901760
      %v5005 = vsub.f32 %v5003, %v5004
      %v5006 = vand.u32 %v5005, 4294901760
      %5007 = vmatpush.msra.mxu0 %v5006
      %v5008 = vand.u32 %v4682, 4294901760
      %5009 = vmatmul.f32.gmra.mxu0 %v5008
      %v5010 = vpop.f32.mrf.mxu0
      %v5011 = vadd.f32 %v4961, %v5010
      %v5012 = vand.u32 %v4685, 4294901760
      %5013 = vmatmul.f32.gmra.mxu0 %v5012
      %v5014 = vpop.f32.mrf.mxu0
      %v5015 = vadd.f32 %v4969, %v5014
      %v5016 = vand.u32 %v4688, 4294901760
      %5017 = vmatmul.f32.gmra.mxu0 %v5016
      %v5018 = vpop.f32.mrf.mxu0
      %v5019 = vadd.f32 %v4977, %v5018
      %v5020 = vand.u32 %v4691, 4294901760
      %5021 = vmatmul.f32.gmra.mxu0 %v5020
      %v5022 = vpop.f32.mrf.mxu0
      %v5023 = vadd.f32 %v4985, %v5022
      %5024 = vdwg.mxu0
      %5025 = vmatpush.msra.mxu0 0.0
      %5026 = vmatpush.msra.mxu0 0.0
      %5027 = vmatpush.msra.mxu0 0.0
      %5028 = vmatpush.msra.mxu0 0.0
      %5029 = vmatpush.msra.mxu0 0.0
      %5030 = vmatpush.msra.mxu0 0.0
      %5031 = vmatpush.msra.mxu0 0.0
      %5032 = vmatpush.msra.mxu0 0.0
      %5033 = vmatpush.msra.mxu0 0.0
      %5034 = vmatpush.msra.mxu0 0.0
      %5035 = vmatpush.msra.mxu0 0.0
      %5036 = vmatpush.msra.mxu0 0.0
      %5037 = vmatpush.msra.mxu0 0.0
      %5038 = vmatpush.msra.mxu0 0.0
      %5039 = vmatpush.msra.mxu0 0.0
      %v5040 = vand.u32 %v4696, 4294901760
      %v5041 = vsub.f32 %v4696, %v5040
      %5042 = vmatpush.msra.mxu0 %v5041
      %v5043 = vand.u32 %v4682, 4294901760
      %v5044 = vsub.f32 %v4682, %v5043
      %5045 = vmatmul.f32.gmra.mxu0 %v5044
      %v5046 = vpop.f32.mrf.mxu0
      %v5047 = vadd.f32 %v5011, %v5046
      %v5048 = vand.u32 %v4685, 4294901760
      %v5049 = vsub.f32 %v4685, %v5048
      %5050 = vmatmul.f32.gmra.mxu0 %v5049
      %v5051 = vpop.f32.mrf.mxu0
      %v5052 = vadd.f32 %v5015, %v5051
      %v5053 = vand.u32 %v4688, 4294901760
      %v5054 = vsub.f32 %v4688, %v5053
      %5055 = vmatmul.f32.gmra.mxu0 %v5054
      %v5056 = vpop.f32.mrf.mxu0
      %v5057 = vadd.f32 %v5019, %v5056
      %v5058 = vand.u32 %v4691, 4294901760
      %v5059 = vsub.f32 %v4691, %v5058
      %5060 = vmatmul.f32.gmra.mxu0 %v5059
      %v5061 = vpop.f32.mrf.mxu0
      %v5062 = vadd.f32 %v5023, %v5061
      %5063 = vdwg.mxu0
      %5064 = vmatpush.msra.mxu0 0.0
      %5065 = vmatpush.msra.mxu0 0.0
      %5066 = vmatpush.msra.mxu0 0.0
      %5067 = vmatpush.msra.mxu0 0.0
      %5068 = vmatpush.msra.mxu0 0.0
      %5069 = vmatpush.msra.mxu0 0.0
      %5070 = vmatpush.msra.mxu0 0.0
      %5071 = vmatpush.msra.mxu0 0.0
      %5072 = vmatpush.msra.mxu0 0.0
      %5073 = vmatpush.msra.mxu0 0.0
      %5074 = vmatpush.msra.mxu0 0.0
      %5075 = vmatpush.msra.mxu0 0.0
      %5076 = vmatpush.msra.mxu0 0.0
      %5077 = vmatpush.msra.mxu0 0.0
      %5078 = vmatpush.msra.mxu0 0.0
      %v5079 = vand.u32 %v4696, 4294901760
      %5080 = vmatpush.msra.mxu0 %v5079
      %v5081 = vand.u32 %v4682, 4294901760
      %v5082 = vsub.f32 %v4682, %v5081
      %v5083 = vand.u32 %v5082, 4294901760
      %5084 = vmatmul.f32.gmra.mxu0 %v5083
      %v5085 = vpop.f32.mrf.mxu0
      %v5086 = vadd.f32 %v5047, %v5085
      %v5087 = vand.u32 %v4685, 4294901760
      %v5088 = vsub.f32 %v4685, %v5087
      %v5089 = vand.u32 %v5088, 4294901760
      %5090 = vmatmul.f32.gmra.mxu0 %v5089
      %v5091 = vpop.f32.mrf.mxu0
      %v5092 = vadd.f32 %v5052, %v5091
      %v5093 = vand.u32 %v4688, 4294901760
      %v5094 = vsub.f32 %v4688, %v5093
      %v5095 = vand.u32 %v5094, 4294901760
      %5096 = vmatmul.f32.gmra.mxu0 %v5095
      %v5097 = vpop.f32.mrf.mxu0
      %v5098 = vadd.f32 %v5057, %v5097
      %v5099 = vand.u32 %v4691, 4294901760
      %v5100 = vsub.f32 %v4691, %v5099
      %v5101 = vand.u32 %v5100, 4294901760
      %5102 = vmatmul.f32.gmra.mxu0 %v5101
      %v5103 = vpop.f32.mrf.mxu0
      %v5104 = vadd.f32 %v5062, %v5103
      %5105 = vdwg.mxu0
      %5106 = vmatpush.msra.mxu0 0.0
      %5107 = vmatpush.msra.mxu0 0.0
      %5108 = vmatpush.msra.mxu0 0.0
      %5109 = vmatpush.msra.mxu0 0.0
      %5110 = vmatpush.msra.mxu0 0.0
      %5111 = vmatpush.msra.mxu0 0.0
      %5112 = vmatpush.msra.mxu0 0.0
      %5113 = vmatpush.msra.mxu0 0.0
      %5114 = vmatpush.msra.mxu0 0.0
      %5115 = vmatpush.msra.mxu0 0.0
      %5116 = vmatpush.msra.mxu0 0.0
      %5117 = vmatpush.msra.mxu0 0.0
      %5118 = vmatpush.msra.mxu0 0.0
      %5119 = vmatpush.msra.mxu0 0.0
      %5120 = vmatpush.msra.mxu0 0.0
      %v5121 = vand.u32 %v4696, 4294901760
      %v5122 = vsub.f32 %v4696, %v5121
      %v5123 = vand.u32 %v5122, 4294901760
      %5124 = vmatpush.msra.mxu0 %v5123
      %v5125 = vand.u32 %v4682, 4294901760
      %5126 = vmatmul.f32.gmra.mxu0 %v5125
      %v5127 = vpop.f32.mrf.mxu0
      %v5128 = vadd.f32 %v5086, %v5127
      %v5129 = vand.u32 %v4685, 4294901760
      %5130 = vmatmul.f32.gmra.mxu0 %v5129
      %v5131 = vpop.f32.mrf.mxu0
      %v5132 = vadd.f32 %v5092, %v5131
      %v5133 = vand.u32 %v4688, 4294901760
      %5134 = vmatmul.f32.gmra.mxu0 %v5133
      %v5135 = vpop.f32.mrf.mxu0
      %v5136 = vadd.f32 %v5098, %v5135
      %v5137 = vand.u32 %v4691, 4294901760
      %5138 = vmatmul.f32.gmra.mxu0 %v5137
      %v5139 = vpop.f32.mrf.mxu0
      %v5140 = vadd.f32 %v5104, %v5139
      %5141 = vdwg.mxu0
      %5142 = vmatpush.msra.mxu0 0.0
      %5143 = vmatpush.msra.mxu0 0.0
      %5144 = vmatpush.msra.mxu0 0.0
      %5145 = vmatpush.msra.mxu0 0.0
      %5146 = vmatpush.msra.mxu0 0.0
      %5147 = vmatpush.msra.mxu0 0.0
      %5148 = vmatpush.msra.mxu0 0.0
      %5149 = vmatpush.msra.mxu0 0.0
      %5150 = vmatpush.msra.mxu0 0.0
      %5151 = vmatpush.msra.mxu0 0.0
      %5152 = vmatpush.msra.mxu0 0.0
      %5153 = vmatpush.msra.mxu0 0.0
      %5154 = vmatpush.msra.mxu0 0.0
      %5155 = vmatpush.msra.mxu0 0.0
      %5156 = vmatpush.msra.mxu0 0.0
      %v5157 = vand.u32 %v4696, 4294901760
      %5158 = vmatpush.msra.mxu0 %v5157
      %v5159 = vand.u32 %v4682, 4294901760
      %5160 = vmatmul.f32.gmra.mxu0 %v5159
      %v5161 = vpop.f32.mrf.mxu0
      %v5162 = vadd.f32 %v5128, %v5161
      %v5163 = vand.u32 %v4685, 4294901760
      %5164 = vmatmul.f32.gmra.mxu0 %v5163
      %v5165 = vpop.f32.mrf.mxu0
      %v5166 = vadd.f32 %v5132, %v5165
      %v5167 = vand.u32 %v4688, 4294901760
      %5168 = vmatmul.f32.gmra.mxu0 %v5167
      %v5169 = vpop.f32.mrf.mxu0
      %v5170 = vadd.f32 %v5136, %v5169
      %v5171 = vand.u32 %v4691, 4294901760
      %5172 = vmatmul.f32.gmra.mxu0 %v5171
      %v5173 = vpop.f32.mrf.mxu0
      %v5174 = vadd.f32 %v5140, %v5173
      %5175 = vdwg.mxu0
      %5176 = vst [vmem:[#allocation1] ss:$2 sm:$0xff] %v462
      %v5177 = vld.sshfl [vmem:[#allocation1] sm:$0xff pattern:$0x75316420]
      %v5178 = vld.sshfl [vmem:[#allocation1 + $0x8] sm:$0xff pattern:$0x75316420]
      %v5179 = vsel %vm4693, %v5177, 0
      %v5181 = vsel %vm4693, %v5178, 0
      %5183 = vmatpush.msra.mxu0 0.0
      %5184 = vmatpush.msra.mxu0 0.0
      %5185 = vmatpush.msra.mxu0 0.0
      %5186 = vmatpush.msra.mxu0 0.0
      %5187 = vmatpush.msra.mxu0 0.0
      %5188 = vmatpush.msra.mxu0 0.0
      %5189 = vmatpush.msra.mxu0 0.0
      %5190 = vmatpush.msra.mxu0 0.0
      %5191 = vmatpush.msra.mxu0 0.0
      %5192 = vmatpush.msra.mxu0 0.0
      %5193 = vmatpush.msra.mxu0 0.0
      %5194 = vmatpush.msra.mxu0 0.0
      %5195 = vmatpush.msra.mxu0 0.0
      %5196 = vmatpush.msra.mxu0 0.0
      %5197 = vmatpush.msra.mxu0 0.0
      %v5198 = vand.u32 %v5179, 4294901760
      %5199 = vmatpush.msra.mxu0 %v5198
      %v5200 = vand.u32 %v4682, 4294901760
      %v5201 = vsub.f32 %v4682, %v5200
      %v5202 = vand.u32 %v5201, 4294901760
      %v5203 = vsub.f32 %v5201, %v5202
      %v5204 = vand.u32 %v5203, 4294901760
      %5205 = vmatmul.f32.gmra.mxu0 %v5204
      %v5206 = vpop.f32.mrf.mxu0
      %v5207 = vadd.f32 0.0, %v5206
      %v5208 = vand.u32 %v4685, 4294901760
      %v5209 = vsub.f32 %v4685, %v5208
      %v5210 = vand.u32 %v5209, 4294901760
      %v5211 = vsub.f32 %v5209, %v5210
      %v5212 = vand.u32 %v5211, 4294901760
      %5213 = vmatmul.f32.gmra.mxu0 %v5212
      %v5214 = vpop.f32.mrf.mxu0
      %v5215 = vadd.f32 0.0, %v5214
      %v5216 = vand.u32 %v4688, 4294901760
      %v5217 = vsub.f32 %v4688, %v5216
      %v5218 = vand.u32 %v5217, 4294901760
      %v5219 = vsub.f32 %v5217, %v5218
      %v5220 = vand.u32 %v5219, 4294901760
      %5221 = vmatmul.f32.gmra.mxu0 %v5220
      %v5222 = vpop.f32.mrf.mxu0
      %v5223 = vadd.f32 0.0, %v5222
      %v5224 = vand.u32 %v4691, 4294901760
      %v5225 = vsub.f32 %v4691, %v5224
      %v5226 = vand.u32 %v5225, 4294901760
      %v5227 = vsub.f32 %v5225, %v5226
      %v5228 = vand.u32 %v5227, 4294901760
      %5229 = vmatmul.f32.gmra.mxu0 %v5228
      %v5230 = vpop.f32.mrf.mxu0
      %v5231 = vadd.f32 0.0, %v5230
      %5232 = vdwg.mxu0
      %5233 = vmatpush.msra.mxu0 0.0
      %5234 = vmatpush.msra.mxu0 0.0
      %5235 = vmatpush.msra.mxu0 0.0
      %5236 = vmatpush.msra.mxu0 0.0
      %5237 = vmatpush.msra.mxu0 0.0
      %5238 = vmatpush.msra.mxu0 0.0
      %5239 = vmatpush.msra.mxu0 0.0
      %5240 = vmatpush.msra.mxu0 0.0
      %5241 = vmatpush.msra.mxu0 0.0
      %5242 = vmatpush.msra.mxu0 0.0
      %5243 = vmatpush.msra.mxu0 0.0
      %5244 = vmatpush.msra.mxu0 0.0
      %5245 = vmatpush.msra.mxu0 0.0
      %5246 = vmatpush.msra.mxu0 0.0
      %5247 = vmatpush.msra.mxu0 0.0
      %v5248 = vand.u32 %v5179, 4294901760
      %v5249 = vsub.f32 %v5179, %v5248
      %v5250 = vand.u32 %v5249, 4294901760
      %v5251 = vsub.f32 %v5249, %v5250
      %v5252 = vand.u32 %v5251, 4294901760
      %5253 = vmatpush.msra.mxu0 %v5252
      %v5254 = vand.u32 %v4682, 4294901760
      %5255 = vmatmul.f32.gmra.mxu0 %v5254
      %v5256 = vpop.f32.mrf.mxu0
      %v5257 = vadd.f32 %v5207, %v5256
      %v5258 = vand.u32 %v4685, 4294901760
      %5259 = vmatmul.f32.gmra.mxu0 %v5258
      %v5260 = vpop.f32.mrf.mxu0
      %v5261 = vadd.f32 %v5215, %v5260
      %v5262 = vand.u32 %v4688, 4294901760
      %5263 = vmatmul.f32.gmra.mxu0 %v5262
      %v5264 = vpop.f32.mrf.mxu0
      %v5265 = vadd.f32 %v5223, %v5264
      %v5266 = vand.u32 %v4691, 4294901760
      %5267 = vmatmul.f32.gmra.mxu0 %v5266
      %v5268 = vpop.f32.mrf.mxu0
      %v5269 = vadd.f32 %v5231, %v5268
      %5270 = vdwg.mxu0
      %5271 = vmatpush.msra.mxu0 0.0
      %5272 = vmatpush.msra.mxu0 0.0
      %5273 = vmatpush.msra.mxu0 0.0
      %5274 = vmatpush.msra.mxu0 0.0
      %5275 = vmatpush.msra.mxu0 0.0
      %5276 = vmatpush.msra.mxu0 0.0
      %5277 = vmatpush.msra.mxu0 0.0
      %5278 = vmatpush.msra.mxu0 0.0
      %5279 = vmatpush.msra.mxu0 0.0
      %5280 = vmatpush.msra.mxu0 0.0
      %5281 = vmatpush.msra.mxu0 0.0
      %5282 = vmatpush.msra.mxu0 0.0
      %5283 = vmatpush.msra.mxu0 0.0
      %5284 = vmatpush.msra.mxu0 0.0
      %5285 = vmatpush.msra.mxu0 0.0
      %v5286 = vand.u32 %v5179, 4294901760
      %v5287 = vsub.f32 %v5179, %v5286
      %5288 = vmatpush.msra.mxu0 %v5287
      %v5289 = vand.u32 %v4682, 4294901760
      %v5290 = vsub.f32 %v4682, %v5289
      %5291 = vmatmul.f32.gmra.mxu0 %v5290
      %v5292 = vpop.f32.mrf.mxu0
      %v5293 = vadd.f32 %v5257, %v5292
      %v5294 = vand.u32 %v4685, 4294901760
      %v5295 = vsub.f32 %v4685, %v5294
      %5296 = vmatmul.f32.gmra.mxu0 %v5295
      %v5297 = vpop.f32.mrf.mxu0
      %v5298 = vadd.f32 %v5261, %v5297
      %v5299 = vand.u32 %v4688, 4294901760
      %v5300 = vsub.f32 %v4688, %v5299
      %5301 = vmatmul.f32.gmra.mxu0 %v5300
      %v5302 = vpop.f32.mrf.mxu0
      %v5303 = vadd.f32 %v5265, %v5302
      %v5304 = vand.u32 %v4691, 4294901760
      %v5305 = vsub.f32 %v4691, %v5304
      %5306 = vmatmul.f32.gmra.mxu0 %v5305
      %v5307 = vpop.f32.mrf.mxu0
      %v5308 = vadd.f32 %v5269, %v5307
      %5309 = vdwg.mxu0
      %5310 = vmatpush.msra.mxu0 0.0
      %5311 = vmatpush.msra.mxu0 0.0
      %5312 = vmatpush.msra.mxu0 0.0
      %5313 = vmatpush.msra.mxu0 0.0
      %5314 = vmatpush.msra.mxu0 0.0
      %5315 = vmatpush.msra.mxu0 0.0
      %5316 = vmatpush.msra.mxu0 0.0
      %5317 = vmatpush.msra.mxu0 0.0
      %5318 = vmatpush.msra.mxu0 0.0
      %5319 = vmatpush.msra.mxu0 0.0
      %5320 = vmatpush.msra.mxu0 0.0
      %5321 = vmatpush.msra.mxu0 0.0
      %5322 = vmatpush.msra.mxu0 0.0
      %5323 = vmatpush.msra.mxu0 0.0
      %5324 = vmatpush.msra.mxu0 0.0
      %v5325 = vand.u32 %v5179, 4294901760
      %5326 = vmatpush.msra.mxu0 %v5325
      %v5327 = vand.u32 %v4682, 4294901760
      %v5328 = vsub.f32 %v4682, %v5327
      %v5329 = vand.u32 %v5328, 4294901760
      %5330 = vmatmul.f32.gmra.mxu0 %v5329
      %v5331 = vpop.f32.mrf.mxu0
      %v5332 = vadd.f32 %v5293, %v5331
      %v5333 = vand.u32 %v4685, 4294901760
      %v5334 = vsub.f32 %v4685, %v5333
      %v5335 = vand.u32 %v5334, 4294901760
      %5336 = vmatmul.f32.gmra.mxu0 %v5335
      %v5337 = vpop.f32.mrf.mxu0
      %v5338 = vadd.f32 %v5298, %v5337
      %v5339 = vand.u32 %v4688, 4294901760
      %v5340 = vsub.f32 %v4688, %v5339
      %v5341 = vand.u32 %v5340, 4294901760
      %5342 = vmatmul.f32.gmra.mxu0 %v5341
      %v5343 = vpop.f32.mrf.mxu0
      %v5344 = vadd.f32 %v5303, %v5343
      %v5345 = vand.u32 %v4691, 4294901760
      %v5346 = vsub.f32 %v4691, %v5345
      %v5347 = vand.u32 %v5346, 4294901760
      %5348 = vmatmul.f32.gmra.mxu0 %v5347
      %v5349 = vpop.f32.mrf.mxu0
      %v5350 = vadd.f32 %v5308, %v5349
      %5351 = vdwg.mxu0
      %5352 = vmatpush.msra.mxu0 0.0
      %5353 = vmatpush.msra.mxu0 0.0
      %5354 = vmatpush.msra.mxu0 0.0
      %5355 = vmatpush.msra.mxu0 0.0
      %5356 = vmatpush.msra.mxu0 0.0
      %5357 = vmatpush.msra.mxu0 0.0
      %5358 = vmatpush.msra.mxu0 0.0
      %5359 = vmatpush.msra.mxu0 0.0
      %5360 = vmatpush.msra.mxu0 0.0
      %5361 = vmatpush.msra.mxu0 0.0
      %5362 = vmatpush.msra.mxu0 0.0
      %5363 = vmatpush.msra.mxu0 0.0
      %5364 = vmatpush.msra.mxu0 0.0
      %5365 = vmatpush.msra.mxu0 0.0
      %5366 = vmatpush.msra.mxu0 0.0
      %v5367 = vand.u32 %v5179, 4294901760
      %v5368 = vsub.f32 %v5179, %v5367
      %v5369 = vand.u32 %v5368, 4294901760
      %5370 = vmatpush.msra.mxu0 %v5369
      %v5371 = vand.u32 %v4682, 4294901760
      %5372 = vmatmul.f32.gmra.mxu0 %v5371
      %v5373 = vpop.f32.mrf.mxu0
      %v5374 = vadd.f32 %v5332, %v5373
      %v5375 = vand.u32 %v4685, 4294901760
      %5376 = vmatmul.f32.gmra.mxu0 %v5375
      %v5377 = vpop.f32.mrf.mxu0
      %v5378 = vadd.f32 %v5338, %v5377
      %v5379 = vand.u32 %v4688, 4294901760
      %5380 = vmatmul.f32.gmra.mxu0 %v5379
      %v5381 = vpop.f32.mrf.mxu0
      %v5382 = vadd.f32 %v5344, %v5381
      %v5383 = vand.u32 %v4691, 4294901760
      %5384 = vmatmul.f32.gmra.mxu0 %v5383
      %v5385 = vpop.f32.mrf.mxu0
      %v5386 = vadd.f32 %v5350, %v5385
      %5387 = vdwg.mxu0
      %5388 = vmatpush.msra.mxu0 0.0
      %5389 = vmatpush.msra.mxu0 0.0
      %5390 = vmatpush.msra.mxu0 0.0
      %5391 = vmatpush.msra.mxu0 0.0
      %5392 = vmatpush.msra.mxu0 0.0
      %5393 = vmatpush.msra.mxu0 0.0
      %5394 = vmatpush.msra.mxu0 0.0
      %5395 = vmatpush.msra.mxu0 0.0
      %5396 = vmatpush.msra.mxu0 0.0
      %5397 = vmatpush.msra.mxu0 0.0
      %5398 = vmatpush.msra.mxu0 0.0
      %5399 = vmatpush.msra.mxu0 0.0
      %5400 = vmatpush.msra.mxu0 0.0
      %5401 = vmatpush.msra.mxu0 0.0
      %5402 = vmatpush.msra.mxu0 0.0
      %v5403 = vand.u32 %v5179, 4294901760
      %5404 = vmatpush.msra.mxu0 %v5403
      %v5405 = vand.u32 %v4682, 4294901760
      %5406 = vmatmul.f32.gmra.mxu0 %v5405
      %v5407 = vpop.f32.mrf.mxu0
      %v5408 = vadd.f32 %v5374, %v5407
      %v5409 = vand.u32 %v4685, 4294901760
      %5410 = vmatmul.f32.gmra.mxu0 %v5409
      %v5411 = vpop.f32.mrf.mxu0
      %v5412 = vadd.f32 %v5378, %v5411
      %v5413 = vand.u32 %v4688, 4294901760
      %5414 = vmatmul.f32.gmra.mxu0 %v5413
      %v5415 = vpop.f32.mrf.mxu0
      %v5416 = vadd.f32 %v5382, %v5415
      %v5417 = vand.u32 %v4691, 4294901760
      %5418 = vmatmul.f32.gmra.mxu0 %v5417
      %v5419 = vpop.f32.mrf.mxu0
      %v5420 = vadd.f32 %v5386, %v5419
      %5421 = vdwg.mxu0
      %5422 = vmatpush.msra.mxu0 0.0
      %5423 = vmatpush.msra.mxu0 0.0
      %5424 = vmatpush.msra.mxu0 0.0
      %5425 = vmatpush.msra.mxu0 0.0
      %5426 = vmatpush.msra.mxu0 0.0
      %5427 = vmatpush.msra.mxu0 0.0
      %5428 = vmatpush.msra.mxu0 0.0
      %5429 = vmatpush.msra.mxu0 0.0
      %5430 = vmatpush.msra.mxu0 0.0
      %5431 = vmatpush.msra.mxu0 0.0
      %5432 = vmatpush.msra.mxu0 0.0
      %5433 = vmatpush.msra.mxu0 0.0
      %5434 = vmatpush.msra.mxu0 0.0
      %5435 = vmatpush.msra.mxu0 0.0
      %5436 = vmatpush.msra.mxu0 0.0
      %v5437 = vand.u32 %v5181, 4294901760
      %5438 = vmatpush.msra.mxu0 %v5437
      %v5439 = vand.u32 %v4682, 4294901760
      %v5440 = vsub.f32 %v4682, %v5439
      %v5441 = vand.u32 %v5440, 4294901760
      %v5442 = vsub.f32 %v5440, %v5441
      %v5443 = vand.u32 %v5442, 4294901760
      %5444 = vmatmul.f32.gmra.mxu0 %v5443
      %v5445 = vpop.f32.mrf.mxu0
      %v5446 = vadd.f32 0.0, %v5445
      %v5447 = vand.u32 %v4685, 4294901760
      %v5448 = vsub.f32 %v4685, %v5447
      %v5449 = vand.u32 %v5448, 4294901760
      %v5450 = vsub.f32 %v5448, %v5449
      %v5451 = vand.u32 %v5450, 4294901760
      %5452 = vmatmul.f32.gmra.mxu0 %v5451
      %v5453 = vpop.f32.mrf.mxu0
      %v5454 = vadd.f32 0.0, %v5453
      %v5455 = vand.u32 %v4688, 4294901760
      %v5456 = vsub.f32 %v4688, %v5455
      %v5457 = vand.u32 %v5456, 4294901760
      %v5458 = vsub.f32 %v5456, %v5457
      %v5459 = vand.u32 %v5458, 4294901760
      %5460 = vmatmul.f32.gmra.mxu0 %v5459
      %v5461 = vpop.f32.mrf.mxu0
      %v5462 = vadd.f32 0.0, %v5461
      %v5463 = vand.u32 %v4691, 4294901760
      %v5464 = vsub.f32 %v4691, %v5463
      %v5465 = vand.u32 %v5464, 4294901760
      %v5466 = vsub.f32 %v5464, %v5465
      %v5467 = vand.u32 %v5466, 4294901760
      %5468 = vmatmul.f32.gmra.mxu0 %v5467
      %v5469 = vpop.f32.mrf.mxu0
      %v5470 = vadd.f32 0.0, %v5469
      %5471 = vdwg.mxu0
      %5472 = vmatpush.msra.mxu0 0.0
      %5473 = vmatpush.msra.mxu0 0.0
      %5474 = vmatpush.msra.mxu0 0.0
      %5475 = vmatpush.msra.mxu0 0.0
      %5476 = vmatpush.msra.mxu0 0.0
      %5477 = vmatpush.msra.mxu0 0.0
      %5478 = vmatpush.msra.mxu0 0.0
      %5479 = vmatpush.msra.mxu0 0.0
      %5480 = vmatpush.msra.mxu0 0.0
      %5481 = vmatpush.msra.mxu0 0.0
      %5482 = vmatpush.msra.mxu0 0.0
      %5483 = vmatpush.msra.mxu0 0.0
      %5484 = vmatpush.msra.mxu0 0.0
      %5485 = vmatpush.msra.mxu0 0.0
      %5486 = vmatpush.msra.mxu0 0.0
      %v5487 = vand.u32 %v5181, 4294901760
      %v5488 = vsub.f32 %v5181, %v5487
      %v5489 = vand.u32 %v5488, 4294901760
      %v5490 = vsub.f32 %v5488, %v5489
      %v5491 = vand.u32 %v5490, 4294901760
      %5492 = vmatpush.msra.mxu0 %v5491
      %v5493 = vand.u32 %v4682, 4294901760
      %5494 = vmatmul.f32.gmra.mxu0 %v5493
      %v5495 = vpop.f32.mrf.mxu0
      %v5496 = vadd.f32 %v5446, %v5495
      %v5497 = vand.u32 %v4685, 4294901760
      %5498 = vmatmul.f32.gmra.mxu0 %v5497
      %v5499 = vpop.f32.mrf.mxu0
      %v5500 = vadd.f32 %v5454, %v5499
      %v5501 = vand.u32 %v4688, 4294901760
      %5502 = vmatmul.f32.gmra.mxu0 %v5501
      %v5503 = vpop.f32.mrf.mxu0
      %v5504 = vadd.f32 %v5462, %v5503
      %v5505 = vand.u32 %v4691, 4294901760
      %5506 = vmatmul.f32.gmra.mxu0 %v5505
      %v5507 = vpop.f32.mrf.mxu0
      %v5508 = vadd.f32 %v5470, %v5507
      %5509 = vdwg.mxu0
      %5510 = vmatpush.msra.mxu0 0.0
      %5511 = vmatpush.msra.mxu0 0.0
      %5512 = vmatpush.msra.mxu0 0.0
      %5513 = vmatpush.msra.mxu0 0.0
      %5514 = vmatpush.msra.mxu0 0.0
      %5515 = vmatpush.msra.mxu0 0.0
      %5516 = vmatpush.msra.mxu0 0.0
      %5517 = vmatpush.msra.mxu0 0.0
      %5518 = vmatpush.msra.mxu0 0.0
      %5519 = vmatpush.msra.mxu0 0.0
      %5520 = vmatpush.msra.mxu0 0.0
      %5521 = vmatpush.msra.mxu0 0.0
      %5522 = vmatpush.msra.mxu0 0.0
      %5523 = vmatpush.msra.mxu0 0.0
      %5524 = vmatpush.msra.mxu0 0.0
      %v5525 = vand.u32 %v5181, 4294901760
      %v5526 = vsub.f32 %v5181, %v5525
      %5527 = vmatpush.msra.mxu0 %v5526
      %v5528 = vand.u32 %v4682, 4294901760
      %v5529 = vsub.f32 %v4682, %v5528
      %5530 = vmatmul.f32.gmra.mxu0 %v5529
      %v5531 = vpop.f32.mrf.mxu0
      %v5532 = vadd.f32 %v5496, %v5531
      %v5533 = vand.u32 %v4685, 4294901760
      %v5534 = vsub.f32 %v4685, %v5533
      %5535 = vmatmul.f32.gmra.mxu0 %v5534
      %v5536 = vpop.f32.mrf.mxu0
      %v5537 = vadd.f32 %v5500, %v5536
      %v5538 = vand.u32 %v4688, 4294901760
      %v5539 = vsub.f32 %v4688, %v5538
      %5540 = vmatmul.f32.gmra.mxu0 %v5539
      %v5541 = vpop.f32.mrf.mxu0
      %v5542 = vadd.f32 %v5504, %v5541
      %v5543 = vand.u32 %v4691, 4294901760
      %v5544 = vsub.f32 %v4691, %v5543
      %5545 = vmatmul.f32.gmra.mxu0 %v5544
      %v5546 = vpop.f32.mrf.mxu0
      %v5547 = vadd.f32 %v5508, %v5546
      %5548 = vdwg.mxu0
      %5549 = vmatpush.msra.mxu0 0.0
      %5550 = vmatpush.msra.mxu0 0.0
      %5551 = vmatpush.msra.mxu0 0.0
      %5552 = vmatpush.msra.mxu0 0.0
      %5553 = vmatpush.msra.mxu0 0.0
      %5554 = vmatpush.msra.mxu0 0.0
      %5555 = vmatpush.msra.mxu0 0.0
      %5556 = vmatpush.msra.mxu0 0.0
      %5557 = vmatpush.msra.mxu0 0.0
      %5558 = vmatpush.msra.mxu0 0.0
      %5559 = vmatpush.msra.mxu0 0.0
      %5560 = vmatpush.msra.mxu0 0.0
      %5561 = vmatpush.msra.mxu0 0.0
      %5562 = vmatpush.msra.mxu0 0.0
      %5563 = vmatpush.msra.mxu0 0.0
      %v5564 = vand.u32 %v5181, 4294901760
      %5565 = vmatpush.msra.mxu0 %v5564
      %v5566 = vand.u32 %v4682, 4294901760
      %v5567 = vsub.f32 %v4682, %v5566
      %v5568 = vand.u32 %v5567, 4294901760
      %5569 = vmatmul.f32.gmra.mxu0 %v5568
      %v5570 = vpop.f32.mrf.mxu0
      %v5571 = vadd.f32 %v5532, %v5570
      %v5572 = vand.u32 %v4685, 4294901760
      %v5573 = vsub.f32 %v4685, %v5572
      %v5574 = vand.u32 %v5573, 4294901760
      %5575 = vmatmul.f32.gmra.mxu0 %v5574
      %v5576 = vpop.f32.mrf.mxu0
      %v5577 = vadd.f32 %v5537, %v5576
      %v5578 = vand.u32 %v4688, 4294901760
      %v5579 = vsub.f32 %v4688, %v5578
      %v5580 = vand.u32 %v5579, 4294901760
      %5581 = vmatmul.f32.gmra.mxu0 %v5580
      %v5582 = vpop.f32.mrf.mxu0
      %v5583 = vadd.f32 %v5542, %v5582
      %v5584 = vand.u32 %v4691, 4294901760
      %v5585 = vsub.f32 %v4691, %v5584
      %v5586 = vand.u32 %v5585, 4294901760
      %5587 = vmatmul.f32.gmra.mxu0 %v5586
      %v5588 = vpop.f32.mrf.mxu0
      %v5589 = vadd.f32 %v5547, %v5588
      %5590 = vdwg.mxu0
      %5591 = vmatpush.msra.mxu0 0.0
      %5592 = vmatpush.msra.mxu0 0.0
      %5593 = vmatpush.msra.mxu0 0.0
      %5594 = vmatpush.msra.mxu0 0.0
      %5595 = vmatpush.msra.mxu0 0.0
      %5596 = vmatpush.msra.mxu0 0.0
      %5597 = vmatpush.msra.mxu0 0.0
      %5598 = vmatpush.msra.mxu0 0.0
      %5599 = vmatpush.msra.mxu0 0.0
      %5600 = vmatpush.msra.mxu0 0.0
      %5601 = vmatpush.msra.mxu0 0.0
      %5602 = vmatpush.msra.mxu0 0.0
      %5603 = vmatpush.msra.mxu0 0.0
      %5604 = vmatpush.msra.mxu0 0.0
      %5605 = vmatpush.msra.mxu0 0.0
      %v5606 = vand.u32 %v5181, 4294901760
      %v5607 = vsub.f32 %v5181, %v5606
      %v5608 = vand.u32 %v5607, 4294901760
      %5609 = vmatpush.msra.mxu0 %v5608
      %v5610 = vand.u32 %v4682, 4294901760
      %5611 = vmatmul.f32.gmra.mxu0 %v5610
      %v5612 = vpop.f32.mrf.mxu0
      %v5613 = vadd.f32 %v5571, %v5612
      %v5614 = vand.u32 %v4685, 4294901760
      %5615 = vmatmul.f32.gmra.mxu0 %v5614
      %v5616 = vpop.f32.mrf.mxu0
      %v5617 = vadd.f32 %v5577, %v5616
      %v5618 = vand.u32 %v4688, 4294901760
      %5619 = vmatmul.f32.gmra.mxu0 %v5618
      %v5620 = vpop.f32.mrf.mxu0
      %v5621 = vadd.f32 %v5583, %v5620
      %v5622 = vand.u32 %v4691, 4294901760
      %5623 = vmatmul.f32.gmra.mxu0 %v5622
      %v5624 = vpop.f32.mrf.mxu0
      %v5625 = vadd.f32 %v5589, %v5624
      %5626 = vdwg.mxu0
      %5627 = vmatpush.msra.mxu0 0.0
      %5628 = vmatpush.msra.mxu0 0.0
      %5629 = vmatpush.msra.mxu0 0.0
      %5630 = vmatpush.msra.mxu0 0.0
      %5631 = vmatpush.msra.mxu0 0.0
      %5632 = vmatpush.msra.mxu0 0.0
      %5633 = vmatpush.msra.mxu0 0.0
      %5634 = vmatpush.msra.mxu0 0.0
      %5635 = vmatpush.msra.mxu0 0.0
      %5636 = vmatpush.msra.mxu0 0.0
      %5637 = vmatpush.msra.mxu0 0.0
      %5638 = vmatpush.msra.mxu0 0.0
      %5639 = vmatpush.msra.mxu0 0.0
      %5640 = vmatpush.msra.mxu0 0.0
      %5641 = vmatpush.msra.mxu0 0.0
      %v5642 = vand.u32 %v5181, 4294901760
      %5643 = vmatpush.msra.mxu0 %v5642
      %v5644 = vand.u32 %v4682, 4294901760
      %5645 = vmatmul.f32.gmra.mxu0 %v5644
      %v5646 = vpop.f32.mrf.mxu0
      %v5647 = vadd.f32 %v5613, %v5646
      %v5648 = vand.u32 %v4685, 4294901760
      %5649 = vmatmul.f32.gmra.mxu0 %v5648
      %v5650 = vpop.f32.mrf.mxu0
      %v5651 = vadd.f32 %v5617, %v5650
      %v5652 = vand.u32 %v4688, 4294901760
      %5653 = vmatmul.f32.gmra.mxu0 %v5652
      %v5654 = vpop.f32.mrf.mxu0
      %v5655 = vadd.f32 %v5621, %v5654
      %v5656 = vand.u32 %v4691, 4294901760
      %5657 = vmatmul.f32.gmra.mxu0 %v5656
      %v5658 = vpop.f32.mrf.mxu0
      %v5659 = vadd.f32 %v5625, %v5658
      %5660 = vdwg.mxu0
      %v5661 = vmul.f32 %v2576, %v2640
      %v5662 = vmul.f32 %v3474, %v3538
      %v5663 = vmul.f32 %v2580, %v2644
      %v5664 = vmul.f32 %v3478, %v3542
      %v5665 = vmul.f32 %v2584, %v2648
      %v5666 = vmul.f32 %v3482, %v3546
      %v5667 = vmul.f32 %v2588, %v2652
      %v5668 = vmul.f32 %v3486, %v3550
      %5669 = vst [vmem:[#allocation1] ss:$2 sm:$0xff] %v462
      %v5670 = vld.sshfl [vmem:[#allocation1] sm:$0xff pattern:$0x75316420]
      %v5671 = vld.sshfl [vmem:[#allocation1 + $0x8] sm:$0xff pattern:$0x75316420]
      %5674 = vmatpush.xpose.msra.mxu0 0.0
      %5675 = vmatpush.xpose.msra.mxu0 0.0
      %5676 = vmatpush.xpose.msra.mxu0 0.0
      %5677 = vmatpush.xpose.msra.mxu0 0.0
      %5678 = vmatpush.xpose.msra.mxu0 0.0
      %5679 = vmatpush.xpose.msra.mxu0 0.0
      %5680 = vmatpush.xpose.msra.mxu0 0.0
      %5681 = vmatpush.xpose.msra.mxu0 0.0
      %5682 = vmatpush.xpose.msra.mxu0 0.0
      %5683 = vmatpush.xpose.msra.mxu0 0.0
      %5684 = vmatpush.xpose.msra.mxu0 0.0
      %5685 = vmatpush.xpose.msra.mxu0 0.0
      %5686 = vmatpush.xpose.msra.mxu0 0.0
      %5687 = vmatpush.xpose.msra.mxu0 0.0
      %5688 = vmatpush.xpose.msra.mxu0 0.0
      %v5689 = vand.u32 %v5670, 4294901760
      %5690 = vmatpush.xpose.msra.mxu0 %v5689
      %v5691 = vand.u32 %v5661, 4294901760
      %v5692 = vsub.f32 %v5661, %v5691
      %v5693 = vand.u32 %v5692, 4294901760
      %v5694 = vsub.f32 %v5692, %v5693
      %v5695 = vand.u32 %v5694, 4294901760
      %5696 = vmatmul.f32.gmra.mxu0 %v5695
      %v5697 = vpop.f32.mrf.mxu0
      %v5698 = vadd.f32 0.0, %v5697
      %v5699 = vand.u32 %v5663, 4294901760
      %v5700 = vsub.f32 %v5663, %v5699
      %v5701 = vand.u32 %v5700, 4294901760
      %v5702 = vsub.f32 %v5700, %v5701
      %v5703 = vand.u32 %v5702, 4294901760
      %5704 = vmatmul.f32.gmra.mxu0 %v5703
      %v5705 = vpop.f32.mrf.mxu0
      %v5706 = vadd.f32 0.0, %v5705
      %v5707 = vand.u32 %v5665, 4294901760
      %v5708 = vsub.f32 %v5665, %v5707
      %v5709 = vand.u32 %v5708, 4294901760
      %v5710 = vsub.f32 %v5708, %v5709
      %v5711 = vand.u32 %v5710, 4294901760
      %5712 = vmatmul.f32.gmra.mxu0 %v5711
      %v5713 = vpop.f32.mrf.mxu0
      %v5714 = vadd.f32 0.0, %v5713
      %v5715 = vand.u32 %v5667, 4294901760
      %v5716 = vsub.f32 %v5667, %v5715
      %v5717 = vand.u32 %v5716, 4294901760
      %v5718 = vsub.f32 %v5716, %v5717
      %v5719 = vand.u32 %v5718, 4294901760
      %5720 = vmatmul.f32.gmra.mxu0 %v5719
      %v5721 = vpop.f32.mrf.mxu0
      %v5722 = vadd.f32 0.0, %v5721
      %5723 = vdwg.mxu0
      %5724 = vmatpush.xpose.msra.mxu0 0.0
      %5725 = vmatpush.xpose.msra.mxu0 0.0
      %5726 = vmatpush.xpose.msra.mxu0 0.0
      %5727 = vmatpush.xpose.msra.mxu0 0.0
      %5728 = vmatpush.xpose.msra.mxu0 0.0
      %5729 = vmatpush.xpose.msra.mxu0 0.0
      %5730 = vmatpush.xpose.msra.mxu0 0.0
      %5731 = vmatpush.xpose.msra.mxu0 0.0
      %5732 = vmatpush.xpose.msra.mxu0 0.0
      %5733 = vmatpush.xpose.msra.mxu0 0.0
      %5734 = vmatpush.xpose.msra.mxu0 0.0
      %5735 = vmatpush.xpose.msra.mxu0 0.0
      %5736 = vmatpush.xpose.msra.mxu0 0.0
      %5737 = vmatpush.xpose.msra.mxu0 0.0
      %5738 = vmatpush.xpose.msra.mxu0 0.0
      %v5739 = vand.u32 %v5670, 4294901760
      %v5740 = vsub.f32 %v5670, %v5739
      %v5741 = vand.u32 %v5740, 4294901760
      %v5742 = vsub.f32 %v5740, %v5741
      %v5743 = vand.u32 %v5742, 4294901760
      %5744 = vmatpush.xpose.msra.mxu0 %v5743
      %v5745 = vand.u32 %v5661, 4294901760
      %5746 = vmatmul.f32.gmra.mxu0 %v5745
      %v5747 = vpop.f32.mrf.mxu0
      %v5748 = vadd.f32 %v5698, %v5747
      %v5749 = vand.u32 %v5663, 4294901760
      %5750 = vmatmul.f32.gmra.mxu0 %v5749
      %v5751 = vpop.f32.mrf.mxu0
      %v5752 = vadd.f32 %v5706, %v5751
      %v5753 = vand.u32 %v5665, 4294901760
      %5754 = vmatmul.f32.gmra.mxu0 %v5753
      %v5755 = vpop.f32.mrf.mxu0
      %v5756 = vadd.f32 %v5714, %v5755
      %v5757 = vand.u32 %v5667, 4294901760
      %5758 = vmatmul.f32.gmra.mxu0 %v5757
      %v5759 = vpop.f32.mrf.mxu0
      %v5760 = vadd.f32 %v5722, %v5759
      %5761 = vdwg.mxu0
      %5762 = vmatpush.xpose.msra.mxu0 0.0
      %5763 = vmatpush.xpose.msra.mxu0 0.0
      %5764 = vmatpush.xpose.msra.mxu0 0.0
      %5765 = vmatpush.xpose.msra.mxu0 0.0
      %5766 = vmatpush.xpose.msra.mxu0 0.0
      %5767 = vmatpush.xpose.msra.mxu0 0.0
      %5768 = vmatpush.xpose.msra.mxu0 0.0
      %5769 = vmatpush.xpose.msra.mxu0 0.0
      %5770 = vmatpush.xpose.msra.mxu0 0.0
      %5771 = vmatpush.xpose.msra.mxu0 0.0
      %5772 = vmatpush.xpose.msra.mxu0 0.0
      %5773 = vmatpush.xpose.msra.mxu0 0.0
      %5774 = vmatpush.xpose.msra.mxu0 0.0
      %5775 = vmatpush.xpose.msra.mxu0 0.0
      %5776 = vmatpush.xpose.msra.mxu0 0.0
      %v5777 = vand.u32 %v5670, 4294901760
      %v5778 = vsub.f32 %v5670, %v5777
      %5779 = vmatpush.xpose.msra.mxu0 %v5778
      %v5780 = vand.u32 %v5661, 4294901760
      %v5781 = vsub.f32 %v5661, %v5780
      %5782 = vmatmul.f32.gmra.mxu0 %v5781
      %v5783 = vpop.f32.mrf.mxu0
      %v5784 = vadd.f32 %v5748, %v5783
      %v5785 = vand.u32 %v5663, 4294901760
      %v5786 = vsub.f32 %v5663, %v5785
      %5787 = vmatmul.f32.gmra.mxu0 %v5786
      %v5788 = vpop.f32.mrf.mxu0
      %v5789 = vadd.f32 %v5752, %v5788
      %v5790 = vand.u32 %v5665, 4294901760
      %v5791 = vsub.f32 %v5665, %v5790
      %5792 = vmatmul.f32.gmra.mxu0 %v5791
      %v5793 = vpop.f32.mrf.mxu0
      %v5794 = vadd.f32 %v5756, %v5793
      %v5795 = vand.u32 %v5667, 4294901760
      %v5796 = vsub.f32 %v5667, %v5795
      %5797 = vmatmul.f32.gmra.mxu0 %v5796
      %v5798 = vpop.f32.mrf.mxu0
      %v5799 = vadd.f32 %v5760, %v5798
      %5800 = vdwg.mxu0
      %5801 = vmatpush.xpose.msra.mxu0 0.0
      %5802 = vmatpush.xpose.msra.mxu0 0.0
      %5803 = vmatpush.xpose.msra.mxu0 0.0
      %5804 = vmatpush.xpose.msra.mxu0 0.0
      %5805 = vmatpush.xpose.msra.mxu0 0.0
      %5806 = vmatpush.xpose.msra.mxu0 0.0
      %5807 = vmatpush.xpose.msra.mxu0 0.0
      %5808 = vmatpush.xpose.msra.mxu0 0.0
      %5809 = vmatpush.xpose.msra.mxu0 0.0
      %5810 = vmatpush.xpose.msra.mxu0 0.0
      %5811 = vmatpush.xpose.msra.mxu0 0.0
      %5812 = vmatpush.xpose.msra.mxu0 0.0
      %5813 = vmatpush.xpose.msra.mxu0 0.0
      %5814 = vmatpush.xpose.msra.mxu0 0.0
      %5815 = vmatpush.xpose.msra.mxu0 0.0
      %v5816 = vand.u32 %v5670, 4294901760
      %5817 = vmatpush.xpose.msra.mxu0 %v5816
      %v5818 = vand.u32 %v5661, 4294901760
      %v5819 = vsub.f32 %v5661, %v5818
      %v5820 = vand.u32 %v5819, 4294901760
      %5821 = vmatmul.f32.gmra.mxu0 %v5820
      %v5822 = vpop.f32.mrf.mxu0
      %v5823 = vadd.f32 %v5784, %v5822
      %v5824 = vand.u32 %v5663, 4294901760
      %v5825 = vsub.f32 %v5663, %v5824
      %v5826 = vand.u32 %v5825, 4294901760
      %5827 = vmatmul.f32.gmra.mxu0 %v5826
      %v5828 = vpop.f32.mrf.mxu0
      %v5829 = vadd.f32 %v5789, %v5828
      %v5830 = vand.u32 %v5665, 4294901760
      %v5831 = vsub.f32 %v5665, %v5830
      %v5832 = vand.u32 %v5831, 4294901760
      %5833 = vmatmul.f32.gmra.mxu0 %v5832
      %v5834 = vpop.f32.mrf.mxu0
      %v5835 = vadd.f32 %v5794, %v5834
      %v5836 = vand.u32 %v5667, 4294901760
      %v5837 = vsub.f32 %v5667, %v5836
      %v5838 = vand.u32 %v5837, 4294901760
      %5839 = vmatmul.f32.gmra.mxu0 %v5838
      %v5840 = vpop.f32.mrf.mxu0
      %v5841 = vadd.f32 %v5799, %v5840
      %5842 = vdwg.mxu0
      %5843 = vmatpush.xpose.msra.mxu0 0.0
      %5844 = vmatpush.xpose.msra.mxu0 0.0
      %5845 = vmatpush.xpose.msra.mxu0 0.0
      %5846 = vmatpush.xpose.msra.mxu0 0.0
      %5847 = vmatpush.xpose.msra.mxu0 0.0
      %5848 = vmatpush.xpose.msra.mxu0 0.0
      %5849 = vmatpush.xpose.msra.mxu0 0.0
      %5850 = vmatpush.xpose.msra.mxu0 0.0
      %5851 = vmatpush.xpose.msra.mxu0 0.0
      %5852 = vmatpush.xpose.msra.mxu0 0.0
      %5853 = vmatpush.xpose.msra.mxu0 0.0
      %5854 = vmatpush.xpose.msra.mxu0 0.0
      %5855 = vmatpush.xpose.msra.mxu0 0.0
      %5856 = vmatpush.xpose.msra.mxu0 0.0
      %5857 = vmatpush.xpose.msra.mxu0 0.0
      %v5858 = vand.u32 %v5670, 4294901760
      %v5859 = vsub.f32 %v5670, %v5858
      %v5860 = vand.u32 %v5859, 4294901760
      %5861 = vmatpush.xpose.msra.mxu0 %v5860
      %v5862 = vand.u32 %v5661, 4294901760
      %5863 = vmatmul.f32.gmra.mxu0 %v5862
      %v5864 = vpop.f32.mrf.mxu0
      %v5865 = vadd.f32 %v5823, %v5864
      %v5866 = vand.u32 %v5663, 4294901760
      %5867 = vmatmul.f32.gmra.mxu0 %v5866
      %v5868 = vpop.f32.mrf.mxu0
      %v5869 = vadd.f32 %v5829, %v5868
      %v5870 = vand.u32 %v5665, 4294901760
      %5871 = vmatmul.f32.gmra.mxu0 %v5870
      %v5872 = vpop.f32.mrf.mxu0
      %v5873 = vadd.f32 %v5835, %v5872
      %v5874 = vand.u32 %v5667, 4294901760
      %5875 = vmatmul.f32.gmra.mxu0 %v5874
      %v5876 = vpop.f32.mrf.mxu0
      %v5877 = vadd.f32 %v5841, %v5876
      %5878 = vdwg.mxu0
      %5879 = vmatpush.xpose.msra.mxu0 0.0
      %5880 = vmatpush.xpose.msra.mxu0 0.0
      %5881 = vmatpush.xpose.msra.mxu0 0.0
      %5882 = vmatpush.xpose.msra.mxu0 0.0
      %5883 = vmatpush.xpose.msra.mxu0 0.0
      %5884 = vmatpush.xpose.msra.mxu0 0.0
      %5885 = vmatpush.xpose.msra.mxu0 0.0
      %5886 = vmatpush.xpose.msra.mxu0 0.0
      %5887 = vmatpush.xpose.msra.mxu0 0.0
      %5888 = vmatpush.xpose.msra.mxu0 0.0
      %5889 = vmatpush.xpose.msra.mxu0 0.0
      %5890 = vmatpush.xpose.msra.mxu0 0.0
      %5891 = vmatpush.xpose.msra.mxu0 0.0
      %5892 = vmatpush.xpose.msra.mxu0 0.0
      %5893 = vmatpush.xpose.msra.mxu0 0.0
      %v5894 = vand.u32 %v5670, 4294901760
      %5895 = vmatpush.xpose.msra.mxu0 %v5894
      %v5896 = vand.u32 %v5661, 4294901760
      %5897 = vmatmul.f32.gmra.mxu0 %v5896
      %v5898 = vpop.f32.mrf.mxu0
      %v5899 = vadd.f32 %v5865, %v5898
      %v5900 = vand.u32 %v5663, 4294901760
      %5901 = vmatmul.f32.gmra.mxu0 %v5900
      %v5902 = vpop.f32.mrf.mxu0
      %v5903 = vadd.f32 %v5869, %v5902
      %v5904 = vand.u32 %v5665, 4294901760
      %5905 = vmatmul.f32.gmra.mxu0 %v5904
      %v5906 = vpop.f32.mrf.mxu0
      %v5907 = vadd.f32 %v5873, %v5906
      %v5908 = vand.u32 %v5667, 4294901760
      %5909 = vmatmul.f32.gmra.mxu0 %v5908
      %v5910 = vpop.f32.mrf.mxu0
      %v5911 = vadd.f32 %v5877, %v5910
      %5912 = vdwg.mxu0
      %5913 = vmatpush.xpose.msra.mxu0 0.0
      %5914 = vmatpush.xpose.msra.mxu0 0.0
      %5915 = vmatpush.xpose.msra.mxu0 0.0
      %5916 = vmatpush.xpose.msra.mxu0 0.0
      %5917 = vmatpush.xpose.msra.mxu0 0.0
      %5918 = vmatpush.xpose.msra.mxu0 0.0
      %5919 = vmatpush.xpose.msra.mxu0 0.0
      %5920 = vmatpush.xpose.msra.mxu0 0.0
      %5921 = vmatpush.xpose.msra.mxu0 0.0
      %5922 = vmatpush.xpose.msra.mxu0 0.0
      %5923 = vmatpush.xpose.msra.mxu0 0.0
      %5924 = vmatpush.xpose.msra.mxu0 0.0
      %5925 = vmatpush.xpose.msra.mxu0 0.0
      %5926 = vmatpush.xpose.msra.mxu0 0.0
      %5927 = vmatpush.xpose.msra.mxu0 0.0
      %v5928 = vand.u32 %v5671, 4294901760
      %5929 = vmatpush.xpose.msra.mxu0 %v5928
      %v5930 = vand.u32 %v5662, 4294901760
      %v5931 = vsub.f32 %v5662, %v5930
      %v5932 = vand.u32 %v5931, 4294901760
      %v5933 = vsub.f32 %v5931, %v5932
      %v5934 = vand.u32 %v5933, 4294901760
      %5935 = vmatmul.f32.gmra.mxu0 %v5934
      %v5936 = vpop.f32.mrf.mxu0
      %v5937 = vadd.f32 %v5899, %v5936
      %v5938 = vand.u32 %v5664, 4294901760
      %v5939 = vsub.f32 %v5664, %v5938
      %v5940 = vand.u32 %v5939, 4294901760
      %v5941 = vsub.f32 %v5939, %v5940
      %v5942 = vand.u32 %v5941, 4294901760
      %5943 = vmatmul.f32.gmra.mxu0 %v5942
      %v5944 = vpop.f32.mrf.mxu0
      %v5945 = vadd.f32 %v5903, %v5944
      %v5946 = vand.u32 %v5666, 4294901760
      %v5947 = vsub.f32 %v5666, %v5946
      %v5948 = vand.u32 %v5947, 4294901760
      %v5949 = vsub.f32 %v5947, %v5948
      %v5950 = vand.u32 %v5949, 4294901760
      %5951 = vmatmul.f32.gmra.mxu0 %v5950
      %v5952 = vpop.f32.mrf.mxu0
      %v5953 = vadd.f32 %v5907, %v5952
      %v5954 = vand.u32 %v5668, 4294901760
      %v5955 = vsub.f32 %v5668, %v5954
      %v5956 = vand.u32 %v5955, 4294901760
      %v5957 = vsub.f32 %v5955, %v5956
      %v5958 = vand.u32 %v5957, 4294901760
      %5959 = vmatmul.f32.gmra.mxu0 %v5958
      %v5960 = vpop.f32.mrf.mxu0
      %v5961 = vadd.f32 %v5911, %v5960
      %5962 = vdwg.mxu0
      %5963 = vmatpush.xpose.msra.mxu0 0.0
      %5964 = vmatpush.xpose.msra.mxu0 0.0
      %5965 = vmatpush.xpose.msra.mxu0 0.0
      %5966 = vmatpush.xpose.msra.mxu0 0.0
      %5967 = vmatpush.xpose.msra.mxu0 0.0
      %5968 = vmatpush.xpose.msra.mxu0 0.0
      %5969 = vmatpush.xpose.msra.mxu0 0.0
      %5970 = vmatpush.xpose.msra.mxu0 0.0
      %5971 = vmatpush.xpose.msra.mxu0 0.0
      %5972 = vmatpush.xpose.msra.mxu0 0.0
      %5973 = vmatpush.xpose.msra.mxu0 0.0
      %5974 = vmatpush.xpose.msra.mxu0 0.0
      %5975 = vmatpush.xpose.msra.mxu0 0.0
      %5976 = vmatpush.xpose.msra.mxu0 0.0
      %5977 = vmatpush.xpose.msra.mxu0 0.0
      %v5978 = vand.u32 %v5671, 4294901760
      %v5979 = vsub.f32 %v5671, %v5978
      %v5980 = vand.u32 %v5979, 4294901760
      %v5981 = vsub.f32 %v5979, %v5980
      %v5982 = vand.u32 %v5981, 4294901760
      %5983 = vmatpush.xpose.msra.mxu0 %v5982
      %v5984 = vand.u32 %v5662, 4294901760
      %5985 = vmatmul.f32.gmra.mxu0 %v5984
      %v5986 = vpop.f32.mrf.mxu0
      %v5987 = vadd.f32 %v5937, %v5986
      %v5988 = vand.u32 %v5664, 4294901760
      %5989 = vmatmul.f32.gmra.mxu0 %v5988
      %v5990 = vpop.f32.mrf.mxu0
      %v5991 = vadd.f32 %v5945, %v5990
      %v5992 = vand.u32 %v5666, 4294901760
      %5993 = vmatmul.f32.gmra.mxu0 %v5992
      %v5994 = vpop.f32.mrf.mxu0
      %v5995 = vadd.f32 %v5953, %v5994
      %v5996 = vand.u32 %v5668, 4294901760
      %5997 = vmatmul.f32.gmra.mxu0 %v5996
      %v5998 = vpop.f32.mrf.mxu0
      %v5999 = vadd.f32 %v5961, %v5998
      %6000 = vdwg.mxu0
      %6001 = vmatpush.xpose.msra.mxu0 0.0
      %6002 = vmatpush.xpose.msra.mxu0 0.0
      %6003 = vmatpush.xpose.msra.mxu0 0.0
      %6004 = vmatpush.xpose.msra.mxu0 0.0
      %6005 = vmatpush.xpose.msra.mxu0 0.0
      %6006 = vmatpush.xpose.msra.mxu0 0.0
      %6007 = vmatpush.xpose.msra.mxu0 0.0
      %6008 = vmatpush.xpose.msra.mxu0 0.0
      %6009 = vmatpush.xpose.msra.mxu0 0.0
      %6010 = vmatpush.xpose.msra.mxu0 0.0
      %6011 = vmatpush.xpose.msra.mxu0 0.0
      %6012 = vmatpush.xpose.msra.mxu0 0.0
      %6013 = vmatpush.xpose.msra.mxu0 0.0
      %6014 = vmatpush.xpose.msra.mxu0 0.0
      %6015 = vmatpush.xpose.msra.mxu0 0.0
      %v6016 = vand.u32 %v5671, 4294901760
      %v6017 = vsub.f32 %v5671, %v6016
      %6018 = vmatpush.xpose.msra.mxu0 %v6017
      %v6019 = vand.u32 %v5662, 4294901760
      %v6020 = vsub.f32 %v5662, %v6019
      %6021 = vmatmul.f32.gmra.mxu0 %v6020
      %v6022 = vpop.f32.mrf.mxu0
      %v6023 = vadd.f32 %v5987, %v6022
      %v6024 = vand.u32 %v5664, 4294901760
      %v6025 = vsub.f32 %v5664, %v6024
      %6026 = vmatmul.f32.gmra.mxu0 %v6025
      %v6027 = vpop.f32.mrf.mxu0
      %v6028 = vadd.f32 %v5991, %v6027
      %v6029 = vand.u32 %v5666, 4294901760
      %v6030 = vsub.f32 %v5666, %v6029
      %6031 = vmatmul.f32.gmra.mxu0 %v6030
      %v6032 = vpop.f32.mrf.mxu0
      %v6033 = vadd.f32 %v5995, %v6032
      %v6034 = vand.u32 %v5668, 4294901760
      %v6035 = vsub.f32 %v5668, %v6034
      %6036 = vmatmul.f32.gmra.mxu0 %v6035
      %v6037 = vpop.f32.mrf.mxu0
      %v6038 = vadd.f32 %v5999, %v6037
      %6039 = vdwg.mxu0
      %6040 = vmatpush.xpose.msra.mxu0 0.0
      %6041 = vmatpush.xpose.msra.mxu0 0.0
      %6042 = vmatpush.xpose.msra.mxu0 0.0
      %6043 = vmatpush.xpose.msra.mxu0 0.0
      %6044 = vmatpush.xpose.msra.mxu0 0.0
      %6045 = vmatpush.xpose.msra.mxu0 0.0
      %6046 = vmatpush.xpose.msra.mxu0 0.0
      %6047 = vmatpush.xpose.msra.mxu0 0.0
      %6048 = vmatpush.xpose.msra.mxu0 0.0
      %6049 = vmatpush.xpose.msra.mxu0 0.0
      %6050 = vmatpush.xpose.msra.mxu0 0.0
      %6051 = vmatpush.xpose.msra.mxu0 0.0
      %6052 = vmatpush.xpose.msra.mxu0 0.0
      %6053 = vmatpush.xpose.msra.mxu0 0.0
      %6054 = vmatpush.xpose.msra.mxu0 0.0
      %v6055 = vand.u32 %v5671, 4294901760
      %6056 = vmatpush.xpose.msra.mxu0 %v6055
      %v6057 = vand.u32 %v5662, 4294901760
      %v6058 = vsub.f32 %v5662, %v6057
      %v6059 = vand.u32 %v6058, 4294901760
      %6060 = vmatmul.f32.gmra.mxu0 %v6059
      %v6061 = vpop.f32.mrf.mxu0
      %v6062 = vadd.f32 %v6023, %v6061
      %v6063 = vand.u32 %v5664, 4294901760
      %v6064 = vsub.f32 %v5664, %v6063
      %v6065 = vand.u32 %v6064, 4294901760
      %6066 = vmatmul.f32.gmra.mxu0 %v6065
      %v6067 = vpop.f32.mrf.mxu0
      %v6068 = vadd.f32 %v6028, %v6067
      %v6069 = vand.u32 %v5666, 4294901760
      %v6070 = vsub.f32 %v5666, %v6069
      %v6071 = vand.u32 %v6070, 4294901760
      %6072 = vmatmul.f32.gmra.mxu0 %v6071
      %v6073 = vpop.f32.mrf.mxu0
      %v6074 = vadd.f32 %v6033, %v6073
      %v6075 = vand.u32 %v5668, 4294901760
      %v6076 = vsub.f32 %v5668, %v6075
      %v6077 = vand.u32 %v6076, 4294901760
      %6078 = vmatmul.f32.gmra.mxu0 %v6077
      %v6079 = vpop.f32.mrf.mxu0
      %v6080 = vadd.f32 %v6038, %v6079
      %6081 = vdwg.mxu0
      %6082 = vmatpush.xpose.msra.mxu0 0.0
      %6083 = vmatpush.xpose.msra.mxu0 0.0
      %6084 = vmatpush.xpose.msra.mxu0 0.0
      %6085 = vmatpush.xpose.msra.mxu0 0.0
      %6086 = vmatpush.xpose.msra.mxu0 0.0
      %6087 = vmatpush.xpose.msra.mxu0 0.0
      %6088 = vmatpush.xpose.msra.mxu0 0.0
      %6089 = vmatpush.xpose.msra.mxu0 0.0
      %6090 = vmatpush.xpose.msra.mxu0 0.0
      %6091 = vmatpush.xpose.msra.mxu0 0.0
      %6092 = vmatpush.xpose.msra.mxu0 0.0
      %6093 = vmatpush.xpose.msra.mxu0 0.0
      %6094 = vmatpush.xpose.msra.mxu0 0.0
      %6095 = vmatpush.xpose.msra.mxu0 0.0
      %6096 = vmatpush.xpose.msra.mxu0 0.0
      %v6097 = vand.u32 %v5671, 4294901760
      %v6098 = vsub.f32 %v5671, %v6097
      %v6099 = vand.u32 %v6098, 4294901760
      %6100 = vmatpush.xpose.msra.mxu0 %v6099
      %v6101 = vand.u32 %v5662, 4294901760
      %6102 = vmatmul.f32.gmra.mxu0 %v6101
      %v6103 = vpop.f32.mrf.mxu0
      %v6104 = vadd.f32 %v6062, %v6103
      %v6105 = vand.u32 %v5664, 4294901760
      %6106 = vmatmul.f32.gmra.mxu0 %v6105
      %v6107 = vpop.f32.mrf.mxu0
      %v6108 = vadd.f32 %v6068, %v6107
      %v6109 = vand.u32 %v5666, 4294901760
      %6110 = vmatmul.f32.gmra.mxu0 %v6109
      %v6111 = vpop.f32.mrf.mxu0
      %v6112 = vadd.f32 %v6074, %v6111
      %v6113 = vand.u32 %v5668, 4294901760
      %6114 = vmatmul.f32.gmra.mxu0 %v6113
      %v6115 = vpop.f32.mrf.mxu0
      %v6116 = vadd.f32 %v6080, %v6115
      %6117 = vdwg.mxu0
      %6118 = vmatpush.xpose.msra.mxu0 0.0
      %6119 = vmatpush.xpose.msra.mxu0 0.0
      %6120 = vmatpush.xpose.msra.mxu0 0.0
      %6121 = vmatpush.xpose.msra.mxu0 0.0
      %6122 = vmatpush.xpose.msra.mxu0 0.0
      %6123 = vmatpush.xpose.msra.mxu0 0.0
      %6124 = vmatpush.xpose.msra.mxu0 0.0
      %6125 = vmatpush.xpose.msra.mxu0 0.0
      %6126 = vmatpush.xpose.msra.mxu0 0.0
      %6127 = vmatpush.xpose.msra.mxu0 0.0
      %6128 = vmatpush.xpose.msra.mxu0 0.0
      %6129 = vmatpush.xpose.msra.mxu0 0.0
      %6130 = vmatpush.xpose.msra.mxu0 0.0
      %6131 = vmatpush.xpose.msra.mxu0 0.0
      %6132 = vmatpush.xpose.msra.mxu0 0.0
      %v6133 = vand.u32 %v5671, 4294901760
      %6134 = vmatpush.xpose.msra.mxu0 %v6133
      %v6135 = vand.u32 %v5662, 4294901760
      %6136 = vmatmul.f32.gmra.mxu0 %v6135
      %v6137 = vpop.f32.mrf.mxu0
      %v6138 = vadd.f32 %v6104, %v6137
      %v6139 = vand.u32 %v5664, 4294901760
      %6140 = vmatmul.f32.gmra.mxu0 %v6139
      %v6141 = vpop.f32.mrf.mxu0
      %v6142 = vadd.f32 %v6108, %v6141
      %v6143 = vand.u32 %v5666, 4294901760
      %6144 = vmatmul.f32.gmra.mxu0 %v6143
      %v6145 = vpop.f32.mrf.mxu0
      %v6146 = vadd.f32 %v6112, %v6145
      %v6147 = vand.u32 %v5668, 4294901760
      %6148 = vmatmul.f32.gmra.mxu0 %v6147
      %v6149 = vpop.f32.mrf.mxu0
      %v6150 = vadd.f32 %v6116, %v6149
      %6151 = vdwg.mxu0
      %v6152 = vmul.f32 %v6138, 0.125
      %v6153 = vmul.f32 %v6142, 0.125
      %v6154 = vmul.f32 %v6146, 0.125
      %v6155 = vmul.f32 %v6150, 0.125
      %6156 = vrot.lane.b32.xlu0 %v2640, 64
      %v6157 = vpop.permute.xlu0 %6156
      %6158 = vrot.lane.b32.xlu0 %v2644, 64
      %v6159 = vpop.permute.xlu0 %6158
      %6160 = vrot.lane.b32.xlu0 %v2648, 64
      %v6161 = vpop.permute.xlu0 %6160
      %6162 = vrot.lane.b32.xlu0 %v2652, 64
      %v6163 = vpop.permute.xlu0 %6162
      %6164 = vrot.lane.b32.xlu0 %v3538, 64
      %v6165 = vpop.permute.xlu0 %6164
      %6166 = vrot.lane.b32.xlu0 %v3542, 64
      %v6167 = vpop.permute.xlu0 %6166
      %6168 = vrot.lane.b32.xlu0 %v3546, 64
      %v6169 = vpop.permute.xlu0 %6168
      %6170 = vrot.lane.b32.xlu0 %v3550, 64
      %v6171 = vpop.permute.xlu0 %6170
      %v6172 = vlaneseq
      %v6173 = vand.u32 %v6172, 127
      %vm6174 = vcmp.lt.s32.totalorder %v6173, 64
      %v6175 = vsel %vm6174, %v6157, %v6165
      %v6176 = vsel %vm6174, %v6159, %v6167
      %v6177 = vsel %vm6174, %v6161, %v6169
      %v6178 = vsel %vm6174, %v6163, %v6171
      %v6179 = vsel %vm6174, %v6165, %v6157
      %v6180 = vsel %vm6174, %v6167, %v6159
      %v6181 = vsel %vm6174, %v6169, %v6161
      %v6182 = vsel %vm6174, %v6171, %v6163
      %v6183 = vmul.f32 %v2576, %v6179
      %v6184 = vmul.f32 %v3474, %v6175
      %v6185 = vmul.f32 %v2580, %v6180
      %v6186 = vmul.f32 %v3478, %v6176
      %v6187 = vmul.f32 %v2584, %v6181
      %v6188 = vmul.f32 %v3482, %v6177
      %v6189 = vmul.f32 %v2588, %v6182
      %v6190 = vmul.f32 %v3486, %v6178
      %6191 = vst [vmem:[#allocation1] ss:$2 sm:$0xff] %v462
      %v6192 = vld.sshfl [vmem:[#allocation1] sm:$0xff pattern:$0x75316420]
      %v6193 = vld.sshfl [vmem:[#allocation1 + $0x8] sm:$0xff pattern:$0x75316420]
      %6196 = vmatpush.xpose.msra.mxu0 0.0
      %6197 = vmatpush.xpose.msra.mxu0 0.0
      %6198 = vmatpush.xpose.msra.mxu0 0.0
      %6199 = vmatpush.xpose.msra.mxu0 0.0
      %6200 = vmatpush.xpose.msra.mxu0 0.0
      %6201 = vmatpush.xpose.msra.mxu0 0.0
      %6202 = vmatpush.xpose.msra.mxu0 0.0
      %6203 = vmatpush.xpose.msra.mxu0 0.0
      %6204 = vmatpush.xpose.msra.mxu0 0.0
      %6205 = vmatpush.xpose.msra.mxu0 0.0
      %6206 = vmatpush.xpose.msra.mxu0 0.0
      %6207 = vmatpush.xpose.msra.mxu0 0.0
      %6208 = vmatpush.xpose.msra.mxu0 0.0
      %6209 = vmatpush.xpose.msra.mxu0 0.0
      %6210 = vmatpush.xpose.msra.mxu0 0.0
      %v6211 = vand.u32 %v6192, 4294901760
      %6212 = vmatpush.xpose.msra.mxu0 %v6211
      %v6213 = vand.u32 %v6183, 4294901760
      %v6214 = vsub.f32 %v6183, %v6213
      %v6215 = vand.u32 %v6214, 4294901760
      %v6216 = vsub.f32 %v6214, %v6215
      %v6217 = vand.u32 %v6216, 4294901760
      %6218 = vmatmul.f32.gmra.mxu0 %v6217
      %v6219 = vpop.f32.mrf.mxu0
      %v6220 = vadd.f32 0.0, %v6219
      %v6221 = vand.u32 %v6185, 4294901760
      %v6222 = vsub.f32 %v6185, %v6221
      %v6223 = vand.u32 %v6222, 4294901760
      %v6224 = vsub.f32 %v6222, %v6223
      %v6225 = vand.u32 %v6224, 4294901760
      %6226 = vmatmul.f32.gmra.mxu0 %v6225
      %v6227 = vpop.f32.mrf.mxu0
      %v6228 = vadd.f32 0.0, %v6227
      %v6229 = vand.u32 %v6187, 4294901760
      %v6230 = vsub.f32 %v6187, %v6229
      %v6231 = vand.u32 %v6230, 4294901760
      %v6232 = vsub.f32 %v6230, %v6231
      %v6233 = vand.u32 %v6232, 4294901760
      %6234 = vmatmul.f32.gmra.mxu0 %v6233
      %v6235 = vpop.f32.mrf.mxu0
      %v6236 = vadd.f32 0.0, %v6235
      %v6237 = vand.u32 %v6189, 4294901760
      %v6238 = vsub.f32 %v6189, %v6237
      %v6239 = vand.u32 %v6238, 4294901760
      %v6240 = vsub.f32 %v6238, %v6239
      %v6241 = vand.u32 %v6240, 4294901760
      %6242 = vmatmul.f32.gmra.mxu0 %v6241
      %v6243 = vpop.f32.mrf.mxu0
      %v6244 = vadd.f32 0.0, %v6243
      %6245 = vdwg.mxu0
      %6246 = vmatpush.xpose.msra.mxu0 0.0
      %6247 = vmatpush.xpose.msra.mxu0 0.0
      %6248 = vmatpush.xpose.msra.mxu0 0.0
      %6249 = vmatpush.xpose.msra.mxu0 0.0
      %6250 = vmatpush.xpose.msra.mxu0 0.0
      %6251 = vmatpush.xpose.msra.mxu0 0.0
      %6252 = vmatpush.xpose.msra.mxu0 0.0
      %6253 = vmatpush.xpose.msra.mxu0 0.0
      %6254 = vmatpush.xpose.msra.mxu0 0.0
      %6255 = vmatpush.xpose.msra.mxu0 0.0
      %6256 = vmatpush.xpose.msra.mxu0 0.0
      %6257 = vmatpush.xpose.msra.mxu0 0.0
      %6258 = vmatpush.xpose.msra.mxu0 0.0
      %6259 = vmatpush.xpose.msra.mxu0 0.0
      %6260 = vmatpush.xpose.msra.mxu0 0.0
      %v6261 = vand.u32 %v6192, 4294901760
      %v6262 = vsub.f32 %v6192, %v6261
      %v6263 = vand.u32 %v6262, 4294901760
      %v6264 = vsub.f32 %v6262, %v6263
      %v6265 = vand.u32 %v6264, 4294901760
      %6266 = vmatpush.xpose.msra.mxu0 %v6265
      %v6267 = vand.u32 %v6183, 4294901760
      %6268 = vmatmul.f32.gmra.mxu0 %v6267
      %v6269 = vpop.f32.mrf.mxu0
      %v6270 = vadd.f32 %v6220, %v6269
      %v6271 = vand.u32 %v6185, 4294901760
      %6272 = vmatmul.f32.gmra.mxu0 %v6271
      %v6273 = vpop.f32.mrf.mxu0
      %v6274 = vadd.f32 %v6228, %v6273
      %v6275 = vand.u32 %v6187, 4294901760
      %6276 = vmatmul.f32.gmra.mxu0 %v6275
      %v6277 = vpop.f32.mrf.mxu0
      %v6278 = vadd.f32 %v6236, %v6277
      %v6279 = vand.u32 %v6189, 4294901760
      %6280 = vmatmul.f32.gmra.mxu0 %v6279
      %v6281 = vpop.f32.mrf.mxu0
      %v6282 = vadd.f32 %v6244, %v6281
      %6283 = vdwg.mxu0
      %6284 = vmatpush.xpose.msra.mxu0 0.0
      %6285 = vmatpush.xpose.msra.mxu0 0.0
      %6286 = vmatpush.xpose.msra.mxu0 0.0
      %6287 = vmatpush.xpose.msra.mxu0 0.0
      %6288 = vmatpush.xpose.msra.mxu0 0.0
      %6289 = vmatpush.xpose.msra.mxu0 0.0
      %6290 = vmatpush.xpose.msra.mxu0 0.0
      %6291 = vmatpush.xpose.msra.mxu0 0.0
      %6292 = vmatpush.xpose.msra.mxu0 0.0
      %6293 = vmatpush.xpose.msra.mxu0 0.0
      %6294 = vmatpush.xpose.msra.mxu0 0.0
      %6295 = vmatpush.xpose.msra.mxu0 0.0
      %6296 = vmatpush.xpose.msra.mxu0 0.0
      %6297 = vmatpush.xpose.msra.mxu0 0.0
      %6298 = vmatpush.xpose.msra.mxu0 0.0
      %v6299 = vand.u32 %v6192, 4294901760
      %v6300 = vsub.f32 %v6192, %v6299
      %6301 = vmatpush.xpose.msra.mxu0 %v6300
      %v6302 = vand.u32 %v6183, 4294901760
      %v6303 = vsub.f32 %v6183, %v6302
      %6304 = vmatmul.f32.gmra.mxu0 %v6303
      %v6305 = vpop.f32.mrf.mxu0
      %v6306 = vadd.f32 %v6270, %v6305
      %v6307 = vand.u32 %v6185, 4294901760
      %v6308 = vsub.f32 %v6185, %v6307
      %6309 = vmatmul.f32.gmra.mxu0 %v6308
      %v6310 = vpop.f32.mrf.mxu0
      %v6311 = vadd.f32 %v6274, %v6310
      %v6312 = vand.u32 %v6187, 4294901760
      %v6313 = vsub.f32 %v6187, %v6312
      %6314 = vmatmul.f32.gmra.mxu0 %v6313
      %v6315 = vpop.f32.mrf.mxu0
      %v6316 = vadd.f32 %v6278, %v6315
      %v6317 = vand.u32 %v6189, 4294901760
      %v6318 = vsub.f32 %v6189, %v6317
      %6319 = vmatmul.f32.gmra.mxu0 %v6318
      %v6320 = vpop.f32.mrf.mxu0
      %v6321 = vadd.f32 %v6282, %v6320
      %6322 = vdwg.mxu0
      %6323 = vmatpush.xpose.msra.mxu0 0.0
      %6324 = vmatpush.xpose.msra.mxu0 0.0
      %6325 = vmatpush.xpose.msra.mxu0 0.0
      %6326 = vmatpush.xpose.msra.mxu0 0.0
      %6327 = vmatpush.xpose.msra.mxu0 0.0
      %6328 = vmatpush.xpose.msra.mxu0 0.0
      %6329 = vmatpush.xpose.msra.mxu0 0.0
      %6330 = vmatpush.xpose.msra.mxu0 0.0
      %6331 = vmatpush.xpose.msra.mxu0 0.0
      %6332 = vmatpush.xpose.msra.mxu0 0.0
      %6333 = vmatpush.xpose.msra.mxu0 0.0
      %6334 = vmatpush.xpose.msra.mxu0 0.0
      %6335 = vmatpush.xpose.msra.mxu0 0.0
      %6336 = vmatpush.xpose.msra.mxu0 0.0
      %6337 = vmatpush.xpose.msra.mxu0 0.0
      %v6338 = vand.u32 %v6192, 4294901760
      %6339 = vmatpush.xpose.msra.mxu0 %v6338
      %v6340 = vand.u32 %v6183, 4294901760
      %v6341 = vsub.f32 %v6183, %v6340
      %v6342 = vand.u32 %v6341, 4294901760
      %6343 = vmatmul.f32.gmra.mxu0 %v6342
      %v6344 = vpop.f32.mrf.mxu0
      %v6345 = vadd.f32 %v6306, %v6344
      %v6346 = vand.u32 %v6185, 4294901760
      %v6347 = vsub.f32 %v6185, %v6346
      %v6348 = vand.u32 %v6347, 4294901760
      %6349 = vmatmul.f32.gmra.mxu0 %v6348
      %v6350 = vpop.f32.mrf.mxu0
      %v6351 = vadd.f32 %v6311, %v6350
      %v6352 = vand.u32 %v6187, 4294901760
      %v6353 = vsub.f32 %v6187, %v6352
      %v6354 = vand.u32 %v6353, 4294901760
      %6355 = vmatmul.f32.gmra.mxu0 %v6354
      %v6356 = vpop.f32.mrf.mxu0
      %v6357 = vadd.f32 %v6316, %v6356
      %v6358 = vand.u32 %v6189, 4294901760
      %v6359 = vsub.f32 %v6189, %v6358
      %v6360 = vand.u32 %v6359, 4294901760
      %6361 = vmatmul.f32.gmra.mxu0 %v6360
      %v6362 = vpop.f32.mrf.mxu0
      %v6363 = vadd.f32 %v6321, %v6362
      %6364 = vdwg.mxu0
      %6365 = vmatpush.xpose.msra.mxu0 0.0
      %6366 = vmatpush.xpose.msra.mxu0 0.0
      %6367 = vmatpush.xpose.msra.mxu0 0.0
      %6368 = vmatpush.xpose.msra.mxu0 0.0
      %6369 = vmatpush.xpose.msra.mxu0 0.0
      %6370 = vmatpush.xpose.msra.mxu0 0.0
      %6371 = vmatpush.xpose.msra.mxu0 0.0
      %6372 = vmatpush.xpose.msra.mxu0 0.0
      %6373 = vmatpush.xpose.msra.mxu0 0.0
      %6374 = vmatpush.xpose.msra.mxu0 0.0
      %6375 = vmatpush.xpose.msra.mxu0 0.0
      %6376 = vmatpush.xpose.msra.mxu0 0.0
      %6377 = vmatpush.xpose.msra.mxu0 0.0
      %6378 = vmatpush.xpose.msra.mxu0 0.0
      %6379 = vmatpush.xpose.msra.mxu0 0.0
      %v6380 = vand.u32 %v6192, 4294901760
      %v6381 = vsub.f32 %v6192, %v6380
      %v6382 = vand.u32 %v6381, 4294901760
      %6383 = vmatpush.xpose.msra.mxu0 %v6382
      %v6384 = vand.u32 %v6183, 4294901760
      %6385 = vmatmul.f32.gmra.mxu0 %v6384
      %v6386 = vpop.f32.mrf.mxu0
      %v6387 = vadd.f32 %v6345, %v6386
      %v6388 = vand.u32 %v6185, 4294901760
      %6389 = vmatmul.f32.gmra.mxu0 %v6388
      %v6390 = vpop.f32.mrf.mxu0
      %v6391 = vadd.f32 %v6351, %v6390
      %v6392 = vand.u32 %v6187, 4294901760
      %6393 = vmatmul.f32.gmra.mxu0 %v6392
      %v6394 = vpop.f32.mrf.mxu0
      %v6395 = vadd.f32 %v6357, %v6394
      %v6396 = vand.u32 %v6189, 4294901760
      %6397 = vmatmul.f32.gmra.mxu0 %v6396
      %v6398 = vpop.f32.mrf.mxu0
      %v6399 = vadd.f32 %v6363, %v6398
      %6400 = vdwg.mxu0
      %6401 = vmatpush.xpose.msra.mxu0 0.0
      %6402 = vmatpush.xpose.msra.mxu0 0.0
      %6403 = vmatpush.xpose.msra.mxu0 0.0
      %6404 = vmatpush.xpose.msra.mxu0 0.0
      %6405 = vmatpush.xpose.msra.mxu0 0.0
      %6406 = vmatpush.xpose.msra.mxu0 0.0
      %6407 = vmatpush.xpose.msra.mxu0 0.0
      %6408 = vmatpush.xpose.msra.mxu0 0.0
      %6409 = vmatpush.xpose.msra.mxu0 0.0
      %6410 = vmatpush.xpose.msra.mxu0 0.0
      %6411 = vmatpush.xpose.msra.mxu0 0.0
      %6412 = vmatpush.xpose.msra.mxu0 0.0
      %6413 = vmatpush.xpose.msra.mxu0 0.0
      %6414 = vmatpush.xpose.msra.mxu0 0.0
      %6415 = vmatpush.xpose.msra.mxu0 0.0
      %v6416 = vand.u32 %v6192, 4294901760
      %6417 = vmatpush.xpose.msra.mxu0 %v6416
      %v6418 = vand.u32 %v6183, 4294901760
      %6419 = vmatmul.f32.gmra.mxu0 %v6418
      %v6420 = vpop.f32.mrf.mxu0
      %v6421 = vadd.f32 %v6387, %v6420
      %v6422 = vand.u32 %v6185, 4294901760
      %6423 = vmatmul.f32.gmra.mxu0 %v6422
      %v6424 = vpop.f32.mrf.mxu0
      %v6425 = vadd.f32 %v6391, %v6424
      %v6426 = vand.u32 %v6187, 4294901760
      %6427 = vmatmul.f32.gmra.mxu0 %v6426
      %v6428 = vpop.f32.mrf.mxu0
      %v6429 = vadd.f32 %v6395, %v6428
      %v6430 = vand.u32 %v6189, 4294901760
      %6431 = vmatmul.f32.gmra.mxu0 %v6430
      %v6432 = vpop.f32.mrf.mxu0
      %v6433 = vadd.f32 %v6399, %v6432
      %6434 = vdwg.mxu0
      %6435 = vmatpush.xpose.msra.mxu0 0.0
      %6436 = vmatpush.xpose.msra.mxu0 0.0
      %6437 = vmatpush.xpose.msra.mxu0 0.0
      %6438 = vmatpush.xpose.msra.mxu0 0.0
      %6439 = vmatpush.xpose.msra.mxu0 0.0
      %6440 = vmatpush.xpose.msra.mxu0 0.0
      %6441 = vmatpush.xpose.msra.mxu0 0.0
      %6442 = vmatpush.xpose.msra.mxu0 0.0
      %6443 = vmatpush.xpose.msra.mxu0 0.0
      %6444 = vmatpush.xpose.msra.mxu0 0.0
      %6445 = vmatpush.xpose.msra.mxu0 0.0
      %6446 = vmatpush.xpose.msra.mxu0 0.0
      %6447 = vmatpush.xpose.msra.mxu0 0.0
      %6448 = vmatpush.xpose.msra.mxu0 0.0
      %6449 = vmatpush.xpose.msra.mxu0 0.0
      %v6450 = vand.u32 %v6193, 4294901760
      %6451 = vmatpush.xpose.msra.mxu0 %v6450
      %v6452 = vand.u32 %v6184, 4294901760
      %v6453 = vsub.f32 %v6184, %v6452
      %v6454 = vand.u32 %v6453, 4294901760
      %v6455 = vsub.f32 %v6453, %v6454
      %v6456 = vand.u32 %v6455, 4294901760
      %6457 = vmatmul.f32.gmra.mxu0 %v6456
      %v6458 = vpop.f32.mrf.mxu0
      %v6459 = vadd.f32 %v6421, %v6458
      %v6460 = vand.u32 %v6186, 4294901760
      %v6461 = vsub.f32 %v6186, %v6460
      %v6462 = vand.u32 %v6461, 4294901760
      %v6463 = vsub.f32 %v6461, %v6462
      %v6464 = vand.u32 %v6463, 4294901760
      %6465 = vmatmul.f32.gmra.mxu0 %v6464
      %v6466 = vpop.f32.mrf.mxu0
      %v6467 = vadd.f32 %v6425, %v6466
      %v6468 = vand.u32 %v6188, 4294901760
      %v6469 = vsub.f32 %v6188, %v6468
      %v6470 = vand.u32 %v6469, 4294901760
      %v6471 = vsub.f32 %v6469, %v6470
      %v6472 = vand.u32 %v6471, 4294901760
      %6473 = vmatmul.f32.gmra.mxu0 %v6472
      %v6474 = vpop.f32.mrf.mxu0
      %v6475 = vadd.f32 %v6429, %v6474
      %v6476 = vand.u32 %v6190, 4294901760
      %v6477 = vsub.f32 %v6190, %v6476
      %v6478 = vand.u32 %v6477, 4294901760
      %v6479 = vsub.f32 %v6477, %v6478
      %v6480 = vand.u32 %v6479, 4294901760
      %6481 = vmatmul.f32.gmra.mxu0 %v6480
      %v6482 = vpop.f32.mrf.mxu0
      %v6483 = vadd.f32 %v6433, %v6482
      %6484 = vdwg.mxu0
      %6485 = vmatpush.xpose.msra.mxu0 0.0
      %6486 = vmatpush.xpose.msra.mxu0 0.0
      %6487 = vmatpush.xpose.msra.mxu0 0.0
      %6488 = vmatpush.xpose.msra.mxu0 0.0
      %6489 = vmatpush.xpose.msra.mxu0 0.0
      %6490 = vmatpush.xpose.msra.mxu0 0.0
      %6491 = vmatpush.xpose.msra.mxu0 0.0
      %6492 = vmatpush.xpose.msra.mxu0 0.0
      %6493 = vmatpush.xpose.msra.mxu0 0.0
      %6494 = vmatpush.xpose.msra.mxu0 0.0
      %6495 = vmatpush.xpose.msra.mxu0 0.0
      %6496 = vmatpush.xpose.msra.mxu0 0.0
      %6497 = vmatpush.xpose.msra.mxu0 0.0
      %6498 = vmatpush.xpose.msra.mxu0 0.0
      %6499 = vmatpush.xpose.msra.mxu0 0.0
      %v6500 = vand.u32 %v6193, 4294901760
      %v6501 = vsub.f32 %v6193, %v6500
      %v6502 = vand.u32 %v6501, 4294901760
      %v6503 = vsub.f32 %v6501, %v6502
      %v6504 = vand.u32 %v6503, 4294901760
      %6505 = vmatpush.xpose.msra.mxu0 %v6504
      %v6506 = vand.u32 %v6184, 4294901760
      %6507 = vmatmul.f32.gmra.mxu0 %v6506
      %v6508 = vpop.f32.mrf.mxu0
      %v6509 = vadd.f32 %v6459, %v6508
      %v6510 = vand.u32 %v6186, 4294901760
      %6511 = vmatmul.f32.gmra.mxu0 %v6510
      %v6512 = vpop.f32.mrf.mxu0
      %v6513 = vadd.f32 %v6467, %v6512
      %v6514 = vand.u32 %v6188, 4294901760
      %6515 = vmatmul.f32.gmra.mxu0 %v6514
      %v6516 = vpop.f32.mrf.mxu0
      %v6517 = vadd.f32 %v6475, %v6516
      %v6518 = vand.u32 %v6190, 4294901760
      %6519 = vmatmul.f32.gmra.mxu0 %v6518
      %v6520 = vpop.f32.mrf.mxu0
      %v6521 = vadd.f32 %v6483, %v6520
      %6522 = vdwg.mxu0
      %6523 = vmatpush.xpose.msra.mxu0 0.0
      %6524 = vmatpush.xpose.msra.mxu0 0.0
      %6525 = vmatpush.xpose.msra.mxu0 0.0
      %6526 = vmatpush.xpose.msra.mxu0 0.0
      %6527 = vmatpush.xpose.msra.mxu0 0.0
      %6528 = vmatpush.xpose.msra.mxu0 0.0
      %6529 = vmatpush.xpose.msra.mxu0 0.0
      %6530 = vmatpush.xpose.msra.mxu0 0.0
      %6531 = vmatpush.xpose.msra.mxu0 0.0
      %6532 = vmatpush.xpose.msra.mxu0 0.0
      %6533 = vmatpush.xpose.msra.mxu0 0.0
      %6534 = vmatpush.xpose.msra.mxu0 0.0
      %6535 = vmatpush.xpose.msra.mxu0 0.0
      %6536 = vmatpush.xpose.msra.mxu0 0.0
      %6537 = vmatpush.xpose.msra.mxu0 0.0
      %v6538 = vand.u32 %v6193, 4294901760
      %v6539 = vsub.f32 %v6193, %v6538
      %6540 = vmatpush.xpose.msra.mxu0 %v6539
      %v6541 = vand.u32 %v6184, 4294901760
      %v6542 = vsub.f32 %v6184, %v6541
      %6543 = vmatmul.f32.gmra.mxu0 %v6542
      %v6544 = vpop.f32.mrf.mxu0
      %v6545 = vadd.f32 %v6509, %v6544
      %v6546 = vand.u32 %v6186, 4294901760
      %v6547 = vsub.f32 %v6186, %v6546
      %6548 = vmatmul.f32.gmra.mxu0 %v6547
      %v6549 = vpop.f32.mrf.mxu0
      %v6550 = vadd.f32 %v6513, %v6549
      %v6551 = vand.u32 %v6188, 4294901760
      %v6552 = vsub.f32 %v6188, %v6551
      %6553 = vmatmul.f32.gmra.mxu0 %v6552
      %v6554 = vpop.f32.mrf.mxu0
      %v6555 = vadd.f32 %v6517, %v6554
      %v6556 = vand.u32 %v6190, 4294901760
      %v6557 = vsub.f32 %v6190, %v6556
      %6558 = vmatmul.f32.gmra.mxu0 %v6557
      %v6559 = vpop.f32.mrf.mxu0
      %v6560 = vadd.f32 %v6521, %v6559
      %6561 = vdwg.mxu0
      %6562 = vmatpush.xpose.msra.mxu0 0.0
      %6563 = vmatpush.xpose.msra.mxu0 0.0
      %6564 = vmatpush.xpose.msra.mxu0 0.0
      %6565 = vmatpush.xpose.msra.mxu0 0.0
      %6566 = vmatpush.xpose.msra.mxu0 0.0
      %6567 = vmatpush.xpose.msra.mxu0 0.0
      %6568 = vmatpush.xpose.msra.mxu0 0.0
      %6569 = vmatpush.xpose.msra.mxu0 0.0
      %6570 = vmatpush.xpose.msra.mxu0 0.0
      %6571 = vmatpush.xpose.msra.mxu0 0.0
      %6572 = vmatpush.xpose.msra.mxu0 0.0
      %6573 = vmatpush.xpose.msra.mxu0 0.0
      %6574 = vmatpush.xpose.msra.mxu0 0.0
      %6575 = vmatpush.xpose.msra.mxu0 0.0
      %6576 = vmatpush.xpose.msra.mxu0 0.0
      %v6577 = vand.u32 %v6193, 4294901760
      %6578 = vmatpush.xpose.msra.mxu0 %v6577
      %v6579 = vand.u32 %v6184, 4294901760
      %v6580 = vsub.f32 %v6184, %v6579
      %v6581 = vand.u32 %v6580, 4294901760
      %6582 = vmatmul.f32.gmra.mxu0 %v6581
      %v6583 = vpop.f32.mrf.mxu0
      %v6584 = vadd.f32 %v6545, %v6583
      %v6585 = vand.u32 %v6186, 4294901760
      %v6586 = vsub.f32 %v6186, %v6585
      %v6587 = vand.u32 %v6586, 4294901760
      %6588 = vmatmul.f32.gmra.mxu0 %v6587
      %v6589 = vpop.f32.mrf.mxu0
      %v6590 = vadd.f32 %v6550, %v6589
      %v6591 = vand.u32 %v6188, 4294901760
      %v6592 = vsub.f32 %v6188, %v6591
      %v6593 = vand.u32 %v6592, 4294901760
      %6594 = vmatmul.f32.gmra.mxu0 %v6593
      %v6595 = vpop.f32.mrf.mxu0
      %v6596 = vadd.f32 %v6555, %v6595
      %v6597 = vand.u32 %v6190, 4294901760
      %v6598 = vsub.f32 %v6190, %v6597
      %v6599 = vand.u32 %v6598, 4294901760
      %6600 = vmatmul.f32.gmra.mxu0 %v6599
      %v6601 = vpop.f32.mrf.mxu0
      %v6602 = vadd.f32 %v6560, %v6601
      %6603 = vdwg.mxu0
      %6604 = vmatpush.xpose.msra.mxu0 0.0
      %6605 = vmatpush.xpose.msra.mxu0 0.0
      %6606 = vmatpush.xpose.msra.mxu0 0.0
      %6607 = vmatpush.xpose.msra.mxu0 0.0
      %6608 = vmatpush.xpose.msra.mxu0 0.0
      %6609 = vmatpush.xpose.msra.mxu0 0.0
      %6610 = vmatpush.xpose.msra.mxu0 0.0
      %6611 = vmatpush.xpose.msra.mxu0 0.0
      %6612 = vmatpush.xpose.msra.mxu0 0.0
      %6613 = vmatpush.xpose.msra.mxu0 0.0
      %6614 = vmatpush.xpose.msra.mxu0 0.0
      %6615 = vmatpush.xpose.msra.mxu0 0.0
      %6616 = vmatpush.xpose.msra.mxu0 0.0
      %6617 = vmatpush.xpose.msra.mxu0 0.0
      %6618 = vmatpush.xpose.msra.mxu0 0.0
      %v6619 = vand.u32 %v6193, 4294901760
      %v6620 = vsub.f32 %v6193, %v6619
      %v6621 = vand.u32 %v6620, 4294901760
      %6622 = vmatpush.xpose.msra.mxu0 %v6621
      %v6623 = vand.u32 %v6184, 4294901760
      %6624 = vmatmul.f32.gmra.mxu0 %v6623
      %v6625 = vpop.f32.mrf.mxu0
      %v6626 = vadd.f32 %v6584, %v6625
      %v6627 = vand.u32 %v6186, 4294901760
      %6628 = vmatmul.f32.gmra.mxu0 %v6627
      %v6629 = vpop.f32.mrf.mxu0
      %v6630 = vadd.f32 %v6590, %v6629
      %v6631 = vand.u32 %v6188, 4294901760
      %6632 = vmatmul.f32.gmra.mxu0 %v6631
      %v6633 = vpop.f32.mrf.mxu0
      %v6634 = vadd.f32 %v6596, %v6633
      %v6635 = vand.u32 %v6190, 4294901760
      %6636 = vmatmul.f32.gmra.mxu0 %v6635
      %v6637 = vpop.f32.mrf.mxu0
      %v6638 = vadd.f32 %v6602, %v6637
      %6639 = vdwg.mxu0
      %6640 = vmatpush.xpose.msra.mxu0 0.0
      %6641 = vmatpush.xpose.msra.mxu0 0.0
      %6642 = vmatpush.xpose.msra.mxu0 0.0
      %6643 = vmatpush.xpose.msra.mxu0 0.0
      %6644 = vmatpush.xpose.msra.mxu0 0.0
      %6645 = vmatpush.xpose.msra.mxu0 0.0
      %6646 = vmatpush.xpose.msra.mxu0 0.0
      %6647 = vmatpush.xpose.msra.mxu0 0.0
      %6648 = vmatpush.xpose.msra.mxu0 0.0
      %6649 = vmatpush.xpose.msra.mxu0 0.0
      %6650 = vmatpush.xpose.msra.mxu0 0.0
      %6651 = vmatpush.xpose.msra.mxu0 0.0
      %6652 = vmatpush.xpose.msra.mxu0 0.0
      %6653 = vmatpush.xpose.msra.mxu0 0.0
      %6654 = vmatpush.xpose.msra.mxu0 0.0
      %v6655 = vand.u32 %v6193, 4294901760
      %6656 = vmatpush.xpose.msra.mxu0 %v6655
      %v6657 = vand.u32 %v6184, 4294901760
      %6658 = vmatmul.f32.gmra.mxu0 %v6657
      %v6659 = vpop.f32.mrf.mxu0
      %v6660 = vadd.f32 %v6626, %v6659
      %v6661 = vand.u32 %v6186, 4294901760
      %6662 = vmatmul.f32.gmra.mxu0 %v6661
      %v6663 = vpop.f32.mrf.mxu0
      %v6664 = vadd.f32 %v6630, %v6663
      %v6665 = vand.u32 %v6188, 4294901760
      %6666 = vmatmul.f32.gmra.mxu0 %v6665
      %v6667 = vpop.f32.mrf.mxu0
      %v6668 = vadd.f32 %v6634, %v6667
      %v6669 = vand.u32 %v6190, 4294901760
      %6670 = vmatmul.f32.gmra.mxu0 %v6669
      %v6671 = vpop.f32.mrf.mxu0
      %v6672 = vadd.f32 %v6638, %v6671
      %6673 = vdwg.mxu0
      %v6674 = vmul.f32 %v6660, 0.125
      %v6675 = vmul.f32 %v6664, 0.125
      %v6676 = vmul.f32 %v6668, 0.125
      %v6677 = vmul.f32 %v6672, 0.125
      %v6678 = vmul.f32 %v2576, %v3538
      %v6679 = vmul.f32 %v3474, %v2640
      %v6680 = vmul.f32 %v2580, %v3542
      %v6681 = vmul.f32 %v3478, %v2644
      %v6682 = vmul.f32 %v2584, %v3546
      %v6683 = vmul.f32 %v3482, %v2648
      %v6684 = vmul.f32 %v2588, %v3550
      %v6685 = vmul.f32 %v3486, %v2652
      %6686 = vst [vmem:[#allocation1] ss:$2 sm:$0xff] %v462
      %v6687 = vld.sshfl [vmem:[#allocation1] sm:$0xff pattern:$0x75316420]
      %v6688 = vld.sshfl [vmem:[#allocation1 + $0x8] sm:$0xff pattern:$0x75316420]
      %6691 = vmatpush.xpose.msra.mxu0 0.0
      %6692 = vmatpush.xpose.msra.mxu0 0.0
      %6693 = vmatpush.xpose.msra.mxu0 0.0
      %6694 = vmatpush.xpose.msra.mxu0 0.0
      %6695 = vmatpush.xpose.msra.mxu0 0.0
      %6696 = vmatpush.xpose.msra.mxu0 0.0
      %6697 = vmatpush.xpose.msra.mxu0 0.0
      %6698 = vmatpush.xpose.msra.mxu0 0.0
      %6699 = vmatpush.xpose.msra.mxu0 0.0
      %6700 = vmatpush.xpose.msra.mxu0 0.0
      %6701 = vmatpush.xpose.msra.mxu0 0.0
      %6702 = vmatpush.xpose.msra.mxu0 0.0
      %6703 = vmatpush.xpose.msra.mxu0 0.0
      %6704 = vmatpush.xpose.msra.mxu0 0.0
      %6705 = vmatpush.xpose.msra.mxu0 0.0
      %v6706 = vand.u32 %v6687, 4294901760
      %6707 = vmatpush.xpose.msra.mxu0 %v6706
      %v6708 = vand.u32 %v6678, 4294901760
      %v6709 = vsub.f32 %v6678, %v6708
      %v6710 = vand.u32 %v6709, 4294901760
      %v6711 = vsub.f32 %v6709, %v6710
      %v6712 = vand.u32 %v6711, 4294901760
      %6713 = vmatmul.f32.gmra.mxu0 %v6712
      %v6714 = vpop.f32.mrf.mxu0
      %v6715 = vadd.f32 0.0, %v6714
      %v6716 = vand.u32 %v6680, 4294901760
      %v6717 = vsub.f32 %v6680, %v6716
      %v6718 = vand.u32 %v6717, 4294901760
      %v6719 = vsub.f32 %v6717, %v6718
      %v6720 = vand.u32 %v6719, 4294901760
      %6721 = vmatmul.f32.gmra.mxu0 %v6720
      %v6722 = vpop.f32.mrf.mxu0
      %v6723 = vadd.f32 0.0, %v6722
      %v6724 = vand.u32 %v6682, 4294901760
      %v6725 = vsub.f32 %v6682, %v6724
      %v6726 = vand.u32 %v6725, 4294901760
      %v6727 = vsub.f32 %v6725, %v6726
      %v6728 = vand.u32 %v6727, 4294901760
      %6729 = vmatmul.f32.gmra.mxu0 %v6728
      %v6730 = vpop.f32.mrf.mxu0
      %v6731 = vadd.f32 0.0, %v6730
      %v6732 = vand.u32 %v6684, 4294901760
      %v6733 = vsub.f32 %v6684, %v6732
      %v6734 = vand.u32 %v6733, 4294901760
      %v6735 = vsub.f32 %v6733, %v6734
      %v6736 = vand.u32 %v6735, 4294901760
      %6737 = vmatmul.f32.gmra.mxu0 %v6736
      %v6738 = vpop.f32.mrf.mxu0
      %v6739 = vadd.f32 0.0, %v6738
      %6740 = vdwg.mxu0
      %6741 = vmatpush.xpose.msra.mxu0 0.0
      %6742 = vmatpush.xpose.msra.mxu0 0.0
      %6743 = vmatpush.xpose.msra.mxu0 0.0
      %6744 = vmatpush.xpose.msra.mxu0 0.0
      %6745 = vmatpush.xpose.msra.mxu0 0.0
      %6746 = vmatpush.xpose.msra.mxu0 0.0
      %6747 = vmatpush.xpose.msra.mxu0 0.0
      %6748 = vmatpush.xpose.msra.mxu0 0.0
      %6749 = vmatpush.xpose.msra.mxu0 0.0
      %6750 = vmatpush.xpose.msra.mxu0 0.0
      %6751 = vmatpush.xpose.msra.mxu0 0.0
      %6752 = vmatpush.xpose.msra.mxu0 0.0
      %6753 = vmatpush.xpose.msra.mxu0 0.0
      %6754 = vmatpush.xpose.msra.mxu0 0.0
      %6755 = vmatpush.xpose.msra.mxu0 0.0
      %v6756 = vand.u32 %v6687, 4294901760
      %v6757 = vsub.f32 %v6687, %v6756
      %v6758 = vand.u32 %v6757, 4294901760
      %v6759 = vsub.f32 %v6757, %v6758
      %v6760 = vand.u32 %v6759, 4294901760
      %6761 = vmatpush.xpose.msra.mxu0 %v6760
      %v6762 = vand.u32 %v6678, 4294901760
      %6763 = vmatmul.f32.gmra.mxu0 %v6762
      %v6764 = vpop.f32.mrf.mxu0
      %v6765 = vadd.f32 %v6715, %v6764
      %v6766 = vand.u32 %v6680, 4294901760
      %6767 = vmatmul.f32.gmra.mxu0 %v6766
      %v6768 = vpop.f32.mrf.mxu0
      %v6769 = vadd.f32 %v6723, %v6768
      %v6770 = vand.u32 %v6682, 4294901760
      %6771 = vmatmul.f32.gmra.mxu0 %v6770
      %v6772 = vpop.f32.mrf.mxu0
      %v6773 = vadd.f32 %v6731, %v6772
      %v6774 = vand.u32 %v6684, 4294901760
      %6775 = vmatmul.f32.gmra.mxu0 %v6774
      %v6776 = vpop.f32.mrf.mxu0
      %v6777 = vadd.f32 %v6739, %v6776
      %6778 = vdwg.mxu0
      %6779 = vmatpush.xpose.msra.mxu0 0.0
      %6780 = vmatpush.xpose.msra.mxu0 0.0
      %6781 = vmatpush.xpose.msra.mxu0 0.0
      %6782 = vmatpush.xpose.msra.mxu0 0.0
      %6783 = vmatpush.xpose.msra.mxu0 0.0
      %6784 = vmatpush.xpose.msra.mxu0 0.0
      %6785 = vmatpush.xpose.msra.mxu0 0.0
      %6786 = vmatpush.xpose.msra.mxu0 0.0
      %6787 = vmatpush.xpose.msra.mxu0 0.0
      %6788 = vmatpush.xpose.msra.mxu0 0.0
      %6789 = vmatpush.xpose.msra.mxu0 0.0
      %6790 = vmatpush.xpose.msra.mxu0 0.0
      %6791 = vmatpush.xpose.msra.mxu0 0.0
      %6792 = vmatpush.xpose.msra.mxu0 0.0
      %6793 = vmatpush.xpose.msra.mxu0 0.0
      %v6794 = vand.u32 %v6687, 4294901760
      %v6795 = vsub.f32 %v6687, %v6794
      %6796 = vmatpush.xpose.msra.mxu0 %v6795
      %v6797 = vand.u32 %v6678, 4294901760
      %v6798 = vsub.f32 %v6678, %v6797
      %6799 = vmatmul.f32.gmra.mxu0 %v6798
      %v6800 = vpop.f32.mrf.mxu0
      %v6801 = vadd.f32 %v6765, %v6800
      %v6802 = vand.u32 %v6680, 4294901760
      %v6803 = vsub.f32 %v6680, %v6802
      %6804 = vmatmul.f32.gmra.mxu0 %v6803
      %v6805 = vpop.f32.mrf.mxu0
      %v6806 = vadd.f32 %v6769, %v6805
      %v6807 = vand.u32 %v6682, 4294901760
      %v6808 = vsub.f32 %v6682, %v6807
      %6809 = vmatmul.f32.gmra.mxu0 %v6808
      %v6810 = vpop.f32.mrf.mxu0
      %v6811 = vadd.f32 %v6773, %v6810
      %v6812 = vand.u32 %v6684, 4294901760
      %v6813 = vsub.f32 %v6684, %v6812
      %6814 = vmatmul.f32.gmra.mxu0 %v6813
      %v6815 = vpop.f32.mrf.mxu0
      %v6816 = vadd.f32 %v6777, %v6815
      %6817 = vdwg.mxu0
      %6818 = vmatpush.xpose.msra.mxu0 0.0
      %6819 = vmatpush.xpose.msra.mxu0 0.0
      %6820 = vmatpush.xpose.msra.mxu0 0.0
      %6821 = vmatpush.xpose.msra.mxu0 0.0
      %6822 = vmatpush.xpose.msra.mxu0 0.0
      %6823 = vmatpush.xpose.msra.mxu0 0.0
      %6824 = vmatpush.xpose.msra.mxu0 0.0
      %6825 = vmatpush.xpose.msra.mxu0 0.0
      %6826 = vmatpush.xpose.msra.mxu0 0.0
      %6827 = vmatpush.xpose.msra.mxu0 0.0
      %6828 = vmatpush.xpose.msra.mxu0 0.0
      %6829 = vmatpush.xpose.msra.mxu0 0.0
      %6830 = vmatpush.xpose.msra.mxu0 0.0
      %6831 = vmatpush.xpose.msra.mxu0 0.0
      %6832 = vmatpush.xpose.msra.mxu0 0.0
      %v6833 = vand.u32 %v6687, 4294901760
      %6834 = vmatpush.xpose.msra.mxu0 %v6833
      %v6835 = vand.u32 %v6678, 4294901760
      %v6836 = vsub.f32 %v6678, %v6835
      %v6837 = vand.u32 %v6836, 4294901760
      %6838 = vmatmul.f32.gmra.mxu0 %v6837
      %v6839 = vpop.f32.mrf.mxu0
      %v6840 = vadd.f32 %v6801, %v6839
      %v6841 = vand.u32 %v6680, 4294901760
      %v6842 = vsub.f32 %v6680, %v6841
      %v6843 = vand.u32 %v6842, 4294901760
      %6844 = vmatmul.f32.gmra.mxu0 %v6843
      %v6845 = vpop.f32.mrf.mxu0
      %v6846 = vadd.f32 %v6806, %v6845
      %v6847 = vand.u32 %v6682, 4294901760
      %v6848 = vsub.f32 %v6682, %v6847
      %v6849 = vand.u32 %v6848, 4294901760
      %6850 = vmatmul.f32.gmra.mxu0 %v6849
      %v6851 = vpop.f32.mrf.mxu0
      %v6852 = vadd.f32 %v6811, %v6851
      %v6853 = vand.u32 %v6684, 4294901760
      %v6854 = vsub.f32 %v6684, %v6853
      %v6855 = vand.u32 %v6854, 4294901760
      %6856 = vmatmul.f32.gmra.mxu0 %v6855
      %v6857 = vpop.f32.mrf.mxu0
      %v6858 = vadd.f32 %v6816, %v6857
      %6859 = vdwg.mxu0
      %6860 = vmatpush.xpose.msra.mxu0 0.0
      %6861 = vmatpush.xpose.msra.mxu0 0.0
      %6862 = vmatpush.xpose.msra.mxu0 0.0
      %6863 = vmatpush.xpose.msra.mxu0 0.0
      %6864 = vmatpush.xpose.msra.mxu0 0.0
      %6865 = vmatpush.xpose.msra.mxu0 0.0
      %6866 = vmatpush.xpose.msra.mxu0 0.0
      %6867 = vmatpush.xpose.msra.mxu0 0.0
      %6868 = vmatpush.xpose.msra.mxu0 0.0
      %6869 = vmatpush.xpose.msra.mxu0 0.0
      %6870 = vmatpush.xpose.msra.mxu0 0.0
      %6871 = vmatpush.xpose.msra.mxu0 0.0
      %6872 = vmatpush.xpose.msra.mxu0 0.0
      %6873 = vmatpush.xpose.msra.mxu0 0.0
      %6874 = vmatpush.xpose.msra.mxu0 0.0
      %v6875 = vand.u32 %v6687, 4294901760
      %v6876 = vsub.f32 %v6687, %v6875
      %v6877 = vand.u32 %v6876, 4294901760
      %6878 = vmatpush.xpose.msra.mxu0 %v6877
      %v6879 = vand.u32 %v6678, 4294901760
      %6880 = vmatmul.f32.gmra.mxu0 %v6879
      %v6881 = vpop.f32.mrf.mxu0
      %v6882 = vadd.f32 %v6840, %v6881
      %v6883 = vand.u32 %v6680, 4294901760
      %6884 = vmatmul.f32.gmra.mxu0 %v6883
      %v6885 = vpop.f32.mrf.mxu0
      %v6886 = vadd.f32 %v6846, %v6885
      %v6887 = vand.u32 %v6682, 4294901760
      %6888 = vmatmul.f32.gmra.mxu0 %v6887
      %v6889 = vpop.f32.mrf.mxu0
      %v6890 = vadd.f32 %v6852, %v6889
      %v6891 = vand.u32 %v6684, 4294901760
      %6892 = vmatmul.f32.gmra.mxu0 %v6891
      %v6893 = vpop.f32.mrf.mxu0
      %v6894 = vadd.f32 %v6858, %v6893
      %6895 = vdwg.mxu0
      %6896 = vmatpush.xpose.msra.mxu0 0.0
      %6897 = vmatpush.xpose.msra.mxu0 0.0
      %6898 = vmatpush.xpose.msra.mxu0 0.0
      %6899 = vmatpush.xpose.msra.mxu0 0.0
      %6900 = vmatpush.xpose.msra.mxu0 0.0
      %6901 = vmatpush.xpose.msra.mxu0 0.0
      %6902 = vmatpush.xpose.msra.mxu0 0.0
      %6903 = vmatpush.xpose.msra.mxu0 0.0
      %6904 = vmatpush.xpose.msra.mxu0 0.0
      %6905 = vmatpush.xpose.msra.mxu0 0.0
      %6906 = vmatpush.xpose.msra.mxu0 0.0
      %6907 = vmatpush.xpose.msra.mxu0 0.0
      %6908 = vmatpush.xpose.msra.mxu0 0.0
      %6909 = vmatpush.xpose.msra.mxu0 0.0
      %6910 = vmatpush.xpose.msra.mxu0 0.0
      %v6911 = vand.u32 %v6687, 4294901760
      %6912 = vmatpush.xpose.msra.mxu0 %v6911
      %v6913 = vand.u32 %v6678, 4294901760
      %6914 = vmatmul.f32.gmra.mxu0 %v6913
      %v6915 = vpop.f32.mrf.mxu0
      %v6916 = vadd.f32 %v6882, %v6915
      %v6917 = vand.u32 %v6680, 4294901760
      %6918 = vmatmul.f32.gmra.mxu0 %v6917
      %v6919 = vpop.f32.mrf.mxu0
      %v6920 = vadd.f32 %v6886, %v6919
      %v6921 = vand.u32 %v6682, 4294901760
      %6922 = vmatmul.f32.gmra.mxu0 %v6921
      %v6923 = vpop.f32.mrf.mxu0
      %v6924 = vadd.f32 %v6890, %v6923
      %v6925 = vand.u32 %v6684, 4294901760
      %6926 = vmatmul.f32.gmra.mxu0 %v6925
      %v6927 = vpop.f32.mrf.mxu0
      %v6928 = vadd.f32 %v6894, %v6927
      %6929 = vdwg.mxu0
      %6930 = vmatpush.xpose.msra.mxu0 0.0
      %6931 = vmatpush.xpose.msra.mxu0 0.0
      %6932 = vmatpush.xpose.msra.mxu0 0.0
      %6933 = vmatpush.xpose.msra.mxu0 0.0
      %6934 = vmatpush.xpose.msra.mxu0 0.0
      %6935 = vmatpush.xpose.msra.mxu0 0.0
      %6936 = vmatpush.xpose.msra.mxu0 0.0
      %6937 = vmatpush.xpose.msra.mxu0 0.0
      %6938 = vmatpush.xpose.msra.mxu0 0.0
      %6939 = vmatpush.xpose.msra.mxu0 0.0
      %6940 = vmatpush.xpose.msra.mxu0 0.0
      %6941 = vmatpush.xpose.msra.mxu0 0.0
      %6942 = vmatpush.xpose.msra.mxu0 0.0
      %6943 = vmatpush.xpose.msra.mxu0 0.0
      %6944 = vmatpush.xpose.msra.mxu0 0.0
      %v6945 = vand.u32 %v6688, 4294901760
      %6946 = vmatpush.xpose.msra.mxu0 %v6945
      %v6947 = vand.u32 %v6679, 4294901760
      %v6948 = vsub.f32 %v6679, %v6947
      %v6949 = vand.u32 %v6948, 4294901760
      %v6950 = vsub.f32 %v6948, %v6949
      %v6951 = vand.u32 %v6950, 4294901760
      %6952 = vmatmul.f32.gmra.mxu0 %v6951
      %v6953 = vpop.f32.mrf.mxu0
      %v6954 = vadd.f32 %v6916, %v6953
      %v6955 = vand.u32 %v6681, 4294901760
      %v6956 = vsub.f32 %v6681, %v6955
      %v6957 = vand.u32 %v6956, 4294901760
      %v6958 = vsub.f32 %v6956, %v6957
      %v6959 = vand.u32 %v6958, 4294901760
      %6960 = vmatmul.f32.gmra.mxu0 %v6959
      %v6961 = vpop.f32.mrf.mxu0
      %v6962 = vadd.f32 %v6920, %v6961
      %v6963 = vand.u32 %v6683, 4294901760
      %v6964 = vsub.f32 %v6683, %v6963
      %v6965 = vand.u32 %v6964, 4294901760
      %v6966 = vsub.f32 %v6964, %v6965
      %v6967 = vand.u32 %v6966, 4294901760
      %6968 = vmatmul.f32.gmra.mxu0 %v6967
      %v6969 = vpop.f32.mrf.mxu0
      %v6970 = vadd.f32 %v6924, %v6969
      %v6971 = vand.u32 %v6685, 4294901760
      %v6972 = vsub.f32 %v6685, %v6971
      %v6973 = vand.u32 %v6972, 4294901760
      %v6974 = vsub.f32 %v6972, %v6973
      %v6975 = vand.u32 %v6974, 4294901760
      %6976 = vmatmul.f32.gmra.mxu0 %v6975
      %v6977 = vpop.f32.mrf.mxu0
      %v6978 = vadd.f32 %v6928, %v6977
      %6979 = vdwg.mxu0
      %6980 = vmatpush.xpose.msra.mxu0 0.0
      %6981 = vmatpush.xpose.msra.mxu0 0.0
      %6982 = vmatpush.xpose.msra.mxu0 0.0
      %6983 = vmatpush.xpose.msra.mxu0 0.0
      %6984 = vmatpush.xpose.msra.mxu0 0.0
      %6985 = vmatpush.xpose.msra.mxu0 0.0
      %6986 = vmatpush.xpose.msra.mxu0 0.0
      %6987 = vmatpush.xpose.msra.mxu0 0.0
      %6988 = vmatpush.xpose.msra.mxu0 0.0
      %6989 = vmatpush.xpose.msra.mxu0 0.0
      %6990 = vmatpush.xpose.msra.mxu0 0.0
      %6991 = vmatpush.xpose.msra.mxu0 0.0
      %6992 = vmatpush.xpose.msra.mxu0 0.0
      %6993 = vmatpush.xpose.msra.mxu0 0.0
      %6994 = vmatpush.xpose.msra.mxu0 0.0
      %v6995 = vand.u32 %v6688, 4294901760
      %v6996 = vsub.f32 %v6688, %v6995
      %v6997 = vand.u32 %v6996, 4294901760
      %v6998 = vsub.f32 %v6996, %v6997
      %v6999 = vand.u32 %v6998, 4294901760
      %7000 = vmatpush.xpose.msra.mxu0 %v6999
      %v7001 = vand.u32 %v6679, 4294901760
      %7002 = vmatmul.f32.gmra.mxu0 %v7001
      %v7003 = vpop.f32.mrf.mxu0
      %v7004 = vadd.f32 %v6954, %v7003
      %v7005 = vand.u32 %v6681, 4294901760
      %7006 = vmatmul.f32.gmra.mxu0 %v7005
      %v7007 = vpop.f32.mrf.mxu0
      %v7008 = vadd.f32 %v6962, %v7007
      %v7009 = vand.u32 %v6683, 4294901760
      %7010 = vmatmul.f32.gmra.mxu0 %v7009
      %v7011 = vpop.f32.mrf.mxu0
      %v7012 = vadd.f32 %v6970, %v7011
      %v7013 = vand.u32 %v6685, 4294901760
      %7014 = vmatmul.f32.gmra.mxu0 %v7013
      %v7015 = vpop.f32.mrf.mxu0
      %v7016 = vadd.f32 %v6978, %v7015
      %7017 = vdwg.mxu0
      %7018 = vmatpush.xpose.msra.mxu0 0.0
      %7019 = vmatpush.xpose.msra.mxu0 0.0
      %7020 = vmatpush.xpose.msra.mxu0 0.0
      %7021 = vmatpush.xpose.msra.mxu0 0.0
      %7022 = vmatpush.xpose.msra.mxu0 0.0
      %7023 = vmatpush.xpose.msra.mxu0 0.0
      %7024 = vmatpush.xpose.msra.mxu0 0.0
      %7025 = vmatpush.xpose.msra.mxu0 0.0
      %7026 = vmatpush.xpose.msra.mxu0 0.0
      %7027 = vmatpush.xpose.msra.mxu0 0.0
      %7028 = vmatpush.xpose.msra.mxu0 0.0
      %7029 = vmatpush.xpose.msra.mxu0 0.0
      %7030 = vmatpush.xpose.msra.mxu0 0.0
      %7031 = vmatpush.xpose.msra.mxu0 0.0
      %7032 = vmatpush.xpose.msra.mxu0 0.0
      %v7033 = vand.u32 %v6688, 4294901760
      %v7034 = vsub.f32 %v6688, %v7033
      %7035 = vmatpush.xpose.msra.mxu0 %v7034
      %v7036 = vand.u32 %v6679, 4294901760
      %v7037 = vsub.f32 %v6679, %v7036
      %7038 = vmatmul.f32.gmra.mxu0 %v7037
      %v7039 = vpop.f32.mrf.mxu0
      %v7040 = vadd.f32 %v7004, %v7039
      %v7041 = vand.u32 %v6681, 4294901760
      %v7042 = vsub.f32 %v6681, %v7041
      %7043 = vmatmul.f32.gmra.mxu0 %v7042
      %v7044 = vpop.f32.mrf.mxu0
      %v7045 = vadd.f32 %v7008, %v7044
      %v7046 = vand.u32 %v6683, 4294901760
      %v7047 = vsub.f32 %v6683, %v7046
      %7048 = vmatmul.f32.gmra.mxu0 %v7047
      %v7049 = vpop.f32.mrf.mxu0
      %v7050 = vadd.f32 %v7012, %v7049
      %v7051 = vand.u32 %v6685, 4294901760
      %v7052 = vsub.f32 %v6685, %v7051
      %7053 = vmatmul.f32.gmra.mxu0 %v7052
      %v7054 = vpop.f32.mrf.mxu0
      %v7055 = vadd.f32 %v7016, %v7054
      %7056 = vdwg.mxu0
      %7057 = vmatpush.xpose.msra.mxu0 0.0
      %7058 = vmatpush.xpose.msra.mxu0 0.0
      %7059 = vmatpush.xpose.msra.mxu0 0.0
      %7060 = vmatpush.xpose.msra.mxu0 0.0
      %7061 = vmatpush.xpose.msra.mxu0 0.0
      %7062 = vmatpush.xpose.msra.mxu0 0.0
      %7063 = vmatpush.xpose.msra.mxu0 0.0
      %7064 = vmatpush.xpose.msra.mxu0 0.0
      %7065 = vmatpush.xpose.msra.mxu0 0.0
      %7066 = vmatpush.xpose.msra.mxu0 0.0
      %7067 = vmatpush.xpose.msra.mxu0 0.0
      %7068 = vmatpush.xpose.msra.mxu0 0.0
      %7069 = vmatpush.xpose.msra.mxu0 0.0
      %7070 = vmatpush.xpose.msra.mxu0 0.0
      %7071 = vmatpush.xpose.msra.mxu0 0.0
      %v7072 = vand.u32 %v6688, 4294901760
      %7073 = vmatpush.xpose.msra.mxu0 %v7072
      %v7074 = vand.u32 %v6679, 4294901760
      %v7075 = vsub.f32 %v6679, %v7074
      %v7076 = vand.u32 %v7075, 4294901760
      %7077 = vmatmul.f32.gmra.mxu0 %v7076
      %v7078 = vpop.f32.mrf.mxu0
      %v7079 = vadd.f32 %v7040, %v7078
      %v7080 = vand.u32 %v6681, 4294901760
      %v7081 = vsub.f32 %v6681, %v7080
      %v7082 = vand.u32 %v7081, 4294901760
      %7083 = vmatmul.f32.gmra.mxu0 %v7082
      %v7084 = vpop.f32.mrf.mxu0
      %v7085 = vadd.f32 %v7045, %v7084
      %v7086 = vand.u32 %v6683, 4294901760
      %v7087 = vsub.f32 %v6683, %v7086
      %v7088 = vand.u32 %v7087, 4294901760
      %7089 = vmatmul.f32.gmra.mxu0 %v7088
      %v7090 = vpop.f32.mrf.mxu0
      %v7091 = vadd.f32 %v7050, %v7090
      %v7092 = vand.u32 %v6685, 4294901760
      %v7093 = vsub.f32 %v6685, %v7092
      %v7094 = vand.u32 %v7093, 4294901760
      %7095 = vmatmul.f32.gmra.mxu0 %v7094
      %v7096 = vpop.f32.mrf.mxu0
      %v7097 = vadd.f32 %v7055, %v7096
      %7098 = vdwg.mxu0
      %7099 = vmatpush.xpose.msra.mxu0 0.0
      %7100 = vmatpush.xpose.msra.mxu0 0.0
      %7101 = vmatpush.xpose.msra.mxu0 0.0
      %7102 = vmatpush.xpose.msra.mxu0 0.0
      %7103 = vmatpush.xpose.msra.mxu0 0.0
      %7104 = vmatpush.xpose.msra.mxu0 0.0
      %7105 = vmatpush.xpose.msra.mxu0 0.0
      %7106 = vmatpush.xpose.msra.mxu0 0.0
      %7107 = vmatpush.xpose.msra.mxu0 0.0
      %7108 = vmatpush.xpose.msra.mxu0 0.0
      %7109 = vmatpush.xpose.msra.mxu0 0.0
      %7110 = vmatpush.xpose.msra.mxu0 0.0
      %7111 = vmatpush.xpose.msra.mxu0 0.0
      %7112 = vmatpush.xpose.msra.mxu0 0.0
      %7113 = vmatpush.xpose.msra.mxu0 0.0
      %v7114 = vand.u32 %v6688, 4294901760
      %v7115 = vsub.f32 %v6688, %v7114
      %v7116 = vand.u32 %v7115, 4294901760
      %7117 = vmatpush.xpose.msra.mxu0 %v7116
      %v7118 = vand.u32 %v6679, 4294901760
      %7119 = vmatmul.f32.gmra.mxu0 %v7118
      %v7120 = vpop.f32.mrf.mxu0
      %v7121 = vadd.f32 %v7079, %v7120
      %v7122 = vand.u32 %v6681, 4294901760
      %7123 = vmatmul.f32.gmra.mxu0 %v7122
      %v7124 = vpop.f32.mrf.mxu0
      %v7125 = vadd.f32 %v7085, %v7124
      %v7126 = vand.u32 %v6683, 4294901760
      %7127 = vmatmul.f32.gmra.mxu0 %v7126
      %v7128 = vpop.f32.mrf.mxu0
      %v7129 = vadd.f32 %v7091, %v7128
      %v7130 = vand.u32 %v6685, 4294901760
      %7131 = vmatmul.f32.gmra.mxu0 %v7130
      %v7132 = vpop.f32.mrf.mxu0
      %v7133 = vadd.f32 %v7097, %v7132
      %7134 = vdwg.mxu0
      %7135 = vmatpush.xpose.msra.mxu0 0.0
      %7136 = vmatpush.xpose.msra.mxu0 0.0
      %7137 = vmatpush.xpose.msra.mxu0 0.0
      %7138 = vmatpush.xpose.msra.mxu0 0.0
      %7139 = vmatpush.xpose.msra.mxu0 0.0
      %7140 = vmatpush.xpose.msra.mxu0 0.0
      %7141 = vmatpush.xpose.msra.mxu0 0.0
      %7142 = vmatpush.xpose.msra.mxu0 0.0
      %7143 = vmatpush.xpose.msra.mxu0 0.0
      %7144 = vmatpush.xpose.msra.mxu0 0.0
      %7145 = vmatpush.xpose.msra.mxu0 0.0
      %7146 = vmatpush.xpose.msra.mxu0 0.0
      %7147 = vmatpush.xpose.msra.mxu0 0.0
      %7148 = vmatpush.xpose.msra.mxu0 0.0
      %7149 = vmatpush.xpose.msra.mxu0 0.0
      %v7150 = vand.u32 %v6688, 4294901760
      %7151 = vmatpush.xpose.msra.mxu0 %v7150
      %v7152 = vand.u32 %v6679, 4294901760
      %7153 = vmatmul.f32.gmra.mxu0 %v7152
      %v7154 = vpop.f32.mrf.mxu0
      %v7155 = vadd.f32 %v7121, %v7154
      %v7156 = vand.u32 %v6681, 4294901760
      %7157 = vmatmul.f32.gmra.mxu0 %v7156
      %v7158 = vpop.f32.mrf.mxu0
      %v7159 = vadd.f32 %v7125, %v7158
      %v7160 = vand.u32 %v6683, 4294901760
      %7161 = vmatmul.f32.gmra.mxu0 %v7160
      %v7162 = vpop.f32.mrf.mxu0
      %v7163 = vadd.f32 %v7129, %v7162
      %v7164 = vand.u32 %v6685, 4294901760
      %7165 = vmatmul.f32.gmra.mxu0 %v7164
      %v7166 = vpop.f32.mrf.mxu0
      %v7167 = vadd.f32 %v7133, %v7166
      %7168 = vdwg.mxu0
      %v7169 = vmul.f32 %v7155, 0.125
      %v7170 = vmul.f32 %v7159, 0.125
      %v7171 = vmul.f32 %v7163, 0.125
      %v7172 = vmul.f32 %v7167, 0.125
      %v7173 = vmul.f32 %v2576, %v6175
      %v7174 = vmul.f32 %v3474, %v6179
      %v7175 = vmul.f32 %v2580, %v6176
      %v7176 = vmul.f32 %v3478, %v6180
      %v7177 = vmul.f32 %v2584, %v6177
      %v7178 = vmul.f32 %v3482, %v6181
      %v7179 = vmul.f32 %v2588, %v6178
      %v7180 = vmul.f32 %v3486, %v6182
      %7181 = vst [vmem:[#allocation1] ss:$2 sm:$0xff] %v462
      %v7182 = vld.sshfl [vmem:[#allocation1] sm:$0xff pattern:$0x75316420]
      %v7183 = vld.sshfl [vmem:[#allocation1 + $0x8] sm:$0xff pattern:$0x75316420]
      %7186 = vmatpush.xpose.msra.mxu0 0.0
      %7187 = vmatpush.xpose.msra.mxu0 0.0
      %7188 = vmatpush.xpose.msra.mxu0 0.0
      %7189 = vmatpush.xpose.msra.mxu0 0.0
      %7190 = vmatpush.xpose.msra.mxu0 0.0
      %7191 = vmatpush.xpose.msra.mxu0 0.0
      %7192 = vmatpush.xpose.msra.mxu0 0.0
      %7193 = vmatpush.xpose.msra.mxu0 0.0
      %7194 = vmatpush.xpose.msra.mxu0 0.0
      %7195 = vmatpush.xpose.msra.mxu0 0.0
      %7196 = vmatpush.xpose.msra.mxu0 0.0
      %7197 = vmatpush.xpose.msra.mxu0 0.0
      %7198 = vmatpush.xpose.msra.mxu0 0.0
      %7199 = vmatpush.xpose.msra.mxu0 0.0
      %7200 = vmatpush.xpose.msra.mxu0 0.0
      %v7201 = vand.u32 %v7182, 4294901760
      %7202 = vmatpush.xpose.msra.mxu0 %v7201
      %v7203 = vand.u32 %v7173, 4294901760
      %v7204 = vsub.f32 %v7173, %v7203
      %v7205 = vand.u32 %v7204, 4294901760
      %v7206 = vsub.f32 %v7204, %v7205
      %v7207 = vand.u32 %v7206, 4294901760
      %7208 = vmatmul.f32.gmra.mxu0 %v7207
      %v7209 = vpop.f32.mrf.mxu0
      %v7210 = vadd.f32 0.0, %v7209
      %v7211 = vand.u32 %v7175, 4294901760
      %v7212 = vsub.f32 %v7175, %v7211
      %v7213 = vand.u32 %v7212, 4294901760
      %v7214 = vsub.f32 %v7212, %v7213
      %v7215 = vand.u32 %v7214, 4294901760
      %7216 = vmatmul.f32.gmra.mxu0 %v7215
      %v7217 = vpop.f32.mrf.mxu0
      %v7218 = vadd.f32 0.0, %v7217
      %v7219 = vand.u32 %v7177, 4294901760
      %v7220 = vsub.f32 %v7177, %v7219
      %v7221 = vand.u32 %v7220, 4294901760
      %v7222 = vsub.f32 %v7220, %v7221
      %v7223 = vand.u32 %v7222, 4294901760
      %7224 = vmatmul.f32.gmra.mxu0 %v7223
      %v7225 = vpop.f32.mrf.mxu0
      %v7226 = vadd.f32 0.0, %v7225
      %v7227 = vand.u32 %v7179, 4294901760
      %v7228 = vsub.f32 %v7179, %v7227
      %v7229 = vand.u32 %v7228, 4294901760
      %v7230 = vsub.f32 %v7228, %v7229
      %v7231 = vand.u32 %v7230, 4294901760
      %7232 = vmatmul.f32.gmra.mxu0 %v7231
      %v7233 = vpop.f32.mrf.mxu0
      %v7234 = vadd.f32 0.0, %v7233
      %7235 = vdwg.mxu0
      %7236 = vmatpush.xpose.msra.mxu0 0.0
      %7237 = vmatpush.xpose.msra.mxu0 0.0
      %7238 = vmatpush.xpose.msra.mxu0 0.0
      %7239 = vmatpush.xpose.msra.mxu0 0.0
      %7240 = vmatpush.xpose.msra.mxu0 0.0
      %7241 = vmatpush.xpose.msra.mxu0 0.0
      %7242 = vmatpush.xpose.msra.mxu0 0.0
      %7243 = vmatpush.xpose.msra.mxu0 0.0
      %7244 = vmatpush.xpose.msra.mxu0 0.0
      %7245 = vmatpush.xpose.msra.mxu0 0.0
      %7246 = vmatpush.xpose.msra.mxu0 0.0
      %7247 = vmatpush.xpose.msra.mxu0 0.0
      %7248 = vmatpush.xpose.msra.mxu0 0.0
      %7249 = vmatpush.xpose.msra.mxu0 0.0
      %7250 = vmatpush.xpose.msra.mxu0 0.0
      %v7251 = vand.u32 %v7182, 4294901760
      %v7252 = vsub.f32 %v7182, %v7251
      %v7253 = vand.u32 %v7252, 4294901760
      %v7254 = vsub.f32 %v7252, %v7253
      %v7255 = vand.u32 %v7254, 4294901760
      %7256 = vmatpush.xpose.msra.mxu0 %v7255
      %v7257 = vand.u32 %v7173, 4294901760
      %7258 = vmatmul.f32.gmra.mxu0 %v7257
      %v7259 = vpop.f32.mrf.mxu0
      %v7260 = vadd.f32 %v7210, %v7259
      %v7261 = vand.u32 %v7175, 4294901760
      %7262 = vmatmul.f32.gmra.mxu0 %v7261
      %v7263 = vpop.f32.mrf.mxu0
      %v7264 = vadd.f32 %v7218, %v7263
      %v7265 = vand.u32 %v7177, 4294901760
      %7266 = vmatmul.f32.gmra.mxu0 %v7265
      %v7267 = vpop.f32.mrf.mxu0
      %v7268 = vadd.f32 %v7226, %v7267
      %v7269 = vand.u32 %v7179, 4294901760
      %7270 = vmatmul.f32.gmra.mxu0 %v7269
      %v7271 = vpop.f32.mrf.mxu0
      %v7272 = vadd.f32 %v7234, %v7271
      %7273 = vdwg.mxu0
      %7274 = vmatpush.xpose.msra.mxu0 0.0
      %7275 = vmatpush.xpose.msra.mxu0 0.0
      %7276 = vmatpush.xpose.msra.mxu0 0.0
      %7277 = vmatpush.xpose.msra.mxu0 0.0
      %7278 = vmatpush.xpose.msra.mxu0 0.0
      %7279 = vmatpush.xpose.msra.mxu0 0.0
      %7280 = vmatpush.xpose.msra.mxu0 0.0
      %7281 = vmatpush.xpose.msra.mxu0 0.0
      %7282 = vmatpush.xpose.msra.mxu0 0.0
      %7283 = vmatpush.xpose.msra.mxu0 0.0
      %7284 = vmatpush.xpose.msra.mxu0 0.0
      %7285 = vmatpush.xpose.msra.mxu0 0.0
      %7286 = vmatpush.xpose.msra.mxu0 0.0
      %7287 = vmatpush.xpose.msra.mxu0 0.0
      %7288 = vmatpush.xpose.msra.mxu0 0.0
      %v7289 = vand.u32 %v7182, 4294901760
      %v7290 = vsub.f32 %v7182, %v7289
      %7291 = vmatpush.xpose.msra.mxu0 %v7290
      %v7292 = vand.u32 %v7173, 4294901760
      %v7293 = vsub.f32 %v7173, %v7292
      %7294 = vmatmul.f32.gmra.mxu0 %v7293
      %v7295 = vpop.f32.mrf.mxu0
      %v7296 = vadd.f32 %v7260, %v7295
      %v7297 = vand.u32 %v7175, 4294901760
      %v7298 = vsub.f32 %v7175, %v7297
      %7299 = vmatmul.f32.gmra.mxu0 %v7298
      %v7300 = vpop.f32.mrf.mxu0
      %v7301 = vadd.f32 %v7264, %v7300
      %v7302 = vand.u32 %v7177, 4294901760
      %v7303 = vsub.f32 %v7177, %v7302
      %7304 = vmatmul.f32.gmra.mxu0 %v7303
      %v7305 = vpop.f32.mrf.mxu0
      %v7306 = vadd.f32 %v7268, %v7305
      %v7307 = vand.u32 %v7179, 4294901760
      %v7308 = vsub.f32 %v7179, %v7307
      %7309 = vmatmul.f32.gmra.mxu0 %v7308
      %v7310 = vpop.f32.mrf.mxu0
      %v7311 = vadd.f32 %v7272, %v7310
      %7312 = vdwg.mxu0
      %7313 = vmatpush.xpose.msra.mxu0 0.0
      %7314 = vmatpush.xpose.msra.mxu0 0.0
      %7315 = vmatpush.xpose.msra.mxu0 0.0
      %7316 = vmatpush.xpose.msra.mxu0 0.0
      %7317 = vmatpush.xpose.msra.mxu0 0.0
      %7318 = vmatpush.xpose.msra.mxu0 0.0
      %7319 = vmatpush.xpose.msra.mxu0 0.0
      %7320 = vmatpush.xpose.msra.mxu0 0.0
      %7321 = vmatpush.xpose.msra.mxu0 0.0
      %7322 = vmatpush.xpose.msra.mxu0 0.0
      %7323 = vmatpush.xpose.msra.mxu0 0.0
      %7324 = vmatpush.xpose.msra.mxu0 0.0
      %7325 = vmatpush.xpose.msra.mxu0 0.0
      %7326 = vmatpush.xpose.msra.mxu0 0.0
      %7327 = vmatpush.xpose.msra.mxu0 0.0
      %v7328 = vand.u32 %v7182, 4294901760
      %7329 = vmatpush.xpose.msra.mxu0 %v7328
      %v7330 = vand.u32 %v7173, 4294901760
      %v7331 = vsub.f32 %v7173, %v7330
      %v7332 = vand.u32 %v7331, 4294901760
      %7333 = vmatmul.f32.gmra.mxu0 %v7332
      %v7334 = vpop.f32.mrf.mxu0
      %v7335 = vadd.f32 %v7296, %v7334
      %v7336 = vand.u32 %v7175, 4294901760
      %v7337 = vsub.f32 %v7175, %v7336
      %v7338 = vand.u32 %v7337, 4294901760
      %7339 = vmatmul.f32.gmra.mxu0 %v7338
      %v7340 = vpop.f32.mrf.mxu0
      %v7341 = vadd.f32 %v7301, %v7340
      %v7342 = vand.u32 %v7177, 4294901760
      %v7343 = vsub.f32 %v7177, %v7342
      %v7344 = vand.u32 %v7343, 4294901760
      %7345 = vmatmul.f32.gmra.mxu0 %v7344
      %v7346 = vpop.f32.mrf.mxu0
      %v7347 = vadd.f32 %v7306, %v7346
      %v7348 = vand.u32 %v7179, 4294901760
      %v7349 = vsub.f32 %v7179, %v7348
      %v7350 = vand.u32 %v7349, 4294901760
      %7351 = vmatmul.f32.gmra.mxu0 %v7350
      %v7352 = vpop.f32.mrf.mxu0
      %v7353 = vadd.f32 %v7311, %v7352
      %7354 = vdwg.mxu0
      %7355 = vmatpush.xpose.msra.mxu0 0.0
      %7356 = vmatpush.xpose.msra.mxu0 0.0
      %7357 = vmatpush.xpose.msra.mxu0 0.0
      %7358 = vmatpush.xpose.msra.mxu0 0.0
      %7359 = vmatpush.xpose.msra.mxu0 0.0
      %7360 = vmatpush.xpose.msra.mxu0 0.0
      %7361 = vmatpush.xpose.msra.mxu0 0.0
      %7362 = vmatpush.xpose.msra.mxu0 0.0
      %7363 = vmatpush.xpose.msra.mxu0 0.0
      %7364 = vmatpush.xpose.msra.mxu0 0.0
      %7365 = vmatpush.xpose.msra.mxu0 0.0
      %7366 = vmatpush.xpose.msra.mxu0 0.0
      %7367 = vmatpush.xpose.msra.mxu0 0.0
      %7368 = vmatpush.xpose.msra.mxu0 0.0
      %7369 = vmatpush.xpose.msra.mxu0 0.0
      %v7370 = vand.u32 %v7182, 4294901760
      %v7371 = vsub.f32 %v7182, %v7370
      %v7372 = vand.u32 %v7371, 4294901760
      %7373 = vmatpush.xpose.msra.mxu0 %v7372
      %v7374 = vand.u32 %v7173, 4294901760
      %7375 = vmatmul.f32.gmra.mxu0 %v7374
      %v7376 = vpop.f32.mrf.mxu0
      %v7377 = vadd.f32 %v7335, %v7376
      %v7378 = vand.u32 %v7175, 4294901760
      %7379 = vmatmul.f32.gmra.mxu0 %v7378
      %v7380 = vpop.f32.mrf.mxu0
      %v7381 = vadd.f32 %v7341, %v7380
      %v7382 = vand.u32 %v7177, 4294901760
      %7383 = vmatmul.f32.gmra.mxu0 %v7382
      %v7384 = vpop.f32.mrf.mxu0
      %v7385 = vadd.f32 %v7347, %v7384
      %v7386 = vand.u32 %v7179, 4294901760
      %7387 = vmatmul.f32.gmra.mxu0 %v7386
      %v7388 = vpop.f32.mrf.mxu0
      %v7389 = vadd.f32 %v7353, %v7388
      %7390 = vdwg.mxu0
      %7391 = vmatpush.xpose.msra.mxu0 0.0
      %7392 = vmatpush.xpose.msra.mxu0 0.0
      %7393 = vmatpush.xpose.msra.mxu0 0.0
      %7394 = vmatpush.xpose.msra.mxu0 0.0
      %7395 = vmatpush.xpose.msra.mxu0 0.0
      %7396 = vmatpush.xpose.msra.mxu0 0.0
      %7397 = vmatpush.xpose.msra.mxu0 0.0
      %7398 = vmatpush.xpose.msra.mxu0 0.0
      %7399 = vmatpush.xpose.msra.mxu0 0.0
      %7400 = vmatpush.xpose.msra.mxu0 0.0
      %7401 = vmatpush.xpose.msra.mxu0 0.0
      %7402 = vmatpush.xpose.msra.mxu0 0.0
      %7403 = vmatpush.xpose.msra.mxu0 0.0
      %7404 = vmatpush.xpose.msra.mxu0 0.0
      %7405 = vmatpush.xpose.msra.mxu0 0.0
      %v7406 = vand.u32 %v7182, 4294901760
      %7407 = vmatpush.xpose.msra.mxu0 %v7406
      %v7408 = vand.u32 %v7173, 4294901760
      %7409 = vmatmul.f32.gmra.mxu0 %v7408
      %v7410 = vpop.f32.mrf.mxu0
      %v7411 = vadd.f32 %v7377, %v7410
      %v7412 = vand.u32 %v7175, 4294901760
      %7413 = vmatmul.f32.gmra.mxu0 %v7412
      %v7414 = vpop.f32.mrf.mxu0
      %v7415 = vadd.f32 %v7381, %v7414
      %v7416 = vand.u32 %v7177, 4294901760
      %7417 = vmatmul.f32.gmra.mxu0 %v7416
      %v7418 = vpop.f32.mrf.mxu0
      %v7419 = vadd.f32 %v7385, %v7418
      %v7420 = vand.u32 %v7179, 4294901760
      %7421 = vmatmul.f32.gmra.mxu0 %v7420
      %v7422 = vpop.f32.mrf.mxu0
      %v7423 = vadd.f32 %v7389, %v7422
      %7424 = vdwg.mxu0
      %7425 = vmatpush.xpose.msra.mxu0 0.0
      %7426 = vmatpush.xpose.msra.mxu0 0.0
      %7427 = vmatpush.xpose.msra.mxu0 0.0
      %7428 = vmatpush.xpose.msra.mxu0 0.0
      %7429 = vmatpush.xpose.msra.mxu0 0.0
      %7430 = vmatpush.xpose.msra.mxu0 0.0
      %7431 = vmatpush.xpose.msra.mxu0 0.0
      %7432 = vmatpush.xpose.msra.mxu0 0.0
      %7433 = vmatpush.xpose.msra.mxu0 0.0
      %7434 = vmatpush.xpose.msra.mxu0 0.0
      %7435 = vmatpush.xpose.msra.mxu0 0.0
      %7436 = vmatpush.xpose.msra.mxu0 0.0
      %7437 = vmatpush.xpose.msra.mxu0 0.0
      %7438 = vmatpush.xpose.msra.mxu0 0.0
      %7439 = vmatpush.xpose.msra.mxu0 0.0
      %v7440 = vand.u32 %v7183, 4294901760
      %7441 = vmatpush.xpose.msra.mxu0 %v7440
      %v7442 = vand.u32 %v7174, 4294901760
      %v7443 = vsub.f32 %v7174, %v7442
      %v7444 = vand.u32 %v7443, 4294901760
      %v7445 = vsub.f32 %v7443, %v7444
      %v7446 = vand.u32 %v7445, 4294901760
      %7447 = vmatmul.f32.gmra.mxu0 %v7446
      %v7448 = vpop.f32.mrf.mxu0
      %v7449 = vadd.f32 %v7411, %v7448
      %v7450 = vand.u32 %v7176, 4294901760
      %v7451 = vsub.f32 %v7176, %v7450
      %v7452 = vand.u32 %v7451, 4294901760
      %v7453 = vsub.f32 %v7451, %v7452
      %v7454 = vand.u32 %v7453, 4294901760
      %7455 = vmatmul.f32.gmra.mxu0 %v7454
      %v7456 = vpop.f32.mrf.mxu0
      %v7457 = vadd.f32 %v7415, %v7456
      %v7458 = vand.u32 %v7178, 4294901760
      %v7459 = vsub.f32 %v7178, %v7458
      %v7460 = vand.u32 %v7459, 4294901760
      %v7461 = vsub.f32 %v7459, %v7460
      %v7462 = vand.u32 %v7461, 4294901760
      %7463 = vmatmul.f32.gmra.mxu0 %v7462
      %v7464 = vpop.f32.mrf.mxu0
      %v7465 = vadd.f32 %v7419, %v7464
      %v7466 = vand.u32 %v7180, 4294901760
      %v7467 = vsub.f32 %v7180, %v7466
      %v7468 = vand.u32 %v7467, 4294901760
      %v7469 = vsub.f32 %v7467, %v7468
      %v7470 = vand.u32 %v7469, 4294901760
      %7471 = vmatmul.f32.gmra.mxu0 %v7470
      %v7472 = vpop.f32.mrf.mxu0
      %v7473 = vadd.f32 %v7423, %v7472
      %7474 = vdwg.mxu0
      %7475 = vmatpush.xpose.msra.mxu0 0.0
      %7476 = vmatpush.xpose.msra.mxu0 0.0
      %7477 = vmatpush.xpose.msra.mxu0 0.0
      %7478 = vmatpush.xpose.msra.mxu0 0.0
      %7479 = vmatpush.xpose.msra.mxu0 0.0
      %7480 = vmatpush.xpose.msra.mxu0 0.0
      %7481 = vmatpush.xpose.msra.mxu0 0.0
      %7482 = vmatpush.xpose.msra.mxu0 0.0
      %7483 = vmatpush.xpose.msra.mxu0 0.0
      %7484 = vmatpush.xpose.msra.mxu0 0.0
      %7485 = vmatpush.xpose.msra.mxu0 0.0
      %7486 = vmatpush.xpose.msra.mxu0 0.0
      %7487 = vmatpush.xpose.msra.mxu0 0.0
      %7488 = vmatpush.xpose.msra.mxu0 0.0
      %7489 = vmatpush.xpose.msra.mxu0 0.0
      %v7490 = vand.u32 %v7183, 4294901760
      %v7491 = vsub.f32 %v7183, %v7490
      %v7492 = vand.u32 %v7491, 4294901760
      %v7493 = vsub.f32 %v7491, %v7492
      %v7494 = vand.u32 %v7493, 4294901760
      %7495 = vmatpush.xpose.msra.mxu0 %v7494
      %v7496 = vand.u32 %v7174, 4294901760
      %7497 = vmatmul.f32.gmra.mxu0 %v7496
      %v7498 = vpop.f32.mrf.mxu0
      %v7499 = vadd.f32 %v7449, %v7498
      %v7500 = vand.u32 %v7176, 4294901760
      %7501 = vmatmul.f32.gmra.mxu0 %v7500
      %v7502 = vpop.f32.mrf.mxu0
      %v7503 = vadd.f32 %v7457, %v7502
      %v7504 = vand.u32 %v7178, 4294901760
      %7505 = vmatmul.f32.gmra.mxu0 %v7504
      %v7506 = vpop.f32.mrf.mxu0
      %v7507 = vadd.f32 %v7465, %v7506
      %v7508 = vand.u32 %v7180, 4294901760
      %7509 = vmatmul.f32.gmra.mxu0 %v7508
      %v7510 = vpop.f32.mrf.mxu0
      %v7511 = vadd.f32 %v7473, %v7510
      %7512 = vdwg.mxu0
      %7513 = vmatpush.xpose.msra.mxu0 0.0
      %7514 = vmatpush.xpose.msra.mxu0 0.0
      %7515 = vmatpush.xpose.msra.mxu0 0.0
      %7516 = vmatpush.xpose.msra.mxu0 0.0
      %7517 = vmatpush.xpose.msra.mxu0 0.0
      %7518 = vmatpush.xpose.msra.mxu0 0.0
      %7519 = vmatpush.xpose.msra.mxu0 0.0
      %7520 = vmatpush.xpose.msra.mxu0 0.0
      %7521 = vmatpush.xpose.msra.mxu0 0.0
      %7522 = vmatpush.xpose.msra.mxu0 0.0
      %7523 = vmatpush.xpose.msra.mxu0 0.0
      %7524 = vmatpush.xpose.msra.mxu0 0.0
      %7525 = vmatpush.xpose.msra.mxu0 0.0
      %7526 = vmatpush.xpose.msra.mxu0 0.0
      %7527 = vmatpush.xpose.msra.mxu0 0.0
      %v7528 = vand.u32 %v7183, 4294901760
      %v7529 = vsub.f32 %v7183, %v7528
      %7530 = vmatpush.xpose.msra.mxu0 %v7529
      %v7531 = vand.u32 %v7174, 4294901760
      %v7532 = vsub.f32 %v7174, %v7531
      %7533 = vmatmul.f32.gmra.mxu0 %v7532
      %v7534 = vpop.f32.mrf.mxu0
      %v7535 = vadd.f32 %v7499, %v7534
      %v7536 = vand.u32 %v7176, 4294901760
      %v7537 = vsub.f32 %v7176, %v7536
      %7538 = vmatmul.f32.gmra.mxu0 %v7537
      %v7539 = vpop.f32.mrf.mxu0
      %v7540 = vadd.f32 %v7503, %v7539
      %v7541 = vand.u32 %v7178, 4294901760
      %v7542 = vsub.f32 %v7178, %v7541
      %7543 = vmatmul.f32.gmra.mxu0 %v7542
      %v7544 = vpop.f32.mrf.mxu0
      %v7545 = vadd.f32 %v7507, %v7544
      %v7546 = vand.u32 %v7180, 4294901760
      %v7547 = vsub.f32 %v7180, %v7546
      %7548 = vmatmul.f32.gmra.mxu0 %v7547
      %v7549 = vpop.f32.mrf.mxu0
      %v7550 = vadd.f32 %v7511, %v7549
      %7551 = vdwg.mxu0
      %7552 = vmatpush.xpose.msra.mxu0 0.0
      %7553 = vmatpush.xpose.msra.mxu0 0.0
      %7554 = vmatpush.xpose.msra.mxu0 0.0
      %7555 = vmatpush.xpose.msra.mxu0 0.0
      %7556 = vmatpush.xpose.msra.mxu0 0.0
      %7557 = vmatpush.xpose.msra.mxu0 0.0
      %7558 = vmatpush.xpose.msra.mxu0 0.0
      %7559 = vmatpush.xpose.msra.mxu0 0.0
      %7560 = vmatpush.xpose.msra.mxu0 0.0
      %7561 = vmatpush.xpose.msra.mxu0 0.0
      %7562 = vmatpush.xpose.msra.mxu0 0.0
      %7563 = vmatpush.xpose.msra.mxu0 0.0
      %7564 = vmatpush.xpose.msra.mxu0 0.0
      %7565 = vmatpush.xpose.msra.mxu0 0.0
      %7566 = vmatpush.xpose.msra.mxu0 0.0
      %v7567 = vand.u32 %v7183, 4294901760
      %7568 = vmatpush.xpose.msra.mxu0 %v7567
      %v7569 = vand.u32 %v7174, 4294901760
      %v7570 = vsub.f32 %v7174, %v7569
      %v7571 = vand.u32 %v7570, 4294901760
      %7572 = vmatmul.f32.gmra.mxu0 %v7571
      %v7573 = vpop.f32.mrf.mxu0
      %v7574 = vadd.f32 %v7535, %v7573
      %v7575 = vand.u32 %v7176, 4294901760
      %v7576 = vsub.f32 %v7176, %v7575
      %v7577 = vand.u32 %v7576, 4294901760
      %7578 = vmatmul.f32.gmra.mxu0 %v7577
      %v7579 = vpop.f32.mrf.mxu0
      %v7580 = vadd.f32 %v7540, %v7579
      %v7581 = vand.u32 %v7178, 4294901760
      %v7582 = vsub.f32 %v7178, %v7581
      %v7583 = vand.u32 %v7582, 4294901760
      %7584 = vmatmul.f32.gmra.mxu0 %v7583
      %v7585 = vpop.f32.mrf.mxu0
      %v7586 = vadd.f32 %v7545, %v7585
      %v7587 = vand.u32 %v7180, 4294901760
      %v7588 = vsub.f32 %v7180, %v7587
      %v7589 = vand.u32 %v7588, 4294901760
      %7590 = vmatmul.f32.gmra.mxu0 %v7589
      %v7591 = vpop.f32.mrf.mxu0
      %v7592 = vadd.f32 %v7550, %v7591
      %7593 = vdwg.mxu0
      %7594 = vmatpush.xpose.msra.mxu0 0.0
      %7595 = vmatpush.xpose.msra.mxu0 0.0
      %7596 = vmatpush.xpose.msra.mxu0 0.0
      %7597 = vmatpush.xpose.msra.mxu0 0.0
      %7598 = vmatpush.xpose.msra.mxu0 0.0
      %7599 = vmatpush.xpose.msra.mxu0 0.0
      %7600 = vmatpush.xpose.msra.mxu0 0.0
      %7601 = vmatpush.xpose.msra.mxu0 0.0
      %7602 = vmatpush.xpose.msra.mxu0 0.0
      %7603 = vmatpush.xpose.msra.mxu0 0.0
      %7604 = vmatpush.xpose.msra.mxu0 0.0
      %7605 = vmatpush.xpose.msra.mxu0 0.0
      %7606 = vmatpush.xpose.msra.mxu0 0.0
      %7607 = vmatpush.xpose.msra.mxu0 0.0
      %7608 = vmatpush.xpose.msra.mxu0 0.0
      %v7609 = vand.u32 %v7183, 4294901760
      %v7610 = vsub.f32 %v7183, %v7609
      %v7611 = vand.u32 %v7610, 4294901760
      %7612 = vmatpush.xpose.msra.mxu0 %v7611
      %v7613 = vand.u32 %v7174, 4294901760
      %7614 = vmatmul.f32.gmra.mxu0 %v7613
      %v7615 = vpop.f32.mrf.mxu0
      %v7616 = vadd.f32 %v7574, %v7615
      %v7617 = vand.u32 %v7176, 4294901760
      %7618 = vmatmul.f32.gmra.mxu0 %v7617
      %v7619 = vpop.f32.mrf.mxu0
      %v7620 = vadd.f32 %v7580, %v7619
      %v7621 = vand.u32 %v7178, 4294901760
      %7622 = vmatmul.f32.gmra.mxu0 %v7621
      %v7623 = vpop.f32.mrf.mxu0
      %v7624 = vadd.f32 %v7586, %v7623
      %v7625 = vand.u32 %v7180, 4294901760
      %7626 = vmatmul.f32.gmra.mxu0 %v7625
      %v7627 = vpop.f32.mrf.mxu0
      %v7628 = vadd.f32 %v7592, %v7627
      %7629 = vdwg.mxu0
      %7630 = vmatpush.xpose.msra.mxu0 0.0
      %7631 = vmatpush.xpose.msra.mxu0 0.0
      %7632 = vmatpush.xpose.msra.mxu0 0.0
      %7633 = vmatpush.xpose.msra.mxu0 0.0
      %7634 = vmatpush.xpose.msra.mxu0 0.0
      %7635 = vmatpush.xpose.msra.mxu0 0.0
      %7636 = vmatpush.xpose.msra.mxu0 0.0
      %7637 = vmatpush.xpose.msra.mxu0 0.0
      %7638 = vmatpush.xpose.msra.mxu0 0.0
      %7639 = vmatpush.xpose.msra.mxu0 0.0
      %7640 = vmatpush.xpose.msra.mxu0 0.0
      %7641 = vmatpush.xpose.msra.mxu0 0.0
      %7642 = vmatpush.xpose.msra.mxu0 0.0
      %7643 = vmatpush.xpose.msra.mxu0 0.0
      %7644 = vmatpush.xpose.msra.mxu0 0.0
      %v7645 = vand.u32 %v7183, 4294901760
      %7646 = vmatpush.xpose.msra.mxu0 %v7645
      %v7647 = vand.u32 %v7174, 4294901760
      %7648 = vmatmul.f32.gmra.mxu0 %v7647
      %v7649 = vpop.f32.mrf.mxu0
      %v7650 = vadd.f32 %v7616, %v7649
      %v7651 = vand.u32 %v7176, 4294901760
      %7652 = vmatmul.f32.gmra.mxu0 %v7651
      %v7653 = vpop.f32.mrf.mxu0
      %v7654 = vadd.f32 %v7620, %v7653
      %v7655 = vand.u32 %v7178, 4294901760
      %7656 = vmatmul.f32.gmra.mxu0 %v7655
      %v7657 = vpop.f32.mrf.mxu0
      %v7658 = vadd.f32 %v7624, %v7657
      %v7659 = vand.u32 %v7180, 4294901760
      %7660 = vmatmul.f32.gmra.mxu0 %v7659
      %v7661 = vpop.f32.mrf.mxu0
      %v7662 = vadd.f32 %v7628, %v7661
      %7663 = vdwg.mxu0
      %v7664 = vmul.f32 %v7650, 0.125
      %v7665 = vmul.f32 %v7654, 0.125
      %v7666 = vmul.f32 %v7658, 0.125
      %v7667 = vmul.f32 %v7662, 0.125
      %v7668 = vmax.f32 %v6152, %v6674
      %v7669 = vmax.f32 %v6153, %v6675
      %v7670 = vmax.f32 %v6154, %v6676
      %v7671 = vmax.f32 %v6155, %v6677
      %v7672 = vmax.f32 %v7668, %v7169
      %v7673 = vmax.f32 %v7669, %v7170
      %v7674 = vmax.f32 %v7670, %v7171
      %v7675 = vmax.f32 %v7671, %v7172
      %v7676 = vmax.f32 %v7672, %v7664
      %v7677 = vmax.f32 %v7673, %v7665
      %v7678 = vmax.f32 %v7674, %v7666
      %v7679 = vmax.f32 %v7675, %v7667
      %v7680 = vsub.f32 %v6152, %v7676
      %v7681 = vsub.f32 %v6153, %v7677
      %v7682 = vsub.f32 %v6154, %v7678
      %v7683 = vsub.f32 %v6155, %v7679
      %v7684 = vmul.f32 %v7680, 1.442695
      %v7685 = vpow.pop %v7684
      %v7686 = vmul.f32 %v7681, 1.442695
      %v7687 = vpow.pop %v7686
      %v7688 = vmul.f32 %v7682, 1.442695
      %v7689 = vpow.pop %v7688
      %v7690 = vmul.f32 %v7683, 1.442695
      %v7691 = vpow.pop %v7690
      %v7692 = vsub.f32 %v6674, %v7676
      %v7693 = vsub.f32 %v6675, %v7677
      %v7694 = vsub.f32 %v6676, %v7678
      %v7695 = vsub.f32 %v6677, %v7679
      %v7696 = vmul.f32 %v7692, 1.442695
      %v7697 = vpow.pop %v7696
      %v7698 = vmul.f32 %v7693, 1.442695
      %v7699 = vpow.pop %v7698
      %v7700 = vmul.f32 %v7694, 1.442695
      %v7701 = vpow.pop %v7700
      %v7702 = vmul.f32 %v7695, 1.442695
      %v7703 = vpow.pop %v7702
      %v7704 = vadd.f32 %v7685, %v7697
      %v7705 = vadd.f32 %v7687, %v7699
      %v7706 = vadd.f32 %v7689, %v7701
      %v7707 = vadd.f32 %v7691, %v7703
      %v7708 = vsub.f32 %v7169, %v7676
      %v7709 = vsub.f32 %v7170, %v7677
      %v7710 = vsub.f32 %v7171, %v7678
      %v7711 = vsub.f32 %v7172, %v7679
      %v7712 = vmul.f32 %v7708, 1.442695
      %v7713 = vpow.pop %v7712
      %v7714 = vmul.f32 %v7709, 1.442695
      %v7715 = vpow.pop %v7714
      %v7716 = vmul.f32 %v7710, 1.442695
      %v7717 = vpow.pop %v7716
      %v7718 = vmul.f32 %v7711, 1.442695
      %v7719 = vpow.pop %v7718
      %v7720 = vadd.f32 %v7704, %v7713
      %v7721 = vadd.f32 %v7705, %v7715
      %v7722 = vadd.f32 %v7706, %v7717
      %v7723 = vadd.f32 %v7707, %v7719
      %v7724 = vsub.f32 %v7664, %v7676
      %v7725 = vsub.f32 %v7665, %v7677
      %v7726 = vsub.f32 %v7666, %v7678
      %v7727 = vsub.f32 %v7667, %v7679
      %v7728 = vmul.f32 %v7724, 1.442695
      %v7729 = vpow.pop %v7728
      %v7730 = vmul.f32 %v7725, 1.442695
      %v7731 = vpow.pop %v7730
      %v7732 = vmul.f32 %v7726, 1.442695
      %v7733 = vpow.pop %v7732
      %v7734 = vmul.f32 %v7727, 1.442695
      %v7735 = vpow.pop %v7734
      %v7736 = vadd.f32 %v7720, %v7729
      %v7737 = vadd.f32 %v7721, %v7731
      %v7738 = vadd.f32 %v7722, %v7733
      %v7739 = vadd.f32 %v7723, %v7735
      %v7740 = vrcp.pop %v7736
      %v7741 = vmul.f32 %v7736, %v7740
      %v7742 = vsub.f32 1.0, %v7741
      %v7743 = vmul.f32 %v7740, %v7742
      %v7744 = vadd.f32 %v7740, %v7743
      %vm7745 = vweird.f32 %v7736
      %vm7746 = vweird.f32 %v7740
      %vm7747 = vmor %vm7745, %vm7746
      %v7748 = vsel %vm7747, %v7740, %v7744
      %v7749 = vand.u32 2147483647, %v7736
      %vm7750 = vcmp.eq.f32.partialorder %v7749, 8.507059e+37
      %v7751 = vand.u32 %v7736, 2147483648
      %v7752 = vor.u32 1.1754944e-38, %v7751
      %v7753 = vsel %vm7750, %v7752, %v7748
      %v7754 = vmul.f32 1.0, %v7753
      %v7755 = vrcp.pop %v7737
      %v7756 = vmul.f32 %v7737, %v7755
      %v7757 = vsub.f32 1.0, %v7756
      %v7758 = vmul.f32 %v7755, %v7757
      %v7759 = vadd.f32 %v7755, %v7758
      %vm7760 = vweird.f32 %v7737
      %vm7761 = vweird.f32 %v7755
      %vm7762 = vmor %vm7760, %vm7761
      %v7763 = vsel %vm7762, %v7755, %v7759
      %v7764 = vand.u32 2147483647, %v7737
      %vm7765 = vcmp.eq.f32.partialorder %v7764, 8.507059e+37
      %v7766 = vand.u32 %v7737, 2147483648
      %v7767 = vor.u32 1.1754944e-38, %v7766
      %v7768 = vsel %vm7765, %v7767, %v7763
      %v7769 = vmul.f32 1.0, %v7768
      %v7770 = vrcp.pop %v7738
      %v7771 = vmul.f32 %v7738, %v7770
      %v7772 = vsub.f32 1.0, %v7771
      %v7773 = vmul.f32 %v7770, %v7772
      %v7774 = vadd.f32 %v7770, %v7773
      %vm7775 = vweird.f32 %v7738
      %vm7776 = vweird.f32 %v7770
      %vm7777 = vmor %vm7775, %vm7776
      %v7778 = vsel %vm7777, %v7770, %v7774
      %v7779 = vand.u32 2147483647, %v7738
      %vm7780 = vcmp.eq.f32.partialorder %v7779, 8.507059e+37
      %v7781 = vand.u32 %v7738, 2147483648
      %v7782 = vor.u32 1.1754944e-38, %v7781
      %v7783 = vsel %vm7780, %v7782, %v7778
      %v7784 = vmul.f32 1.0, %v7783
      %v7785 = vrcp.pop %v7739
      %v7786 = vmul.f32 %v7739, %v7785
      %v7787 = vsub.f32 1.0, %v7786
      %v7788 = vmul.f32 %v7785, %v7787
      %v7789 = vadd.f32 %v7785, %v7788
      %vm7790 = vweird.f32 %v7739
      %vm7791 = vweird.f32 %v7785
      %vm7792 = vmor %vm7790, %vm7791
      %v7793 = vsel %vm7792, %v7785, %v7789
      %v7794 = vand.u32 2147483647, %v7739
      %vm7795 = vcmp.eq.f32.partialorder %v7794, 8.507059e+37
      %v7796 = vand.u32 %v7739, 2147483648
      %v7797 = vor.u32 1.1754944e-38, %v7796
      %v7798 = vsel %vm7795, %v7797, %v7793
      %v7799 = vmul.f32 1.0, %v7798
      %v7800 = vmul.f32 %v7685, %v7754
      %v7801 = vmul.f32 %v7687, %v7769
      %v7802 = vmul.f32 %v7689, %v7784
      %v7803 = vmul.f32 %v7691, %v7799
      %7804 = vst [vmem:[#allocation1] ss:$2 sm:$0xff] %v462
      %v7805 = vld.sshfl [vmem:[#allocation1] sm:$0xff pattern:$0x75316420]
      %v7806 = vld.sshfl [vmem:[#allocation1 + $0x8] sm:$0xff pattern:$0x75316420]
      %v7808 = vsel %vm4680, %v7800, 0
      %v7811 = vsel %vm4680, %v7801, 0
      %v7814 = vsel %vm4680, %v7802, 0
      %v7817 = vsel %vm4680, %v7803, 0
      %v7819 = vsel %vm4693, %v7805, 0
      %v7821 = vsel %vm4693, %v7806, 0
      %7823 = vmatpush.msra.mxu0 0.0
      %7824 = vmatpush.msra.mxu0 0.0
      %7825 = vmatpush.msra.mxu0 0.0
      %7826 = vmatpush.msra.mxu0 0.0
      %7827 = vmatpush.msra.mxu0 0.0
      %7828 = vmatpush.msra.mxu0 0.0
      %7829 = vmatpush.msra.mxu0 0.0
      %7830 = vmatpush.msra.mxu0 0.0
      %7831 = vmatpush.msra.mxu0 0.0
      %7832 = vmatpush.msra.mxu0 0.0
      %7833 = vmatpush.msra.mxu0 0.0
      %7834 = vmatpush.msra.mxu0 0.0
      %7835 = vmatpush.msra.mxu0 0.0
      %7836 = vmatpush.msra.mxu0 0.0
      %7837 = vmatpush.msra.mxu0 0.0
      %v7838 = vand.u32 %v7819, 4294901760
      %7839 = vmatpush.msra.mxu0 %v7838
      %v7840 = vand.u32 %v7808, 4294901760
      %v7841 = vsub.f32 %v7808, %v7840
      %v7842 = vand.u32 %v7841, 4294901760
      %v7843 = vsub.f32 %v7841, %v7842
      %v7844 = vand.u32 %v7843, 4294901760
      %7845 = vmatmul.f32.gmra.mxu0 %v7844
      %v7846 = vpop.f32.mrf.mxu0
      %v7847 = vadd.f32 0.0, %v7846
      %v7848 = vand.u32 %v7811, 4294901760
      %v7849 = vsub.f32 %v7811, %v7848
      %v7850 = vand.u32 %v7849, 4294901760
      %v7851 = vsub.f32 %v7849, %v7850
      %v7852 = vand.u32 %v7851, 4294901760
      %7853 = vmatmul.f32.gmra.mxu0 %v7852
      %v7854 = vpop.f32.mrf.mxu0
      %v7855 = vadd.f32 0.0, %v7854
      %v7856 = vand.u32 %v7814, 4294901760
      %v7857 = vsub.f32 %v7814, %v7856
      %v7858 = vand.u32 %v7857, 4294901760
      %v7859 = vsub.f32 %v7857, %v7858
      %v7860 = vand.u32 %v7859, 4294901760
      %7861 = vmatmul.f32.gmra.mxu0 %v7860
      %v7862 = vpop.f32.mrf.mxu0
      %v7863 = vadd.f32 0.0, %v7862
      %v7864 = vand.u32 %v7817, 4294901760
      %v7865 = vsub.f32 %v7817, %v7864
      %v7866 = vand.u32 %v7865, 4294901760
      %v7867 = vsub.f32 %v7865, %v7866
      %v7868 = vand.u32 %v7867, 4294901760
      %7869 = vmatmul.f32.gmra.mxu0 %v7868
      %v7870 = vpop.f32.mrf.mxu0
      %v7871 = vadd.f32 0.0, %v7870
      %7872 = vdwg.mxu0
      %7873 = vmatpush.msra.mxu0 0.0
      %7874 = vmatpush.msra.mxu0 0.0
      %7875 = vmatpush.msra.mxu0 0.0
      %7876 = vmatpush.msra.mxu0 0.0
      %7877 = vmatpush.msra.mxu0 0.0
      %7878 = vmatpush.msra.mxu0 0.0
      %7879 = vmatpush.msra.mxu0 0.0
      %7880 = vmatpush.msra.mxu0 0.0
      %7881 = vmatpush.msra.mxu0 0.0
      %7882 = vmatpush.msra.mxu0 0.0
      %7883 = vmatpush.msra.mxu0 0.0
      %7884 = vmatpush.msra.mxu0 0.0
      %7885 = vmatpush.msra.mxu0 0.0
      %7886 = vmatpush.msra.mxu0 0.0
      %7887 = vmatpush.msra.mxu0 0.0
      %v7888 = vand.u32 %v7819, 4294901760
      %v7889 = vsub.f32 %v7819, %v7888
      %v7890 = vand.u32 %v7889, 4294901760
      %v7891 = vsub.f32 %v7889, %v7890
      %v7892 = vand.u32 %v7891, 4294901760
      %7893 = vmatpush.msra.mxu0 %v7892
      %v7894 = vand.u32 %v7808, 4294901760
      %7895 = vmatmul.f32.gmra.mxu0 %v7894
      %v7896 = vpop.f32.mrf.mxu0
      %v7897 = vadd.f32 %v7847, %v7896
      %v7898 = vand.u32 %v7811, 4294901760
      %7899 = vmatmul.f32.gmra.mxu0 %v7898
      %v7900 = vpop.f32.mrf.mxu0
      %v7901 = vadd.f32 %v7855, %v7900
      %v7902 = vand.u32 %v7814, 4294901760
      %7903 = vmatmul.f32.gmra.mxu0 %v7902
      %v7904 = vpop.f32.mrf.mxu0
      %v7905 = vadd.f32 %v7863, %v7904
      %v7906 = vand.u32 %v7817, 4294901760
      %7907 = vmatmul.f32.gmra.mxu0 %v7906
      %v7908 = vpop.f32.mrf.mxu0
      %v7909 = vadd.f32 %v7871, %v7908
      %7910 = vdwg.mxu0
      %7911 = vmatpush.msra.mxu0 0.0
      %7912 = vmatpush.msra.mxu0 0.0
      %7913 = vmatpush.msra.mxu0 0.0
      %7914 = vmatpush.msra.mxu0 0.0
      %7915 = vmatpush.msra.mxu0 0.0
      %7916 = vmatpush.msra.mxu0 0.0
      %7917 = vmatpush.msra.mxu0 0.0
      %7918 = vmatpush.msra.mxu0 0.0
      %7919 = vmatpush.msra.mxu0 0.0
      %7920 = vmatpush.msra.mxu0 0.0
      %7921 = vmatpush.msra.mxu0 0.0
      %7922 = vmatpush.msra.mxu0 0.0
      %7923 = vmatpush.msra.mxu0 0.0
      %7924 = vmatpush.msra.mxu0 0.0
      %7925 = vmatpush.msra.mxu0 0.0
      %v7926 = vand.u32 %v7819, 4294901760
      %v7927 = vsub.f32 %v7819, %v7926
      %7928 = vmatpush.msra.mxu0 %v7927
      %v7929 = vand.u32 %v7808, 4294901760
      %v7930 = vsub.f32 %v7808, %v7929
      %7931 = vmatmul.f32.gmra.mxu0 %v7930
      %v7932 = vpop.f32.mrf.mxu0
      %v7933 = vadd.f32 %v7897, %v7932
      %v7934 = vand.u32 %v7811, 4294901760
      %v7935 = vsub.f32 %v7811, %v7934
      %7936 = vmatmul.f32.gmra.mxu0 %v7935
      %v7937 = vpop.f32.mrf.mxu0
      %v7938 = vadd.f32 %v7901, %v7937
      %v7939 = vand.u32 %v7814, 4294901760
      %v7940 = vsub.f32 %v7814, %v7939
      %7941 = vmatmul.f32.gmra.mxu0 %v7940
      %v7942 = vpop.f32.mrf.mxu0
      %v7943 = vadd.f32 %v7905, %v7942
      %v7944 = vand.u32 %v7817, 4294901760
      %v7945 = vsub.f32 %v7817, %v7944
      %7946 = vmatmul.f32.gmra.mxu0 %v7945
      %v7947 = vpop.f32.mrf.mxu0
      %v7948 = vadd.f32 %v7909, %v7947
      %7949 = vdwg.mxu0
      %7950 = vmatpush.msra.mxu0 0.0
      %7951 = vmatpush.msra.mxu0 0.0
      %7952 = vmatpush.msra.mxu0 0.0
      %7953 = vmatpush.msra.mxu0 0.0
      %7954 = vmatpush.msra.mxu0 0.0
      %7955 = vmatpush.msra.mxu0 0.0
      %7956 = vmatpush.msra.mxu0 0.0
      %7957 = vmatpush.msra.mxu0 0.0
      %7958 = vmatpush.msra.mxu0 0.0
      %7959 = vmatpush.msra.mxu0 0.0
      %7960 = vmatpush.msra.mxu0 0.0
      %7961 = vmatpush.msra.mxu0 0.0
      %7962 = vmatpush.msra.mxu0 0.0
      %7963 = vmatpush.msra.mxu0 0.0
      %7964 = vmatpush.msra.mxu0 0.0
      %v7965 = vand.u32 %v7819, 4294901760
      %7966 = vmatpush.msra.mxu0 %v7965
      %v7967 = vand.u32 %v7808, 4294901760
      %v7968 = vsub.f32 %v7808, %v7967
      %v7969 = vand.u32 %v7968, 4294901760
      %7970 = vmatmul.f32.gmra.mxu0 %v7969
      %v7971 = vpop.f32.mrf.mxu0
      %v7972 = vadd.f32 %v7933, %v7971
      %v7973 = vand.u32 %v7811, 4294901760
      %v7974 = vsub.f32 %v7811, %v7973
      %v7975 = vand.u32 %v7974, 4294901760
      %7976 = vmatmul.f32.gmra.mxu0 %v7975
      %v7977 = vpop.f32.mrf.mxu0
      %v7978 = vadd.f32 %v7938, %v7977
      %v7979 = vand.u32 %v7814, 4294901760
      %v7980 = vsub.f32 %v7814, %v7979
      %v7981 = vand.u32 %v7980, 4294901760
      %7982 = vmatmul.f32.gmra.mxu0 %v7981
      %v7983 = vpop.f32.mrf.mxu0
      %v7984 = vadd.f32 %v7943, %v7983
      %v7985 = vand.u32 %v7817, 4294901760
      %v7986 = vsub.f32 %v7817, %v7985
      %v7987 = vand.u32 %v7986, 4294901760
      %7988 = vmatmul.f32.gmra.mxu0 %v7987
      %v7989 = vpop.f32.mrf.mxu0
      %v7990 = vadd.f32 %v7948, %v7989
      %7991 = vdwg.mxu0
      %7992 = vmatpush.msra.mxu0 0.0
      %7993 = vmatpush.msra.mxu0 0.0
      %7994 = vmatpush.msra.mxu0 0.0
      %7995 = vmatpush.msra.mxu0 0.0
      %7996 = vmatpush.msra.mxu0 0.0
      %7997 = vmatpush.msra.mxu0 0.0
      %7998 = vmatpush.msra.mxu0 0.0
      %7999 = vmatpush.msra.mxu0 0.0
      %8000 = vmatpush.msra.mxu0 0.0
      %8001 = vmatpush.msra.mxu0 0.0
      %8002 = vmatpush.msra.mxu0 0.0
      %8003 = vmatpush.msra.mxu0 0.0
      %8004 = vmatpush.msra.mxu0 0.0
      %8005 = vmatpush.msra.mxu0 0.0
      %8006 = vmatpush.msra.mxu0 0.0
      %v8007 = vand.u32 %v7819, 4294901760
      %v8008 = vsub.f32 %v7819, %v8007
      %v8009 = vand.u32 %v8008, 4294901760
      %8010 = vmatpush.msra.mxu0 %v8009
      %v8011 = vand.u32 %v7808, 4294901760
      %8012 = vmatmul.f32.gmra.mxu0 %v8011
      %v8013 = vpop.f32.mrf.mxu0
      %v8014 = vadd.f32 %v7972, %v8013
      %v8015 = vand.u32 %v7811, 4294901760
      %8016 = vmatmul.f32.gmra.mxu0 %v8015
      %v8017 = vpop.f32.mrf.mxu0
      %v8018 = vadd.f32 %v7978, %v8017
      %v8019 = vand.u32 %v7814, 4294901760
      %8020 = vmatmul.f32.gmra.mxu0 %v8019
      %v8021 = vpop.f32.mrf.mxu0
      %v8022 = vadd.f32 %v7984, %v8021
      %v8023 = vand.u32 %v7817, 4294901760
      %8024 = vmatmul.f32.gmra.mxu0 %v8023
      %v8025 = vpop.f32.mrf.mxu0
      %v8026 = vadd.f32 %v7990, %v8025
      %8027 = vdwg.mxu0
      %8028 = vmatpush.msra.mxu0 0.0
      %8029 = vmatpush.msra.mxu0 0.0
      %8030 = vmatpush.msra.mxu0 0.0
      %8031 = vmatpush.msra.mxu0 0.0
      %8032 = vmatpush.msra.mxu0 0.0
      %8033 = vmatpush.msra.mxu0 0.0
      %8034 = vmatpush.msra.mxu0 0.0
      %8035 = vmatpush.msra.mxu0 0.0
      %8036 = vmatpush.msra.mxu0 0.0
      %8037 = vmatpush.msra.mxu0 0.0
      %8038 = vmatpush.msra.mxu0 0.0
      %8039 = vmatpush.msra.mxu0 0.0
      %8040 = vmatpush.msra.mxu0 0.0
      %8041 = vmatpush.msra.mxu0 0.0
      %8042 = vmatpush.msra.mxu0 0.0
      %v8043 = vand.u32 %v7819, 4294901760
      %8044 = vmatpush.msra.mxu0 %v8043
      %v8045 = vand.u32 %v7808, 4294901760
      %8046 = vmatmul.f32.gmra.mxu0 %v8045
      %v8047 = vpop.f32.mrf.mxu0
      %v8048 = vadd.f32 %v8014, %v8047
      %v8049 = vand.u32 %v7811, 4294901760
      %8050 = vmatmul.f32.gmra.mxu0 %v8049
      %v8051 = vpop.f32.mrf.mxu0
      %v8052 = vadd.f32 %v8018, %v8051
      %v8053 = vand.u32 %v7814, 4294901760
      %8054 = vmatmul.f32.gmra.mxu0 %v8053
      %v8055 = vpop.f32.mrf.mxu0
      %v8056 = vadd.f32 %v8022, %v8055
      %v8057 = vand.u32 %v7817, 4294901760
      %8058 = vmatmul.f32.gmra.mxu0 %v8057
      %v8059 = vpop.f32.mrf.mxu0
      %v8060 = vadd.f32 %v8026, %v8059
      %8061 = vdwg.mxu0
      %8062 = vmatpush.msra.mxu0 0.0
      %8063 = vmatpush.msra.mxu0 0.0
      %8064 = vmatpush.msra.mxu0 0.0
      %8065 = vmatpush.msra.mxu0 0.0
      %8066 = vmatpush.msra.mxu0 0.0
      %8067 = vmatpush.msra.mxu0 0.0
      %8068 = vmatpush.msra.mxu0 0.0
      %8069 = vmatpush.msra.mxu0 0.0
      %8070 = vmatpush.msra.mxu0 0.0
      %8071 = vmatpush.msra.mxu0 0.0
      %8072 = vmatpush.msra.mxu0 0.0
      %8073 = vmatpush.msra.mxu0 0.0
      %8074 = vmatpush.msra.mxu0 0.0
      %8075 = vmatpush.msra.mxu0 0.0
      %8076 = vmatpush.msra.mxu0 0.0
      %v8077 = vand.u32 %v7821, 4294901760
      %8078 = vmatpush.msra.mxu0 %v8077
      %v8079 = vand.u32 %v7808, 4294901760
      %v8080 = vsub.f32 %v7808, %v8079
      %v8081 = vand.u32 %v8080, 4294901760
      %v8082 = vsub.f32 %v8080, %v8081
      %v8083 = vand.u32 %v8082, 4294901760
      %8084 = vmatmul.f32.gmra.mxu0 %v8083
      %v8085 = vpop.f32.mrf.mxu0
      %v8086 = vadd.f32 0.0, %v8085
      %v8087 = vand.u32 %v7811, 4294901760
      %v8088 = vsub.f32 %v7811, %v8087
      %v8089 = vand.u32 %v8088, 4294901760
      %v8090 = vsub.f32 %v8088, %v8089
      %v8091 = vand.u32 %v8090, 4294901760
      %8092 = vmatmul.f32.gmra.mxu0 %v8091
      %v8093 = vpop.f32.mrf.mxu0
      %v8094 = vadd.f32 0.0, %v8093
      %v8095 = vand.u32 %v7814, 4294901760
      %v8096 = vsub.f32 %v7814, %v8095
      %v8097 = vand.u32 %v8096, 4294901760
      %v8098 = vsub.f32 %v8096, %v8097
      %v8099 = vand.u32 %v8098, 4294901760
      %8100 = vmatmul.f32.gmra.mxu0 %v8099
      %v8101 = vpop.f32.mrf.mxu0
      %v8102 = vadd.f32 0.0, %v8101
      %v8103 = vand.u32 %v7817, 4294901760
      %v8104 = vsub.f32 %v7817, %v8103
      %v8105 = vand.u32 %v8104, 4294901760
      %v8106 = vsub.f32 %v8104, %v8105
      %v8107 = vand.u32 %v8106, 4294901760
      %8108 = vmatmul.f32.gmra.mxu0 %v8107
      %v8109 = vpop.f32.mrf.mxu0
      %v8110 = vadd.f32 0.0, %v8109
      %8111 = vdwg.mxu0
      %8112 = vmatpush.msra.mxu0 0.0
      %8113 = vmatpush.msra.mxu0 0.0
      %8114 = vmatpush.msra.mxu0 0.0
      %8115 = vmatpush.msra.mxu0 0.0
      %8116 = vmatpush.msra.mxu0 0.0
      %8117 = vmatpush.msra.mxu0 0.0
      %8118 = vmatpush.msra.mxu0 0.0
      %8119 = vmatpush.msra.mxu0 0.0
      %8120 = vmatpush.msra.mxu0 0.0
      %8121 = vmatpush.msra.mxu0 0.0
      %8122 = vmatpush.msra.mxu0 0.0
      %8123 = vmatpush.msra.mxu0 0.0
      %8124 = vmatpush.msra.mxu0 0.0
      %8125 = vmatpush.msra.mxu0 0.0
      %8126 = vmatpush.msra.mxu0 0.0
      %v8127 = vand.u32 %v7821, 4294901760
      %v8128 = vsub.f32 %v7821, %v8127
      %v8129 = vand.u32 %v8128, 4294901760
      %v8130 = vsub.f32 %v8128, %v8129
      %v8131 = vand.u32 %v8130, 4294901760
      %8132 = vmatpush.msra.mxu0 %v8131
      %v8133 = vand.u32 %v7808, 4294901760
      %8134 = vmatmul.f32.gmra.mxu0 %v8133
      %v8135 = vpop.f32.mrf.mxu0
      %v8136 = vadd.f32 %v8086, %v8135
      %v8137 = vand.u32 %v7811, 4294901760
      %8138 = vmatmul.f32.gmra.mxu0 %v8137
      %v8139 = vpop.f32.mrf.mxu0
      %v8140 = vadd.f32 %v8094, %v8139
      %v8141 = vand.u32 %v7814, 4294901760
      %8142 = vmatmul.f32.gmra.mxu0 %v8141
      %v8143 = vpop.f32.mrf.mxu0
      %v8144 = vadd.f32 %v8102, %v8143
      %v8145 = vand.u32 %v7817, 4294901760
      %8146 = vmatmul.f32.gmra.mxu0 %v8145
      %v8147 = vpop.f32.mrf.mxu0
      %v8148 = vadd.f32 %v8110, %v8147
      %8149 = vdwg.mxu0
      %8150 = vmatpush.msra.mxu0 0.0
      %8151 = vmatpush.msra.mxu0 0.0
      %8152 = vmatpush.msra.mxu0 0.0
      %8153 = vmatpush.msra.mxu0 0.0
      %8154 = vmatpush.msra.mxu0 0.0
      %8155 = vmatpush.msra.mxu0 0.0
      %8156 = vmatpush.msra.mxu0 0.0
      %8157 = vmatpush.msra.mxu0 0.0
      %8158 = vmatpush.msra.mxu0 0.0
      %8159 = vmatpush.msra.mxu0 0.0
      %8160 = vmatpush.msra.mxu0 0.0
      %8161 = vmatpush.msra.mxu0 0.0
      %8162 = vmatpush.msra.mxu0 0.0
      %8163 = vmatpush.msra.mxu0 0.0
      %8164 = vmatpush.msra.mxu0 0.0
      %v8165 = vand.u32 %v7821, 4294901760
      %v8166 = vsub.f32 %v7821, %v8165
      %8167 = vmatpush.msra.mxu0 %v8166
      %v8168 = vand.u32 %v7808, 4294901760
      %v8169 = vsub.f32 %v7808, %v8168
      %8170 = vmatmul.f32.gmra.mxu0 %v8169
      %v8171 = vpop.f32.mrf.mxu0
      %v8172 = vadd.f32 %v8136, %v8171
      %v8173 = vand.u32 %v7811, 4294901760
      %v8174 = vsub.f32 %v7811, %v8173
      %8175 = vmatmul.f32.gmra.mxu0 %v8174
      %v8176 = vpop.f32.mrf.mxu0
      %v8177 = vadd.f32 %v8140, %v8176
      %v8178 = vand.u32 %v7814, 4294901760
      %v8179 = vsub.f32 %v7814, %v8178
      %8180 = vmatmul.f32.gmra.mxu0 %v8179
      %v8181 = vpop.f32.mrf.mxu0
      %v8182 = vadd.f32 %v8144, %v8181
      %v8183 = vand.u32 %v7817, 4294901760
      %v8184 = vsub.f32 %v7817, %v8183
      %8185 = vmatmul.f32.gmra.mxu0 %v8184
      %v8186 = vpop.f32.mrf.mxu0
      %v8187 = vadd.f32 %v8148, %v8186
      %8188 = vdwg.mxu0
      %8189 = vmatpush.msra.mxu0 0.0
      %8190 = vmatpush.msra.mxu0 0.0
      %8191 = vmatpush.msra.mxu0 0.0
      %8192 = vmatpush.msra.mxu0 0.0
      %8193 = vmatpush.msra.mxu0 0.0
      %8194 = vmatpush.msra.mxu0 0.0
      %8195 = vmatpush.msra.mxu0 0.0
      %8196 = vmatpush.msra.mxu0 0.0
      %8197 = vmatpush.msra.mxu0 0.0
      %8198 = vmatpush.msra.mxu0 0.0
      %8199 = vmatpush.msra.mxu0 0.0
      %8200 = vmatpush.msra.mxu0 0.0
      %8201 = vmatpush.msra.mxu0 0.0
      %8202 = vmatpush.msra.mxu0 0.0
      %8203 = vmatpush.msra.mxu0 0.0
      %v8204 = vand.u32 %v7821, 4294901760
      %8205 = vmatpush.msra.mxu0 %v8204
      %v8206 = vand.u32 %v7808, 4294901760
      %v8207 = vsub.f32 %v7808, %v8206
      %v8208 = vand.u32 %v8207, 4294901760
      %8209 = vmatmul.f32.gmra.mxu0 %v8208
      %v8210 = vpop.f32.mrf.mxu0
      %v8211 = vadd.f32 %v8172, %v8210
      %v8212 = vand.u32 %v7811, 4294901760
      %v8213 = vsub.f32 %v7811, %v8212
      %v8214 = vand.u32 %v8213, 4294901760
      %8215 = vmatmul.f32.gmra.mxu0 %v8214
      %v8216 = vpop.f32.mrf.mxu0
      %v8217 = vadd.f32 %v8177, %v8216
      %v8218 = vand.u32 %v7814, 4294901760
      %v8219 = vsub.f32 %v7814, %v8218
      %v8220 = vand.u32 %v8219, 4294901760
      %8221 = vmatmul.f32.gmra.mxu0 %v8220
      %v8222 = vpop.f32.mrf.mxu0
      %v8223 = vadd.f32 %v8182, %v8222
      %v8224 = vand.u32 %v7817, 4294901760
      %v8225 = vsub.f32 %v7817, %v8224
      %v8226 = vand.u32 %v8225, 4294901760
      %8227 = vmatmul.f32.gmra.mxu0 %v8226
      %v8228 = vpop.f32.mrf.mxu0
      %v8229 = vadd.f32 %v8187, %v8228
      %8230 = vdwg.mxu0
      %8231 = vmatpush.msra.mxu0 0.0
      %8232 = vmatpush.msra.mxu0 0.0
      %8233 = vmatpush.msra.mxu0 0.0
      %8234 = vmatpush.msra.mxu0 0.0
      %8235 = vmatpush.msra.mxu0 0.0
      %8236 = vmatpush.msra.mxu0 0.0
      %8237 = vmatpush.msra.mxu0 0.0
      %8238 = vmatpush.msra.mxu0 0.0
      %8239 = vmatpush.msra.mxu0 0.0
      %8240 = vmatpush.msra.mxu0 0.0
      %8241 = vmatpush.msra.mxu0 0.0
      %8242 = vmatpush.msra.mxu0 0.0
      %8243 = vmatpush.msra.mxu0 0.0
      %8244 = vmatpush.msra.mxu0 0.0
      %8245 = vmatpush.msra.mxu0 0.0
      %v8246 = vand.u32 %v7821, 4294901760
      %v8247 = vsub.f32 %v7821, %v8246
      %v8248 = vand.u32 %v8247, 4294901760
      %8249 = vmatpush.msra.mxu0 %v8248
      %v8250 = vand.u32 %v7808, 4294901760
      %8251 = vmatmul.f32.gmra.mxu0 %v8250
      %v8252 = vpop.f32.mrf.mxu0
      %v8253 = vadd.f32 %v8211, %v8252
      %v8254 = vand.u32 %v7811, 4294901760
      %8255 = vmatmul.f32.gmra.mxu0 %v8254
      %v8256 = vpop.f32.mrf.mxu0
      %v8257 = vadd.f32 %v8217, %v8256
      %v8258 = vand.u32 %v7814, 4294901760
      %8259 = vmatmul.f32.gmra.mxu0 %v8258
      %v8260 = vpop.f32.mrf.mxu0
      %v8261 = vadd.f32 %v8223, %v8260
      %v8262 = vand.u32 %v7817, 4294901760
      %8263 = vmatmul.f32.gmra.mxu0 %v8262
      %v8264 = vpop.f32.mrf.mxu0
      %v8265 = vadd.f32 %v8229, %v8264
      %8266 = vdwg.mxu0
      %8267 = vmatpush.msra.mxu0 0.0
      %8268 = vmatpush.msra.mxu0 0.0
      %8269 = vmatpush.msra.mxu0 0.0
      %8270 = vmatpush.msra.mxu0 0.0
      %8271 = vmatpush.msra.mxu0 0.0
      %8272 = vmatpush.msra.mxu0 0.0
      %8273 = vmatpush.msra.mxu0 0.0
      %8274 = vmatpush.msra.mxu0 0.0
      %8275 = vmatpush.msra.mxu0 0.0
      %8276 = vmatpush.msra.mxu0 0.0
      %8277 = vmatpush.msra.mxu0 0.0
      %8278 = vmatpush.msra.mxu0 0.0
      %8279 = vmatpush.msra.mxu0 0.0
      %8280 = vmatpush.msra.mxu0 0.0
      %8281 = vmatpush.msra.mxu0 0.0
      %v8282 = vand.u32 %v7821, 4294901760
      %8283 = vmatpush.msra.mxu0 %v8282
      %v8284 = vand.u32 %v7808, 4294901760
      %8285 = vmatmul.f32.gmra.mxu0 %v8284
      %v8286 = vpop.f32.mrf.mxu0
      %v8287 = vadd.f32 %v8253, %v8286
      %v8288 = vand.u32 %v7811, 4294901760
      %8289 = vmatmul.f32.gmra.mxu0 %v8288
      %v8290 = vpop.f32.mrf.mxu0
      %v8291 = vadd.f32 %v8257, %v8290
      %v8292 = vand.u32 %v7814, 4294901760
      %8293 = vmatmul.f32.gmra.mxu0 %v8292
      %v8294 = vpop.f32.mrf.mxu0
      %v8295 = vadd.f32 %v8261, %v8294
      %v8296 = vand.u32 %v7817, 4294901760
      %8297 = vmatmul.f32.gmra.mxu0 %v8296
      %v8298 = vpop.f32.mrf.mxu0
      %v8299 = vadd.f32 %v8265, %v8298
      %8300 = vdwg.mxu0
      %v8301 = vmul.f32 %v8048, %v2608
      %v8302 = vmul.f32 %v8287, %v3506
      %v8303 = vmul.f32 %v8052, %v2612
      %v8304 = vmul.f32 %v8291, %v3510
      %v8305 = vmul.f32 %v8056, %v2616
      %v8306 = vmul.f32 %v8295, %v3514
      %v8307 = vmul.f32 %v8060, %v2620
      %v8308 = vmul.f32 %v8299, %v3518
      %v8309 = vmul.f32 %v7697, %v7754
      %v8310 = vmul.f32 %v7699, %v7769
      %v8311 = vmul.f32 %v7701, %v7784
      %v8312 = vmul.f32 %v7703, %v7799
      %8313 = vrot.lane.b32.xlu0 %v2608, 64
      %v8314 = vpop.permute.xlu0 %8313
      %8315 = vrot.lane.b32.xlu0 %v2612, 64
      %v8316 = vpop.permute.xlu0 %8315
      %8317 = vrot.lane.b32.xlu0 %v2616, 64
      %v8318 = vpop.permute.xlu0 %8317
      %8319 = vrot.lane.b32.xlu0 %v2620, 64
      %v8320 = vpop.permute.xlu0 %8319
      %8321 = vrot.lane.b32.xlu0 %v3506, 64
      %v8322 = vpop.permute.xlu0 %8321
      %8323 = vrot.lane.b32.xlu0 %v3510, 64
      %v8324 = vpop.permute.xlu0 %8323
      %8325 = vrot.lane.b32.xlu0 %v3514, 64
      %v8326 = vpop.permute.xlu0 %8325
      %8327 = vrot.lane.b32.xlu0 %v3518, 64
      %v8328 = vpop.permute.xlu0 %8327
      %v8329 = vsel %vm6174, %v8314, %v8322
      %v8330 = vsel %vm6174, %v8316, %v8324
      %v8331 = vsel %vm6174, %v8318, %v8326
      %v8332 = vsel %vm6174, %v8320, %v8328
      %v8333 = vsel %vm6174, %v8322, %v8314
      %v8334 = vsel %vm6174, %v8324, %v8316
      %v8335 = vsel %vm6174, %v8326, %v8318
      %v8336 = vsel %vm6174, %v8328, %v8320
      %8337 = vst [vmem:[#allocation1] ss:$2 sm:$0xff] %v462
      %v8338 = vld.sshfl [vmem:[#allocation1] sm:$0xff pattern:$0x75316420]
      %v8339 = vld.sshfl [vmem:[#allocation1 + $0x8] sm:$0xff pattern:$0x75316420]
      %v8341 = vsel %vm4680, %v8309, 0
      %v8344 = vsel %vm4680, %v8310, 0
      %v8347 = vsel %vm4680, %v8311, 0
      %v8350 = vsel %vm4680, %v8312, 0
      %v8352 = vsel %vm4693, %v8338, 0
      %v8354 = vsel %vm4693, %v8339, 0
      %8356 = vmatpush.msra.mxu0 0.0
      %8357 = vmatpush.msra.mxu0 0.0
      %8358 = vmatpush.msra.mxu0 0.0
      %8359 = vmatpush.msra.mxu0 0.0
      %8360 = vmatpush.msra.mxu0 0.0
      %8361 = vmatpush.msra.mxu0 0.0
      %8362 = vmatpush.msra.mxu0 0.0
      %8363 = vmatpush.msra.mxu0 0.0
      %8364 = vmatpush.msra.mxu0 0.0
      %8365 = vmatpush.msra.mxu0 0.0
      %8366 = vmatpush.msra.mxu0 0.0
      %8367 = vmatpush.msra.mxu0 0.0
      %8368 = vmatpush.msra.mxu0 0.0
      %8369 = vmatpush.msra.mxu0 0.0
      %8370 = vmatpush.msra.mxu0 0.0
      %v8371 = vand.u32 %v8352, 4294901760
      %8372 = vmatpush.msra.mxu0 %v8371
      %v8373 = vand.u32 %v8341, 4294901760
      %v8374 = vsub.f32 %v8341, %v8373
      %v8375 = vand.u32 %v8374, 4294901760
      %v8376 = vsub.f32 %v8374, %v8375
      %v8377 = vand.u32 %v8376, 4294901760
      %8378 = vmatmul.f32.gmra.mxu0 %v8377
      %v8379 = vpop.f32.mrf.mxu0
      %v8380 = vadd.f32 0.0, %v8379
      %v8381 = vand.u32 %v8344, 4294901760
      %v8382 = vsub.f32 %v8344, %v8381
      %v8383 = vand.u32 %v8382, 4294901760
      %v8384 = vsub.f32 %v8382, %v8383
      %v8385 = vand.u32 %v8384, 4294901760
      %8386 = vmatmul.f32.gmra.mxu0 %v8385
      %v8387 = vpop.f32.mrf.mxu0
      %v8388 = vadd.f32 0.0, %v8387
      %v8389 = vand.u32 %v8347, 4294901760
      %v8390 = vsub.f32 %v8347, %v8389
      %v8391 = vand.u32 %v8390, 4294901760
      %v8392 = vsub.f32 %v8390, %v8391
      %v8393 = vand.u32 %v8392, 4294901760
      %8394 = vmatmul.f32.gmra.mxu0 %v8393
      %v8395 = vpop.f32.mrf.mxu0
      %v8396 = vadd.f32 0.0, %v8395
      %v8397 = vand.u32 %v8350, 4294901760
      %v8398 = vsub.f32 %v8350, %v8397
      %v8399 = vand.u32 %v8398, 4294901760
      %v8400 = vsub.f32 %v8398, %v8399
      %v8401 = vand.u32 %v8400, 4294901760
      %8402 = vmatmul.f32.gmra.mxu0 %v8401
      %v8403 = vpop.f32.mrf.mxu0
      %v8404 = vadd.f32 0.0, %v8403
      %8405 = vdwg.mxu0
      %8406 = vmatpush.msra.mxu0 0.0
      %8407 = vmatpush.msra.mxu0 0.0
      %8408 = vmatpush.msra.mxu0 0.0
      %8409 = vmatpush.msra.mxu0 0.0
      %8410 = vmatpush.msra.mxu0 0.0
      %8411 = vmatpush.msra.mxu0 0.0
      %8412 = vmatpush.msra.mxu0 0.0
      %8413 = vmatpush.msra.mxu0 0.0
      %8414 = vmatpush.msra.mxu0 0.0
      %8415 = vmatpush.msra.mxu0 0.0
      %8416 = vmatpush.msra.mxu0 0.0
      %8417 = vmatpush.msra.mxu0 0.0
      %8418 = vmatpush.msra.mxu0 0.0
      %8419 = vmatpush.msra.mxu0 0.0
      %8420 = vmatpush.msra.mxu0 0.0
      %v8421 = vand.u32 %v8352, 4294901760
      %v8422 = vsub.f32 %v8352, %v8421
      %v8423 = vand.u32 %v8422, 4294901760
      %v8424 = vsub.f32 %v8422, %v8423
      %v8425 = vand.u32 %v8424, 4294901760
      %8426 = vmatpush.msra.mxu0 %v8425
      %v8427 = vand.u32 %v8341, 4294901760
      %8428 = vmatmul.f32.gmra.mxu0 %v8427
      %v8429 = vpop.f32.mrf.mxu0
      %v8430 = vadd.f32 %v8380, %v8429
      %v8431 = vand.u32 %v8344, 4294901760
      %8432 = vmatmul.f32.gmra.mxu0 %v8431
      %v8433 = vpop.f32.mrf.mxu0
      %v8434 = vadd.f32 %v8388, %v8433
      %v8435 = vand.u32 %v8347, 4294901760
      %8436 = vmatmul.f32.gmra.mxu0 %v8435
      %v8437 = vpop.f32.mrf.mxu0
      %v8438 = vadd.f32 %v8396, %v8437
      %v8439 = vand.u32 %v8350, 4294901760
      %8440 = vmatmul.f32.gmra.mxu0 %v8439
      %v8441 = vpop.f32.mrf.mxu0
      %v8442 = vadd.f32 %v8404, %v8441
      %8443 = vdwg.mxu0
      %8444 = vmatpush.msra.mxu0 0.0
      %8445 = vmatpush.msra.mxu0 0.0
      %8446 = vmatpush.msra.mxu0 0.0
      %8447 = vmatpush.msra.mxu0 0.0
      %8448 = vmatpush.msra.mxu0 0.0
      %8449 = vmatpush.msra.mxu0 0.0
      %8450 = vmatpush.msra.mxu0 0.0
      %8451 = vmatpush.msra.mxu0 0.0
      %8452 = vmatpush.msra.mxu0 0.0
      %8453 = vmatpush.msra.mxu0 0.0
      %8454 = vmatpush.msra.mxu0 0.0
      %8455 = vmatpush.msra.mxu0 0.0
      %8456 = vmatpush.msra.mxu0 0.0
      %8457 = vmatpush.msra.mxu0 0.0
      %8458 = vmatpush.msra.mxu0 0.0
      %v8459 = vand.u32 %v8352, 4294901760
      %v8460 = vsub.f32 %v8352, %v8459
      %8461 = vmatpush.msra.mxu0 %v8460
      %v8462 = vand.u32 %v8341, 4294901760
      %v8463 = vsub.f32 %v8341, %v8462
      %8464 = vmatmul.f32.gmra.mxu0 %v8463
      %v8465 = vpop.f32.mrf.mxu0
      %v8466 = vadd.f32 %v8430, %v8465
      %v8467 = vand.u32 %v8344, 4294901760
      %v8468 = vsub.f32 %v8344, %v8467
      %8469 = vmatmul.f32.gmra.mxu0 %v8468
      %v8470 = vpop.f32.mrf.mxu0
      %v8471 = vadd.f32 %v8434, %v8470
      %v8472 = vand.u32 %v8347, 4294901760
      %v8473 = vsub.f32 %v8347, %v8472
      %8474 = vmatmul.f32.gmra.mxu0 %v8473
      %v8475 = vpop.f32.mrf.mxu0
      %v8476 = vadd.f32 %v8438, %v8475
      %v8477 = vand.u32 %v8350, 4294901760
      %v8478 = vsub.f32 %v8350, %v8477
      %8479 = vmatmul.f32.gmra.mxu0 %v8478
      %v8480 = vpop.f32.mrf.mxu0
      %v8481 = vadd.f32 %v8442, %v8480
      %8482 = vdwg.mxu0
      %8483 = vmatpush.msra.mxu0 0.0
      %8484 = vmatpush.msra.mxu0 0.0
      %8485 = vmatpush.msra.mxu0 0.0
      %8486 = vmatpush.msra.mxu0 0.0
      %8487 = vmatpush.msra.mxu0 0.0
      %8488 = vmatpush.msra.mxu0 0.0
      %8489 = vmatpush.msra.mxu0 0.0
      %8490 = vmatpush.msra.mxu0 0.0
      %8491 = vmatpush.msra.mxu0 0.0
      %8492 = vmatpush.msra.mxu0 0.0
      %8493 = vmatpush.msra.mxu0 0.0
      %8494 = vmatpush.msra.mxu0 0.0
      %8495 = vmatpush.msra.mxu0 0.0
      %8496 = vmatpush.msra.mxu0 0.0
      %8497 = vmatpush.msra.mxu0 0.0
      %v8498 = vand.u32 %v8352, 4294901760
      %8499 = vmatpush.msra.mxu0 %v8498
      %v8500 = vand.u32 %v8341, 4294901760
      %v8501 = vsub.f32 %v8341, %v8500
      %v8502 = vand.u32 %v8501, 4294901760
      %8503 = vmatmul.f32.gmra.mxu0 %v8502
      %v8504 = vpop.f32.mrf.mxu0
      %v8505 = vadd.f32 %v8466, %v8504
      %v8506 = vand.u32 %v8344, 4294901760
      %v8507 = vsub.f32 %v8344, %v8506
      %v8508 = vand.u32 %v8507, 4294901760
      %8509 = vmatmul.f32.gmra.mxu0 %v8508
      %v8510 = vpop.f32.mrf.mxu0
      %v8511 = vadd.f32 %v8471, %v8510
      %v8512 = vand.u32 %v8347, 4294901760
      %v8513 = vsub.f32 %v8347, %v8512
      %v8514 = vand.u32 %v8513, 4294901760
      %8515 = vmatmul.f32.gmra.mxu0 %v8514
      %v8516 = vpop.f32.mrf.mxu0
      %v8517 = vadd.f32 %v8476, %v8516
      %v8518 = vand.u32 %v8350, 4294901760
      %v8519 = vsub.f32 %v8350, %v8518
      %v8520 = vand.u32 %v8519, 4294901760
      %8521 = vmatmul.f32.gmra.mxu0 %v8520
      %v8522 = vpop.f32.mrf.mxu0
      %v8523 = vadd.f32 %v8481, %v8522
      %8524 = vdwg.mxu0
      %8525 = vmatpush.msra.mxu0 0.0
      %8526 = vmatpush.msra.mxu0 0.0
      %8527 = vmatpush.msra.mxu0 0.0
      %8528 = vmatpush.msra.mxu0 0.0
      %8529 = vmatpush.msra.mxu0 0.0
      %8530 = vmatpush.msra.mxu0 0.0
      %8531 = vmatpush.msra.mxu0 0.0
      %8532 = vmatpush.msra.mxu0 0.0
      %8533 = vmatpush.msra.mxu0 0.0
      %8534 = vmatpush.msra.mxu0 0.0
      %8535 = vmatpush.msra.mxu0 0.0
      %8536 = vmatpush.msra.mxu0 0.0
      %8537 = vmatpush.msra.mxu0 0.0
      %8538 = vmatpush.msra.mxu0 0.0
      %8539 = vmatpush.msra.mxu0 0.0
      %v8540 = vand.u32 %v8352, 4294901760
      %v8541 = vsub.f32 %v8352, %v8540
      %v8542 = vand.u32 %v8541, 4294901760
      %8543 = vmatpush.msra.mxu0 %v8542
      %v8544 = vand.u32 %v8341, 4294901760
      %8545 = vmatmul.f32.gmra.mxu0 %v8544
      %v8546 = vpop.f32.mrf.mxu0
      %v8547 = vadd.f32 %v8505, %v8546
      %v8548 = vand.u32 %v8344, 4294901760
      %8549 = vmatmul.f32.gmra.mxu0 %v8548
      %v8550 = vpop.f32.mrf.mxu0
      %v8551 = vadd.f32 %v8511, %v8550
      %v8552 = vand.u32 %v8347, 4294901760
      %8553 = vmatmul.f32.gmra.mxu0 %v8552
      %v8554 = vpop.f32.mrf.mxu0
      %v8555 = vadd.f32 %v8517, %v8554
      %v8556 = vand.u32 %v8350, 4294901760
      %8557 = vmatmul.f32.gmra.mxu0 %v8556
      %v8558 = vpop.f32.mrf.mxu0
      %v8559 = vadd.f32 %v8523, %v8558
      %8560 = vdwg.mxu0
      %8561 = vmatpush.msra.mxu0 0.0
      %8562 = vmatpush.msra.mxu0 0.0
      %8563 = vmatpush.msra.mxu0 0.0
      %8564 = vmatpush.msra.mxu0 0.0
      %8565 = vmatpush.msra.mxu0 0.0
      %8566 = vmatpush.msra.mxu0 0.0
      %8567 = vmatpush.msra.mxu0 0.0
      %8568 = vmatpush.msra.mxu0 0.0
      %8569 = vmatpush.msra.mxu0 0.0
      %8570 = vmatpush.msra.mxu0 0.0
      %8571 = vmatpush.msra.mxu0 0.0
      %8572 = vmatpush.msra.mxu0 0.0
      %8573 = vmatpush.msra.mxu0 0.0
      %8574 = vmatpush.msra.mxu0 0.0
      %8575 = vmatpush.msra.mxu0 0.0
      %v8576 = vand.u32 %v8352, 4294901760
      %8577 = vmatpush.msra.mxu0 %v8576
      %v8578 = vand.u32 %v8341, 4294901760
      %8579 = vmatmul.f32.gmra.mxu0 %v8578
      %v8580 = vpop.f32.mrf.mxu0
      %v8581 = vadd.f32 %v8547, %v8580
      %v8582 = vand.u32 %v8344, 4294901760
      %8583 = vmatmul.f32.gmra.mxu0 %v8582
      %v8584 = vpop.f32.mrf.mxu0
      %v8585 = vadd.f32 %v8551, %v8584
      %v8586 = vand.u32 %v8347, 4294901760
      %8587 = vmatmul.f32.gmra.mxu0 %v8586
      %v8588 = vpop.f32.mrf.mxu0
      %v8589 = vadd.f32 %v8555, %v8588
      %v8590 = vand.u32 %v8350, 4294901760
      %8591 = vmatmul.f32.gmra.mxu0 %v8590
      %v8592 = vpop.f32.mrf.mxu0
      %v8593 = vadd.f32 %v8559, %v8592
      %8594 = vdwg.mxu0
      %8595 = vmatpush.msra.mxu0 0.0
      %8596 = vmatpush.msra.mxu0 0.0
      %8597 = vmatpush.msra.mxu0 0.0
      %8598 = vmatpush.msra.mxu0 0.0
      %8599 = vmatpush.msra.mxu0 0.0
      %8600 = vmatpush.msra.mxu0 0.0
      %8601 = vmatpush.msra.mxu0 0.0
      %8602 = vmatpush.msra.mxu0 0.0
      %8603 = vmatpush.msra.mxu0 0.0
      %8604 = vmatpush.msra.mxu0 0.0
      %8605 = vmatpush.msra.mxu0 0.0
      %8606 = vmatpush.msra.mxu0 0.0
      %8607 = vmatpush.msra.mxu0 0.0
      %8608 = vmatpush.msra.mxu0 0.0
      %8609 = vmatpush.msra.mxu0 0.0
      %v8610 = vand.u32 %v8354, 4294901760
      %8611 = vmatpush.msra.mxu0 %v8610
      %v8612 = vand.u32 %v8341, 4294901760
      %v8613 = vsub.f32 %v8341, %v8612
      %v8614 = vand.u32 %v8613, 4294901760
      %v8615 = vsub.f32 %v8613, %v8614
      %v8616 = vand.u32 %v8615, 4294901760
      %8617 = vmatmul.f32.gmra.mxu0 %v8616
      %v8618 = vpop.f32.mrf.mxu0
      %v8619 = vadd.f32 0.0, %v8618
      %v8620 = vand.u32 %v8344, 4294901760
      %v8621 = vsub.f32 %v8344, %v8620
      %v8622 = vand.u32 %v8621, 4294901760
      %v8623 = vsub.f32 %v8621, %v8622
      %v8624 = vand.u32 %v8623, 4294901760
      %8625 = vmatmul.f32.gmra.mxu0 %v8624
      %v8626 = vpop.f32.mrf.mxu0
      %v8627 = vadd.f32 0.0, %v8626
      %v8628 = vand.u32 %v8347, 4294901760
      %v8629 = vsub.f32 %v8347, %v8628
      %v8630 = vand.u32 %v8629, 4294901760
      %v8631 = vsub.f32 %v8629, %v8630
      %v8632 = vand.u32 %v8631, 4294901760
      %8633 = vmatmul.f32.gmra.mxu0 %v8632
      %v8634 = vpop.f32.mrf.mxu0
      %v8635 = vadd.f32 0.0, %v8634
      %v8636 = vand.u32 %v8350, 4294901760
      %v8637 = vsub.f32 %v8350, %v8636
      %v8638 = vand.u32 %v8637, 4294901760
      %v8639 = vsub.f32 %v8637, %v8638
      %v8640 = vand.u32 %v8639, 4294901760
      %8641 = vmatmul.f32.gmra.mxu0 %v8640
      %v8642 = vpop.f32.mrf.mxu0
      %v8643 = vadd.f32 0.0, %v8642
      %8644 = vdwg.mxu0
      %8645 = vmatpush.msra.mxu0 0.0
      %8646 = vmatpush.msra.mxu0 0.0
      %8647 = vmatpush.msra.mxu0 0.0
      %8648 = vmatpush.msra.mxu0 0.0
      %8649 = vmatpush.msra.mxu0 0.0
      %8650 = vmatpush.msra.mxu0 0.0
      %8651 = vmatpush.msra.mxu0 0.0
      %8652 = vmatpush.msra.mxu0 0.0
      %8653 = vmatpush.msra.mxu0 0.0
      %8654 = vmatpush.msra.mxu0 0.0
      %8655 = vmatpush.msra.mxu0 0.0
      %8656 = vmatpush.msra.mxu0 0.0
      %8657 = vmatpush.msra.mxu0 0.0
      %8658 = vmatpush.msra.mxu0 0.0
      %8659 = vmatpush.msra.mxu0 0.0
      %v8660 = vand.u32 %v8354, 4294901760
      %v8661 = vsub.f32 %v8354, %v8660
      %v8662 = vand.u32 %v8661, 4294901760
      %v8663 = vsub.f32 %v8661, %v8662
      %v8664 = vand.u32 %v8663, 4294901760
      %8665 = vmatpush.msra.mxu0 %v8664
      %v8666 = vand.u32 %v8341, 4294901760
      %8667 = vmatmul.f32.gmra.mxu0 %v8666
      %v8668 = vpop.f32.mrf.mxu0
      %v8669 = vadd.f32 %v8619, %v8668
      %v8670 = vand.u32 %v8344, 4294901760
      %8671 = vmatmul.f32.gmra.mxu0 %v8670
      %v8672 = vpop.f32.mrf.mxu0
      %v8673 = vadd.f32 %v8627, %v8672
      %v8674 = vand.u32 %v8347, 4294901760
      %8675 = vmatmul.f32.gmra.mxu0 %v8674
      %v8676 = vpop.f32.mrf.mxu0
      %v8677 = vadd.f32 %v8635, %v8676
      %v8678 = vand.u32 %v8350, 4294901760
      %8679 = vmatmul.f32.gmra.mxu0 %v8678
      %v8680 = vpop.f32.mrf.mxu0
      %v8681 = vadd.f32 %v8643, %v8680
      %8682 = vdwg.mxu0
      %8683 = vmatpush.msra.mxu0 0.0
      %8684 = vmatpush.msra.mxu0 0.0
      %8685 = vmatpush.msra.mxu0 0.0
      %8686 = vmatpush.msra.mxu0 0.0
      %8687 = vmatpush.msra.mxu0 0.0
      %8688 = vmatpush.msra.mxu0 0.0
      %8689 = vmatpush.msra.mxu0 0.0
      %8690 = vmatpush.msra.mxu0 0.0
      %8691 = vmatpush.msra.mxu0 0.0
      %8692 = vmatpush.msra.mxu0 0.0
      %8693 = vmatpush.msra.mxu0 0.0
      %8694 = vmatpush.msra.mxu0 0.0
      %8695 = vmatpush.msra.mxu0 0.0
      %8696 = vmatpush.msra.mxu0 0.0
      %8697 = vmatpush.msra.mxu0 0.0
      %v8698 = vand.u32 %v8354, 4294901760
      %v8699 = vsub.f32 %v8354, %v8698
      %8700 = vmatpush.msra.mxu0 %v8699
      %v8701 = vand.u32 %v8341, 4294901760
      %v8702 = vsub.f32 %v8341, %v8701
      %8703 = vmatmul.f32.gmra.mxu0 %v8702
      %v8704 = vpop.f32.mrf.mxu0
      %v8705 = vadd.f32 %v8669, %v8704
      %v8706 = vand.u32 %v8344, 4294901760
      %v8707 = vsub.f32 %v8344, %v8706
      %8708 = vmatmul.f32.gmra.mxu0 %v8707
      %v8709 = vpop.f32.mrf.mxu0
      %v8710 = vadd.f32 %v8673, %v8709
      %v8711 = vand.u32 %v8347, 4294901760
      %v8712 = vsub.f32 %v8347, %v8711
      %8713 = vmatmul.f32.gmra.mxu0 %v8712
      %v8714 = vpop.f32.mrf.mxu0
      %v8715 = vadd.f32 %v8677, %v8714
      %v8716 = vand.u32 %v8350, 4294901760
      %v8717 = vsub.f32 %v8350, %v8716
      %8718 = vmatmul.f32.gmra.mxu0 %v8717
      %v8719 = vpop.f32.mrf.mxu0
      %v8720 = vadd.f32 %v8681, %v8719
      %8721 = vdwg.mxu0
      %8722 = vmatpush.msra.mxu0 0.0
      %8723 = vmatpush.msra.mxu0 0.0
      %8724 = vmatpush.msra.mxu0 0.0
      %8725 = vmatpush.msra.mxu0 0.0
      %8726 = vmatpush.msra.mxu0 0.0
      %8727 = vmatpush.msra.mxu0 0.0
      %8728 = vmatpush.msra.mxu0 0.0
      %8729 = vmatpush.msra.mxu0 0.0
      %8730 = vmatpush.msra.mxu0 0.0
      %8731 = vmatpush.msra.mxu0 0.0
      %8732 = vmatpush.msra.mxu0 0.0
      %8733 = vmatpush.msra.mxu0 0.0
      %8734 = vmatpush.msra.mxu0 0.0
      %8735 = vmatpush.msra.mxu0 0.0
      %8736 = vmatpush.msra.mxu0 0.0
      %v8737 = vand.u32 %v8354, 4294901760
      %8738 = vmatpush.msra.mxu0 %v8737
      %v8739 = vand.u32 %v8341, 4294901760
      %v8740 = vsub.f32 %v8341, %v8739
      %v8741 = vand.u32 %v8740, 4294901760
      %8742 = vmatmul.f32.gmra.mxu0 %v8741
      %v8743 = vpop.f32.mrf.mxu0
      %v8744 = vadd.f32 %v8705, %v8743
      %v8745 = vand.u32 %v8344, 4294901760
      %v8746 = vsub.f32 %v8344, %v8745
      %v8747 = vand.u32 %v8746, 4294901760
      %8748 = vmatmul.f32.gmra.mxu0 %v8747
      %v8749 = vpop.f32.mrf.mxu0
      %v8750 = vadd.f32 %v8710, %v8749
      %v8751 = vand.u32 %v8347, 4294901760
      %v8752 = vsub.f32 %v8347, %v8751
      %v8753 = vand.u32 %v8752, 4294901760
      %8754 = vmatmul.f32.gmra.mxu0 %v8753
      %v8755 = vpop.f32.mrf.mxu0
      %v8756 = vadd.f32 %v8715, %v8755
      %v8757 = vand.u32 %v8350, 4294901760
      %v8758 = vsub.f32 %v8350, %v8757
      %v8759 = vand.u32 %v8758, 4294901760
      %8760 = vmatmul.f32.gmra.mxu0 %v8759
      %v8761 = vpop.f32.mrf.mxu0
      %v8762 = vadd.f32 %v8720, %v8761
      %8763 = vdwg.mxu0
      %8764 = vmatpush.msra.mxu0 0.0
      %8765 = vmatpush.msra.mxu0 0.0
      %8766 = vmatpush.msra.mxu0 0.0
      %8767 = vmatpush.msra.mxu0 0.0
      %8768 = vmatpush.msra.mxu0 0.0
      %8769 = vmatpush.msra.mxu0 0.0
      %8770 = vmatpush.msra.mxu0 0.0
      %8771 = vmatpush.msra.mxu0 0.0
      %8772 = vmatpush.msra.mxu0 0.0
      %8773 = vmatpush.msra.mxu0 0.0
      %8774 = vmatpush.msra.mxu0 0.0
      %8775 = vmatpush.msra.mxu0 0.0
      %8776 = vmatpush.msra.mxu0 0.0
      %8777 = vmatpush.msra.mxu0 0.0
      %8778 = vmatpush.msra.mxu0 0.0
      %v8779 = vand.u32 %v8354, 4294901760
      %v8780 = vsub.f32 %v8354, %v8779
      %v8781 = vand.u32 %v8780, 4294901760
      %8782 = vmatpush.msra.mxu0 %v8781
      %v8783 = vand.u32 %v8341, 4294901760
      %8784 = vmatmul.f32.gmra.mxu0 %v8783
      %v8785 = vpop.f32.mrf.mxu0
      %v8786 = vadd.f32 %v8744, %v8785
      %v8787 = vand.u32 %v8344, 4294901760
      %8788 = vmatmul.f32.gmra.mxu0 %v8787
      %v8789 = vpop.f32.mrf.mxu0
      %v8790 = vadd.f32 %v8750, %v8789
      %v8791 = vand.u32 %v8347, 4294901760
      %8792 = vmatmul.f32.gmra.mxu0 %v8791
      %v8793 = vpop.f32.mrf.mxu0
      %v8794 = vadd.f32 %v8756, %v8793
      %v8795 = vand.u32 %v8350, 4294901760
      %8796 = vmatmul.f32.gmra.mxu0 %v8795
      %v8797 = vpop.f32.mrf.mxu0
      %v8798 = vadd.f32 %v8762, %v8797
      %8799 = vdwg.mxu0
      %8800 = vmatpush.msra.mxu0 0.0
      %8801 = vmatpush.msra.mxu0 0.0
      %8802 = vmatpush.msra.mxu0 0.0
      %8803 = vmatpush.msra.mxu0 0.0
      %8804 = vmatpush.msra.mxu0 0.0
      %8805 = vmatpush.msra.mxu0 0.0
      %8806 = vmatpush.msra.mxu0 0.0
      %8807 = vmatpush.msra.mxu0 0.0
      %8808 = vmatpush.msra.mxu0 0.0
      %8809 = vmatpush.msra.mxu0 0.0
      %8810 = vmatpush.msra.mxu0 0.0
      %8811 = vmatpush.msra.mxu0 0.0
      %8812 = vmatpush.msra.mxu0 0.0
      %8813 = vmatpush.msra.mxu0 0.0
      %8814 = vmatpush.msra.mxu0 0.0
      %v8815 = vand.u32 %v8354, 4294901760
      %8816 = vmatpush.msra.mxu0 %v8815
      %v8817 = vand.u32 %v8341, 4294901760
      %8818 = vmatmul.f32.gmra.mxu0 %v8817
      %v8819 = vpop.f32.mrf.mxu0
      %v8820 = vadd.f32 %v8786, %v8819
      %v8821 = vand.u32 %v8344, 4294901760
      %8822 = vmatmul.f32.gmra.mxu0 %v8821
      %v8823 = vpop.f32.mrf.mxu0
      %v8824 = vadd.f32 %v8790, %v8823
      %v8825 = vand.u32 %v8347, 4294901760
      %8826 = vmatmul.f32.gmra.mxu0 %v8825
      %v8827 = vpop.f32.mrf.mxu0
      %v8828 = vadd.f32 %v8794, %v8827
      %v8829 = vand.u32 %v8350, 4294901760
      %8830 = vmatmul.f32.gmra.mxu0 %v8829
      %v8831 = vpop.f32.mrf.mxu0
      %v8832 = vadd.f32 %v8798, %v8831
      %8833 = vdwg.mxu0
      %v8834 = vmul.f32 %v8581, %v8333
      %v8835 = vmul.f32 %v8820, %v8329
      %v8836 = vmul.f32 %v8585, %v8334
      %v8837 = vmul.f32 %v8824, %v8330
      %v8838 = vmul.f32 %v8589, %v8335
      %v8839 = vmul.f32 %v8828, %v8331
      %v8840 = vmul.f32 %v8593, %v8336
      %v8841 = vmul.f32 %v8832, %v8332
      %v8842 = vadd.f32 %v8301, %v8834
      %v8843 = vadd.f32 %v8302, %v8835
      %v8844 = vadd.f32 %v8303, %v8836
      %v8845 = vadd.f32 %v8304, %v8837
      %v8846 = vadd.f32 %v8305, %v8838
      %v8847 = vadd.f32 %v8306, %v8839
      %v8848 = vadd.f32 %v8307, %v8840
      %v8849 = vadd.f32 %v8308, %v8841
      %v8850 = vmul.f32 %v7713, %v7754
      %v8851 = vmul.f32 %v7715, %v7769
      %v8852 = vmul.f32 %v7717, %v7784
      %v8853 = vmul.f32 %v7719, %v7799
      %8854 = vst [vmem:[#allocation1] ss:$2 sm:$0xff] %v462
      %v8855 = vld.sshfl [vmem:[#allocation1] sm:$0xff pattern:$0x75316420]
      %v8856 = vld.sshfl [vmem:[#allocation1 + $0x8] sm:$0xff pattern:$0x75316420]
      %v8858 = vsel %vm4680, %v8850, 0
      %v8861 = vsel %vm4680, %v8851, 0
      %v8864 = vsel %vm4680, %v8852, 0
      %v8867 = vsel %vm4680, %v8853, 0
      %v8869 = vsel %vm4693, %v8855, 0
      %v8871 = vsel %vm4693, %v8856, 0
      %8873 = vmatpush.msra.mxu0 0.0
      %8874 = vmatpush.msra.mxu0 0.0
      %8875 = vmatpush.msra.mxu0 0.0
      %8876 = vmatpush.msra.mxu0 0.0
      %8877 = vmatpush.msra.mxu0 0.0
      %8878 = vmatpush.msra.mxu0 0.0
      %8879 = vmatpush.msra.mxu0 0.0
      %8880 = vmatpush.msra.mxu0 0.0
      %8881 = vmatpush.msra.mxu0 0.0
      %8882 = vmatpush.msra.mxu0 0.0
      %8883 = vmatpush.msra.mxu0 0.0
      %8884 = vmatpush.msra.mxu0 0.0
      %8885 = vmatpush.msra.mxu0 0.0
      %8886 = vmatpush.msra.mxu0 0.0
      %8887 = vmatpush.msra.mxu0 0.0
      %v8888 = vand.u32 %v8869, 4294901760
      %8889 = vmatpush.msra.mxu0 %v8888
      %v8890 = vand.u32 %v8858, 4294901760
      %v8891 = vsub.f32 %v8858, %v8890
      %v8892 = vand.u32 %v8891, 4294901760
      %v8893 = vsub.f32 %v8891, %v8892
      %v8894 = vand.u32 %v8893, 4294901760
      %8895 = vmatmul.f32.gmra.mxu0 %v8894
      %v8896 = vpop.f32.mrf.mxu0
      %v8897 = vadd.f32 0.0, %v8896
      %v8898 = vand.u32 %v8861, 4294901760
      %v8899 = vsub.f32 %v8861, %v8898
      %v8900 = vand.u32 %v8899, 4294901760
      %v8901 = vsub.f32 %v8899, %v8900
      %v8902 = vand.u32 %v8901, 4294901760
      %8903 = vmatmul.f32.gmra.mxu0 %v8902
      %v8904 = vpop.f32.mrf.mxu0
      %v8905 = vadd.f32 0.0, %v8904
      %v8906 = vand.u32 %v8864, 4294901760
      %v8907 = vsub.f32 %v8864, %v8906
      %v8908 = vand.u32 %v8907, 4294901760
      %v8909 = vsub.f32 %v8907, %v8908
      %v8910 = vand.u32 %v8909, 4294901760
      %8911 = vmatmul.f32.gmra.mxu0 %v8910
      %v8912 = vpop.f32.mrf.mxu0
      %v8913 = vadd.f32 0.0, %v8912
      %v8914 = vand.u32 %v8867, 4294901760
      %v8915 = vsub.f32 %v8867, %v8914
      %v8916 = vand.u32 %v8915, 4294901760
      %v8917 = vsub.f32 %v8915, %v8916
      %v8918 = vand.u32 %v8917, 4294901760
      %8919 = vmatmul.f32.gmra.mxu0 %v8918
      %v8920 = vpop.f32.mrf.mxu0
      %v8921 = vadd.f32 0.0, %v8920
      %8922 = vdwg.mxu0
      %8923 = vmatpush.msra.mxu0 0.0
      %8924 = vmatpush.msra.mxu0 0.0
      %8925 = vmatpush.msra.mxu0 0.0
      %8926 = vmatpush.msra.mxu0 0.0
      %8927 = vmatpush.msra.mxu0 0.0
      %8928 = vmatpush.msra.mxu0 0.0
      %8929 = vmatpush.msra.mxu0 0.0
      %8930 = vmatpush.msra.mxu0 0.0
      %8931 = vmatpush.msra.mxu0 0.0
      %8932 = vmatpush.msra.mxu0 0.0
      %8933 = vmatpush.msra.mxu0 0.0
      %8934 = vmatpush.msra.mxu0 0.0
      %8935 = vmatpush.msra.mxu0 0.0
      %8936 = vmatpush.msra.mxu0 0.0
      %8937 = vmatpush.msra.mxu0 0.0
      %v8938 = vand.u32 %v8869, 4294901760
      %v8939 = vsub.f32 %v8869, %v8938
      %v8940 = vand.u32 %v8939, 4294901760
      %v8941 = vsub.f32 %v8939, %v8940
      %v8942 = vand.u32 %v8941, 4294901760
      %8943 = vmatpush.msra.mxu0 %v8942
      %v8944 = vand.u32 %v8858, 4294901760
      %8945 = vmatmul.f32.gmra.mxu0 %v8944
      %v8946 = vpop.f32.mrf.mxu0
      %v8947 = vadd.f32 %v8897, %v8946
      %v8948 = vand.u32 %v8861, 4294901760
      %8949 = vmatmul.f32.gmra.mxu0 %v8948
      %v8950 = vpop.f32.mrf.mxu0
      %v8951 = vadd.f32 %v8905, %v8950
      %v8952 = vand.u32 %v8864, 4294901760
      %8953 = vmatmul.f32.gmra.mxu0 %v8952
      %v8954 = vpop.f32.mrf.mxu0
      %v8955 = vadd.f32 %v8913, %v8954
      %v8956 = vand.u32 %v8867, 4294901760
      %8957 = vmatmul.f32.gmra.mxu0 %v8956
      %v8958 = vpop.f32.mrf.mxu0
      %v8959 = vadd.f32 %v8921, %v8958
      %8960 = vdwg.mxu0
      %8961 = vmatpush.msra.mxu0 0.0
      %8962 = vmatpush.msra.mxu0 0.0
      %8963 = vmatpush.msra.mxu0 0.0
      %8964 = vmatpush.msra.mxu0 0.0
      %8965 = vmatpush.msra.mxu0 0.0
      %8966 = vmatpush.msra.mxu0 0.0
      %8967 = vmatpush.msra.mxu0 0.0
      %8968 = vmatpush.msra.mxu0 0.0
      %8969 = vmatpush.msra.mxu0 0.0
      %8970 = vmatpush.msra.mxu0 0.0
      %8971 = vmatpush.msra.mxu0 0.0
      %8972 = vmatpush.msra.mxu0 0.0
      %8973 = vmatpush.msra.mxu0 0.0
      %8974 = vmatpush.msra.mxu0 0.0
      %8975 = vmatpush.msra.mxu0 0.0
      %v8976 = vand.u32 %v8869, 4294901760
      %v8977 = vsub.f32 %v8869, %v8976
      %8978 = vmatpush.msra.mxu0 %v8977
      %v8979 = vand.u32 %v8858, 4294901760
      %v8980 = vsub.f32 %v8858, %v8979
      %8981 = vmatmul.f32.gmra.mxu0 %v8980
      %v8982 = vpop.f32.mrf.mxu0
      %v8983 = vadd.f32 %v8947, %v8982
      %v8984 = vand.u32 %v8861, 4294901760
      %v8985 = vsub.f32 %v8861, %v8984
      %8986 = vmatmul.f32.gmra.mxu0 %v8985
      %v8987 = vpop.f32.mrf.mxu0
      %v8988 = vadd.f32 %v8951, %v8987
      %v8989 = vand.u32 %v8864, 4294901760
      %v8990 = vsub.f32 %v8864, %v8989
      %8991 = vmatmul.f32.gmra.mxu0 %v8990
      %v8992 = vpop.f32.mrf.mxu0
      %v8993 = vadd.f32 %v8955, %v8992
      %v8994 = vand.u32 %v8867, 4294901760
      %v8995 = vsub.f32 %v8867, %v8994
      %8996 = vmatmul.f32.gmra.mxu0 %v8995
      %v8997 = vpop.f32.mrf.mxu0
      %v8998 = vadd.f32 %v8959, %v8997
      %8999 = vdwg.mxu0
      %9000 = vmatpush.msra.mxu0 0.0
      %9001 = vmatpush.msra.mxu0 0.0
      %9002 = vmatpush.msra.mxu0 0.0
      %9003 = vmatpush.msra.mxu0 0.0
      %9004 = vmatpush.msra.mxu0 0.0
      %9005 = vmatpush.msra.mxu0 0.0
      %9006 = vmatpush.msra.mxu0 0.0
      %9007 = vmatpush.msra.mxu0 0.0
      %9008 = vmatpush.msra.mxu0 0.0
      %9009 = vmatpush.msra.mxu0 0.0
      %9010 = vmatpush.msra.mxu0 0.0
      %9011 = vmatpush.msra.mxu0 0.0
      %9012 = vmatpush.msra.mxu0 0.0
      %9013 = vmatpush.msra.mxu0 0.0
      %9014 = vmatpush.msra.mxu0 0.0
      %v9015 = vand.u32 %v8869, 4294901760
      %9016 = vmatpush.msra.mxu0 %v9015
      %v9017 = vand.u32 %v8858, 4294901760
      %v9018 = vsub.f32 %v8858, %v9017
      %v9019 = vand.u32 %v9018, 4294901760
      %9020 = vmatmul.f32.gmra.mxu0 %v9019
      %v9021 = vpop.f32.mrf.mxu0
      %v9022 = vadd.f32 %v8983, %v9021
      %v9023 = vand.u32 %v8861, 4294901760
      %v9024 = vsub.f32 %v8861, %v9023
      %v9025 = vand.u32 %v9024, 4294901760
      %9026 = vmatmul.f32.gmra.mxu0 %v9025
      %v9027 = vpop.f32.mrf.mxu0
      %v9028 = vadd.f32 %v8988, %v9027
      %v9029 = vand.u32 %v8864, 4294901760
      %v9030 = vsub.f32 %v8864, %v9029
      %v9031 = vand.u32 %v9030, 4294901760
      %9032 = vmatmul.f32.gmra.mxu0 %v9031
      %v9033 = vpop.f32.mrf.mxu0
      %v9034 = vadd.f32 %v8993, %v9033
      %v9035 = vand.u32 %v8867, 4294901760
      %v9036 = vsub.f32 %v8867, %v9035
      %v9037 = vand.u32 %v9036, 4294901760
      %9038 = vmatmul.f32.gmra.mxu0 %v9037
      %v9039 = vpop.f32.mrf.mxu0
      %v9040 = vadd.f32 %v8998, %v9039
      %9041 = vdwg.mxu0
      %9042 = vmatpush.msra.mxu0 0.0
      %9043 = vmatpush.msra.mxu0 0.0
      %9044 = vmatpush.msra.mxu0 0.0
      %9045 = vmatpush.msra.mxu0 0.0
      %9046 = vmatpush.msra.mxu0 0.0
      %9047 = vmatpush.msra.mxu0 0.0
      %9048 = vmatpush.msra.mxu0 0.0
      %9049 = vmatpush.msra.mxu0 0.0
      %9050 = vmatpush.msra.mxu0 0.0
      %9051 = vmatpush.msra.mxu0 0.0
      %9052 = vmatpush.msra.mxu0 0.0
      %9053 = vmatpush.msra.mxu0 0.0
      %9054 = vmatpush.msra.mxu0 0.0
      %9055 = vmatpush.msra.mxu0 0.0
      %9056 = vmatpush.msra.mxu0 0.0
      %v9057 = vand.u32 %v8869, 4294901760
      %v9058 = vsub.f32 %v8869, %v9057
      %v9059 = vand.u32 %v9058, 4294901760
      %9060 = vmatpush.msra.mxu0 %v9059
      %v9061 = vand.u32 %v8858, 4294901760
      %9062 = vmatmul.f32.gmra.mxu0 %v9061
      %v9063 = vpop.f32.mrf.mxu0
      %v9064 = vadd.f32 %v9022, %v9063
      %v9065 = vand.u32 %v8861, 4294901760
      %9066 = vmatmul.f32.gmra.mxu0 %v9065
      %v9067 = vpop.f32.mrf.mxu0
      %v9068 = vadd.f32 %v9028, %v9067
      %v9069 = vand.u32 %v8864, 4294901760
      %9070 = vmatmul.f32.gmra.mxu0 %v9069
      %v9071 = vpop.f32.mrf.mxu0
      %v9072 = vadd.f32 %v9034, %v9071
      %v9073 = vand.u32 %v8867, 4294901760
      %9074 = vmatmul.f32.gmra.mxu0 %v9073
      %v9075 = vpop.f32.mrf.mxu0
      %v9076 = vadd.f32 %v9040, %v9075
      %9077 = vdwg.mxu0
      %9078 = vmatpush.msra.mxu0 0.0
      %9079 = vmatpush.msra.mxu0 0.0
      %9080 = vmatpush.msra.mxu0 0.0
      %9081 = vmatpush.msra.mxu0 0.0
      %9082 = vmatpush.msra.mxu0 0.0
      %9083 = vmatpush.msra.mxu0 0.0
      %9084 = vmatpush.msra.mxu0 0.0
      %9085 = vmatpush.msra.mxu0 0.0
      %9086 = vmatpush.msra.mxu0 0.0
      %9087 = vmatpush.msra.mxu0 0.0
      %9088 = vmatpush.msra.mxu0 0.0
      %9089 = vmatpush.msra.mxu0 0.0
      %9090 = vmatpush.msra.mxu0 0.0
      %9091 = vmatpush.msra.mxu0 0.0
      %9092 = vmatpush.msra.mxu0 0.0
      %v9093 = vand.u32 %v8869, 4294901760
      %9094 = vmatpush.msra.mxu0 %v9093
      %v9095 = vand.u32 %v8858, 4294901760
      %9096 = vmatmul.f32.gmra.mxu0 %v9095
      %v9097 = vpop.f32.mrf.mxu0
      %v9098 = vadd.f32 %v9064, %v9097
      %v9099 = vand.u32 %v8861, 4294901760
      %9100 = vmatmul.f32.gmra.mxu0 %v9099
      %v9101 = vpop.f32.mrf.mxu0
      %v9102 = vadd.f32 %v9068, %v9101
      %v9103 = vand.u32 %v8864, 4294901760
      %9104 = vmatmul.f32.gmra.mxu0 %v9103
      %v9105 = vpop.f32.mrf.mxu0
      %v9106 = vadd.f32 %v9072, %v9105
      %v9107 = vand.u32 %v8867, 4294901760
      %9108 = vmatmul.f32.gmra.mxu0 %v9107
      %v9109 = vpop.f32.mrf.mxu0
      %v9110 = vadd.f32 %v9076, %v9109
      %9111 = vdwg.mxu0
      %9112 = vmatpush.msra.mxu0 0.0
      %9113 = vmatpush.msra.mxu0 0.0
      %9114 = vmatpush.msra.mxu0 0.0
      %9115 = vmatpush.msra.mxu0 0.0
      %9116 = vmatpush.msra.mxu0 0.0
      %9117 = vmatpush.msra.mxu0 0.0
      %9118 = vmatpush.msra.mxu0 0.0
      %9119 = vmatpush.msra.mxu0 0.0
      %9120 = vmatpush.msra.mxu0 0.0
      %9121 = vmatpush.msra.mxu0 0.0
      %9122 = vmatpush.msra.mxu0 0.0
      %9123 = vmatpush.msra.mxu0 0.0
      %9124 = vmatpush.msra.mxu0 0.0
      %9125 = vmatpush.msra.mxu0 0.0
      %9126 = vmatpush.msra.mxu0 0.0
      %v9127 = vand.u32 %v8871, 4294901760
      %9128 = vmatpush.msra.mxu0 %v9127
      %v9129 = vand.u32 %v8858, 4294901760
      %v9130 = vsub.f32 %v8858, %v9129
      %v9131 = vand.u32 %v9130, 4294901760
      %v9132 = vsub.f32 %v9130, %v9131
      %v9133 = vand.u32 %v9132, 4294901760
      %9134 = vmatmul.f32.gmra.mxu0 %v9133
      %v9135 = vpop.f32.mrf.mxu0
      %v9136 = vadd.f32 0.0, %v9135
      %v9137 = vand.u32 %v8861, 4294901760
      %v9138 = vsub.f32 %v8861, %v9137
      %v9139 = vand.u32 %v9138, 4294901760
      %v9140 = vsub.f32 %v9138, %v9139
      %v9141 = vand.u32 %v9140, 4294901760
      %9142 = vmatmul.f32.gmra.mxu0 %v9141
      %v9143 = vpop.f32.mrf.mxu0
      %v9144 = vadd.f32 0.0, %v9143
      %v9145 = vand.u32 %v8864, 4294901760
      %v9146 = vsub.f32 %v8864, %v9145
      %v9147 = vand.u32 %v9146, 4294901760
      %v9148 = vsub.f32 %v9146, %v9147
      %v9149 = vand.u32 %v9148, 4294901760
      %9150 = vmatmul.f32.gmra.mxu0 %v9149
      %v9151 = vpop.f32.mrf.mxu0
      %v9152 = vadd.f32 0.0, %v9151
      %v9153 = vand.u32 %v8867, 4294901760
      %v9154 = vsub.f32 %v8867, %v9153
      %v9155 = vand.u32 %v9154, 4294901760
      %v9156 = vsub.f32 %v9154, %v9155
      %v9157 = vand.u32 %v9156, 4294901760
      %9158 = vmatmul.f32.gmra.mxu0 %v9157
      %v9159 = vpop.f32.mrf.mxu0
      %v9160 = vadd.f32 0.0, %v9159
      %9161 = vdwg.mxu0
      %9162 = vmatpush.msra.mxu0 0.0
      %9163 = vmatpush.msra.mxu0 0.0
      %9164 = vmatpush.msra.mxu0 0.0
      %9165 = vmatpush.msra.mxu0 0.0
      %9166 = vmatpush.msra.mxu0 0.0
      %9167 = vmatpush.msra.mxu0 0.0
      %9168 = vmatpush.msra.mxu0 0.0
      %9169 = vmatpush.msra.mxu0 0.0
      %9170 = vmatpush.msra.mxu0 0.0
      %9171 = vmatpush.msra.mxu0 0.0
      %9172 = vmatpush.msra.mxu0 0.0
      %9173 = vmatpush.msra.mxu0 0.0
      %9174 = vmatpush.msra.mxu0 0.0
      %9175 = vmatpush.msra.mxu0 0.0
      %9176 = vmatpush.msra.mxu0 0.0
      %v9177 = vand.u32 %v8871, 4294901760
      %v9178 = vsub.f32 %v8871, %v9177
      %v9179 = vand.u32 %v9178, 4294901760
      %v9180 = vsub.f32 %v9178, %v9179
      %v9181 = vand.u32 %v9180, 4294901760
      %9182 = vmatpush.msra.mxu0 %v9181
      %v9183 = vand.u32 %v8858, 4294901760
      %9184 = vmatmul.f32.gmra.mxu0 %v9183
      %v9185 = vpop.f32.mrf.mxu0
      %v9186 = vadd.f32 %v9136, %v9185
      %v9187 = vand.u32 %v8861, 4294901760
      %9188 = vmatmul.f32.gmra.mxu0 %v9187
      %v9189 = vpop.f32.mrf.mxu0
      %v9190 = vadd.f32 %v9144, %v9189
      %v9191 = vand.u32 %v8864, 4294901760
      %9192 = vmatmul.f32.gmra.mxu0 %v9191
      %v9193 = vpop.f32.mrf.mxu0
      %v9194 = vadd.f32 %v9152, %v9193
      %v9195 = vand.u32 %v8867, 4294901760
      %9196 = vmatmul.f32.gmra.mxu0 %v9195
      %v9197 = vpop.f32.mrf.mxu0
      %v9198 = vadd.f32 %v9160, %v9197
      %9199 = vdwg.mxu0
      %9200 = vmatpush.msra.mxu0 0.0
      %9201 = vmatpush.msra.mxu0 0.0
      %9202 = vmatpush.msra.mxu0 0.0
      %9203 = vmatpush.msra.mxu0 0.0
      %9204 = vmatpush.msra.mxu0 0.0
      %9205 = vmatpush.msra.mxu0 0.0
      %9206 = vmatpush.msra.mxu0 0.0
      %9207 = vmatpush.msra.mxu0 0.0
      %9208 = vmatpush.msra.mxu0 0.0
      %9209 = vmatpush.msra.mxu0 0.0
      %9210 = vmatpush.msra.mxu0 0.0
      %9211 = vmatpush.msra.mxu0 0.0
      %9212 = vmatpush.msra.mxu0 0.0
      %9213 = vmatpush.msra.mxu0 0.0
      %9214 = vmatpush.msra.mxu0 0.0
      %v9215 = vand.u32 %v8871, 4294901760
      %v9216 = vsub.f32 %v8871, %v9215
      %9217 = vmatpush.msra.mxu0 %v9216
      %v9218 = vand.u32 %v8858, 4294901760
      %v9219 = vsub.f32 %v8858, %v9218
      %9220 = vmatmul.f32.gmra.mxu0 %v9219
      %v9221 = vpop.f32.mrf.mxu0
      %v9222 = vadd.f32 %v9186, %v9221
      %v9223 = vand.u32 %v8861, 4294901760
      %v9224 = vsub.f32 %v8861, %v9223
      %9225 = vmatmul.f32.gmra.mxu0 %v9224
      %v9226 = vpop.f32.mrf.mxu0
      %v9227 = vadd.f32 %v9190, %v9226
      %v9228 = vand.u32 %v8864, 4294901760
      %v9229 = vsub.f32 %v8864, %v9228
      %9230 = vmatmul.f32.gmra.mxu0 %v9229
      %v9231 = vpop.f32.mrf.mxu0
      %v9232 = vadd.f32 %v9194, %v9231
      %v9233 = vand.u32 %v8867, 4294901760
      %v9234 = vsub.f32 %v8867, %v9233
      %9235 = vmatmul.f32.gmra.mxu0 %v9234
      %v9236 = vpop.f32.mrf.mxu0
      %v9237 = vadd.f32 %v9198, %v9236
      %9238 = vdwg.mxu0
      %9239 = vmatpush.msra.mxu0 0.0
      %9240 = vmatpush.msra.mxu0 0.0
      %9241 = vmatpush.msra.mxu0 0.0
      %9242 = vmatpush.msra.mxu0 0.0
      %9243 = vmatpush.msra.mxu0 0.0
      %9244 = vmatpush.msra.mxu0 0.0
      %9245 = vmatpush.msra.mxu0 0.0
      %9246 = vmatpush.msra.mxu0 0.0
      %9247 = vmatpush.msra.mxu0 0.0
      %9248 = vmatpush.msra.mxu0 0.0
      %9249 = vmatpush.msra.mxu0 0.0
      %9250 = vmatpush.msra.mxu0 0.0
      %9251 = vmatpush.msra.mxu0 0.0
      %9252 = vmatpush.msra.mxu0 0.0
      %9253 = vmatpush.msra.mxu0 0.0
      %v9254 = vand.u32 %v8871, 4294901760
      %9255 = vmatpush.msra.mxu0 %v9254
      %v9256 = vand.u32 %v8858, 4294901760
      %v9257 = vsub.f32 %v8858, %v9256
      %v9258 = vand.u32 %v9257, 4294901760
      %9259 = vmatmul.f32.gmra.mxu0 %v9258
      %v9260 = vpop.f32.mrf.mxu0
      %v9261 = vadd.f32 %v9222, %v9260
      %v9262 = vand.u32 %v8861, 4294901760
      %v9263 = vsub.f32 %v8861, %v9262
      %v9264 = vand.u32 %v9263, 4294901760
      %9265 = vmatmul.f32.gmra.mxu0 %v9264
      %v9266 = vpop.f32.mrf.mxu0
      %v9267 = vadd.f32 %v9227, %v9266
      %v9268 = vand.u32 %v8864, 4294901760
      %v9269 = vsub.f32 %v8864, %v9268
      %v9270 = vand.u32 %v9269, 4294901760
      %9271 = vmatmul.f32.gmra.mxu0 %v9270
      %v9272 = vpop.f32.mrf.mxu0
      %v9273 = vadd.f32 %v9232, %v9272
      %v9274 = vand.u32 %v8867, 4294901760
      %v9275 = vsub.f32 %v8867, %v9274
      %v9276 = vand.u32 %v9275, 4294901760
      %9277 = vmatmul.f32.gmra.mxu0 %v9276
      %v9278 = vpop.f32.mrf.mxu0
      %v9279 = vadd.f32 %v9237, %v9278
      %9280 = vdwg.mxu0
      %9281 = vmatpush.msra.mxu0 0.0
      %9282 = vmatpush.msra.mxu0 0.0
      %9283 = vmatpush.msra.mxu0 0.0
      %9284 = vmatpush.msra.mxu0 0.0
      %9285 = vmatpush.msra.mxu0 0.0
      %9286 = vmatpush.msra.mxu0 0.0
      %9287 = vmatpush.msra.mxu0 0.0
      %9288 = vmatpush.msra.mxu0 0.0
      %9289 = vmatpush.msra.mxu0 0.0
      %9290 = vmatpush.msra.mxu0 0.0
      %9291 = vmatpush.msra.mxu0 0.0
      %9292 = vmatpush.msra.mxu0 0.0
      %9293 = vmatpush.msra.mxu0 0.0
      %9294 = vmatpush.msra.mxu0 0.0
      %9295 = vmatpush.msra.mxu0 0.0
      %v9296 = vand.u32 %v8871, 4294901760
      %v9297 = vsub.f32 %v8871, %v9296
      %v9298 = vand.u32 %v9297, 4294901760
      %9299 = vmatpush.msra.mxu0 %v9298
      %v9300 = vand.u32 %v8858, 4294901760
      %9301 = vmatmul.f32.gmra.mxu0 %v9300
      %v9302 = vpop.f32.mrf.mxu0
      %v9303 = vadd.f32 %v9261, %v9302
      %v9304 = vand.u32 %v8861, 4294901760
      %9305 = vmatmul.f32.gmra.mxu0 %v9304
      %v9306 = vpop.f32.mrf.mxu0
      %v9307 = vadd.f32 %v9267, %v9306
      %v9308 = vand.u32 %v8864, 4294901760
      %9309 = vmatmul.f32.gmra.mxu0 %v9308
      %v9310 = vpop.f32.mrf.mxu0
      %v9311 = vadd.f32 %v9273, %v9310
      %v9312 = vand.u32 %v8867, 4294901760
      %9313 = vmatmul.f32.gmra.mxu0 %v9312
      %v9314 = vpop.f32.mrf.mxu0
      %v9315 = vadd.f32 %v9279, %v9314
      %9316 = vdwg.mxu0
      %9317 = vmatpush.msra.mxu0 0.0
      %9318 = vmatpush.msra.mxu0 0.0
      %9319 = vmatpush.msra.mxu0 0.0
      %9320 = vmatpush.msra.mxu0 0.0
      %9321 = vmatpush.msra.mxu0 0.0
      %9322 = vmatpush.msra.mxu0 0.0
      %9323 = vmatpush.msra.mxu0 0.0
      %9324 = vmatpush.msra.mxu0 0.0
      %9325 = vmatpush.msra.mxu0 0.0
      %9326 = vmatpush.msra.mxu0 0.0
      %9327 = vmatpush.msra.mxu0 0.0
      %9328 = vmatpush.msra.mxu0 0.0
      %9329 = vmatpush.msra.mxu0 0.0
      %9330 = vmatpush.msra.mxu0 0.0
      %9331 = vmatpush.msra.mxu0 0.0
      %v9332 = vand.u32 %v8871, 4294901760
      %9333 = vmatpush.msra.mxu0 %v9332
      %v9334 = vand.u32 %v8858, 4294901760
      %9335 = vmatmul.f32.gmra.mxu0 %v9334
      %v9336 = vpop.f32.mrf.mxu0
      %v9337 = vadd.f32 %v9303, %v9336
      %v9338 = vand.u32 %v8861, 4294901760
      %9339 = vmatmul.f32.gmra.mxu0 %v9338
      %v9340 = vpop.f32.mrf.mxu0
      %v9341 = vadd.f32 %v9307, %v9340
      %v9342 = vand.u32 %v8864, 4294901760
      %9343 = vmatmul.f32.gmra.mxu0 %v9342
      %v9344 = vpop.f32.mrf.mxu0
      %v9345 = vadd.f32 %v9311, %v9344
      %v9346 = vand.u32 %v8867, 4294901760
      %9347 = vmatmul.f32.gmra.mxu0 %v9346
      %v9348 = vpop.f32.mrf.mxu0
      %v9349 = vadd.f32 %v9315, %v9348
      %9350 = vdwg.mxu0
      %v9351 = vmul.f32 %v9098, %v3506
      %v9352 = vmul.f32 %v9337, %v2608
      %v9353 = vmul.f32 %v9102, %v3510
      %v9354 = vmul.f32 %v9341, %v2612
      %v9355 = vmul.f32 %v9106, %v3514
      %v9356 = vmul.f32 %v9345, %v2616
      %v9357 = vmul.f32 %v9110, %v3518
      %v9358 = vmul.f32 %v9349, %v2620
      %v9359 = vadd.f32 %v8842, %v9351
      %v9360 = vadd.f32 %v8843, %v9352
      %v9361 = vadd.f32 %v8844, %v9353
      %v9362 = vadd.f32 %v8845, %v9354
      %v9363 = vadd.f32 %v8846, %v9355
      %v9364 = vadd.f32 %v8847, %v9356
      %v9365 = vadd.f32 %v8848, %v9357
      %v9366 = vadd.f32 %v8849, %v9358
      %v9367 = vmul.f32 %v7729, %v7754
      %v9368 = vmul.f32 %v7731, %v7769
      %v9369 = vmul.f32 %v7733, %v7784
      %v9370 = vmul.f32 %v7735, %v7799
      %9371 = vst [vmem:[#allocation1] ss:$2 sm:$0xff] %v462
      %v9372 = vld.sshfl [vmem:[#allocation1] sm:$0xff pattern:$0x75316420]
      %v9373 = vld.sshfl [vmem:[#allocation1 + $0x8] sm:$0xff pattern:$0x75316420]
      %v9375 = vsel %vm4680, %v9367, 0
      %v9378 = vsel %vm4680, %v9368, 0
      %v9381 = vsel %vm4680, %v9369, 0
      %v9384 = vsel %vm4680, %v9370, 0
      %v9386 = vsel %vm4693, %v9372, 0
      %v9388 = vsel %vm4693, %v9373, 0
      %9390 = vmatpush.msra.mxu0 0.0
      %9391 = vmatpush.msra.mxu0 0.0
      %9392 = vmatpush.msra.mxu0 0.0
      %9393 = vmatpush.msra.mxu0 0.0
      %9394 = vmatpush.msra.mxu0 0.0
      %9395 = vmatpush.msra.mxu0 0.0
      %9396 = vmatpush.msra.mxu0 0.0
      %9397 = vmatpush.msra.mxu0 0.0
      %9398 = vmatpush.msra.mxu0 0.0
      %9399 = vmatpush.msra.mxu0 0.0
      %9400 = vmatpush.msra.mxu0 0.0
      %9401 = vmatpush.msra.mxu0 0.0
      %9402 = vmatpush.msra.mxu0 0.0
      %9403 = vmatpush.msra.mxu0 0.0
      %9404 = vmatpush.msra.mxu0 0.0
      %v9405 = vand.u32 %v9386, 4294901760
      %9406 = vmatpush.msra.mxu0 %v9405
      %v9407 = vand.u32 %v9375, 4294901760
      %v9408 = vsub.f32 %v9375, %v9407
      %v9409 = vand.u32 %v9408, 4294901760
      %v9410 = vsub.f32 %v9408, %v9409
      %v9411 = vand.u32 %v9410, 4294901760
      %9412 = vmatmul.f32.gmra.mxu0 %v9411
      %v9413 = vpop.f32.mrf.mxu0
      %v9414 = vadd.f32 0.0, %v9413
      %v9415 = vand.u32 %v9378, 4294901760
      %v9416 = vsub.f32 %v9378, %v9415
      %v9417 = vand.u32 %v9416, 4294901760
      %v9418 = vsub.f32 %v9416, %v9417
      %v9419 = vand.u32 %v9418, 4294901760
      %9420 = vmatmul.f32.gmra.mxu0 %v9419
      %v9421 = vpop.f32.mrf.mxu0
      %v9422 = vadd.f32 0.0, %v9421
      %v9423 = vand.u32 %v9381, 4294901760
      %v9424 = vsub.f32 %v9381, %v9423
      %v9425 = vand.u32 %v9424, 4294901760
      %v9426 = vsub.f32 %v9424, %v9425
      %v9427 = vand.u32 %v9426, 4294901760
      %9428 = vmatmul.f32.gmra.mxu0 %v9427
      %v9429 = vpop.f32.mrf.mxu0
      %v9430 = vadd.f32 0.0, %v9429
      %v9431 = vand.u32 %v9384, 4294901760
      %v9432 = vsub.f32 %v9384, %v9431
      %v9433 = vand.u32 %v9432, 4294901760
      %v9434 = vsub.f32 %v9432, %v9433
      %v9435 = vand.u32 %v9434, 4294901760
      %9436 = vmatmul.f32.gmra.mxu0 %v9435
      %v9437 = vpop.f32.mrf.mxu0
      %v9438 = vadd.f32 0.0, %v9437
      %9439 = vdwg.mxu0
      %9440 = vmatpush.msra.mxu0 0.0
      %9441 = vmatpush.msra.mxu0 0.0
      %9442 = vmatpush.msra.mxu0 0.0
      %9443 = vmatpush.msra.mxu0 0.0
      %9444 = vmatpush.msra.mxu0 0.0
      %9445 = vmatpush.msra.mxu0 0.0
      %9446 = vmatpush.msra.mxu0 0.0
      %9447 = vmatpush.msra.mxu0 0.0
      %9448 = vmatpush.msra.mxu0 0.0
      %9449 = vmatpush.msra.mxu0 0.0
      %9450 = vmatpush.msra.mxu0 0.0
      %9451 = vmatpush.msra.mxu0 0.0
      %9452 = vmatpush.msra.mxu0 0.0
      %9453 = vmatpush.msra.mxu0 0.0
      %9454 = vmatpush.msra.mxu0 0.0
      %v9455 = vand.u32 %v9386, 4294901760
      %v9456 = vsub.f32 %v9386, %v9455
      %v9457 = vand.u32 %v9456, 4294901760
      %v9458 = vsub.f32 %v9456, %v9457
      %v9459 = vand.u32 %v9458, 4294901760
      %9460 = vmatpush.msra.mxu0 %v9459
      %v9461 = vand.u32 %v9375, 4294901760
      %9462 = vmatmul.f32.gmra.mxu0 %v9461
      %v9463 = vpop.f32.mrf.mxu0
      %v9464 = vadd.f32 %v9414, %v9463
      %v9465 = vand.u32 %v9378, 4294901760
      %9466 = vmatmul.f32.gmra.mxu0 %v9465
      %v9467 = vpop.f32.mrf.mxu0
      %v9468 = vadd.f32 %v9422, %v9467
      %v9469 = vand.u32 %v9381, 4294901760
      %9470 = vmatmul.f32.gmra.mxu0 %v9469
      %v9471 = vpop.f32.mrf.mxu0
      %v9472 = vadd.f32 %v9430, %v9471
      %v9473 = vand.u32 %v9384, 4294901760
      %9474 = vmatmul.f32.gmra.mxu0 %v9473
      %v9475 = vpop.f32.mrf.mxu0
      %v9476 = vadd.f32 %v9438, %v9475
      %9477 = vdwg.mxu0
      %9478 = vmatpush.msra.mxu0 0.0
      %9479 = vmatpush.msra.mxu0 0.0
      %9480 = vmatpush.msra.mxu0 0.0
      %9481 = vmatpush.msra.mxu0 0.0
      %9482 = vmatpush.msra.mxu0 0.0
      %9483 = vmatpush.msra.mxu0 0.0
      %9484 = vmatpush.msra.mxu0 0.0
      %9485 = vmatpush.msra.mxu0 0.0
      %9486 = vmatpush.msra.mxu0 0.0
      %9487 = vmatpush.msra.mxu0 0.0
      %9488 = vmatpush.msra.mxu0 0.0
      %9489 = vmatpush.msra.mxu0 0.0
      %9490 = vmatpush.msra.mxu0 0.0
      %9491 = vmatpush.msra.mxu0 0.0
      %9492 = vmatpush.msra.mxu0 0.0
      %v9493 = vand.u32 %v9386, 4294901760
      %v9494 = vsub.f32 %v9386, %v9493
      %9495 = vmatpush.msra.mxu0 %v9494
      %v9496 = vand.u32 %v9375, 4294901760
      %v9497 = vsub.f32 %v9375, %v9496
      %9498 = vmatmul.f32.gmra.mxu0 %v9497
      %v9499 = vpop.f32.mrf.mxu0
      %v9500 = vadd.f32 %v9464, %v9499
      %v9501 = vand.u32 %v9378, 4294901760
      %v9502 = vsub.f32 %v9378, %v9501
      %9503 = vmatmul.f32.gmra.mxu0 %v9502
      %v9504 = vpop.f32.mrf.mxu0
      %v9505 = vadd.f32 %v9468, %v9504
      %v9506 = vand.u32 %v9381, 4294901760
      %v9507 = vsub.f32 %v9381, %v9506
      %9508 = vmatmul.f32.gmra.mxu0 %v9507
      %v9509 = vpop.f32.mrf.mxu0
      %v9510 = vadd.f32 %v9472, %v9509
      %v9511 = vand.u32 %v9384, 4294901760
      %v9512 = vsub.f32 %v9384, %v9511
      %9513 = vmatmul.f32.gmra.mxu0 %v9512
      %v9514 = vpop.f32.mrf.mxu0
      %v9515 = vadd.f32 %v9476, %v9514
      %9516 = vdwg.mxu0
      %9517 = vmatpush.msra.mxu0 0.0
      %9518 = vmatpush.msra.mxu0 0.0
      %9519 = vmatpush.msra.mxu0 0.0
      %9520 = vmatpush.msra.mxu0 0.0
      %9521 = vmatpush.msra.mxu0 0.0
      %9522 = vmatpush.msra.mxu0 0.0
      %9523 = vmatpush.msra.mxu0 0.0
      %9524 = vmatpush.msra.mxu0 0.0
      %9525 = vmatpush.msra.mxu0 0.0
      %9526 = vmatpush.msra.mxu0 0.0
      %9527 = vmatpush.msra.mxu0 0.0
      %9528 = vmatpush.msra.mxu0 0.0
      %9529 = vmatpush.msra.mxu0 0.0
      %9530 = vmatpush.msra.mxu0 0.0
      %9531 = vmatpush.msra.mxu0 0.0
      %v9532 = vand.u32 %v9386, 4294901760
      %9533 = vmatpush.msra.mxu0 %v9532
      %v9534 = vand.u32 %v9375, 4294901760
      %v9535 = vsub.f32 %v9375, %v9534
      %v9536 = vand.u32 %v9535, 4294901760
      %9537 = vmatmul.f32.gmra.mxu0 %v9536
      %v9538 = vpop.f32.mrf.mxu0
      %v9539 = vadd.f32 %v9500, %v9538
      %v9540 = vand.u32 %v9378, 4294901760
      %v9541 = vsub.f32 %v9378, %v9540
      %v9542 = vand.u32 %v9541, 4294901760
      %9543 = vmatmul.f32.gmra.mxu0 %v9542
      %v9544 = vpop.f32.mrf.mxu0
      %v9545 = vadd.f32 %v9505, %v9544
      %v9546 = vand.u32 %v9381, 4294901760
      %v9547 = vsub.f32 %v9381, %v9546
      %v9548 = vand.u32 %v9547, 4294901760
      %9549 = vmatmul.f32.gmra.mxu0 %v9548
      %v9550 = vpop.f32.mrf.mxu0
      %v9551 = vadd.f32 %v9510, %v9550
      %v9552 = vand.u32 %v9384, 4294901760
      %v9553 = vsub.f32 %v9384, %v9552
      %v9554 = vand.u32 %v9553, 4294901760
      %9555 = vmatmul.f32.gmra.mxu0 %v9554
      %v9556 = vpop.f32.mrf.mxu0
      %v9557 = vadd.f32 %v9515, %v9556
      %9558 = vdwg.mxu0
      %9559 = vmatpush.msra.mxu0 0.0
      %9560 = vmatpush.msra.mxu0 0.0
      %9561 = vmatpush.msra.mxu0 0.0
      %9562 = vmatpush.msra.mxu0 0.0
      %9563 = vmatpush.msra.mxu0 0.0
      %9564 = vmatpush.msra.mxu0 0.0
      %9565 = vmatpush.msra.mxu0 0.0
      %9566 = vmatpush.msra.mxu0 0.0
      %9567 = vmatpush.msra.mxu0 0.0
      %9568 = vmatpush.msra.mxu0 0.0
      %9569 = vmatpush.msra.mxu0 0.0
      %9570 = vmatpush.msra.mxu0 0.0
      %9571 = vmatpush.msra.mxu0 0.0
      %9572 = vmatpush.msra.mxu0 0.0
      %9573 = vmatpush.msra.mxu0 0.0
      %v9574 = vand.u32 %v9386, 4294901760
      %v9575 = vsub.f32 %v9386, %v9574
      %v9576 = vand.u32 %v9575, 4294901760
      %9577 = vmatpush.msra.mxu0 %v9576
      %v9578 = vand.u32 %v9375, 4294901760
      %9579 = vmatmul.f32.gmra.mxu0 %v9578
      %v9580 = vpop.f32.mrf.mxu0
      %v9581 = vadd.f32 %v9539, %v9580
      %v9582 = vand.u32 %v9378, 4294901760
      %9583 = vmatmul.f32.gmra.mxu0 %v9582
      %v9584 = vpop.f32.mrf.mxu0
      %v9585 = vadd.f32 %v9545, %v9584
      %v9586 = vand.u32 %v9381, 4294901760
      %9587 = vmatmul.f32.gmra.mxu0 %v9586
      %v9588 = vpop.f32.mrf.mxu0
      %v9589 = vadd.f32 %v9551, %v9588
      %v9590 = vand.u32 %v9384, 4294901760
      %9591 = vmatmul.f32.gmra.mxu0 %v9590
      %v9592 = vpop.f32.mrf.mxu0
      %v9593 = vadd.f32 %v9557, %v9592
      %9594 = vdwg.mxu0
      %9595 = vmatpush.msra.mxu0 0.0
      %9596 = vmatpush.msra.mxu0 0.0
      %9597 = vmatpush.msra.mxu0 0.0
      %9598 = vmatpush.msra.mxu0 0.0
      %9599 = vmatpush.msra.mxu0 0.0
      %9600 = vmatpush.msra.mxu0 0.0
      %9601 = vmatpush.msra.mxu0 0.0
      %9602 = vmatpush.msra.mxu0 0.0
      %9603 = vmatpush.msra.mxu0 0.0
      %9604 = vmatpush.msra.mxu0 0.0
      %9605 = vmatpush.msra.mxu0 0.0
      %9606 = vmatpush.msra.mxu0 0.0
      %9607 = vmatpush.msra.mxu0 0.0
      %9608 = vmatpush.msra.mxu0 0.0
      %9609 = vmatpush.msra.mxu0 0.0
      %v9610 = vand.u32 %v9386, 4294901760
      %9611 = vmatpush.msra.mxu0 %v9610
      %v9612 = vand.u32 %v9375, 4294901760
      %9613 = vmatmul.f32.gmra.mxu0 %v9612
      %v9614 = vpop.f32.mrf.mxu0
      %v9615 = vadd.f32 %v9581, %v9614
      %v9616 = vand.u32 %v9378, 4294901760
      %9617 = vmatmul.f32.gmra.mxu0 %v9616
      %v9618 = vpop.f32.mrf.mxu0
      %v9619 = vadd.f32 %v9585, %v9618
      %v9620 = vand.u32 %v9381, 4294901760
      %9621 = vmatmul.f32.gmra.mxu0 %v9620
      %v9622 = vpop.f32.mrf.mxu0
      %v9623 = vadd.f32 %v9589, %v9622
      %v9624 = vand.u32 %v9384, 4294901760
      %9625 = vmatmul.f32.gmra.mxu0 %v9624
      %v9626 = vpop.f32.mrf.mxu0
      %v9627 = vadd.f32 %v9593, %v9626
      %9628 = vdwg.mxu0
      %9629 = vmatpush.msra.mxu0 0.0
      %9630 = vmatpush.msra.mxu0 0.0
      %9631 = vmatpush.msra.mxu0 0.0
      %9632 = vmatpush.msra.mxu0 0.0
      %9633 = vmatpush.msra.mxu0 0.0
      %9634 = vmatpush.msra.mxu0 0.0
      %9635 = vmatpush.msra.mxu0 0.0
      %9636 = vmatpush.msra.mxu0 0.0
      %9637 = vmatpush.msra.mxu0 0.0
      %9638 = vmatpush.msra.mxu0 0.0
      %9639 = vmatpush.msra.mxu0 0.0
      %9640 = vmatpush.msra.mxu0 0.0
      %9641 = vmatpush.msra.mxu0 0.0
      %9642 = vmatpush.msra.mxu0 0.0
      %9643 = vmatpush.msra.mxu0 0.0
      %v9644 = vand.u32 %v9388, 4294901760
      %9645 = vmatpush.msra.mxu0 %v9644
      %v9646 = vand.u32 %v9375, 4294901760
      %v9647 = vsub.f32 %v9375, %v9646
      %v9648 = vand.u32 %v9647, 4294901760
      %v9649 = vsub.f32 %v9647, %v9648
      %v9650 = vand.u32 %v9649, 4294901760
      %9651 = vmatmul.f32.gmra.mxu0 %v9650
      %v9652 = vpop.f32.mrf.mxu0
      %v9653 = vadd.f32 0.0, %v9652
      %v9654 = vand.u32 %v9378, 4294901760
      %v9655 = vsub.f32 %v9378, %v9654
      %v9656 = vand.u32 %v9655, 4294901760
      %v9657 = vsub.f32 %v9655, %v9656
      %v9658 = vand.u32 %v9657, 4294901760
      %9659 = vmatmul.f32.gmra.mxu0 %v9658
      %v9660 = vpop.f32.mrf.mxu0
      %v9661 = vadd.f32 0.0, %v9660
      %v9662 = vand.u32 %v9381, 4294901760
      %v9663 = vsub.f32 %v9381, %v9662
      %v9664 = vand.u32 %v9663, 4294901760
      %v9665 = vsub.f32 %v9663, %v9664
      %v9666 = vand.u32 %v9665, 4294901760
      %9667 = vmatmul.f32.gmra.mxu0 %v9666
      %v9668 = vpop.f32.mrf.mxu0
      %v9669 = vadd.f32 0.0, %v9668
      %v9670 = vand.u32 %v9384, 4294901760
      %v9671 = vsub.f32 %v9384, %v9670
      %v9672 = vand.u32 %v9671, 4294901760
      %v9673 = vsub.f32 %v9671, %v9672
      %v9674 = vand.u32 %v9673, 4294901760
      %9675 = vmatmul.f32.gmra.mxu0 %v9674
      %v9676 = vpop.f32.mrf.mxu0
      %v9677 = vadd.f32 0.0, %v9676
      %9678 = vdwg.mxu0
      %9679 = vmatpush.msra.mxu0 0.0
      %9680 = vmatpush.msra.mxu0 0.0
      %9681 = vmatpush.msra.mxu0 0.0
      %9682 = vmatpush.msra.mxu0 0.0
      %9683 = vmatpush.msra.mxu0 0.0
      %9684 = vmatpush.msra.mxu0 0.0
      %9685 = vmatpush.msra.mxu0 0.0
      %9686 = vmatpush.msra.mxu0 0.0
      %9687 = vmatpush.msra.mxu0 0.0
      %9688 = vmatpush.msra.mxu0 0.0
      %9689 = vmatpush.msra.mxu0 0.0
      %9690 = vmatpush.msra.mxu0 0.0
      %9691 = vmatpush.msra.mxu0 0.0
      %9692 = vmatpush.msra.mxu0 0.0
      %9693 = vmatpush.msra.mxu0 0.0
      %v9694 = vand.u32 %v9388, 4294901760
      %v9695 = vsub.f32 %v9388, %v9694
      %v9696 = vand.u32 %v9695, 4294901760
      %v9697 = vsub.f32 %v9695, %v9696
      %v9698 = vand.u32 %v9697, 4294901760
      %9699 = vmatpush.msra.mxu0 %v9698
      %v9700 = vand.u32 %v9375, 4294901760
      %9701 = vmatmul.f32.gmra.mxu0 %v9700
      %v9702 = vpop.f32.mrf.mxu0
      %v9703 = vadd.f32 %v9653, %v9702
      %v9704 = vand.u32 %v9378, 4294901760
      %9705 = vmatmul.f32.gmra.mxu0 %v9704
      %v9706 = vpop.f32.mrf.mxu0
      %v9707 = vadd.f32 %v9661, %v9706
      %v9708 = vand.u32 %v9381, 4294901760
      %9709 = vmatmul.f32.gmra.mxu0 %v9708
      %v9710 = vpop.f32.mrf.mxu0
      %v9711 = vadd.f32 %v9669, %v9710
      %v9712 = vand.u32 %v9384, 4294901760
      %9713 = vmatmul.f32.gmra.mxu0 %v9712
      %v9714 = vpop.f32.mrf.mxu0
      %v9715 = vadd.f32 %v9677, %v9714
      %9716 = vdwg.mxu0
      %9717 = vmatpush.msra.mxu0 0.0
      %9718 = vmatpush.msra.mxu0 0.0
      %9719 = vmatpush.msra.mxu0 0.0
      %9720 = vmatpush.msra.mxu0 0.0
      %9721 = vmatpush.msra.mxu0 0.0
      %9722 = vmatpush.msra.mxu0 0.0
      %9723 = vmatpush.msra.mxu0 0.0
      %9724 = vmatpush.msra.mxu0 0.0
      %9725 = vmatpush.msra.mxu0 0.0
      %9726 = vmatpush.msra.mxu0 0.0
      %9727 = vmatpush.msra.mxu0 0.0
      %9728 = vmatpush.msra.mxu0 0.0
      %9729 = vmatpush.msra.mxu0 0.0
      %9730 = vmatpush.msra.mxu0 0.0
      %9731 = vmatpush.msra.mxu0 0.0
      %v9732 = vand.u32 %v9388, 4294901760
      %v9733 = vsub.f32 %v9388, %v9732
      %9734 = vmatpush.msra.mxu0 %v9733
      %v9735 = vand.u32 %v9375, 4294901760
      %v9736 = vsub.f32 %v9375, %v9735
      %9737 = vmatmul.f32.gmra.mxu0 %v9736
      %v9738 = vpop.f32.mrf.mxu0
      %v9739 = vadd.f32 %v9703, %v9738
      %v9740 = vand.u32 %v9378, 4294901760
      %v9741 = vsub.f32 %v9378, %v9740
      %9742 = vmatmul.f32.gmra.mxu0 %v9741
      %v9743 = vpop.f32.mrf.mxu0
      %v9744 = vadd.f32 %v9707, %v9743
      %v9745 = vand.u32 %v9381, 4294901760
      %v9746 = vsub.f32 %v9381, %v9745
      %9747 = vmatmul.f32.gmra.mxu0 %v9746
      %v9748 = vpop.f32.mrf.mxu0
      %v9749 = vadd.f32 %v9711, %v9748
      %v9750 = vand.u32 %v9384, 4294901760
      %v9751 = vsub.f32 %v9384, %v9750
      %9752 = vmatmul.f32.gmra.mxu0 %v9751
      %v9753 = vpop.f32.mrf.mxu0
      %v9754 = vadd.f32 %v9715, %v9753
      %9755 = vdwg.mxu0
      %9756 = vmatpush.msra.mxu0 0.0
      %9757 = vmatpush.msra.mxu0 0.0
      %9758 = vmatpush.msra.mxu0 0.0
      %9759 = vmatpush.msra.mxu0 0.0
      %9760 = vmatpush.msra.mxu0 0.0
      %9761 = vmatpush.msra.mxu0 0.0
      %9762 = vmatpush.msra.mxu0 0.0
      %9763 = vmatpush.msra.mxu0 0.0
      %9764 = vmatpush.msra.mxu0 0.0
      %9765 = vmatpush.msra.mxu0 0.0
      %9766 = vmatpush.msra.mxu0 0.0
      %9767 = vmatpush.msra.mxu0 0.0
      %9768 = vmatpush.msra.mxu0 0.0
      %9769 = vmatpush.msra.mxu0 0.0
      %9770 = vmatpush.msra.mxu0 0.0
      %v9771 = vand.u32 %v9388, 4294901760
      %9772 = vmatpush.msra.mxu0 %v9771
      %v9773 = vand.u32 %v9375, 4294901760
      %v9774 = vsub.f32 %v9375, %v9773
      %v9775 = vand.u32 %v9774, 4294901760
      %9776 = vmatmul.f32.gmra.mxu0 %v9775
      %v9777 = vpop.f32.mrf.mxu0
      %v9778 = vadd.f32 %v9739, %v9777
      %v9779 = vand.u32 %v9378, 4294901760
      %v9780 = vsub.f32 %v9378, %v9779
      %v9781 = vand.u32 %v9780, 4294901760
      %9782 = vmatmul.f32.gmra.mxu0 %v9781
      %v9783 = vpop.f32.mrf.mxu0
      %v9784 = vadd.f32 %v9744, %v9783
      %v9785 = vand.u32 %v9381, 4294901760
      %v9786 = vsub.f32 %v9381, %v9785
      %v9787 = vand.u32 %v9786, 4294901760
      %9788 = vmatmul.f32.gmra.mxu0 %v9787
      %v9789 = vpop.f32.mrf.mxu0
      %v9790 = vadd.f32 %v9749, %v9789
      %v9791 = vand.u32 %v9384, 4294901760
      %v9792 = vsub.f32 %v9384, %v9791
      %v9793 = vand.u32 %v9792, 4294901760
      %9794 = vmatmul.f32.gmra.mxu0 %v9793
      %v9795 = vpop.f32.mrf.mxu0
      %v9796 = vadd.f32 %v9754, %v9795
      %9797 = vdwg.mxu0
      %9798 = vmatpush.msra.mxu0 0.0
      %9799 = vmatpush.msra.mxu0 0.0
      %9800 = vmatpush.msra.mxu0 0.0
      %9801 = vmatpush.msra.mxu0 0.0
      %9802 = vmatpush.msra.mxu0 0.0
      %9803 = vmatpush.msra.mxu0 0.0
      %9804 = vmatpush.msra.mxu0 0.0
      %9805 = vmatpush.msra.mxu0 0.0
      %9806 = vmatpush.msra.mxu0 0.0
      %9807 = vmatpush.msra.mxu0 0.0
      %9808 = vmatpush.msra.mxu0 0.0
      %9809 = vmatpush.msra.mxu0 0.0
      %9810 = vmatpush.msra.mxu0 0.0
      %9811 = vmatpush.msra.mxu0 0.0
      %9812 = vmatpush.msra.mxu0 0.0
      %v9813 = vand.u32 %v9388, 4294901760
      %v9814 = vsub.f32 %v9388, %v9813
      %v9815 = vand.u32 %v9814, 4294901760
      %9816 = vmatpush.msra.mxu0 %v9815
      %v9817 = vand.u32 %v9375, 4294901760
      %9818 = vmatmul.f32.gmra.mxu0 %v9817
      %v9819 = vpop.f32.mrf.mxu0
      %v9820 = vadd.f32 %v9778, %v9819
      %v9821 = vand.u32 %v9378, 4294901760
      %9822 = vmatmul.f32.gmra.mxu0 %v9821
      %v9823 = vpop.f32.mrf.mxu0
      %v9824 = vadd.f32 %v9784, %v9823
      %v9825 = vand.u32 %v9381, 4294901760
      %9826 = vmatmul.f32.gmra.mxu0 %v9825
      %v9827 = vpop.f32.mrf.mxu0
      %v9828 = vadd.f32 %v9790, %v9827
      %v9829 = vand.u32 %v9384, 4294901760
      %9830 = vmatmul.f32.gmra.mxu0 %v9829
      %v9831 = vpop.f32.mrf.mxu0
      %v9832 = vadd.f32 %v9796, %v9831
      %9833 = vdwg.mxu0
      %9834 = vmatpush.msra.mxu0 0.0
      %9835 = vmatpush.msra.mxu0 0.0
      %9836 = vmatpush.msra.mxu0 0.0
      %9837 = vmatpush.msra.mxu0 0.0
      %9838 = vmatpush.msra.mxu0 0.0
      %9839 = vmatpush.msra.mxu0 0.0
      %9840 = vmatpush.msra.mxu0 0.0
      %9841 = vmatpush.msra.mxu0 0.0
      %9842 = vmatpush.msra.mxu0 0.0
      %9843 = vmatpush.msra.mxu0 0.0
      %9844 = vmatpush.msra.mxu0 0.0
      %9845 = vmatpush.msra.mxu0 0.0
      %9846 = vmatpush.msra.mxu0 0.0
      %9847 = vmatpush.msra.mxu0 0.0
      %9848 = vmatpush.msra.mxu0 0.0
      %v9849 = vand.u32 %v9388, 4294901760
      %9850 = vmatpush.msra.mxu0 %v9849
      %v9851 = vand.u32 %v9375, 4294901760
      %9852 = vmatmul.f32.gmra.mxu0 %v9851
      %v9853 = vpop.f32.mrf.mxu0
      %v9854 = vadd.f32 %v9820, %v9853
      %v9855 = vand.u32 %v9378, 4294901760
      %9856 = vmatmul.f32.gmra.mxu0 %v9855
      %v9857 = vpop.f32.mrf.mxu0
      %v9858 = vadd.f32 %v9824, %v9857
      %v9859 = vand.u32 %v9381, 4294901760
      %9860 = vmatmul.f32.gmra.mxu0 %v9859
      %v9861 = vpop.f32.mrf.mxu0
      %v9862 = vadd.f32 %v9828, %v9861
      %v9863 = vand.u32 %v9384, 4294901760
      %9864 = vmatmul.f32.gmra.mxu0 %v9863
      %v9865 = vpop.f32.mrf.mxu0
      %v9866 = vadd.f32 %v9832, %v9865
      %9867 = vdwg.mxu0
      %v9868 = vmul.f32 %v9615, %v8329
      %v9869 = vmul.f32 %v9854, %v8333
      %v9870 = vmul.f32 %v9619, %v8330
      %v9871 = vmul.f32 %v9858, %v8334
      %v9872 = vmul.f32 %v9623, %v8331
      %v9873 = vmul.f32 %v9862, %v8335
      %v9874 = vmul.f32 %v9627, %v8332
      %v9875 = vmul.f32 %v9866, %v8336
      %v9876 = vadd.f32 %v9359, %v9868
      %v9877 = vadd.f32 %v9360, %v9869
      %v9878 = vadd.f32 %v9361, %v9870
      %v9879 = vadd.f32 %v9362, %v9871
      %v9880 = vadd.f32 %v9363, %v9872
      %v9881 = vadd.f32 %v9364, %v9873
      %v9882 = vadd.f32 %v9365, %v9874
      %v9883 = vadd.f32 %v9366, %v9875
      %9884 = vmatpush.xpose.msra.mxu0 0.0
      %9885 = vmatpush.xpose.msra.mxu0 0.0
      %9886 = vmatpush.xpose.msra.mxu0 0.0
      %9887 = vmatpush.xpose.msra.mxu0 0.0
      %9888 = vmatpush.xpose.msra.mxu0 0.0
      %9889 = vmatpush.xpose.msra.mxu0 0.0
      %9890 = vmatpush.xpose.msra.mxu0 0.0
      %9891 = vmatpush.xpose.msra.mxu0 0.0
      %9892 = vmatpush.xpose.msra.mxu0 0.0
      %9893 = vmatpush.xpose.msra.mxu0 0.0
      %9894 = vmatpush.xpose.msra.mxu0 0.0
      %9895 = vmatpush.xpose.msra.mxu0 0.0
      %v9896 = vand.u32 %v2604, 4294901760
      %9897 = vmatpush.xpose.msra.mxu0 %v9896
      %v9898 = vand.u32 %v2600, 4294901760
      %9899 = vmatpush.xpose.msra.mxu0 %v9898
      %v9900 = vand.u32 %v2596, 4294901760
      %9901 = vmatpush.xpose.msra.mxu0 %v9900
      %v9902 = vand.u32 %v2592, 4294901760
      %9903 = vmatpush.xpose.msra.mxu0 %v9902
      %v9904 = vand.u32 %v2624, 4294901760
      %v9905 = vsub.f32 %v2624, %v9904
      %v9906 = vand.u32 %v9905, 4294901760
      %v9907 = vsub.f32 %v9905, %v9906
      %v9908 = vand.u32 %v9907, 4294901760
      %9909 = vmatmul.f32.gmra.mxu0 %v9908
      %v9910 = vpop.f32.mrf.mxu0
      %v9911 = vadd.f32 0.0, %v9910
      %v9912 = vand.u32 %v2628, 4294901760
      %v9913 = vsub.f32 %v2628, %v9912
      %v9914 = vand.u32 %v9913, 4294901760
      %v9915 = vsub.f32 %v9913, %v9914
      %v9916 = vand.u32 %v9915, 4294901760
      %9917 = vmatmul.f32.gmra.mxu0 %v9916
      %v9918 = vpop.f32.mrf.mxu0
      %v9919 = vadd.f32 0.0, %v9918
      %v9920 = vand.u32 %v2632, 4294901760
      %v9921 = vsub.f32 %v2632, %v9920
      %v9922 = vand.u32 %v9921, 4294901760
      %v9923 = vsub.f32 %v9921, %v9922
      %v9924 = vand.u32 %v9923, 4294901760
      %9925 = vmatmul.f32.gmra.mxu0 %v9924
      %v9926 = vpop.f32.mrf.mxu0
      %v9927 = vadd.f32 0.0, %v9926
      %v9928 = vand.u32 %v2636, 4294901760
      %v9929 = vsub.f32 %v2636, %v9928
      %v9930 = vand.u32 %v9929, 4294901760
      %v9931 = vsub.f32 %v9929, %v9930
      %v9932 = vand.u32 %v9931, 4294901760
      %9933 = vmatmul.f32.gmra.mxu0 %v9932
      %v9934 = vpop.f32.mrf.mxu0
      %v9935 = vadd.f32 0.0, %v9934
      %9936 = vdwg.mxu0
      %9937 = vmatpush.xpose.msra.mxu0 0.0
      %9938 = vmatpush.xpose.msra.mxu0 0.0
      %9939 = vmatpush.xpose.msra.mxu0 0.0
      %9940 = vmatpush.xpose.msra.mxu0 0.0
      %9941 = vmatpush.xpose.msra.mxu0 0.0
      %9942 = vmatpush.xpose.msra.mxu0 0.0
      %9943 = vmatpush.xpose.msra.mxu0 0.0
      %9944 = vmatpush.xpose.msra.mxu0 0.0
      %9945 = vmatpush.xpose.msra.mxu0 0.0
      %9946 = vmatpush.xpose.msra.mxu0 0.0
      %9947 = vmatpush.xpose.msra.mxu0 0.0
      %9948 = vmatpush.xpose.msra.mxu0 0.0
      %v9949 = vand.u32 %v2604, 4294901760
      %v9950 = vsub.f32 %v2604, %v9949
      %v9951 = vand.u32 %v9950, 4294901760
      %v9952 = vsub.f32 %v9950, %v9951
      %v9953 = vand.u32 %v9952, 4294901760
      %9954 = vmatpush.xpose.msra.mxu0 %v9953
      %v9955 = vand.u32 %v2600, 4294901760
      %v9956 = vsub.f32 %v2600, %v9955
      %v9957 = vand.u32 %v9956, 4294901760
      %v9958 = vsub.f32 %v9956, %v9957
      %v9959 = vand.u32 %v9958, 4294901760
      %9960 = vmatpush.xpose.msra.mxu0 %v9959
      %v9961 = vand.u32 %v2596, 4294901760
      %v9962 = vsub.f32 %v2596, %v9961
      %v9963 = vand.u32 %v9962, 4294901760
      %v9964 = vsub.f32 %v9962, %v9963
      %v9965 = vand.u32 %v9964, 4294901760
      %9966 = vmatpush.xpose.msra.mxu0 %v9965
      %v9967 = vand.u32 %v2592, 4294901760
      %v9968 = vsub.f32 %v2592, %v9967
      %v9969 = vand.u32 %v9968, 4294901760
      %v9970 = vsub.f32 %v9968, %v9969
      %v9971 = vand.u32 %v9970, 4294901760
      %9972 = vmatpush.xpose.msra.mxu0 %v9971
      %v9973 = vand.u32 %v2624, 4294901760
      %9974 = vmatmul.f32.gmra.mxu0 %v9973
      %v9975 = vpop.f32.mrf.mxu0
      %v9976 = vadd.f32 %v9911, %v9975
      %v9977 = vand.u32 %v2628, 4294901760
      %9978 = vmatmul.f32.gmra.mxu0 %v9977
      %v9979 = vpop.f32.mrf.mxu0
      %v9980 = vadd.f32 %v9919, %v9979
      %v9981 = vand.u32 %v2632, 4294901760
      %9982 = vmatmul.f32.gmra.mxu0 %v9981
      %v9983 = vpop.f32.mrf.mxu0
      %v9984 = vadd.f32 %v9927, %v9983
      %v9985 = vand.u32 %v2636, 4294901760
      %9986 = vmatmul.f32.gmra.mxu0 %v9985
      %v9987 = vpop.f32.mrf.mxu0
      %v9988 = vadd.f32 %v9935, %v9987
      %9989 = vdwg.mxu0
      %9990 = vmatpush.xpose.msra.mxu0 0.0
      %9991 = vmatpush.xpose.msra.mxu0 0.0
      %9992 = vmatpush.xpose.msra.mxu0 0.0
      %9993 = vmatpush.xpose.msra.mxu0 0.0
      %9994 = vmatpush.xpose.msra.mxu0 0.0
      %9995 = vmatpush.xpose.msra.mxu0 0.0
      %9996 = vmatpush.xpose.msra.mxu0 0.0
      %9997 = vmatpush.xpose.msra.mxu0 0.0
      %9998 = vmatpush.xpose.msra.mxu0 0.0
      %9999 = vmatpush.xpose.msra.mxu0 0.0
      %10000 = vmatpush.xpose.msra.mxu0 0.0
      %10001 = vmatpush.xpose.msra.mxu0 0.0
      %v10002 = vand.u32 %v2604, 4294901760
      %v10003 = vsub.f32 %v2604, %v10002
      %10004 = vmatpush.xpose.msra.mxu0 %v10003
      %v10005 = vand.u32 %v2600, 4294901760
      %v10006 = vsub.f32 %v2600, %v10005
      %10007 = vmatpush.xpose.msra.mxu0 %v10006
      %v10008 = vand.u32 %v2596, 4294901760
      %v10009 = vsub.f32 %v2596, %v10008
      %10010 = vmatpush.xpose.msra.mxu0 %v10009
      %v10011 = vand.u32 %v2592, 4294901760
      %v10012 = vsub.f32 %v2592, %v10011
      %10013 = vmatpush.xpose.msra.mxu0 %v10012
      %v10014 = vand.u32 %v2624, 4294901760
      %v10015 = vsub.f32 %v2624, %v10014
      %10016 = vmatmul.f32.gmra.mxu0 %v10015
      %v10017 = vpop.f32.mrf.mxu0
      %v10018 = vadd.f32 %v9976, %v10017
      %v10019 = vand.u32 %v2628, 4294901760
      %v10020 = vsub.f32 %v2628, %v10019
      %10021 = vmatmul.f32.gmra.mxu0 %v10020
      %v10022 = vpop.f32.mrf.mxu0
      %v10023 = vadd.f32 %v9980, %v10022
      %v10024 = vand.u32 %v2632, 4294901760
      %v10025 = vsub.f32 %v2632, %v10024
      %10026 = vmatmul.f32.gmra.mxu0 %v10025
      %v10027 = vpop.f32.mrf.mxu0
      %v10028 = vadd.f32 %v9984, %v10027
      %v10029 = vand.u32 %v2636, 4294901760
      %v10030 = vsub.f32 %v2636, %v10029
      %10031 = vmatmul.f32.gmra.mxu0 %v10030
      %v10032 = vpop.f32.mrf.mxu0
      %v10033 = vadd.f32 %v9988, %v10032
      %10034 = vdwg.mxu0
      %10035 = vmatpush.xpose.msra.mxu0 0.0
      %10036 = vmatpush.xpose.msra.mxu0 0.0
      %10037 = vmatpush.xpose.msra.mxu0 0.0
      %10038 = vmatpush.xpose.msra.mxu0 0.0
      %10039 = vmatpush.xpose.msra.mxu0 0.0
      %10040 = vmatpush.xpose.msra.mxu0 0.0
      %10041 = vmatpush.xpose.msra.mxu0 0.0
      %10042 = vmatpush.xpose.msra.mxu0 0.0
      %10043 = vmatpush.xpose.msra.mxu0 0.0
      %10044 = vmatpush.xpose.msra.mxu0 0.0
      %10045 = vmatpush.xpose.msra.mxu0 0.0
      %10046 = vmatpush.xpose.msra.mxu0 0.0
      %v10047 = vand.u32 %v2604, 4294901760
      %10048 = vmatpush.xpose.msra.mxu0 %v10047
      %v10049 = vand.u32 %v2600, 4294901760
      %10050 = vmatpush.xpose.msra.mxu0 %v10049
      %v10051 = vand.u32 %v2596, 4294901760
      %10052 = vmatpush.xpose.msra.mxu0 %v10051
      %v10053 = vand.u32 %v2592, 4294901760
      %10054 = vmatpush.xpose.msra.mxu0 %v10053
      %v10055 = vand.u32 %v2624, 4294901760
      %v10056 = vsub.f32 %v2624, %v10055
      %v10057 = vand.u32 %v10056, 4294901760
      %10058 = vmatmul.f32.gmra.mxu0 %v10057
      %v10059 = vpop.f32.mrf.mxu0
      %v10060 = vadd.f32 %v10018, %v10059
      %v10061 = vand.u32 %v2628, 4294901760
      %v10062 = vsub.f32 %v2628, %v10061
      %v10063 = vand.u32 %v10062, 4294901760
      %10064 = vmatmul.f32.gmra.mxu0 %v10063
      %v10065 = vpop.f32.mrf.mxu0
      %v10066 = vadd.f32 %v10023, %v10065
      %v10067 = vand.u32 %v2632, 4294901760
      %v10068 = vsub.f32 %v2632, %v10067
      %v10069 = vand.u32 %v10068, 4294901760
      %10070 = vmatmul.f32.gmra.mxu0 %v10069
      %v10071 = vpop.f32.mrf.mxu0
      %v10072 = vadd.f32 %v10028, %v10071
      %v10073 = vand.u32 %v2636, 4294901760
      %v10074 = vsub.f32 %v2636, %v10073
      %v10075 = vand.u32 %v10074, 4294901760
      %10076 = vmatmul.f32.gmra.mxu0 %v10075
      %v10077 = vpop.f32.mrf.mxu0
      %v10078 = vadd.f32 %v10033, %v10077
      %10079 = vdwg.mxu0
      %10080 = vmatpush.xpose.msra.mxu0 0.0
      %10081 = vmatpush.xpose.msra.mxu0 0.0
      %10082 = vmatpush.xpose.msra.mxu0 0.0
      %10083 = vmatpush.xpose.msra.mxu0 0.0
      %10084 = vmatpush.xpose.msra.mxu0 0.0
      %10085 = vmatpush.xpose.msra.mxu0 0.0
      %10086 = vmatpush.xpose.msra.mxu0 0.0
      %10087 = vmatpush.xpose.msra.mxu0 0.0
      %10088 = vmatpush.xpose.msra.mxu0 0.0
      %10089 = vmatpush.xpose.msra.mxu0 0.0
      %10090 = vmatpush.xpose.msra.mxu0 0.0
      %10091 = vmatpush.xpose.msra.mxu0 0.0
      %v10092 = vand.u32 %v2604, 4294901760
      %v10093 = vsub.f32 %v2604, %v10092
      %v10094 = vand.u32 %v10093, 4294901760
      %10095 = vmatpush.xpose.msra.mxu0 %v10094
      %v10096 = vand.u32 %v2600, 4294901760
      %v10097 = vsub.f32 %v2600, %v10096
      %v10098 = vand.u32 %v10097, 4294901760
      %10099 = vmatpush.xpose.msra.mxu0 %v10098
      %v10100 = vand.u32 %v2596, 4294901760
      %v10101 = vsub.f32 %v2596, %v10100
      %v10102 = vand.u32 %v10101, 4294901760
      %10103 = vmatpush.xpose.msra.mxu0 %v10102
      %v10104 = vand.u32 %v2592, 4294901760
      %v10105 = vsub.f32 %v2592, %v10104
      %v10106 = vand.u32 %v10105, 4294901760
      %10107 = vmatpush.xpose.msra.mxu0 %v10106
      %v10108 = vand.u32 %v2624, 4294901760
      %10109 = vmatmul.f32.gmra.mxu0 %v10108
      %v10110 = vpop.f32.mrf.mxu0
      %v10111 = vadd.f32 %v10060, %v10110
      %v10112 = vand.u32 %v2628, 4294901760
      %10113 = vmatmul.f32.gmra.mxu0 %v10112
      %v10114 = vpop.f32.mrf.mxu0
      %v10115 = vadd.f32 %v10066, %v10114
      %v10116 = vand.u32 %v2632, 4294901760
      %10117 = vmatmul.f32.gmra.mxu0 %v10116
      %v10118 = vpop.f32.mrf.mxu0
      %v10119 = vadd.f32 %v10072, %v10118
      %v10120 = vand.u32 %v2636, 4294901760
      %10121 = vmatmul.f32.gmra.mxu0 %v10120
      %v10122 = vpop.f32.mrf.mxu0
      %v10123 = vadd.f32 %v10078, %v10122
      %10124 = vdwg.mxu0
      %10125 = vmatpush.xpose.msra.mxu0 0.0
      %10126 = vmatpush.xpose.msra.mxu0 0.0
      %10127 = vmatpush.xpose.msra.mxu0 0.0
      %10128 = vmatpush.xpose.msra.mxu0 0.0
      %10129 = vmatpush.xpose.msra.mxu0 0.0
      %10130 = vmatpush.xpose.msra.mxu0 0.0
      %10131 = vmatpush.xpose.msra.mxu0 0.0
      %10132 = vmatpush.xpose.msra.mxu0 0.0
      %10133 = vmatpush.xpose.msra.mxu0 0.0
      %10134 = vmatpush.xpose.msra.mxu0 0.0
      %10135 = vmatpush.xpose.msra.mxu0 0.0
      %10136 = vmatpush.xpose.msra.mxu0 0.0
      %v10137 = vand.u32 %v2604, 4294901760
      %10138 = vmatpush.xpose.msra.mxu0 %v10137
      %v10139 = vand.u32 %v2600, 4294901760
      %10140 = vmatpush.xpose.msra.mxu0 %v10139
      %v10141 = vand.u32 %v2596, 4294901760
      %10142 = vmatpush.xpose.msra.mxu0 %v10141
      %v10143 = vand.u32 %v2592, 4294901760
      %10144 = vmatpush.xpose.msra.mxu0 %v10143
      %v10145 = vand.u32 %v2624, 4294901760
      %10146 = vmatmul.f32.gmra.mxu0 %v10145
      %v10147 = vpop.f32.mrf.mxu0
      %v10148 = vadd.f32 %v10111, %v10147
      %v10149 = vand.u32 %v2628, 4294901760
      %10150 = vmatmul.f32.gmra.mxu0 %v10149
      %v10151 = vpop.f32.mrf.mxu0
      %v10152 = vadd.f32 %v10115, %v10151
      %v10153 = vand.u32 %v2632, 4294901760
      %10154 = vmatmul.f32.gmra.mxu0 %v10153
      %v10155 = vpop.f32.mrf.mxu0
      %v10156 = vadd.f32 %v10119, %v10155
      %v10157 = vand.u32 %v2636, 4294901760
      %10158 = vmatmul.f32.gmra.mxu0 %v10157
      %v10159 = vpop.f32.mrf.mxu0
      %v10160 = vadd.f32 %v10123, %v10159
      %10161 = vdwg.mxu0
      %10162 = vmatpush.xpose.msra.mxu0 0.0
      %10163 = vmatpush.xpose.msra.mxu0 0.0
      %10164 = vmatpush.xpose.msra.mxu0 0.0
      %10165 = vmatpush.xpose.msra.mxu0 0.0
      %10166 = vmatpush.xpose.msra.mxu0 0.0
      %10167 = vmatpush.xpose.msra.mxu0 0.0
      %10168 = vmatpush.xpose.msra.mxu0 0.0
      %10169 = vmatpush.xpose.msra.mxu0 0.0
      %10170 = vmatpush.xpose.msra.mxu0 0.0
      %10171 = vmatpush.xpose.msra.mxu0 0.0
      %10172 = vmatpush.xpose.msra.mxu0 0.0
      %10173 = vmatpush.xpose.msra.mxu0 0.0
      %v10174 = vand.u32 %v3502, 4294901760
      %10175 = vmatpush.xpose.msra.mxu0 %v10174
      %v10176 = vand.u32 %v3498, 4294901760
      %10177 = vmatpush.xpose.msra.mxu0 %v10176
      %v10178 = vand.u32 %v3494, 4294901760
      %10179 = vmatpush.xpose.msra.mxu0 %v10178
      %v10180 = vand.u32 %v3490, 4294901760
      %10181 = vmatpush.xpose.msra.mxu0 %v10180
      %v10182 = vand.u32 %v3522, 4294901760
      %v10183 = vsub.f32 %v3522, %v10182
      %v10184 = vand.u32 %v10183, 4294901760
      %v10185 = vsub.f32 %v10183, %v10184
      %v10186 = vand.u32 %v10185, 4294901760
      %10187 = vmatmul.f32.gmra.mxu0 %v10186
      %v10188 = vpop.f32.mrf.mxu0
      %v10189 = vadd.f32 %v10148, %v10188
      %v10190 = vand.u32 %v3526, 4294901760
      %v10191 = vsub.f32 %v3526, %v10190
      %v10192 = vand.u32 %v10191, 4294901760
      %v10193 = vsub.f32 %v10191, %v10192
      %v10194 = vand.u32 %v10193, 4294901760
      %10195 = vmatmul.f32.gmra.mxu0 %v10194
      %v10196 = vpop.f32.mrf.mxu0
      %v10197 = vadd.f32 %v10152, %v10196
      %v10198 = vand.u32 %v3530, 4294901760
      %v10199 = vsub.f32 %v3530, %v10198
      %v10200 = vand.u32 %v10199, 4294901760
      %v10201 = vsub.f32 %v10199, %v10200
      %v10202 = vand.u32 %v10201, 4294901760
      %10203 = vmatmul.f32.gmra.mxu0 %v10202
      %v10204 = vpop.f32.mrf.mxu0
      %v10205 = vadd.f32 %v10156, %v10204
      %v10206 = vand.u32 %v3534, 4294901760
      %v10207 = vsub.f32 %v3534, %v10206
      %v10208 = vand.u32 %v10207, 4294901760
      %v10209 = vsub.f32 %v10207, %v10208
      %v10210 = vand.u32 %v10209, 4294901760
      %10211 = vmatmul.f32.gmra.mxu0 %v10210
      %v10212 = vpop.f32.mrf.mxu0
      %v10213 = vadd.f32 %v10160, %v10212
      %10214 = vdwg.mxu0
      %10215 = vmatpush.xpose.msra.mxu0 0.0
      %10216 = vmatpush.xpose.msra.mxu0 0.0
      %10217 = vmatpush.xpose.msra.mxu0 0.0
      %10218 = vmatpush.xpose.msra.mxu0 0.0
      %10219 = vmatpush.xpose.msra.mxu0 0.0
      %10220 = vmatpush.xpose.msra.mxu0 0.0
      %10221 = vmatpush.xpose.msra.mxu0 0.0
      %10222 = vmatpush.xpose.msra.mxu0 0.0
      %10223 = vmatpush.xpose.msra.mxu0 0.0
      %10224 = vmatpush.xpose.msra.mxu0 0.0
      %10225 = vmatpush.xpose.msra.mxu0 0.0
      %10226 = vmatpush.xpose.msra.mxu0 0.0
      %v10227 = vand.u32 %v3502, 4294901760
      %v10228 = vsub.f32 %v3502, %v10227
      %v10229 = vand.u32 %v10228, 4294901760
      %v10230 = vsub.f32 %v10228, %v10229
      %v10231 = vand.u32 %v10230, 4294901760
      %10232 = vmatpush.xpose.msra.mxu0 %v10231
      %v10233 = vand.u32 %v3498, 4294901760
      %v10234 = vsub.f32 %v3498, %v10233
      %v10235 = vand.u32 %v10234, 4294901760
      %v10236 = vsub.f32 %v10234, %v10235
      %v10237 = vand.u32 %v10236, 4294901760
      %10238 = vmatpush.xpose.msra.mxu0 %v10237
      %v10239 = vand.u32 %v3494, 4294901760
      %v10240 = vsub.f32 %v3494, %v10239
      %v10241 = vand.u32 %v10240, 4294901760
      %v10242 = vsub.f32 %v10240, %v10241
      %v10243 = vand.u32 %v10242, 4294901760
      %10244 = vmatpush.xpose.msra.mxu0 %v10243
      %v10245 = vand.u32 %v3490, 4294901760
      %v10246 = vsub.f32 %v3490, %v10245
      %v10247 = vand.u32 %v10246, 4294901760
      %v10248 = vsub.f32 %v10246, %v10247
      %v10249 = vand.u32 %v10248, 4294901760
      %10250 = vmatpush.xpose.msra.mxu0 %v10249
      %v10251 = vand.u32 %v3522, 4294901760
      %10252 = vmatmul.f32.gmra.mxu0 %v10251
      %v10253 = vpop.f32.mrf.mxu0
      %v10254 = vadd.f32 %v10189, %v10253
      %v10255 = vand.u32 %v3526, 4294901760
      %10256 = vmatmul.f32.gmra.mxu0 %v10255
      %v10257 = vpop.f32.mrf.mxu0
      %v10258 = vadd.f32 %v10197, %v10257
      %v10259 = vand.u32 %v3530, 4294901760
      %10260 = vmatmul.f32.gmra.mxu0 %v10259
      %v10261 = vpop.f32.mrf.mxu0
      %v10262 = vadd.f32 %v10205, %v10261
      %v10263 = vand.u32 %v3534, 4294901760
      %10264 = vmatmul.f32.gmra.mxu0 %v10263
      %v10265 = vpop.f32.mrf.mxu0
      %v10266 = vadd.f32 %v10213, %v10265
      %10267 = vdwg.mxu0
      %10268 = vmatpush.xpose.msra.mxu0 0.0
      %10269 = vmatpush.xpose.msra.mxu0 0.0
      %10270 = vmatpush.xpose.msra.mxu0 0.0
      %10271 = vmatpush.xpose.msra.mxu0 0.0
      %10272 = vmatpush.xpose.msra.mxu0 0.0
      %10273 = vmatpush.xpose.msra.mxu0 0.0
      %10274 = vmatpush.xpose.msra.mxu0 0.0
      %10275 = vmatpush.xpose.msra.mxu0 0.0
      %10276 = vmatpush.xpose.msra.mxu0 0.0
      %10277 = vmatpush.xpose.msra.mxu0 0.0
      %10278 = vmatpush.xpose.msra.mxu0 0.0
      %10279 = vmatpush.xpose.msra.mxu0 0.0
      %v10280 = vand.u32 %v3502, 4294901760
      %v10281 = vsub.f32 %v3502, %v10280
      %10282 = vmatpush.xpose.msra.mxu0 %v10281
      %v10283 = vand.u32 %v3498, 4294901760
      %v10284 = vsub.f32 %v3498, %v10283
      %10285 = vmatpush.xpose.msra.mxu0 %v10284
      %v10286 = vand.u32 %v3494, 4294901760
      %v10287 = vsub.f32 %v3494, %v10286
      %10288 = vmatpush.xpose.msra.mxu0 %v10287
      %v10289 = vand.u32 %v3490, 4294901760
      %v10290 = vsub.f32 %v3490, %v10289
      %10291 = vmatpush.xpose.msra.mxu0 %v10290
      %v10292 = vand.u32 %v3522, 4294901760
      %v10293 = vsub.f32 %v3522, %v10292
      %10294 = vmatmul.f32.gmra.mxu0 %v10293
      %v10295 = vpop.f32.mrf.mxu0
      %v10296 = vadd.f32 %v10254, %v10295
      %v10297 = vand.u32 %v3526, 4294901760
      %v10298 = vsub.f32 %v3526, %v10297
      %10299 = vmatmul.f32.gmra.mxu0 %v10298
      %v10300 = vpop.f32.mrf.mxu0
      %v10301 = vadd.f32 %v10258, %v10300
      %v10302 = vand.u32 %v3530, 4294901760
      %v10303 = vsub.f32 %v3530, %v10302
      %10304 = vmatmul.f32.gmra.mxu0 %v10303
      %v10305 = vpop.f32.mrf.mxu0
      %v10306 = vadd.f32 %v10262, %v10305
      %v10307 = vand.u32 %v3534, 4294901760
      %v10308 = vsub.f32 %v3534, %v10307
      %10309 = vmatmul.f32.gmra.mxu0 %v10308
      %v10310 = vpop.f32.mrf.mxu0
      %v10311 = vadd.f32 %v10266, %v10310
      %10312 = vdwg.mxu0
      %10313 = vmatpush.xpose.msra.mxu0 0.0
      %10314 = vmatpush.xpose.msra.mxu0 0.0
      %10315 = vmatpush.xpose.msra.mxu0 0.0
      %10316 = vmatpush.xpose.msra.mxu0 0.0
      %10317 = vmatpush.xpose.msra.mxu0 0.0
      %10318 = vmatpush.xpose.msra.mxu0 0.0
      %10319 = vmatpush.xpose.msra.mxu0 0.0
      %10320 = vmatpush.xpose.msra.mxu0 0.0
      %10321 = vmatpush.xpose.msra.mxu0 0.0
      %10322 = vmatpush.xpose.msra.mxu0 0.0
      %10323 = vmatpush.xpose.msra.mxu0 0.0
      %10324 = vmatpush.xpose.msra.mxu0 0.0
      %v10325 = vand.u32 %v3502, 4294901760
      %10326 = vmatpush.xpose.msra.mxu0 %v10325
      %v10327 = vand.u32 %v3498, 4294901760
      %10328 = vmatpush.xpose.msra.mxu0 %v10327
      %v10329 = vand.u32 %v3494, 4294901760
      %10330 = vmatpush.xpose.msra.mxu0 %v10329
      %v10331 = vand.u32 %v3490, 4294901760
      %10332 = vmatpush.xpose.msra.mxu0 %v10331
      %v10333 = vand.u32 %v3522, 4294901760
      %v10334 = vsub.f32 %v3522, %v10333
      %v10335 = vand.u32 %v10334, 4294901760
      %10336 = vmatmul.f32.gmra.mxu0 %v10335
      %v10337 = vpop.f32.mrf.mxu0
      %v10338 = vadd.f32 %v10296, %v10337
      %v10339 = vand.u32 %v3526, 4294901760
      %v10340 = vsub.f32 %v3526, %v10339
      %v10341 = vand.u32 %v10340, 4294901760
      %10342 = vmatmul.f32.gmra.mxu0 %v10341
      %v10343 = vpop.f32.mrf.mxu0
      %v10344 = vadd.f32 %v10301, %v10343
      %v10345 = vand.u32 %v3530, 4294901760
      %v10346 = vsub.f32 %v3530, %v10345
      %v10347 = vand.u32 %v10346, 4294901760
      %10348 = vmatmul.f32.gmra.mxu0 %v10347
      %v10349 = vpop.f32.mrf.mxu0
      %v10350 = vadd.f32 %v10306, %v10349
      %v10351 = vand.u32 %v3534, 4294901760
      %v10352 = vsub.f32 %v3534, %v10351
      %v10353 = vand.u32 %v10352, 4294901760
      %10354 = vmatmul.f32.gmra.mxu0 %v10353
      %v10355 = vpop.f32.mrf.mxu0
      %v10356 = vadd.f32 %v10311, %v10355
      %10357 = vdwg.mxu0
      %10358 = vmatpush.xpose.msra.mxu0 0.0
      %10359 = vmatpush.xpose.msra.mxu0 0.0
      %10360 = vmatpush.xpose.msra.mxu0 0.0
      %10361 = vmatpush.xpose.msra.mxu0 0.0
      %10362 = vmatpush.xpose.msra.mxu0 0.0
      %10363 = vmatpush.xpose.msra.mxu0 0.0
      %10364 = vmatpush.xpose.msra.mxu0 0.0
      %10365 = vmatpush.xpose.msra.mxu0 0.0
      %10366 = vmatpush.xpose.msra.mxu0 0.0
      %10367 = vmatpush.xpose.msra.mxu0 0.0
      %10368 = vmatpush.xpose.msra.mxu0 0.0
      %10369 = vmatpush.xpose.msra.mxu0 0.0
      %v10370 = vand.u32 %v3502, 4294901760
      %v10371 = vsub.f32 %v3502, %v10370
      %v10372 = vand.u32 %v10371, 4294901760
      %10373 = vmatpush.xpose.msra.mxu0 %v10372
      %v10374 = vand.u32 %v3498, 4294901760
      %v10375 = vsub.f32 %v3498, %v10374
      %v10376 = vand.u32 %v10375, 4294901760
      %10377 = vmatpush.xpose.msra.mxu0 %v10376
      %v10378 = vand.u32 %v3494, 4294901760
      %v10379 = vsub.f32 %v3494, %v10378
      %v10380 = vand.u32 %v10379, 4294901760
      %10381 = vmatpush.xpose.msra.mxu0 %v10380
      %v10382 = vand.u32 %v3490, 4294901760
      %v10383 = vsub.f32 %v3490, %v10382
      %v10384 = vand.u32 %v10383, 4294901760
      %10385 = vmatpush.xpose.msra.mxu0 %v10384
      %v10386 = vand.u32 %v3522, 4294901760
      %10387 = vmatmul.f32.gmra.mxu0 %v10386
      %v10388 = vpop.f32.mrf.mxu0
      %v10389 = vadd.f32 %v10338, %v10388
      %v10390 = vand.u32 %v3526, 4294901760
      %10391 = vmatmul.f32.gmra.mxu0 %v10390
      %v10392 = vpop.f32.mrf.mxu0
      %v10393 = vadd.f32 %v10344, %v10392
      %v10394 = vand.u32 %v3530, 4294901760
      %10395 = vmatmul.f32.gmra.mxu0 %v10394
      %v10396 = vpop.f32.mrf.mxu0
      %v10397 = vadd.f32 %v10350, %v10396
      %v10398 = vand.u32 %v3534, 4294901760
      %10399 = vmatmul.f32.gmra.mxu0 %v10398
      %v10400 = vpop.f32.mrf.mxu0
      %v10401 = vadd.f32 %v10356, %v10400
      %10402 = vdwg.mxu0
      %10403 = vmatpush.xpose.msra.mxu0 0.0
      %10404 = vmatpush.xpose.msra.mxu0 0.0
      %10405 = vmatpush.xpose.msra.mxu0 0.0
      %10406 = vmatpush.xpose.msra.mxu0 0.0
      %10407 = vmatpush.xpose.msra.mxu0 0.0
      %10408 = vmatpush.xpose.msra.mxu0 0.0
      %10409 = vmatpush.xpose.msra.mxu0 0.0
      %10410 = vmatpush.xpose.msra.mxu0 0.0
      %10411 = vmatpush.xpose.msra.mxu0 0.0
      %10412 = vmatpush.xpose.msra.mxu0 0.0
      %10413 = vmatpush.xpose.msra.mxu0 0.0
      %10414 = vmatpush.xpose.msra.mxu0 0.0
      %v10415 = vand.u32 %v3502, 4294901760
      %10416 = vmatpush.xpose.msra.mxu0 %v10415
      %v10417 = vand.u32 %v3498, 4294901760
      %10418 = vmatpush.xpose.msra.mxu0 %v10417
      %v10419 = vand.u32 %v3494, 4294901760
      %10420 = vmatpush.xpose.msra.mxu0 %v10419
      %v10421 = vand.u32 %v3490, 4294901760
      %10422 = vmatpush.xpose.msra.mxu0 %v10421
      %v10423 = vand.u32 %v3522, 4294901760
      %10424 = vmatmul.f32.gmra.mxu0 %v10423
      %v10425 = vpop.f32.mrf.mxu0
      %v10426 = vadd.f32 %v10389, %v10425
      %v10427 = vand.u32 %v3526, 4294901760
      %10428 = vmatmul.f32.gmra.mxu0 %v10427
      %v10429 = vpop.f32.mrf.mxu0
      %v10430 = vadd.f32 %v10393, %v10429
      %v10431 = vand.u32 %v3530, 4294901760
      %10432 = vmatmul.f32.gmra.mxu0 %v10431
      %v10433 = vpop.f32.mrf.mxu0
      %v10434 = vadd.f32 %v10397, %v10433
      %v10435 = vand.u32 %v3534, 4294901760
      %10436 = vmatmul.f32.gmra.mxu0 %v10435
      %v10437 = vpop.f32.mrf.mxu0
      %v10438 = vadd.f32 %v10401, %v10437
      %10439 = vdwg.mxu0
      %v10440 = vmul.f32 %v10426, 0.0625
      %v10441 = vmul.f32 %v10430, 0.0625
      %v10442 = vmul.f32 %v10434, 0.0625
      %v10443 = vmul.f32 %v10438, 0.0625
      %v10444 = vsel %vm1168, %v10440, -inf
      %10445 = vmax.xlane.f32.xlu0 %v10444
      %v10446 = vpop.xlane.xlu0 %10445
      %v10447 = vsel %vm1168, %v10441, -inf
      %10448 = vmax.xlane.f32.xlu0 %v10447
      %v10449 = vpop.xlane.xlu0 %10448
      %v10450 = vsel %vm1168, %v10442, -inf
      %10451 = vmax.xlane.f32.xlu0 %v10450
      %v10452 = vpop.xlane.xlu0 %10451
      %v10453 = vsel %vm1168, %v10443, -inf
      %10454 = vmax.xlane.f32.xlu0 %v10453
      %v10455 = vpop.xlane.xlu0 %10454
      %v10456 = vsub.f32 %v10440, %v10446
      %v10457 = vsub.f32 %v10441, %v10449
      %v10458 = vsub.f32 %v10442, %v10452
      %v10459 = vsub.f32 %v10443, %v10455
      %v10460 = vmul.f32 %v10456, 1.442695
      %v10461 = vpow.pop %v10460
      %v10462 = vmul.f32 %v10457, 1.442695
      %v10463 = vpow.pop %v10462
      %v10464 = vmul.f32 %v10458, 1.442695
      %v10465 = vpow.pop %v10464
      %v10466 = vmul.f32 %v10459, 1.442695
      %v10467 = vpow.pop %v10466
      %v10468 = vsel %vm1168, %v10461, 0.0
      %10469 = vadd.xlane.f32.xlu0 %v10468
      %v10470 = vpop.xlane.xlu0 %10469
      %v10471 = vsel %vm1168, %v10463, 0.0
      %10472 = vadd.xlane.f32.xlu0 %v10471
      %v10473 = vpop.xlane.xlu0 %10472
      %v10474 = vsel %vm1168, %v10465, 0.0
      %10475 = vadd.xlane.f32.xlu0 %v10474
      %v10476 = vpop.xlane.xlu0 %10475
      %v10477 = vsel %vm1168, %v10467, 0.0
      %10478 = vadd.xlane.f32.xlu0 %v10477
      %v10479 = vpop.xlane.xlu0 %10478
      %v10480 = vrcp.pop %v10470
      %v10481 = vmul.f32 %v10470, %v10480
      %v10482 = vsub.f32 1.0, %v10481
      %v10483 = vmul.f32 %v10480, %v10482
      %v10484 = vadd.f32 %v10480, %v10483
      %vm10485 = vweird.f32 %v10470
      %vm10486 = vweird.f32 %v10480
      %vm10487 = vmor %vm10485, %vm10486
      %v10488 = vsel %vm10487, %v10480, %v10484
      %v10489 = vand.u32 2147483647, %v10470
      %vm10490 = vcmp.eq.f32.partialorder %v10489, 8.507059e+37
      %v10491 = vand.u32 %v10470, 2147483648
      %v10492 = vor.u32 1.1754944e-38, %v10491
      %v10493 = vsel %vm10490, %v10492, %v10488
      %v10494 = vmul.f32 %v10461, %v10493
      %v10495 = vrcp.pop %v10473
      %v10496 = vmul.f32 %v10473, %v10495
      %v10497 = vsub.f32 1.0, %v10496
      %v10498 = vmul.f32 %v10495, %v10497
      %v10499 = vadd.f32 %v10495, %v10498
      %vm10500 = vweird.f32 %v10473
      %vm10501 = vweird.f32 %v10495
      %vm10502 = vmor %vm10500, %vm10501
      %v10503 = vsel %vm10502, %v10495, %v10499
      %v10504 = vand.u32 2147483647, %v10473
      %vm10505 = vcmp.eq.f32.partialorder %v10504, 8.507059e+37
      %v10506 = vand.u32 %v10473, 2147483648
      %v10507 = vor.u32 1.1754944e-38, %v10506
      %v10508 = vsel %vm10505, %v10507, %v10503
      %v10509 = vmul.f32 %v10463, %v10508
      %v10510 = vrcp.pop %v10476
      %v10511 = vmul.f32 %v10476, %v10510
      %v10512 = vsub.f32 1.0, %v10511
      %v10513 = vmul.f32 %v10510, %v10512
      %v10514 = vadd.f32 %v10510, %v10513
      %vm10515 = vweird.f32 %v10476
      %vm10516 = vweird.f32 %v10510
      %vm10517 = vmor %vm10515, %vm10516
      %v10518 = vsel %vm10517, %v10510, %v10514
      %v10519 = vand.u32 2147483647, %v10476
      %vm10520 = vcmp.eq.f32.partialorder %v10519, 8.507059e+37
      %v10521 = vand.u32 %v10476, 2147483648
      %v10522 = vor.u32 1.1754944e-38, %v10521
      %v10523 = vsel %vm10520, %v10522, %v10518
      %v10524 = vmul.f32 %v10465, %v10523
      %v10525 = vrcp.pop %v10479
      %v10526 = vmul.f32 %v10479, %v10525
      %v10527 = vsub.f32 1.0, %v10526
      %v10528 = vmul.f32 %v10525, %v10527
      %v10529 = vadd.f32 %v10525, %v10528
      %vm10530 = vweird.f32 %v10479
      %vm10531 = vweird.f32 %v10525
      %vm10532 = vmor %vm10530, %vm10531
      %v10533 = vsel %vm10532, %v10525, %v10529
      %v10534 = vand.u32 2147483647, %v10479
      %vm10535 = vcmp.eq.f32.partialorder %v10534, 8.507059e+37
      %v10536 = vand.u32 %v10479, 2147483648
      %v10537 = vor.u32 1.1754944e-38, %v10536
      %v10538 = vsel %vm10535, %v10537, %v10533
      %v10539 = vmul.f32 %v10467, %v10538
      %v10541 = vsel %vm1168, %v10494, 0
      %v10544 = vsel %vm1168, %v10509, 0
      %v10547 = vsel %vm1168, %v10524, 0
      %v10550 = vsel %vm1168, %v10539, 0
      %10552 = vmatpush.msra.mxu0 0.0
      %10553 = vmatpush.msra.mxu0 0.0
      %10554 = vmatpush.msra.mxu0 0.0
      %10555 = vmatpush.msra.mxu0 0.0
      %10556 = vmatpush.msra.mxu0 0.0
      %10557 = vmatpush.msra.mxu0 0.0
      %10558 = vmatpush.msra.mxu0 0.0
      %10559 = vmatpush.msra.mxu0 0.0
      %10560 = vmatpush.msra.mxu0 0.0
      %10561 = vmatpush.msra.mxu0 0.0
      %10562 = vmatpush.msra.mxu0 0.0
      %10563 = vmatpush.msra.mxu0 0.0
      %v10564 = vand.u32 %v2668, 4294901760
      %10565 = vmatpush.msra.mxu0 %v10564
      %v10566 = vand.u32 %v2664, 4294901760
      %10567 = vmatpush.msra.mxu0 %v10566
      %v10568 = vand.u32 %v2660, 4294901760
      %10569 = vmatpush.msra.mxu0 %v10568
      %v10570 = vand.u32 %v2656, 4294901760
      %10571 = vmatpush.msra.mxu0 %v10570
      %v10572 = vand.u32 %v10541, 4294901760
      %v10573 = vsub.f32 %v10541, %v10572
      %v10574 = vand.u32 %v10573, 4294901760
      %v10575 = vsub.f32 %v10573, %v10574
      %v10576 = vand.u32 %v10575, 4294901760
      %10577 = vmatmul.f32.gmra.mxu0 %v10576
      %v10578 = vpop.f32.mrf.mxu0
      %v10579 = vadd.f32 0.0, %v10578
      %v10580 = vand.u32 %v10544, 4294901760
      %v10581 = vsub.f32 %v10544, %v10580
      %v10582 = vand.u32 %v10581, 4294901760
      %v10583 = vsub.f32 %v10581, %v10582
      %v10584 = vand.u32 %v10583, 4294901760
      %10585 = vmatmul.f32.gmra.mxu0 %v10584
      %v10586 = vpop.f32.mrf.mxu0
      %v10587 = vadd.f32 0.0, %v10586
      %v10588 = vand.u32 %v10547, 4294901760
      %v10589 = vsub.f32 %v10547, %v10588
      %v10590 = vand.u32 %v10589, 4294901760
      %v10591 = vsub.f32 %v10589, %v10590
      %v10592 = vand.u32 %v10591, 4294901760
      %10593 = vmatmul.f32.gmra.mxu0 %v10592
      %v10594 = vpop.f32.mrf.mxu0
      %v10595 = vadd.f32 0.0, %v10594
      %v10596 = vand.u32 %v10550, 4294901760
      %v10597 = vsub.f32 %v10550, %v10596
      %v10598 = vand.u32 %v10597, 4294901760
      %v10599 = vsub.f32 %v10597, %v10598
      %v10600 = vand.u32 %v10599, 4294901760
      %10601 = vmatmul.f32.gmra.mxu0 %v10600
      %v10602 = vpop.f32.mrf.mxu0
      %v10603 = vadd.f32 0.0, %v10602
      %10604 = vdwg.mxu0
      %10605 = vmatpush.msra.mxu0 0.0
      %10606 = vmatpush.msra.mxu0 0.0
      %10607 = vmatpush.msra.mxu0 0.0
      %10608 = vmatpush.msra.mxu0 0.0
      %10609 = vmatpush.msra.mxu0 0.0
      %10610 = vmatpush.msra.mxu0 0.0
      %10611 = vmatpush.msra.mxu0 0.0
      %10612 = vmatpush.msra.mxu0 0.0
      %10613 = vmatpush.msra.mxu0 0.0
      %10614 = vmatpush.msra.mxu0 0.0
      %10615 = vmatpush.msra.mxu0 0.0
      %10616 = vmatpush.msra.mxu0 0.0
      %v10617 = vand.u32 %v2668, 4294901760
      %v10618 = vsub.f32 %v2668, %v10617
      %v10619 = vand.u32 %v10618, 4294901760
      %v10620 = vsub.f32 %v10618, %v10619
      %v10621 = vand.u32 %v10620, 4294901760
      %10622 = vmatpush.msra.mxu0 %v10621
      %v10623 = vand.u32 %v2664, 4294901760
      %v10624 = vsub.f32 %v2664, %v10623
      %v10625 = vand.u32 %v10624, 4294901760
      %v10626 = vsub.f32 %v10624, %v10625
      %v10627 = vand.u32 %v10626, 4294901760
      %10628 = vmatpush.msra.mxu0 %v10627
      %v10629 = vand.u32 %v2660, 4294901760
      %v10630 = vsub.f32 %v2660, %v10629
      %v10631 = vand.u32 %v10630, 4294901760
      %v10632 = vsub.f32 %v10630, %v10631
      %v10633 = vand.u32 %v10632, 4294901760
      %10634 = vmatpush.msra.mxu0 %v10633
      %v10635 = vand.u32 %v2656, 4294901760
      %v10636 = vsub.f32 %v2656, %v10635
      %v10637 = vand.u32 %v10636, 4294901760
      %v10638 = vsub.f32 %v10636, %v10637
      %v10639 = vand.u32 %v10638, 4294901760
      %10640 = vmatpush.msra.mxu0 %v10639
      %v10641 = vand.u32 %v10541, 4294901760
      %10642 = vmatmul.f32.gmra.mxu0 %v10641
      %v10643 = vpop.f32.mrf.mxu0
      %v10644 = vadd.f32 %v10579, %v10643
      %v10645 = vand.u32 %v10544, 4294901760
      %10646 = vmatmul.f32.gmra.mxu0 %v10645
      %v10647 = vpop.f32.mrf.mxu0
      %v10648 = vadd.f32 %v10587, %v10647
      %v10649 = vand.u32 %v10547, 4294901760
      %10650 = vmatmul.f32.gmra.mxu0 %v10649
      %v10651 = vpop.f32.mrf.mxu0
      %v10652 = vadd.f32 %v10595, %v10651
      %v10653 = vand.u32 %v10550, 4294901760
      %10654 = vmatmul.f32.gmra.mxu0 %v10653
      %v10655 = vpop.f32.mrf.mxu0
      %v10656 = vadd.f32 %v10603, %v10655
      %10657 = vdwg.mxu0
      %10658 = vmatpush.msra.mxu0 0.0
      %10659 = vmatpush.msra.mxu0 0.0
      %10660 = vmatpush.msra.mxu0 0.0
      %10661 = vmatpush.msra.mxu0 0.0
      %10662 = vmatpush.msra.mxu0 0.0
      %10663 = vmatpush.msra.mxu0 0.0
      %10664 = vmatpush.msra.mxu0 0.0
      %10665 = vmatpush.msra.mxu0 0.0
      %10666 = vmatpush.msra.mxu0 0.0
      %10667 = vmatpush.msra.mxu0 0.0
      %10668 = vmatpush.msra.mxu0 0.0
      %10669 = vmatpush.msra.mxu0 0.0
      %v10670 = vand.u32 %v2668, 4294901760
      %v10671 = vsub.f32 %v2668, %v10670
      %10672 = vmatpush.msra.mxu0 %v10671
      %v10673 = vand.u32 %v2664, 4294901760
      %v10674 = vsub.f32 %v2664, %v10673
      %10675 = vmatpush.msra.mxu0 %v10674
      %v10676 = vand.u32 %v2660, 4294901760
      %v10677 = vsub.f32 %v2660, %v10676
      %10678 = vmatpush.msra.mxu0 %v10677
      %v10679 = vand.u32 %v2656, 4294901760
      %v10680 = vsub.f32 %v2656, %v10679
      %10681 = vmatpush.msra.mxu0 %v10680
      %v10682 = vand.u32 %v10541, 4294901760
      %v10683 = vsub.f32 %v10541, %v10682
      %10684 = vmatmul.f32.gmra.mxu0 %v10683
      %v10685 = vpop.f32.mrf.mxu0
      %v10686 = vadd.f32 %v10644, %v10685
      %v10687 = vand.u32 %v10544, 4294901760
      %v10688 = vsub.f32 %v10544, %v10687
      %10689 = vmatmul.f32.gmra.mxu0 %v10688
      %v10690 = vpop.f32.mrf.mxu0
      %v10691 = vadd.f32 %v10648, %v10690
      %v10692 = vand.u32 %v10547, 4294901760
      %v10693 = vsub.f32 %v10547, %v10692
      %10694 = vmatmul.f32.gmra.mxu0 %v10693
      %v10695 = vpop.f32.mrf.mxu0
      %v10696 = vadd.f32 %v10652, %v10695
      %v10697 = vand.u32 %v10550, 4294901760
      %v10698 = vsub.f32 %v10550, %v10697
      %10699 = vmatmul.f32.gmra.mxu0 %v10698
      %v10700 = vpop.f32.mrf.mxu0
      %v10701 = vadd.f32 %v10656, %v10700
      %10702 = vdwg.mxu0
      %10703 = vmatpush.msra.mxu0 0.0
      %10704 = vmatpush.msra.mxu0 0.0
      %10705 = vmatpush.msra.mxu0 0.0
      %10706 = vmatpush.msra.mxu0 0.0
      %10707 = vmatpush.msra.mxu0 0.0
      %10708 = vmatpush.msra.mxu0 0.0
      %10709 = vmatpush.msra.mxu0 0.0
      %10710 = vmatpush.msra.mxu0 0.0
      %10711 = vmatpush.msra.mxu0 0.0
      %10712 = vmatpush.msra.mxu0 0.0
      %10713 = vmatpush.msra.mxu0 0.0
      %10714 = vmatpush.msra.mxu0 0.0
      %v10715 = vand.u32 %v2668, 4294901760
      %10716 = vmatpush.msra.mxu0 %v10715
      %v10717 = vand.u32 %v2664, 4294901760
      %10718 = vmatpush.msra.mxu0 %v10717
      %v10719 = vand.u32 %v2660, 4294901760
      %10720 = vmatpush.msra.mxu0 %v10719
      %v10721 = vand.u32 %v2656, 4294901760
      %10722 = vmatpush.msra.mxu0 %v10721
      %v10723 = vand.u32 %v10541, 4294901760
      %v10724 = vsub.f32 %v10541, %v10723
      %v10725 = vand.u32 %v10724, 4294901760
      %10726 = vmatmul.f32.gmra.mxu0 %v10725
      %v10727 = vpop.f32.mrf.mxu0
      %v10728 = vadd.f32 %v10686, %v10727
      %v10729 = vand.u32 %v10544, 4294901760
      %v10730 = vsub.f32 %v10544, %v10729
      %v10731 = vand.u32 %v10730, 4294901760
      %10732 = vmatmul.f32.gmra.mxu0 %v10731
      %v10733 = vpop.f32.mrf.mxu0
      %v10734 = vadd.f32 %v10691, %v10733
      %v10735 = vand.u32 %v10547, 4294901760
      %v10736 = vsub.f32 %v10547, %v10735
      %v10737 = vand.u32 %v10736, 4294901760
      %10738 = vmatmul.f32.gmra.mxu0 %v10737
      %v10739 = vpop.f32.mrf.mxu0
      %v10740 = vadd.f32 %v10696, %v10739
      %v10741 = vand.u32 %v10550, 4294901760
      %v10742 = vsub.f32 %v10550, %v10741
      %v10743 = vand.u32 %v10742, 4294901760
      %10744 = vmatmul.f32.gmra.mxu0 %v10743
      %v10745 = vpop.f32.mrf.mxu0
      %v10746 = vadd.f32 %v10701, %v10745
      %10747 = vdwg.mxu0
      %10748 = vmatpush.msra.mxu0 0.0
      %10749 = vmatpush.msra.mxu0 0.0
      %10750 = vmatpush.msra.mxu0 0.0
      %10751 = vmatpush.msra.mxu0 0.0
      %10752 = vmatpush.msra.mxu0 0.0
      %10753 = vmatpush.msra.mxu0 0.0
      %10754 = vmatpush.msra.mxu0 0.0
      %10755 = vmatpush.msra.mxu0 0.0
      %10756 = vmatpush.msra.mxu0 0.0
      %10757 = vmatpush.msra.mxu0 0.0
      %10758 = vmatpush.msra.mxu0 0.0
      %10759 = vmatpush.msra.mxu0 0.0
      %v10760 = vand.u32 %v2668, 4294901760
      %v10761 = vsub.f32 %v2668, %v10760
      %v10762 = vand.u32 %v10761, 4294901760
      %10763 = vmatpush.msra.mxu0 %v10762
      %v10764 = vand.u32 %v2664, 4294901760
      %v10765 = vsub.f32 %v2664, %v10764
      %v10766 = vand.u32 %v10765, 4294901760
      %10767 = vmatpush.msra.mxu0 %v10766
      %v10768 = vand.u32 %v2660, 4294901760
      %v10769 = vsub.f32 %v2660, %v10768
      %v10770 = vand.u32 %v10769, 4294901760
      %10771 = vmatpush.msra.mxu0 %v10770
      %v10772 = vand.u32 %v2656, 4294901760
      %v10773 = vsub.f32 %v2656, %v10772
      %v10774 = vand.u32 %v10773, 4294901760
      %10775 = vmatpush.msra.mxu0 %v10774
      %v10776 = vand.u32 %v10541, 4294901760
      %10777 = vmatmul.f32.gmra.mxu0 %v10776
      %v10778 = vpop.f32.mrf.mxu0
      %v10779 = vadd.f32 %v10728, %v10778
      %v10780 = vand.u32 %v10544, 4294901760
      %10781 = vmatmul.f32.gmra.mxu0 %v10780
      %v10782 = vpop.f32.mrf.mxu0
      %v10783 = vadd.f32 %v10734, %v10782
      %v10784 = vand.u32 %v10547, 4294901760
      %10785 = vmatmul.f32.gmra.mxu0 %v10784
      %v10786 = vpop.f32.mrf.mxu0
      %v10787 = vadd.f32 %v10740, %v10786
      %v10788 = vand.u32 %v10550, 4294901760
      %10789 = vmatmul.f32.gmra.mxu0 %v10788
      %v10790 = vpop.f32.mrf.mxu0
      %v10791 = vadd.f32 %v10746, %v10790
      %10792 = vdwg.mxu0
      %10793 = vmatpush.msra.mxu0 0.0
      %10794 = vmatpush.msra.mxu0 0.0
      %10795 = vmatpush.msra.mxu0 0.0
      %10796 = vmatpush.msra.mxu0 0.0
      %10797 = vmatpush.msra.mxu0 0.0
      %10798 = vmatpush.msra.mxu0 0.0
      %10799 = vmatpush.msra.mxu0 0.0
      %10800 = vmatpush.msra.mxu0 0.0
      %10801 = vmatpush.msra.mxu0 0.0
      %10802 = vmatpush.msra.mxu0 0.0
      %10803 = vmatpush.msra.mxu0 0.0
      %10804 = vmatpush.msra.mxu0 0.0
      %v10805 = vand.u32 %v2668, 4294901760
      %10806 = vmatpush.msra.mxu0 %v10805
      %v10807 = vand.u32 %v2664, 4294901760
      %10808 = vmatpush.msra.mxu0 %v10807
      %v10809 = vand.u32 %v2660, 4294901760
      %10810 = vmatpush.msra.mxu0 %v10809
      %v10811 = vand.u32 %v2656, 4294901760
      %10812 = vmatpush.msra.mxu0 %v10811
      %v10813 = vand.u32 %v10541, 4294901760
      %10814 = vmatmul.f32.gmra.mxu0 %v10813
      %v10815 = vpop.f32.mrf.mxu0
      %v10816 = vadd.f32 %v10779, %v10815
      %v10817 = vand.u32 %v10544, 4294901760
      %10818 = vmatmul.f32.gmra.mxu0 %v10817
      %v10819 = vpop.f32.mrf.mxu0
      %v10820 = vadd.f32 %v10783, %v10819
      %v10821 = vand.u32 %v10547, 4294901760
      %10822 = vmatmul.f32.gmra.mxu0 %v10821
      %v10823 = vpop.f32.mrf.mxu0
      %v10824 = vadd.f32 %v10787, %v10823
      %v10825 = vand.u32 %v10550, 4294901760
      %10826 = vmatmul.f32.gmra.mxu0 %v10825
      %v10827 = vpop.f32.mrf.mxu0
      %v10828 = vadd.f32 %v10791, %v10827
      %10829 = vdwg.mxu0
      %10830 = vmatpush.msra.mxu0 0.0
      %10831 = vmatpush.msra.mxu0 0.0
      %10832 = vmatpush.msra.mxu0 0.0
      %10833 = vmatpush.msra.mxu0 0.0
      %10834 = vmatpush.msra.mxu0 0.0
      %10835 = vmatpush.msra.mxu0 0.0
      %10836 = vmatpush.msra.mxu0 0.0
      %10837 = vmatpush.msra.mxu0 0.0
      %10838 = vmatpush.msra.mxu0 0.0
      %10839 = vmatpush.msra.mxu0 0.0
      %10840 = vmatpush.msra.mxu0 0.0
      %10841 = vmatpush.msra.mxu0 0.0
      %v10842 = vand.u32 %v3566, 4294901760
      %10843 = vmatpush.msra.mxu0 %v10842
      %v10844 = vand.u32 %v3562, 4294901760
      %10845 = vmatpush.msra.mxu0 %v10844
      %v10846 = vand.u32 %v3558, 4294901760
      %10847 = vmatpush.msra.mxu0 %v10846
      %v10848 = vand.u32 %v3554, 4294901760
      %10849 = vmatpush.msra.mxu0 %v10848
      %v10850 = vand.u32 %v10541, 4294901760
      %v10851 = vsub.f32 %v10541, %v10850
      %v10852 = vand.u32 %v10851, 4294901760
      %v10853 = vsub.f32 %v10851, %v10852
      %v10854 = vand.u32 %v10853, 4294901760
      %10855 = vmatmul.f32.gmra.mxu0 %v10854
      %v10856 = vpop.f32.mrf.mxu0
      %v10857 = vadd.f32 0.0, %v10856
      %v10858 = vand.u32 %v10544, 4294901760
      %v10859 = vsub.f32 %v10544, %v10858
      %v10860 = vand.u32 %v10859, 4294901760
      %v10861 = vsub.f32 %v10859, %v10860
      %v10862 = vand.u32 %v10861, 4294901760
      %10863 = vmatmul.f32.gmra.mxu0 %v10862
      %v10864 = vpop.f32.mrf.mxu0
      %v10865 = vadd.f32 0.0, %v10864
      %v10866 = vand.u32 %v10547, 4294901760
      %v10867 = vsub.f32 %v10547, %v10866
      %v10868 = vand.u32 %v10867, 4294901760
      %v10869 = vsub.f32 %v10867, %v10868
      %v10870 = vand.u32 %v10869, 4294901760
      %10871 = vmatmul.f32.gmra.mxu0 %v10870
      %v10872 = vpop.f32.mrf.mxu0
      %v10873 = vadd.f32 0.0, %v10872
      %v10874 = vand.u32 %v10550, 4294901760
      %v10875 = vsub.f32 %v10550, %v10874
      %v10876 = vand.u32 %v10875, 4294901760
      %v10877 = vsub.f32 %v10875, %v10876
      %v10878 = vand.u32 %v10877, 4294901760
      %10879 = vmatmul.f32.gmra.mxu0 %v10878
      %v10880 = vpop.f32.mrf.mxu0
      %v10881 = vadd.f32 0.0, %v10880
      %10882 = vdwg.mxu0
      %10883 = vmatpush.msra.mxu0 0.0
      %10884 = vmatpush.msra.mxu0 0.0
      %10885 = vmatpush.msra.mxu0 0.0
      %10886 = vmatpush.msra.mxu0 0.0
      %10887 = vmatpush.msra.mxu0 0.0
      %10888 = vmatpush.msra.mxu0 0.0
      %10889 = vmatpush.msra.mxu0 0.0
      %10890 = vmatpush.msra.mxu0 0.0
      %10891 = vmatpush.msra.mxu0 0.0
      %10892 = vmatpush.msra.mxu0 0.0
      %10893 = vmatpush.msra.mxu0 0.0
      %10894 = vmatpush.msra.mxu0 0.0
      %v10895 = vand.u32 %v3566, 4294901760
      %v10896 = vsub.f32 %v3566, %v10895
      %v10897 = vand.u32 %v10896, 4294901760
      %v10898 = vsub.f32 %v10896, %v10897
      %v10899 = vand.u32 %v10898, 4294901760
      %10900 = vmatpush.msra.mxu0 %v10899
      %v10901 = vand.u32 %v3562, 4294901760
      %v10902 = vsub.f32 %v3562, %v10901
      %v10903 = vand.u32 %v10902, 4294901760
      %v10904 = vsub.f32 %v10902, %v10903
      %v10905 = vand.u32 %v10904, 4294901760
      %10906 = vmatpush.msra.mxu0 %v10905
      %v10907 = vand.u32 %v3558, 4294901760
      %v10908 = vsub.f32 %v3558, %v10907
      %v10909 = vand.u32 %v10908, 4294901760
      %v10910 = vsub.f32 %v10908, %v10909
      %v10911 = vand.u32 %v10910, 4294901760
      %10912 = vmatpush.msra.mxu0 %v10911
      %v10913 = vand.u32 %v3554, 4294901760
      %v10914 = vsub.f32 %v3554, %v10913
      %v10915 = vand.u32 %v10914, 4294901760
      %v10916 = vsub.f32 %v10914, %v10915
      %v10917 = vand.u32 %v10916, 4294901760
      %10918 = vmatpush.msra.mxu0 %v10917
      %v10919 = vand.u32 %v10541, 4294901760
      %10920 = vmatmul.f32.gmra.mxu0 %v10919
      %v10921 = vpop.f32.mrf.mxu0
      %v10922 = vadd.f32 %v10857, %v10921
      %v10923 = vand.u32 %v10544, 4294901760
      %10924 = vmatmul.f32.gmra.mxu0 %v10923
      %v10925 = vpop.f32.mrf.mxu0
      %v10926 = vadd.f32 %v10865, %v10925
      %v10927 = vand.u32 %v10547, 4294901760
      %10928 = vmatmul.f32.gmra.mxu0 %v10927
      %v10929 = vpop.f32.mrf.mxu0
      %v10930 = vadd.f32 %v10873, %v10929
      %v10931 = vand.u32 %v10550, 4294901760
      %10932 = vmatmul.f32.gmra.mxu0 %v10931
      %v10933 = vpop.f32.mrf.mxu0
      %v10934 = vadd.f32 %v10881, %v10933
      %10935 = vdwg.mxu0
      %10936 = vmatpush.msra.mxu0 0.0
      %10937 = vmatpush.msra.mxu0 0.0
      %10938 = vmatpush.msra.mxu0 0.0
      %10939 = vmatpush.msra.mxu0 0.0
      %10940 = vmatpush.msra.mxu0 0.0
      %10941 = vmatpush.msra.mxu0 0.0
      %10942 = vmatpush.msra.mxu0 0.0
      %10943 = vmatpush.msra.mxu0 0.0
      %10944 = vmatpush.msra.mxu0 0.0
      %10945 = vmatpush.msra.mxu0 0.0
      %10946 = vmatpush.msra.mxu0 0.0
      %10947 = vmatpush.msra.mxu0 0.0
      %v10948 = vand.u32 %v3566, 4294901760
      %v10949 = vsub.f32 %v3566, %v10948
      %10950 = vmatpush.msra.mxu0 %v10949
      %v10951 = vand.u32 %v3562, 4294901760
      %v10952 = vsub.f32 %v3562, %v10951
      %10953 = vmatpush.msra.mxu0 %v10952
      %v10954 = vand.u32 %v3558, 4294901760
      %v10955 = vsub.f32 %v3558, %v10954
      %10956 = vmatpush.msra.mxu0 %v10955
      %v10957 = vand.u32 %v3554, 4294901760
      %v10958 = vsub.f32 %v3554, %v10957
      %10959 = vmatpush.msra.mxu0 %v10958
      %v10960 = vand.u32 %v10541, 4294901760
      %v10961 = vsub.f32 %v10541, %v10960
      %10962 = vmatmul.f32.gmra.mxu0 %v10961
      %v10963 = vpop.f32.mrf.mxu0
      %v10964 = vadd.f32 %v10922, %v10963
      %v10965 = vand.u32 %v10544, 4294901760
      %v10966 = vsub.f32 %v10544, %v10965
      %10967 = vmatmul.f32.gmra.mxu0 %v10966
      %v10968 = vpop.f32.mrf.mxu0
      %v10969 = vadd.f32 %v10926, %v10968
      %v10970 = vand.u32 %v10547, 4294901760
      %v10971 = vsub.f32 %v10547, %v10970
      %10972 = vmatmul.f32.gmra.mxu0 %v10971
      %v10973 = vpop.f32.mrf.mxu0
      %v10974 = vadd.f32 %v10930, %v10973
      %v10975 = vand.u32 %v10550, 4294901760
      %v10976 = vsub.f32 %v10550, %v10975
      %10977 = vmatmul.f32.gmra.mxu0 %v10976
      %v10978 = vpop.f32.mrf.mxu0
      %v10979 = vadd.f32 %v10934, %v10978
      %10980 = vdwg.mxu0
      %10981 = vmatpush.msra.mxu0 0.0
      %10982 = vmatpush.msra.mxu0 0.0
      %10983 = vmatpush.msra.mxu0 0.0
      %10984 = vmatpush.msra.mxu0 0.0
      %10985 = vmatpush.msra.mxu0 0.0
      %10986 = vmatpush.msra.mxu0 0.0
      %10987 = vmatpush.msra.mxu0 0.0
      %10988 = vmatpush.msra.mxu0 0.0
      %10989 = vmatpush.msra.mxu0 0.0
      %10990 = vmatpush.msra.mxu0 0.0
      %10991 = vmatpush.msra.mxu0 0.0
      %10992 = vmatpush.msra.mxu0 0.0
      %v10993 = vand.u32 %v3566, 4294901760
      %10994 = vmatpush.msra.mxu0 %v10993
      %v10995 = vand.u32 %v3562, 4294901760
      %10996 = vmatpush.msra.mxu0 %v10995
      %v10997 = vand.u32 %v3558, 4294901760
      %10998 = vmatpush.msra.mxu0 %v10997
      %v10999 = vand.u32 %v3554, 4294901760
      %11000 = vmatpush.msra.mxu0 %v10999
      %v11001 = vand.u32 %v10541, 4294901760
      %v11002 = vsub.f32 %v10541, %v11001
      %v11003 = vand.u32 %v11002, 4294901760
      %11004 = vmatmul.f32.gmra.mxu0 %v11003
      %v11005 = vpop.f32.mrf.mxu0
      %v11006 = vadd.f32 %v10964, %v11005
      %v11007 = vand.u32 %v10544, 4294901760
      %v11008 = vsub.f32 %v10544, %v11007
      %v11009 = vand.u32 %v11008, 4294901760
      %11010 = vmatmul.f32.gmra.mxu0 %v11009
      %v11011 = vpop.f32.mrf.mxu0
      %v11012 = vadd.f32 %v10969, %v11011
      %v11013 = vand.u32 %v10547, 4294901760
      %v11014 = vsub.f32 %v10547, %v11013
      %v11015 = vand.u32 %v11014, 4294901760
      %11016 = vmatmul.f32.gmra.mxu0 %v11015
      %v11017 = vpop.f32.mrf.mxu0
      %v11018 = vadd.f32 %v10974, %v11017
      %v11019 = vand.u32 %v10550, 4294901760
      %v11020 = vsub.f32 %v10550, %v11019
      %v11021 = vand.u32 %v11020, 4294901760
      %11022 = vmatmul.f32.gmra.mxu0 %v11021
      %v11023 = vpop.f32.mrf.mxu0
      %v11024 = vadd.f32 %v10979, %v11023
      %11025 = vdwg.mxu0
      %11026 = vmatpush.msra.mxu0 0.0
      %11027 = vmatpush.msra.mxu0 0.0
      %11028 = vmatpush.msra.mxu0 0.0
      %11029 = vmatpush.msra.mxu0 0.0
      %11030 = vmatpush.msra.mxu0 0.0
      %11031 = vmatpush.msra.mxu0 0.0
      %11032 = vmatpush.msra.mxu0 0.0
      %11033 = vmatpush.msra.mxu0 0.0
      %11034 = vmatpush.msra.mxu0 0.0
      %11035 = vmatpush.msra.mxu0 0.0
      %11036 = vmatpush.msra.mxu0 0.0
      %11037 = vmatpush.msra.mxu0 0.0
      %v11038 = vand.u32 %v3566, 4294901760
      %v11039 = vsub.f32 %v3566, %v11038
      %v11040 = vand.u32 %v11039, 4294901760
      %11041 = vmatpush.msra.mxu0 %v11040
      %v11042 = vand.u32 %v3562, 4294901760
      %v11043 = vsub.f32 %v3562, %v11042
      %v11044 = vand.u32 %v11043, 4294901760
      %11045 = vmatpush.msra.mxu0 %v11044
      %v11046 = vand.u32 %v3558, 4294901760
      %v11047 = vsub.f32 %v3558, %v11046
      %v11048 = vand.u32 %v11047, 4294901760
      %11049 = vmatpush.msra.mxu0 %v11048
      %v11050 = vand.u32 %v3554, 4294901760
      %v11051 = vsub.f32 %v3554, %v11050
      %v11052 = vand.u32 %v11051, 4294901760
      %11053 = vmatpush.msra.mxu0 %v11052
      %v11054 = vand.u32 %v10541, 4294901760
      %11055 = vmatmul.f32.gmra.mxu0 %v11054
      %v11056 = vpop.f32.mrf.mxu0
      %v11057 = vadd.f32 %v11006, %v11056
      %v11058 = vand.u32 %v10544, 4294901760
      %11059 = vmatmul.f32.gmra.mxu0 %v11058
      %v11060 = vpop.f32.mrf.mxu0
      %v11061 = vadd.f32 %v11012, %v11060
      %v11062 = vand.u32 %v10547, 4294901760
      %11063 = vmatmul.f32.gmra.mxu0 %v11062
      %v11064 = vpop.f32.mrf.mxu0
      %v11065 = vadd.f32 %v11018, %v11064
      %v11066 = vand.u32 %v10550, 4294901760
      %11067 = vmatmul.f32.gmra.mxu0 %v11066
      %v11068 = vpop.f32.mrf.mxu0
      %v11069 = vadd.f32 %v11024, %v11068
      %11070 = vdwg.mxu0
      %11071 = vmatpush.msra.mxu0 0.0
      %11072 = vmatpush.msra.mxu0 0.0
      %11073 = vmatpush.msra.mxu0 0.0
      %11074 = vmatpush.msra.mxu0 0.0
      %11075 = vmatpush.msra.mxu0 0.0
      %11076 = vmatpush.msra.mxu0 0.0
      %11077 = vmatpush.msra.mxu0 0.0
      %11078 = vmatpush.msra.mxu0 0.0
      %11079 = vmatpush.msra.mxu0 0.0
      %11080 = vmatpush.msra.mxu0 0.0
      %11081 = vmatpush.msra.mxu0 0.0
      %11082 = vmatpush.msra.mxu0 0.0
      %v11083 = vand.u32 %v3566, 4294901760
      %11084 = vmatpush.msra.mxu0 %v11083
      %v11085 = vand.u32 %v3562, 4294901760
      %11086 = vmatpush.msra.mxu0 %v11085
      %v11087 = vand.u32 %v3558, 4294901760
      %11088 = vmatpush.msra.mxu0 %v11087
      %v11089 = vand.u32 %v3554, 4294901760
      %11090 = vmatpush.msra.mxu0 %v11089
      %v11091 = vand.u32 %v10541, 4294901760
      %11092 = vmatmul.f32.gmra.mxu0 %v11091
      %v11093 = vpop.f32.mrf.mxu0
      %v11094 = vadd.f32 %v11057, %v11093
      %v11095 = vand.u32 %v10544, 4294901760
      %11096 = vmatmul.f32.gmra.mxu0 %v11095
      %v11097 = vpop.f32.mrf.mxu0
      %v11098 = vadd.f32 %v11061, %v11097
      %v11099 = vand.u32 %v10547, 4294901760
      %11100 = vmatmul.f32.gmra.mxu0 %v11099
      %v11101 = vpop.f32.mrf.mxu0
      %v11102 = vadd.f32 %v11065, %v11101
      %v11103 = vand.u32 %v10550, 4294901760
      %11104 = vmatmul.f32.gmra.mxu0 %v11103
      %v11105 = vpop.f32.mrf.mxu0
      %v11106 = vadd.f32 %v11069, %v11105
      %11107 = vdwg.mxu0
      %v11108 = vmul.f32 %v9876, %v4923
      %v11109 = vmul.f32 %v9877, %v5162
      %v11110 = vmul.f32 %v9878, %v4927
      %v11111 = vmul.f32 %v9879, %v5166
      %v11112 = vmul.f32 %v9880, %v4931
      %v11113 = vmul.f32 %v9881, %v5170
      %v11114 = vmul.f32 %v9882, %v4935
      %v11115 = vmul.f32 %v9883, %v5174
      %11116 = vst [vmem:[%s448] sm:$0xff] %v11108
      %11117 = vst [vmem:[%s448 + $0x8] sm:$0xff] %v11109
      %11118 = vst [vmem:[%s448 + $0x10] sm:$0xff] %v11110
      %11119 = vst [vmem:[%s448 + $0x18] sm:$0xff] %v11111
      %11120 = vst [vmem:[%s448 + $0x20] sm:$0xff] %v11112
      %11121 = vst [vmem:[%s448 + $0x28] sm:$0xff] %v11113
      %11122 = vst [vmem:[%s448 + $0x30] sm:$0xff] %v11114
      %11123 = vst [vmem:[%s448 + $0x38] sm:$0xff] %v11115
      %v11124 = vmul.f32 %v10816, %v5408
      %v11125 = vmul.f32 %v11094, %v5647
      %v11126 = vmul.f32 %v10820, %v5412
      %v11127 = vmul.f32 %v11098, %v5651
      %v11128 = vmul.f32 %v10824, %v5416
      %v11129 = vmul.f32 %v11102, %v5655
      %v11130 = vmul.f32 %v10828, %v5420
      %v11131 = vmul.f32 %v11106, %v5659
      %v11132 = vadd.f32 %v11124, %v454
      %v11133 = vadd.f32 %v11125, %v455
      %v11134 = vadd.f32 %v11126, %v456
      %v11135 = vadd.f32 %v11127, %v457
      %v11136 = vadd.f32 %v11128, %v458
      %v11137 = vadd.f32 %v11129, %v459
      %v11138 = vadd.f32 %v11130, %v460
      %v11139 = vadd.f32 %v11131, %v461
      %11140 = vst [vmem:[%s453] sm:$0xff] %v11132
      %11141 = vst [vmem:[%s453 + $0x8] sm:$0xff] %v11133
      %11142 = vst [vmem:[%s453 + $0x10] sm:$0xff] %v11134
      %11143 = vst [vmem:[%s453 + $0x18] sm:$0xff] %v11135
      %11144 = vst [vmem:[%s453 + $0x20] sm:$0xff] %v11136
      %11145 = vst [vmem:[%s453 + $0x28] sm:$0xff] %v11137
      %11146 = vst [vmem:[%s453 + $0x30] sm:$0xff] %v11138
      %11147 = vst [vmem:[%s453 + $0x38] sm:$0xff] %v11139
      %p11148 = scmp.lt.s32.totalorder %s25, 1
      %s11149 = scalar_select %p11148, %s25, 1
      %s11150 = smul.addr %s11149, 8
      %s11151 = smul.addr %s11150, 8
      %s11152 = scalar_lea.vmem %s12, %s11151
      %p11153 = scmp.lt.s32.totalorder %s25, 1
      %s11154 = scalar_select %p11153, %s25, 1
      %s11155 = smul.addr %s11154, 8
      %s11156 = smul.addr %s11155, 8
      %s11157 = scalar_lea.vmem %s13, %s11156
      // Predicated region
      $region69: #{attention_block_pallas.1} parent=67 // pred_check
        %p11158 = pneg %p300
      $region70: #{attention_block_pallas.1} parent=67 // pred_check_branch
        %11160 = sbr.rel (%p11158) target = $region72
      $region71: #{attention_block_pallas.1} parent=67 // pred_region
        _
      $region72: #{attention_block_pallas.1} parent=67 // pred_fallthru
        _
      // Predicated region
      $region73: #{attention_block_pallas.1} parent=67 // pred_check
        %p11161 = pneg %p326
      $region74: #{attention_block_pallas.1} parent=67 // pred_check_branch
        %11163 = sbr.rel (%p11161) target = $region76
      $region75: #{attention_block_pallas.1} parent=67 // pred_region
        _
      $region76: #{attention_block_pallas.1} parent=67 // pred_fallthru
        _
    $region68: #{attention_block_pallas.1} parent=5 // pred_fallthru
      _
    %p11164 = scmp.le.s32.totalorder 2, %s20
    // Predicated region
    $region77: #{attention_block_pallas.1} parent=5 // pred_check
      %p11165 = pneg %p11164
    $region78: #{attention_block_pallas.1} parent=5 // pred_check_branch
      %11167 = sbr.rel (%p11165) target = $region80
    $region79: #{attention_block_pallas.1} parent=5 // pred_region
      %s11168 = ssub.s32 %s20, 2
      // Predicated region
      $region81: #{attention_block_pallas.1} parent=79 // pred_check
        %p11169 = pneg %p306
      $region82: #{attention_block_pallas.1} parent=79 // pred_check_branch
        %11171 = sbr.rel (%p11169) target = $region84
      $region83: #{attention_block_pallas.1} parent=79 // pred_region
        %p11172 = scmp.lt.s32.totalorder %s26, 1
        %s11173 = scalar_select %p11172, %s26, 1
        %s11174 = smul.addr %s11173, 8
        %s11175 = smul.addr %s11174, 8
        %s11176 = scalar_lea.vmem %s12, %s11175
      $region84: #{attention_block_pallas.1} parent=79 // pred_fallthru
        _
      // Predicated region
      $region85: #{attention_block_pallas.1} parent=79 // pred_check
        %p11177 = pneg %p332
      $region86: #{attention_block_pallas.1} parent=79 // pred_check_branch
        %11179 = sbr.rel (%p11177) target = $region88
      $region87: #{attention_block_pallas.1} parent=79 // pred_region
        %p11180 = scmp.lt.s32.totalorder %s26, 1
        %s11181 = scalar_select %p11180, %s26, 1
        %s11182 = smul.addr %s11181, 8
        %s11183 = smul.addr %s11182, 8
        %s11184 = scalar_lea.vmem %s13, %s11183
      $region88: #{attention_block_pallas.1} parent=79 // pred_fallthru
        _
    $region80: #{attention_block_pallas.1} parent=5 // pred_fallthru
      _
  $region6: #{attention_block_pallas.1} parent=0 // loop_footer
    %s24 = sadd.s32 1, %s20
  $region7: #{attention_block_pallas.1} parent=0 // loop_footer_branch
    %19 = sbr.rel target = $region3
  $region8: #{attention_block_pallas.1} parent=0 // loop_exit
    _

</llo_original>
